<compile_context>
chip_gen: v7x
topology: tpu7x:2x2x1
jax: 0.10.0
libtpu: 0.0.40
codegen_flags: <defaults>
</compile_context>

<pallas_src>
import jax
import jax.numpy as jnp
from jax.experimental import pallas as pl
from jax.experimental.pallas import tpu as pltpu

# ----------------------------- module config (from __init__) -----------------
NPOINTS = [1024, 256, 64, 16]
RADIUS = [[0.05, 0.1], [0.1, 0.2], [0.2, 0.4], [0.4, 0.8]]
NSAMPLE = [[16, 32], [16, 32], [16, 32], [16, 32]]
MLPS = [
    [[16, 16, 32], [32, 32, 64]],
    [[64, 64, 128], [64, 96, 128]],
    [[128, 196, 256], [128, 196, 256]],
    [[256, 256, 512], [256, 384, 512]],
]
BN_EPS = 1e-5

MAX_ROWS_PER_STEP = 4096           # matmul rows (TP * nsample) per grid step
VMEM_LIMIT_BYTES = 40 * 1024 * 1024


def _round_up(x, m):
    return ((x + m - 1) // m) * m


def _pick_tp(S, NS, B):
    """Largest point-tile TP that divides S, is a multiple of 16 (bf16 sublane
    tiling) and keeps TP*NS <= MAX_ROWS_PER_STEP.  Falls back to the full
    extent S (always a legal block).  With B == 1 we also keep >=2 grid steps
    so both v7x TensorCores get work."""
    cap = max(1, MAX_ROWS_PER_STEP // NS)
    if B == 1:
        cap = min(cap, max(16, S // 2))
    best = S
    for tp in range(16, min(S, cap) + 1, 16):
        if S % tp == 0:
            best = tp
    return best


# ----------------------------- Pallas kernel: fused shared MLP + max-pool ----
def fused_mlp_maxpool(x, layers):
    """x: (B, S, NS, Cin) grouped features, bf16 (both radius branches already
    concatenated on the channel axis).  layers: 3x (W (Cin, Cout) f32 block-
    diagonal & channel-padded, b (1, Cout) f32).

    Computes relu(relu(relu(x@W1+b1)@W2+b2)@W3+b3), then max over the NS
    neighbor axis.  Returns (B, S, Cout3) bfloat16 (Cout3 is 128-padded)."""
    B, S, NS, Cin = x.shape
    (w1, b1), (w2, b2), (w3, b3) = layers
    C1, C2, C3 = w1.shape[1], w2.shape[1], w3.shape[1]      # all multiples of 128

    TP = _pick_tp(S, NS, B)
    R = TP * NS                                             # rows per grid step

    xf = x.reshape(B, S * NS, Cin)
    w1b = w1.astype(jnp.bfloat16)
    w2b = w2.astype(jnp.bfloat16)
    w3b = w3.astype(jnp.bfloat16)

    def kernel(x_ref, w1_ref, b1_ref, w2_ref, b2_ref, w3_ref, b3_ref, o_ref):
        h = x_ref[...]                                                      # (R, Cin) bf16
        h = jnp.maximum(
            jnp.dot(h, w1_ref[...], preferred_element_type=jnp.float32)
            + b1_ref[...], 0.0)
        h = jnp.maximum(
            jnp.dot(h.astype(jnp.bfloat16), w2_ref[...],
                    preferred_element_type=jnp.float32) + b2_ref[...], 0.0)
        h = jnp.maximum(
            jnp.dot(h.astype(jnp.bfloat16), w3_ref[...],
                    preferred_element_type=jnp.float32) + b3_ref[...], 0.0)
        # max-pool over the neighbor axis (F.max_pool2d kernel [1, nsample])
        o_ref[...] = jnp.max(h.reshape(TP, NS, C3), axis=1).astype(o_ref.dtype)

    out = pl.pallas_call(
        kernel,
        out_shape=jax.ShapeDtypeStruct((B, S, C3), jnp.bfloat16),
        grid=(B, S // TP),
        in_specs=[
            pl.BlockSpec((None, R, Cin), lambda b, p: (b, p, 0)),
            pl.BlockSpec((Cin, C1), lambda b, p: (0, 0)),
            pl.BlockSpec((1, C1), lambda b, p: (0, 0)),
            pl.BlockSpec((C1, C2), lambda b, p: (0, 0)),
            pl.BlockSpec((1, C2), lambda b, p: (0, 0)),
            pl.BlockSpec((C2, C3), lambda b, p: (0, 0)),
            pl.BlockSpec((1, C3), lambda b, p: (0, 0)),
        ],
        out_specs=pl.BlockSpec((None, TP, C3), lambda b, p: (b, p, 0)),
        compiler_params=pltpu.CompilerParams(
            dimension_semantics=("parallel", "parallel"),
            vmem_limit_bytes=VMEM_LIMIT_BYTES,
        ),
    )(xf, w1b, b1, w2b, b2, w3b, b3)
    return out


def ref_branch_mlp_maxpool(x, branches):
    """Pure-JAX f32 reference: per-branch MLP + max-pool, concat over branches.
    x channels are the concat of the branch inputs (same layout the fused
    kernel consumes)."""
    B, S, NS, _ = x.shape
    outs, off = [], 0
    for layers in branches:
        cin = layers[0][0].shape[0]
        h = x[..., off:off + cin].astype(jnp.float32).reshape(B, S * NS, cin)
        off += cin
        for (w, b) in layers:
            h = jnp.maximum(h @ w + b, 0.0)
        outs.append(jnp.max(h.reshape(B, S, NS, -1), axis=2))
    return jnp.concatenate(outs, axis=-1)


# ----------------------------- branch fusion (block-diagonal weights) --------
def fuse_branch_params(branches):
    """branches: list (per radius branch) of 3 (w (Cin,Cout), b (1,Cout)).
    Returns 3 fused (W, b) layers with block-diagonal weights; every layer's
    output channels are zero-padded to a multiple of 128 (padded columns
    compute relu(0)=0, contribute nothing through the zero rows of the next
    layer, and max-pool to 0).  Also returns the true (unpadded) fused output
    width of the last layer."""
    n_layers = len(branches[0])
    k_pad = sum(br[0][0].shape[0] for br in branches)   # fused input channels
    fused = []
    n_true = 0
    for l in range(n_layers):
        n_true = sum(br[l][0].shape[1] for br in branches)
        n_pad = _round_up(n_true, 128)
        W = jnp.zeros((k_pad, n_pad), jnp.float32)
        bvec = jnp.zeros((1, n_pad), jnp.float32)
        ko = no = 0
        for br in branches:
            w_i, b_i = br[l]
            W = W.at[ko:ko + w_i.shape[0], no:no + w_i.shape[1]].set(w_i)
            bvec = bvec.at[:, no:no + w_i.shape[1]].set(b_i)
            ko += w_i.shape[0]
            no += w_i.shape[1]
        fused.append((W, bvec))
        k_pad = n_pad
    return fused, n_true


# ----------------------------- plain-JAX glue: FPS / ball query / grouping ---
def farthest_point_sample(xyz, npoint):
    """xyz: (B, N, 3) -> idx (B, npoint) int32.  Matches CUDA FPS (start at 0)."""
    B, N, _ = xyz.shape
    barange = jnp.arange(B)

    def body(i, state):
        idxs, dists, farthest = state
        idxs = idxs.at[:, i].set(farthest)
        centroid = xyz[barange, farthest, :]                     # (B, 3)
        d = jnp.sum((xyz - centroid[:, None, :]) ** 2, axis=-1)  # (B, N)
        dists = jnp.minimum(dists, d)
        farthest = jnp.argmax(dists, axis=-1).astype(jnp.int32)
        return idxs, dists, farthest

    idxs0 = jnp.zeros((B, npoint), dtype=jnp.int32)
    dists0 = jnp.full((B, N), 1e10, dtype=xyz.dtype)
    far0 = jnp.zeros((B,), dtype=jnp.int32)
    idxs, _, _ = jax.lax.fori_loop(0, npoint, body, (idxs0, dists0, far0))
    return idxs


def ball_query(radius, nsample, xyz, new_xyz):
    """xyz (B,N,3), new_xyz (B,S,3) -> idx (B,S,nsample) int32.
    Smallest in-ball indices (index order == 'first found' CUDA semantics);
    empty balls / short lists are padded with the first found index."""
    N = xyz.shape[1]
    d2 = jnp.sum((new_xyz[:, :, None, :] - xyz[:, None, :, :]) ** 2, axis=-1)
    within = d2 < (radius ** 2)
    cand = jnp.where(within, jnp.arange(N, dtype=jnp.int32)[None, None, :],
                     jnp.int32(N))
    neg_top, _ = jax.lax.top_k(-cand, nsample)
    cand = -neg_top                                      # ascending, N = "missing"
    first = cand[..., :1]
    first = jnp.where(first == N, 0, first)
    idx = jnp.where(cand == N, first, cand)
    return idx


def group_points(points, idx):
    """points (B,N,C), idx (B,S,ns) -> (B,S,ns,C)."""
    B = points.shape[0]
    return points[jnp.arange(B)[:, None, None], idx, :]


def sa_module_msg(xyz, features, npoint, radii, nsamples, fused_layers, c_out,
                  use_xyz=True):
    """PointnetSAModuleMSG forward with both radius branches fused into one
    Pallas call (channels-last)."""
    fps_idx = farthest_point_sample(xyz, npoint)
    new_xyz = xyz[jnp.arange(xyz.shape[0])[:, None], fps_idx, :]   # (B, npoint, 3)

    ns_max = max(nsamples)
    branch_inputs = []
    for radius, nsample in zip(radii, nsamples):
        idx = ball_query(radius, nsample, xyz, new_xyz)
        if nsample < ns_max:
            # duplicate indices up to the fused neighbor count; exact, because
            # the max-pool is duplicate-invariant.
            reps = -(-ns_max // nsample)
            idx = jnp.tile(idx, (1, 1, reps))[..., :ns_max]
        grouped_xyz = group_points(xyz, idx) - new_xyz[:, :, None, :]
        parts = []
        if use_xyz:
            parts.append(grouped_xyz.astype(jnp.bfloat16))
        if features is not None:
            parts.append(group_points(features, idx).astype(jnp.bfloat16))
        branch_inputs.append(parts[0] if len(parts) == 1
                             else jnp.concatenate(parts, axis=-1))
    x_fused = jnp.concatenate(branch_inputs, axis=-1)              # (B,S,ns_max,ΣCin)

    out = fused_mlp_maxpool(x_fused, fused_layers)                 # (B, npoint, C3p) bf16
    if out.shape[-1] != c_out:
        out = out[..., :c_out]
    return new_xyz, out


# ----------------------------- parameters (deterministic, BN folded) ---------
def build_params(key, input_channels=3, use_xyz=True):
    """Per-stage, per-branch conv weights with BatchNorm2d (eval mode, default
    running stats: gamma=1, beta=0, mean=0, var=1) folded in."""
    params = []
    channel_in = input_channels
    for k in range(len(NPOINTS)):
        branches = []
        channel_out = 0
        for mlp in MLPS[k]:
            spec = [channel_in] + list(mlp)
            if use_xyz:
                spec[0] += 3
            layers = []
            for li in range(len(spec) - 1):
                cin, cout = spec[li], spec[li + 1]
                key, wk = jax.random.split(key)
                w = jax.random.normal(wk, (cin, cout), jnp.float32) / jnp.sqrt(
                    jnp.float32(cin))
                gamma = jnp.ones((cout,), jnp.float32)
                beta = jnp.zeros((cout,), jnp.float32)
                rmean = jnp.zeros((cout,), jnp.float32)
                rvar = jnp.ones((cout,), jnp.float32)
                scale = gamma / jnp.sqrt(rvar + BN_EPS)
                w = w * scale[None, :]
                b = (beta - rmean * scale).reshape(1, cout)
                layers.append((w, b))
            branches.append(layers)
            channel_out += spec[-1]
        params.append(branches)
        channel_in = channel_out
    return params


def prepare_fused_params(params):
    """Fuse every stage's radius branches into block-diagonal, 128-padded
    weight triples (done once, outside jit)."""
    return [fuse_branch_params(branches)[0] for branches in params]


# ----------------------------- full forward ----------------------------------
def pointnet2_msg_feature_forward(pc, fused_params):
    """pc: (B, N, 3 + input_channels) f32.  Returns (l_xyz, l_features).
    l_features[k>=1] are bf16 (intentional: the MXU consumes bf16 anyway)."""
    xyz = pc[..., 0:3]
    features = pc[..., 3:] if pc.shape[-1] > 3 else None
    l_xyz, l_features = [xyz], [features]
    for k in range(len(NPOINTS)):
        c_out = sum(m[-1] for m in MLPS[k])        # static: 96, 256, 512, 1024
        new_xyz, new_feat = sa_module_msg(
            l_xyz[k], l_features[k], NPOINTS[k], RADIUS[k], NSAMPLE[k],
            fused_params[k], c_out)
        l_xyz.append(new_xyz)
        l_features.append(new_feat)
    return l_xyz, l_features


# ----------------------------- main -------------------------------------------
if __name__ == "__main__":
    key = jax.random.PRNGKey(0)
    kp, kx, kf, kc = jax.random.split(key, 4)

    B, N, IN_CH = 2, 2048, 3
    params = build_params(kp, input_channels=IN_CH, use_xyz=True)
    fused_params = prepare_fused_params(params)

    xyz_in = jax.random.uniform(kx, (B, N, 3), jnp.float32)            # coords in [0,1)
    feat_in = 0.1 * jax.random.normal(kf, (B, N, IN_CH), jnp.float32)
    pointcloud = jnp.concatenate([xyz_in, feat_in], axis=-1)           # (B, N, 6)

    # Sanity-check the fused Pallas kernel against a per-branch pure-JAX f32
    # reference at a small shape (bf16 MXU path -> loosened tolerance).
    xs = 0.2 * jax.random.normal(kc, (2, 64, 32, 12), jnp.float32)
    xs_bf = xs.astype(jnp.bfloat16)
    fused0, c_out0 = fuse_branch_params(params[0])
    out_k = jax.block_until_ready(
        fused_mlp_maxpool(xs_bf, fused0))[..., :c_out0].astype(jnp.float32)
    out_r = ref_branch_mlp_maxpool(xs_bf.astype(jnp.float32), params[0])
    if not jnp.allclose(out_k, out_r, rtol=2e-2, atol=2e-2):
        raise AssertionError("Pallas fused shared-MLP kernel mismatch vs reference")

    forward = jax.jit(pointnet2_msg_feature_forward)
    l_xyz, l_features = forward(pointcloud, fused_params)
    jax.block_until_ready((l_xyz, l_features))

    # expected shapes (channels-last):
    #   l_xyz:      (2,2048,3) (2,1024,3) (2,256,3) (2,64,3) (2,16,3)
    #   l_features: (2,2048,3) (2,1024,96) (2,256,256) (2,64,512) (2,16,1024)
    assert l_xyz[4].shape == (B, 16, 3)
    assert l_features[1].shape == (B, 1024, 96)
    assert l_features[2].shape == (B, 256, 256)
    assert l_features[3].shape == (B, 64, 512)
    assert l_features[4].shape == (B, 16, 1024)

    print("KERNEL_OK")
</pallas_src>

<mosaic_0001>
module attributes {stable_mosaic.version = 11 : i64} {
  func.func @kernel(%arg0: i32, %arg1: i32, %arg2: memref<1x2048x12xbf16, #tpu.memory_space<vmem>>, %arg3: memref<12x128xbf16, #tpu.memory_space<vmem>>, %arg4: memref<1x128xf32, #tpu.memory_space<vmem>>, %arg5: memref<128x128xbf16, #tpu.memory_space<vmem>>, %arg6: memref<1x128xf32, #tpu.memory_space<vmem>>, %arg7: memref<128x128xbf16, #tpu.memory_space<vmem>>, %arg8: memref<1x128xf32, #tpu.memory_space<vmem>>, %arg9: memref<1x64x128xbf16, #tpu.memory_space<vmem>>) attributes {dimension_semantics = [#tpu.dimension_semantics<parallel>, #tpu.dimension_semantics<parallel>], iteration_bounds = array<i64: 2, 1>, scalar_prefetch = 0 : i64, scratch_operands = 0 : i64, tpu.core_type = #tpu.core_type<tc>, window_params = [{transform_indices = @transform_0, window_bounds = array<i64: 1, 2048, 12>}, {pipeline_mode = #tpu.pipeline_mode<synchronous>, transform_indices = @transform_1, window_bounds = array<i64: 12, 128>}, {pipeline_mode = #tpu.pipeline_mode<synchronous>, transform_indices = @transform_2, window_bounds = array<i64: 1, 128>}, {pipeline_mode = #tpu.pipeline_mode<synchronous>, transform_indices = @transform_3, window_bounds = array<i64: 128, 128>}, {pipeline_mode = #tpu.pipeline_mode<synchronous>, transform_indices = @transform_4, window_bounds = array<i64: 1, 128>}, {pipeline_mode = #tpu.pipeline_mode<synchronous>, transform_indices = @transform_5, window_bounds = array<i64: 128, 128>}, {pipeline_mode = #tpu.pipeline_mode<synchronous>, transform_indices = @transform_6, window_bounds = array<i64: 1, 128>}, {transform_indices = @transform_7, window_bounds = array<i64: 1, 64, 128>}]} {
    %c0 = arith.constant 0 : index
    %c0_0 = arith.constant 0 : index
    %c0_1 = arith.constant 0 : index
    %0 = vector.load %arg2[%c0, %c0_0, %c0_1] : memref<1x2048x12xbf16, #tpu.memory_space<vmem>>, vector<1x2048x12xbf16>
    %1 = vector.shape_cast %0 : vector<1x2048x12xbf16> to vector<2048x12xbf16>
    %c0_2 = arith.constant 0 : index
    %c0_3 = arith.constant 0 : index
    %2 = vector.load %arg3[%c0_2, %c0_3] : memref<12x128xbf16, #tpu.memory_space<vmem>>, vector<12x128xbf16>
    %cst = arith.constant dense<0.000000e+00> : vector<2048x128xf32>
    %3 = tpu.matmul %1, %2, %cst {dimension_numbers = #tpu.dot_dimension_numbers<[1], [0], [0], [1], [0, 0, 1, 1], [], []>} : vector<2048x12xbf16>, vector<12x128xbf16>, vector<2048x128xf32> -> vector<2048x128xf32>
    %c0_4 = arith.constant 0 : index
    %c0_5 = arith.constant 0 : index
    %4 = vector.load %arg4[%c0_4, %c0_5] : memref<1x128xf32, #tpu.memory_space<vmem>>, vector<1x128xf32>
    %5 = vector.broadcast %4 : vector<1x128xf32> to vector<2048x128xf32>
    %6 = arith.addf %3, %5 : vector<2048x128xf32>
    %cst_6 = arith.constant 0.000000e+00 : f32
    %7 = vector.broadcast %cst_6 : f32 to vector<2048x128xf32>
    %8 = arith.maximumf %6, %7 : vector<2048x128xf32>
    %9 = arith.truncf %8 : vector<2048x128xf32> to vector<2048x128xbf16>
    %c0_7 = arith.constant 0 : index
    %c0_8 = arith.constant 0 : index
    %10 = vector.load %arg5[%c0_7, %c0_8] : memref<128x128xbf16, #tpu.memory_space<vmem>>, vector<128x128xbf16>
    %cst_9 = arith.constant dense<0.000000e+00> : vector<2048x128xf32>
    %11 = tpu.matmul %9, %10, %cst_9 {dimension_numbers = #tpu.dot_dimension_numbers<[1], [0], [0], [1], [0, 0, 1, 1], [], []>} : vector<2048x128xbf16>, vector<128x128xbf16>, vector<2048x128xf32> -> vector<2048x128xf32>
    %c0_10 = arith.constant 0 : index
    %c0_11 = arith.constant 0 : index
    %12 = vector.load %arg6[%c0_10, %c0_11] : memref<1x128xf32, #tpu.memory_space<vmem>>, vector<1x128xf32>
    %13 = vector.broadcast %12 : vector<1x128xf32> to vector<2048x128xf32>
    %14 = arith.addf %11, %13 : vector<2048x128xf32>
    %cst_12 = arith.constant 0.000000e+00 : f32
    %15 = vector.broadcast %cst_12 : f32 to vector<2048x128xf32>
    %16 = arith.maximumf %14, %15 : vector<2048x128xf32>
    %17 = arith.truncf %16 : vector<2048x128xf32> to vector<2048x128xbf16>
    %c0_13 = arith.constant 0 : index
    %c0_14 = arith.constant 0 : index
    %18 = vector.load %arg7[%c0_13, %c0_14] : memref<128x128xbf16, #tpu.memory_space<vmem>>, vector<128x128xbf16>
    %cst_15 = arith.constant dense<0.000000e+00> : vector<2048x128xf32>
    %19 = tpu.matmul %17, %18, %cst_15 {dimension_numbers = #tpu.dot_dimension_numbers<[1], [0], [0], [1], [0, 0, 1, 1], [], []>} : vector<2048x128xbf16>, vector<128x128xbf16>, vector<2048x128xf32> -> vector<2048x128xf32>
    %c0_16 = arith.constant 0 : index
    %c0_17 = arith.constant 0 : index
    %20 = vector.load %arg8[%c0_16, %c0_17] : memref<1x128xf32, #tpu.memory_space<vmem>>, vector<1x128xf32>
    %21 = vector.broadcast %20 : vector<1x128xf32> to vector<2048x128xf32>
    %22 = arith.addf %19, %21 : vector<2048x128xf32>
    %cst_18 = arith.constant 0.000000e+00 : f32
    %23 = vector.broadcast %cst_18 : f32 to vector<2048x128xf32>
    %24 = arith.maximumf %22, %23 : vector<2048x128xf32>
    %25 = vector.shape_cast %24 : vector<2048x128xf32> to vector<64x32x128xf32>
    %cst_19 = arith.constant dense<0xFF800000> : vector<64x128xf32>
    %26 = vector.multi_reduction <maximumf>, %25, %cst_19 [1] : vector<64x32x128xf32> to vector<64x128xf32>
    %27 = arith.truncf %26 : vector<64x128xf32> to vector<64x128xbf16>
    %c0_20 = arith.constant 0 : index
    %c0_21 = arith.constant 0 : index
    %c0_22 = arith.constant 0 : index
    %28 = vector.load %arg9[%c0_20, %c0_21, %c0_22] : memref<1x64x128xbf16, #tpu.memory_space<vmem>>, vector<1x64x128xbf16>
    %29 = vector.shape_cast %28 : vector<1x64x128xbf16> to vector<64x128xbf16>
    %30 = vector.shape_cast %27 : vector<64x128xbf16> to vector<1x64x128xbf16>
    tpu.vector_store %arg9[%c0_20, %c0_21, %c0_22], %30 {strides = array<i32>} : memref<1x64x128xbf16, #tpu.memory_space<vmem>>, vector<1x64x128xbf16>,
    return
  }
  func.func @transform_0(%arg0: i32, %arg1: i32) -> (i32, i32, i32) {
    %c0_i32 = arith.constant 0 : i32
    %c0_i32_0 = arith.constant 0 : i32
    return %arg0, %arg1, %c0_i32 : i32, i32, i32
  }
  func.func @transform_1(%arg0: i32, %arg1: i32) -> (i32, i32) {
    %c0_i32 = arith.constant 0 : i32
    %c0_i32_0 = arith.constant 0 : i32
    %c0_i32_1 = arith.constant 0 : i32
    return %c0_i32, %c0_i32_0 : i32, i32
  }
  func.func @transform_2(%arg0: i32, %arg1: i32) -> (i32, i32) {
    %c0_i32 = arith.constant 0 : i32
    %c0_i32_0 = arith.constant 0 : i32
    %c0_i32_1 = arith.constant 0 : i32
    return %c0_i32, %c0_i32_0 : i32, i32
  }
  func.func @transform_3(%arg0: i32, %arg1: i32) -> (i32, i32) {
    %c0_i32 = arith.constant 0 : i32
    %c0_i32_0 = arith.constant 0 : i32
    %c0_i32_1 = arith.constant 0 : i32
    return %c0_i32, %c0_i32_0 : i32, i32
  }
  func.func @transform_4(%arg0: i32, %arg1: i32) -> (i32, i32) {
    %c0_i32 = arith.constant 0 : i32
    %c0_i32_0 = arith.constant 0 : i32
    %c0_i32_1 = arith.constant 0 : i32
    return %c0_i32, %c0_i32_0 : i32, i32
  }
  func.func @transform_5(%arg0: i32, %arg1: i32) -> (i32, i32) {
    %c0_i32 = arith.constant 0 : i32
    %c0_i32_0 = arith.constant 0 : i32
    %c0_i32_1 = arith.constant 0 : i32
    return %c0_i32, %c0_i32_0 : i32, i32
  }
  func.func @transform_6(%arg0: i32, %arg1: i32) -> (i32, i32) {
    %c0_i32 = arith.constant 0 : i32
    %c0_i32_0 = arith.constant 0 : i32
    %c0_i32_1 = arith.constant 0 : i32
    return %c0_i32, %c0_i32_0 : i32, i32
  }
  func.func @transform_7(%arg0: i32, %arg1: i32) -> (i32, i32, i32) {
    %c0_i32 = arith.constant 0 : i32
    %c0_i32_0 = arith.constant 0 : i32
    return %arg0, %arg1, %c0_i32 : i32, i32, i32
  }
}

</mosaic_0001>

<llo_original>
// kernel: tpu_custom_call.1
$region0: #{tpu_custom_call.1}
  #allocation0 [shape = 'u32[]', space=smem, size = 0x4, offset = 0x4, fixed_abs, tag = 'smem constant byte address 0x4 - core index']
  #allocation1 [shape = 'u32[144,128]{1,0:T(1,128)}', space=vmem, size = 0x12000, scoped, tag = 'internal scratch']
  %s0 = inlined_call_operand.vmem [shape: bf16[2,2048,12], index: 0, kind: input, shape index: {}]
  %s1 = inlined_call_operand.vmem [shape: bf16[12,128], index: 1, kind: input, shape index: {}]
  %s2 = inlined_call_operand.vmem [shape: f32[1,128], index: 2, kind: input, shape index: {}]
  %s3 = inlined_call_operand.vmem [shape: bf16[128,128], index: 3, kind: input, shape index: {}]
  %s4 = inlined_call_operand.vmem [shape: f32[1,128], index: 4, kind: input, shape index: {}]
  %s5 = inlined_call_operand.vmem [shape: bf16[128,128], index: 5, kind: input, shape index: {}]
  %s6 = inlined_call_operand.vmem [shape: f32[1,128], index: 6, kind: input, shape index: {}]
  %s7 = inlined_call_operand.hbm [shape: bf16[2,64,128], index: 7, kind: output, shape index: {}]
  %s8 = sld [smem:[#allocation0]]
  $region61: #{tpu_custom_call.1} parent=0
    _
  %s10 = ssub.s32 1, %s8
  %s11 = scalar_select 0, %s10, %s8
  $region1: #{tpu_custom_call.1} parent=0
    #allocation2 [shape = 'u8[32768]{0}', space=vmem, size = 0x8000, scoped, tag = 'output window, operand 0']
    #allocation3 [shape = 's32[2]{0}', space=sflag, size = 0x8, scoped, tag = 'scoped memory for tpu_custom_call.1']
    %12 = vsyncpa [#allocation3], 0
    %s13 = scalar_lea.sflag [#allocation3], 1
    %14 = vsyncpa %s13, 0
    loop: start=0, step=1, limit=4
    $region2: #{tpu_custom_call.1} parent=1 // loop_pre_header
      _
    $region3: #{tpu_custom_call.1} parent=1 // loop_header
      %s16 = sphi 0, %s20
      %p17 = scmp.ge.s32.totalorder %s16, 4
      %s23 = sphi 0, %s35
      %s24 = sphi 0, %s31
      %s25 = sphi 0, %s23
      %s26 = sphi 0, %s24
      %s27 = sphi 0, %s25
      %s28 = sphi 0, %s26
      %s40 = sphi 0, %s42
      %s43 = sphi 0, %s40
      %s44 = sphi 0, %s43
      %s60 = sphi 0, %s44
      %s64 = sphi 0, %s64
      %s66 = sphi 0, %s64
      %s67 = sphi 0, %s66
      %s81 = sphi 0, %s67
      %s85 = sphi 0, %s85
      %s87 = sphi 0, %s85
      %s88 = sphi 0, %s87
      %s102 = sphi 0, %s88
      %s106 = sphi 0, %s106
      %s108 = sphi 0, %s106
      %s109 = sphi 0, %s108
      %s123 = sphi 0, %s109
      %s127 = sphi 0, %s127
      %s129 = sphi 0, %s127
      %s130 = sphi 0, %s129
      %s144 = sphi 0, %s130
      %s148 = sphi 0, %s148
      %s150 = sphi 0, %s148
      %s151 = sphi 0, %s150
      %s165 = sphi 0, %s151
      %s169 = sphi 0, %s169
      %s171 = sphi 0, %s169
      %s172 = sphi 0, %s171
      %s186 = sphi 0, %s172
      %s194 = sphi 0, %s196
      %s197 = sphi 0, %s194
      %s198 = sphi 0, %s197
      %s214 = sphi 0, %s198
    $region4: #{tpu_custom_call.1} parent=1 // loop_header_branch
      %19 = sbr.rel (%p17) target = $region8
    $region5: #{tpu_custom_call.1} parent=1 // loop_body
      %s21 = ssub.s32 %s16, 1
      %s22 = ssub.s32 %s16, 2
      %s29 = sadd.s32 1, %s24
      %p30 = scmp.ge.s32.totalorder %s29, 1
      %s31 = scalar_select %p30, 0, %s29
      %s32 = sadd.s32 1, %s23
      %s33 = scalar_select %p30, %s32, %s23
      %p34 = scmp.ge.s32.totalorder %s33, 2
      %s35 = scalar_select %p34, 0, %s33
      %s36 = ssub.s32 %s23, %s35
      %s37 = ssub.s32 %s24, %s31
      %s38 = sor.u32 %s36, %s37
      %p39 = scmp.eq.s32.totalorder %s38, 0
      %s41 = sadd.s32 %s40, 1
      %s42 = scalar_select %p39, %s40, %s41
      %p45 = pneg %p39
      %p46 = scmp.eq.s32.totalorder %s16, 1
      %p47 = por %p45, %p46
      %p48 = scmp.ne.s32.totalorder %s40, %s43
      %p49 = scmp.eq.s32.totalorder %s16, 0
      %p50 = por %p48, %p49
      %p51 = scmp.ne.s32.totalorder %s40, %s43
      %p52 = scmp.eq.s32.totalorder %s21, 1
      %p53 = por %p51, %p52
      %p54 = scmp.ne.s32.totalorder %s43, %s44
      %p55 = scmp.eq.s32.totalorder %s21, 0
      %p56 = por %p54, %p55
      %p57 = scmp.ne.s32.totalorder %s43, %s44
      %p58 = scmp.eq.s32.totalorder %s22, 1
      %p59 = por %p57, %p58
      %p61 = scmp.ne.s32.totalorder %s44, %s60
      %p62 = scmp.eq.s32.totalorder %s22, 0
      %p63 = por %p61, %p62
      %s65 = sadd.s32 %s64, 1
      %p68 = scmp.eq.s32.totalorder %s16, 1
      %p69 = scmp.ne.s32.totalorder %s64, %s66
      %p70 = scmp.eq.s32.totalorder %s16, 0
      %p71 = por %p69, %p70
      %p72 = scmp.ne.s32.totalorder %s64, %s66
      %p73 = scmp.eq.s32.totalorder %s21, 1
      %p74 = por %p72, %p73
      %p75 = scmp.ne.s32.totalorder %s66, %s67
      %p76 = scmp.eq.s32.totalorder %s21, 0
      %p77 = por %p75, %p76
      %p78 = scmp.ne.s32.totalorder %s66, %s67
      %p79 = scmp.eq.s32.totalorder %s22, 1
      %p80 = por %p78, %p79
      %p82 = scmp.ne.s32.totalorder %s67, %s81
      %p83 = scmp.eq.s32.totalorder %s22, 0
      %p84 = por %p82, %p83
      %s86 = sadd.s32 %s85, 1
      %p89 = scmp.eq.s32.totalorder %s16, 1
      %p90 = scmp.ne.s32.totalorder %s85, %s87
      %p91 = scmp.eq.s32.totalorder %s16, 0
      %p92 = por %p90, %p91
      %p93 = scmp.ne.s32.totalorder %s85, %s87
      %p94 = scmp.eq.s32.totalorder %s21, 1
      %p95 = por %p93, %p94
      %p96 = scmp.ne.s32.totalorder %s87, %s88
      %p97 = scmp.eq.s32.totalorder %s21, 0
      %p98 = por %p96, %p97
      %p99 = scmp.ne.s32.totalorder %s87, %s88
      %p100 = scmp.eq.s32.totalorder %s22, 1
      %p101 = por %p99, %p100
      %p103 = scmp.ne.s32.totalorder %s88, %s102
      %p104 = scmp.eq.s32.totalorder %s22, 0
      %p105 = por %p103, %p104
      %s107 = sadd.s32 %s106, 1
      %p110 = scmp.eq.s32.totalorder %s16, 1
      %p111 = scmp.ne.s32.totalorder %s106, %s108
      %p112 = scmp.eq.s32.totalorder %s16, 0
      %p113 = por %p111, %p112
      %p114 = scmp.ne.s32.totalorder %s106, %s108
      %p115 = scmp.eq.s32.totalorder %s21, 1
      %p116 = por %p114, %p115
      %p117 = scmp.ne.s32.totalorder %s108, %s109
      %p118 = scmp.eq.s32.totalorder %s21, 0
      %p119 = por %p117, %p118
      %p120 = scmp.ne.s32.totalorder %s108, %s109
      %p121 = scmp.eq.s32.totalorder %s22, 1
      %p122 = por %p120, %p121
      %p124 = scmp.ne.s32.totalorder %s109, %s123
      %p125 = scmp.eq.s32.totalorder %s22, 0
      %p126 = por %p124, %p125
      %s128 = sadd.s32 %s127, 1
      %p131 = scmp.eq.s32.totalorder %s16, 1
      %p132 = scmp.ne.s32.totalorder %s127, %s129
      %p133 = scmp.eq.s32.totalorder %s16, 0
      %p134 = por %p132, %p133
      %p135 = scmp.ne.s32.totalorder %s127, %s129
      %p136 = scmp.eq.s32.totalorder %s21, 1
      %p137 = por %p135, %p136
      %p138 = scmp.ne.s32.totalorder %s129, %s130
      %p139 = scmp.eq.s32.totalorder %s21, 0
      %p140 = por %p138, %p139
      %p141 = scmp.ne.s32.totalorder %s129, %s130
      %p142 = scmp.eq.s32.totalorder %s22, 1
      %p143 = por %p141, %p142
      %p145 = scmp.ne.s32.totalorder %s130, %s144
      %p146 = scmp.eq.s32.totalorder %s22, 0
      %p147 = por %p145, %p146
      %s149 = sadd.s32 %s148, 1
      %p152 = scmp.eq.s32.totalorder %s16, 1
      %p153 = scmp.ne.s32.totalorder %s148, %s150
      %p154 = scmp.eq.s32.totalorder %s16, 0
      %p155 = por %p153, %p154
      %p156 = scmp.ne.s32.totalorder %s148, %s150
      %p157 = scmp.eq.s32.totalorder %s21, 1
      %p158 = por %p156, %p157
      %p159 = scmp.ne.s32.totalorder %s150, %s151
      %p160 = scmp.eq.s32.totalorder %s21, 0
      %p161 = por %p159, %p160
      %p162 = scmp.ne.s32.totalorder %s150, %s151
      %p163 = scmp.eq.s32.totalorder %s22, 1
      %p164 = por %p162, %p163
      %p166 = scmp.ne.s32.totalorder %s151, %s165
      %p167 = scmp.eq.s32.totalorder %s22, 0
      %p168 = por %p166, %p167
      %s170 = sadd.s32 %s169, 1
      %p173 = scmp.eq.s32.totalorder %s16, 1
      %p174 = scmp.ne.s32.totalorder %s169, %s171
      %p175 = scmp.eq.s32.totalorder %s16, 0
      %p176 = por %p174, %p175
      %p177 = scmp.ne.s32.totalorder %s169, %s171
      %p178 = scmp.eq.s32.totalorder %s21, 1
      %p179 = por %p177, %p178
      %p180 = scmp.ne.s32.totalorder %s171, %s172
      %p181 = scmp.eq.s32.totalorder %s21, 0
      %p182 = por %p180, %p181
      %p183 = scmp.ne.s32.totalorder %s171, %s172
      %p184 = scmp.eq.s32.totalorder %s22, 1
      %p185 = por %p183, %p184
      %p187 = scmp.ne.s32.totalorder %s172, %s186
      %p188 = scmp.eq.s32.totalorder %s22, 0
      %p189 = por %p187, %p188
      %s190 = ssub.s32 %s23, %s35
      %s191 = ssub.s32 %s24, %s31
      %s192 = sor.u32 %s190, %s191
      %p193 = scmp.eq.s32.totalorder %s192, 0
      %s195 = sadd.s32 %s194, 1
      %s196 = scalar_select %p193, %s194, %s195
      %p199 = pneg %p193
      %p200 = scmp.eq.s32.totalorder %s16, 1
      %p201 = por %p199, %p200
      %p202 = scmp.ne.s32.totalorder %s194, %s197
      %p203 = scmp.eq.s32.totalorder %s16, 0
      %p204 = por %p202, %p203
      %p205 = scmp.ne.s32.totalorder %s194, %s197
      %p206 = scmp.eq.s32.totalorder %s21, 1
      %p207 = por %p205, %p206
      %p208 = scmp.ne.s32.totalorder %s197, %s198
      %p209 = scmp.eq.s32.totalorder %s21, 0
      %p210 = por %p208, %p209
      %p211 = scmp.ne.s32.totalorder %s197, %s198
      %p212 = scmp.eq.s32.totalorder %s22, 1
      %p213 = por %p211, %p212
      %p215 = scmp.ne.s32.totalorder %s198, %s214
      %p216 = scmp.eq.s32.totalorder %s22, 0
      %p217 = por %p215, %p216
      %p218 = scmp.le.s32.totalorder 1, %s16
      %p219 = scmp.lt.s32.totalorder %s16, 3
      %p220 = pnand %p218, %p219
      %p221 = pneg %p220
      // Predicated region
      $region9: #{tpu_custom_call.1} parent=5 // pred_check
        _
      $region10: #{tpu_custom_call.1} parent=5 // pred_check_branch
        %223 = sbr.rel (%p220) target = $region12
      $region11: #{tpu_custom_call.1} parent=5 // pred_region
        %s224 = ssub.s32 %s16, 1
        // Predicated region
        $region13: #{tpu_custom_call.1} parent=11 // pred_check
          %p225 = pneg %p77
        $region14: #{tpu_custom_call.1} parent=11 // pred_check_branch
          %227 = sbr.rel (%p225) target = $region16
        $region15: #{tpu_custom_call.1} parent=11 // pred_region
          _
        $region16: #{tpu_custom_call.1} parent=11 // pred_fallthru
          _
        // Predicated region
        $region17: #{tpu_custom_call.1} parent=11 // pred_check
          %p228 = pneg %p98
        $region18: #{tpu_custom_call.1} parent=11 // pred_check_branch
          %230 = sbr.rel (%p228) target = $region20
        $region19: #{tpu_custom_call.1} parent=11 // pred_region
          _
        $region20: #{tpu_custom_call.1} parent=11 // pred_fallthru
          _
        // Predicated region
        $region21: #{tpu_custom_call.1} parent=11 // pred_check
          %p231 = pneg %p119
        $region22: #{tpu_custom_call.1} parent=11 // pred_check_branch
          %233 = sbr.rel (%p231) target = $region24
        $region23: #{tpu_custom_call.1} parent=11 // pred_region
          _
        $region24: #{tpu_custom_call.1} parent=11 // pred_fallthru
          _
        // Predicated region
        $region25: #{tpu_custom_call.1} parent=11 // pred_check
          %p234 = pneg %p140
        $region26: #{tpu_custom_call.1} parent=11 // pred_check_branch
          %236 = sbr.rel (%p234) target = $region28
        $region27: #{tpu_custom_call.1} parent=11 // pred_region
          _
        $region28: #{tpu_custom_call.1} parent=11 // pred_fallthru
          _
        // Predicated region
        $region29: #{tpu_custom_call.1} parent=11 // pred_check
          %p237 = pneg %p161
        $region30: #{tpu_custom_call.1} parent=11 // pred_check_branch
          %239 = sbr.rel (%p237) target = $region32
        $region31: #{tpu_custom_call.1} parent=11 // pred_region
          _
        $region32: #{tpu_custom_call.1} parent=11 // pred_fallthru
          _
        // Predicated region
        $region33: #{tpu_custom_call.1} parent=11 // pred_check
          %p240 = pneg %p182
        $region34: #{tpu_custom_call.1} parent=11 // pred_check_branch
          %242 = sbr.rel (%p240) target = $region36
        $region35: #{tpu_custom_call.1} parent=11 // pred_region
          _
        $region36: #{tpu_custom_call.1} parent=11 // pred_fallthru
          _
      $region12: #{tpu_custom_call.1} parent=5 // pred_fallthru
        _
      %p243 = scmp.lt.s32.totalorder %s16, 2
      // Predicated region
      $region37: #{tpu_custom_call.1} parent=5 // pred_check
        %p244 = pneg %p243
      $region38: #{tpu_custom_call.1} parent=5 // pred_check_branch
        %246 = sbr.rel (%p244) target = $region40
      $region39: #{tpu_custom_call.1} parent=5 // pred_region
        // Predicated region
        $region41: #{tpu_custom_call.1} parent=39 // pred_check
          %p247 = pneg %p50
        $region42: #{tpu_custom_call.1} parent=39 // pred_check_branch
          %249 = sbr.rel (%p247) target = $region44
        $region43: #{tpu_custom_call.1} parent=39 // pred_region
          %s250 = smul.u32 256, %s24
          %p251 = scmp.lt.s32.totalorder %s23, 1
          %s252 = scalar_select %p251, %s23, 1
          %p253 = scmp.lt.s32.totalorder %s250, 255
          %s254 = scalar_select %p253, %s250, 255
          %s255 = smul.addr %s252, 256
          %s256 = sadd.s32 %s254, %s255
          %s257 = smul.addr %s256, 4
          %s258 = scalar_lea.vmem %s0, %s257
          %s259 = smul.u32 256, %s24
        $region44: #{tpu_custom_call.1} parent=39 // pred_fallthru
          _
      $region40: #{tpu_custom_call.1} parent=5 // pred_fallthru
        _
      %p260 = scmp.le.s32.totalorder 1, %s16
      %p261 = scmp.lt.s32.totalorder %s16, 3
      %p262 = pnand %p260, %p261
      %p263 = pneg %p262
      // Predicated region
      $region45: #{tpu_custom_call.1} parent=5 // pred_check
        _
      $region46: #{tpu_custom_call.1} parent=5 // pred_check_branch
        %265 = sbr.rel (%p262) target = $region48
      $region47: #{tpu_custom_call.1} parent=5 // pred_region
        %s266 = ssub.s32 %s16, 1
        %s267 = smul.u32 256, %s26
        %p268 = scmp.lt.s32.totalorder %s25, 1
        %s269 = scalar_select %p268, %s25, 1
        %p270 = scmp.lt.s32.totalorder %s267, 255
        %s271 = scalar_select %p270, %s267, 255
        %s272 = smul.addr %s269, 256
        %s273 = sadd.s32 %s271, %s272
        %s274 = smul.addr %s273, 4
        %s275 = scalar_lea.vmem %s0, %s274
        %p276 = pneg %p56
        %p277 = pneg %p53
        %p278 = pneg %p77
        %p279 = pneg %p74
        %p280 = pneg %p98
        %p281 = pneg %p95
        %p282 = pneg %p119
        %p283 = pneg %p116
        %p284 = pneg %p140
        %p285 = pneg %p137
        %p286 = pneg %p161
        %p287 = pneg %p158
        %p288 = pneg %p182
        %p289 = pneg %p179
        %p290 = pneg %p210
        %p291 = pneg %p207
        %s292 = sand.u32 %s197, 1
        %s293 = scalar_lea.sflag [#allocation3], %s292
        %s294 = sand.u32 %s197, 1
        %s295 = smul.addr %s294, 32
        %s296 = scalar_lea.vmem [#allocation2], %s295
        %s297 = smul.u32 256, %s26
        %p298 = scmp.lt.s32.totalorder %s25, 1
        %s299 = scalar_select %p298, %s25, 1
        %p300 = scmp.lt.s32.totalorder %s297, 255
        %s301 = scalar_select %p300, %s297, 255
        %s302 = smul.addr %s299, 256
        %s303 = sadd.s32 %s301, %s302
        %s304 = smul.addr %s303, 4
        %s305 = scalar_lea.vmem %s0, %s304
        %s306 = smul.u32 256, %s26
        %s307 = smul.u32 8, %s26
        %v309 = vld [vmem:[%s305] sm:$0xf]
        %v310 = vld [vmem:[%s305 + $0x4] sm:$0xf]
        %v311 = vld [vmem:[%s305 + $0x8] sm:$0xf]
        %v312 = vld [vmem:[%s305 + $0xc] sm:$0xf]
        %v313 = vld [vmem:[%s305 + $0x10] sm:$0xf]
        %v314 = vld [vmem:[%s305 + $0x14] sm:$0xf]
        %v315 = vld [vmem:[%s305 + $0x18] sm:$0xf]
        %v316 = vld [vmem:[%s305 + $0x1c] sm:$0xf]
        %v317 = vld [vmem:[%s305 + $0x20] sm:$0xf]
        %v318 = vld [vmem:[%s305 + $0x24] sm:$0xf]
        %v319 = vld [vmem:[%s305 + $0x28] sm:$0xf]
        %v320 = vld [vmem:[%s305 + $0x2c] sm:$0xf]
        %v321 = vld [vmem:[%s305 + $0x30] sm:$0xf]
        %v322 = vld [vmem:[%s305 + $0x34] sm:$0xf]
        %v323 = vld [vmem:[%s305 + $0x38] sm:$0xf]
        %v324 = vld [vmem:[%s305 + $0x3c] sm:$0xf]
        %v325 = vld [vmem:[%s305 + $0x40] sm:$0xf]
        %v326 = vld [vmem:[%s305 + $0x44] sm:$0xf]
        %v327 = vld [vmem:[%s305 + $0x48] sm:$0xf]
        %v328 = vld [vmem:[%s305 + $0x4c] sm:$0xf]
        %v329 = vld [vmem:[%s305 + $0x50] sm:$0xf]
        %v330 = vld [vmem:[%s305 + $0x54] sm:$0xf]
        %v331 = vld [vmem:[%s305 + $0x58] sm:$0xf]
        %v332 = vld [vmem:[%s305 + $0x5c] sm:$0xf]
        %v333 = vld [vmem:[%s305 + $0x60] sm:$0xf]
        %v334 = vld [vmem:[%s305 + $0x64] sm:$0xf]
        %v335 = vld [vmem:[%s305 + $0x68] sm:$0xf]
        %v336 = vld [vmem:[%s305 + $0x6c] sm:$0xf]
        %v337 = vld [vmem:[%s305 + $0x70] sm:$0xf]
        %v338 = vld [vmem:[%s305 + $0x74] sm:$0xf]
        %v339 = vld [vmem:[%s305 + $0x78] sm:$0xf]
        %v340 = vld [vmem:[%s305 + $0x7c] sm:$0xf]
        %v341 = vld [vmem:[%s305 + $0x80] sm:$0xf]
        %v342 = vld [vmem:[%s305 + $0x84] sm:$0xf]
        %v343 = vld [vmem:[%s305 + $0x88] sm:$0xf]
        %v344 = vld [vmem:[%s305 + $0x8c] sm:$0xf]
        %v345 = vld [vmem:[%s305 + $0x90] sm:$0xf]
        %v346 = vld [vmem:[%s305 + $0x94] sm:$0xf]
        %v347 = vld [vmem:[%s305 + $0x98] sm:$0xf]
        %v348 = vld [vmem:[%s305 + $0x9c] sm:$0xf]
        %v349 = vld [vmem:[%s305 + $0xa0] sm:$0xf]
        %v350 = vld [vmem:[%s305 + $0xa4] sm:$0xf]
        %v351 = vld [vmem:[%s305 + $0xa8] sm:$0xf]
        %v352 = vld [vmem:[%s305 + $0xac] sm:$0xf]
        %v353 = vld [vmem:[%s305 + $0xb0] sm:$0xf]
        %v354 = vld [vmem:[%s305 + $0xb4] sm:$0xf]
        %v355 = vld [vmem:[%s305 + $0xb8] sm:$0xf]
        %v356 = vld [vmem:[%s305 + $0xbc] sm:$0xf]
        %v357 = vld [vmem:[%s305 + $0xc0] sm:$0xf]
        %v358 = vld [vmem:[%s305 + $0xc4] sm:$0xf]
        %v359 = vld [vmem:[%s305 + $0xc8] sm:$0xf]
        %v360 = vld [vmem:[%s305 + $0xcc] sm:$0xf]
        %v361 = vld [vmem:[%s305 + $0xd0] sm:$0xf]
        %v362 = vld [vmem:[%s305 + $0xd4] sm:$0xf]
        %v363 = vld [vmem:[%s305 + $0xd8] sm:$0xf]
        %v364 = vld [vmem:[%s305 + $0xdc] sm:$0xf]
        %v365 = vld [vmem:[%s305 + $0xe0] sm:$0xf]
        %v366 = vld [vmem:[%s305 + $0xe4] sm:$0xf]
        %v367 = vld [vmem:[%s305 + $0xe8] sm:$0xf]
        %v368 = vld [vmem:[%s305 + $0xec] sm:$0xf]
        %v369 = vld [vmem:[%s305 + $0xf0] sm:$0xf]
        %v370 = vld [vmem:[%s305 + $0xf4] sm:$0xf]
        %v371 = vld [vmem:[%s305 + $0xf8] sm:$0xf]
        %v372 = vld [vmem:[%s305 + $0xfc] sm:$0xf]
        %v373 = vld [vmem:[%s305 + $0x100] sm:$0xf]
        %v374 = vld [vmem:[%s305 + $0x104] sm:$0xf]
        %v375 = vld [vmem:[%s305 + $0x108] sm:$0xf]
        %v376 = vld [vmem:[%s305 + $0x10c] sm:$0xf]
        %v377 = vld [vmem:[%s305 + $0x110] sm:$0xf]
        %v378 = vld [vmem:[%s305 + $0x114] sm:$0xf]
        %v379 = vld [vmem:[%s305 + $0x118] sm:$0xf]
        %v380 = vld [vmem:[%s305 + $0x11c] sm:$0xf]
        %v381 = vld [vmem:[%s305 + $0x120] sm:$0xf]
        %v382 = vld [vmem:[%s305 + $0x124] sm:$0xf]
        %v383 = vld [vmem:[%s305 + $0x128] sm:$0xf]
        %v384 = vld [vmem:[%s305 + $0x12c] sm:$0xf]
        %v385 = vld [vmem:[%s305 + $0x130] sm:$0xf]
        %v386 = vld [vmem:[%s305 + $0x134] sm:$0xf]
        %v387 = vld [vmem:[%s305 + $0x138] sm:$0xf]
        %v388 = vld [vmem:[%s305 + $0x13c] sm:$0xf]
        %v389 = vld [vmem:[%s305 + $0x140] sm:$0xf]
        %v390 = vld [vmem:[%s305 + $0x144] sm:$0xf]
        %v391 = vld [vmem:[%s305 + $0x148] sm:$0xf]
        %v392 = vld [vmem:[%s305 + $0x14c] sm:$0xf]
        %v393 = vld [vmem:[%s305 + $0x150] sm:$0xf]
        %v394 = vld [vmem:[%s305 + $0x154] sm:$0xf]
        %v395 = vld [vmem:[%s305 + $0x158] sm:$0xf]
        %v396 = vld [vmem:[%s305 + $0x15c] sm:$0xf]
        %v397 = vld [vmem:[%s305 + $0x160] sm:$0xf]
        %v398 = vld [vmem:[%s305 + $0x164] sm:$0xf]
        %v399 = vld [vmem:[%s305 + $0x168] sm:$0xf]
        %v400 = vld [vmem:[%s305 + $0x16c] sm:$0xf]
        %v401 = vld [vmem:[%s305 + $0x170] sm:$0xf]
        %v402 = vld [vmem:[%s305 + $0x174] sm:$0xf]
        %v403 = vld [vmem:[%s305 + $0x178] sm:$0xf]
        %v404 = vld [vmem:[%s305 + $0x17c] sm:$0xf]
        %v405 = vld [vmem:[%s305 + $0x180] sm:$0xf]
        %v406 = vld [vmem:[%s305 + $0x184] sm:$0xf]
        %v407 = vld [vmem:[%s305 + $0x188] sm:$0xf]
        %v408 = vld [vmem:[%s305 + $0x18c] sm:$0xf]
        %v409 = vld [vmem:[%s305 + $0x190] sm:$0xf]
        %v410 = vld [vmem:[%s305 + $0x194] sm:$0xf]
        %v411 = vld [vmem:[%s305 + $0x198] sm:$0xf]
        %v412 = vld [vmem:[%s305 + $0x19c] sm:$0xf]
        %v413 = vld [vmem:[%s305 + $0x1a0] sm:$0xf]
        %v414 = vld [vmem:[%s305 + $0x1a4] sm:$0xf]
        %v415 = vld [vmem:[%s305 + $0x1a8] sm:$0xf]
        %v416 = vld [vmem:[%s305 + $0x1ac] sm:$0xf]
        %v417 = vld [vmem:[%s305 + $0x1b0] sm:$0xf]
        %v418 = vld [vmem:[%s305 + $0x1b4] sm:$0xf]
        %v419 = vld [vmem:[%s305 + $0x1b8] sm:$0xf]
        %v420 = vld [vmem:[%s305 + $0x1bc] sm:$0xf]
        %v421 = vld [vmem:[%s305 + $0x1c0] sm:$0xf]
        %v422 = vld [vmem:[%s305 + $0x1c4] sm:$0xf]
        %v423 = vld [vmem:[%s305 + $0x1c8] sm:$0xf]
        %v424 = vld [vmem:[%s305 + $0x1cc] sm:$0xf]
        %v425 = vld [vmem:[%s305 + $0x1d0] sm:$0xf]
        %v426 = vld [vmem:[%s305 + $0x1d4] sm:$0xf]
        %v427 = vld [vmem:[%s305 + $0x1d8] sm:$0xf]
        %v428 = vld [vmem:[%s305 + $0x1dc] sm:$0xf]
        %v429 = vld [vmem:[%s305 + $0x1e0] sm:$0xf]
        %v430 = vld [vmem:[%s305 + $0x1e4] sm:$0xf]
        %v431 = vld [vmem:[%s305 + $0x1e8] sm:$0xf]
        %v432 = vld [vmem:[%s305 + $0x1ec] sm:$0xf]
        %v433 = vld [vmem:[%s305 + $0x1f0] sm:$0xf]
        %v434 = vld [vmem:[%s305 + $0x1f4] sm:$0xf]
        %v435 = vld [vmem:[%s305 + $0x1f8] sm:$0xf]
        %v436 = vld [vmem:[%s305 + $0x1fc] sm:$0xf]
        %v437 = vld [vmem:[%s305 + $0x200] sm:$0xf]
        %v438 = vld [vmem:[%s305 + $0x204] sm:$0xf]
        %v439 = vld [vmem:[%s305 + $0x208] sm:$0xf]
        %v440 = vld [vmem:[%s305 + $0x20c] sm:$0xf]
        %v441 = vld [vmem:[%s305 + $0x210] sm:$0xf]
        %v442 = vld [vmem:[%s305 + $0x214] sm:$0xf]
        %v443 = vld [vmem:[%s305 + $0x218] sm:$0xf]
        %v444 = vld [vmem:[%s305 + $0x21c] sm:$0xf]
        %v445 = vld [vmem:[%s305 + $0x220] sm:$0xf]
        %v446 = vld [vmem:[%s305 + $0x224] sm:$0xf]
        %v447 = vld [vmem:[%s305 + $0x228] sm:$0xf]
        %v448 = vld [vmem:[%s305 + $0x22c] sm:$0xf]
        %v449 = vld [vmem:[%s305 + $0x230] sm:$0xf]
        %v450 = vld [vmem:[%s305 + $0x234] sm:$0xf]
        %v451 = vld [vmem:[%s305 + $0x238] sm:$0xf]
        %v452 = vld [vmem:[%s305 + $0x23c] sm:$0xf]
        %v453 = vld [vmem:[%s305 + $0x240] sm:$0xf]
        %v454 = vld [vmem:[%s305 + $0x244] sm:$0xf]
        %v455 = vld [vmem:[%s305 + $0x248] sm:$0xf]
        %v456 = vld [vmem:[%s305 + $0x24c] sm:$0xf]
        %v457 = vld [vmem:[%s305 + $0x250] sm:$0xf]
        %v458 = vld [vmem:[%s305 + $0x254] sm:$0xf]
        %v459 = vld [vmem:[%s305 + $0x258] sm:$0xf]
        %v460 = vld [vmem:[%s305 + $0x25c] sm:$0xf]
        %v461 = vld [vmem:[%s305 + $0x260] sm:$0xf]
        %v462 = vld [vmem:[%s305 + $0x264] sm:$0xf]
        %v463 = vld [vmem:[%s305 + $0x268] sm:$0xf]
        %v464 = vld [vmem:[%s305 + $0x26c] sm:$0xf]
        %v465 = vld [vmem:[%s305 + $0x270] sm:$0xf]
        %v466 = vld [vmem:[%s305 + $0x274] sm:$0xf]
        %v467 = vld [vmem:[%s305 + $0x278] sm:$0xf]
        %v468 = vld [vmem:[%s305 + $0x27c] sm:$0xf]
        %v469 = vld [vmem:[%s305 + $0x280] sm:$0xf]
        %v470 = vld [vmem:[%s305 + $0x284] sm:$0xf]
        %v471 = vld [vmem:[%s305 + $0x288] sm:$0xf]
        %v472 = vld [vmem:[%s305 + $0x28c] sm:$0xf]
        %v473 = vld [vmem:[%s305 + $0x290] sm:$0xf]
        %v474 = vld [vmem:[%s305 + $0x294] sm:$0xf]
        %v475 = vld [vmem:[%s305 + $0x298] sm:$0xf]
        %v476 = vld [vmem:[%s305 + $0x29c] sm:$0xf]
        %v477 = vld [vmem:[%s305 + $0x2a0] sm:$0xf]
        %v478 = vld [vmem:[%s305 + $0x2a4] sm:$0xf]
        %v479 = vld [vmem:[%s305 + $0x2a8] sm:$0xf]
        %v480 = vld [vmem:[%s305 + $0x2ac] sm:$0xf]
        %v481 = vld [vmem:[%s305 + $0x2b0] sm:$0xf]
        %v482 = vld [vmem:[%s305 + $0x2b4] sm:$0xf]
        %v483 = vld [vmem:[%s305 + $0x2b8] sm:$0xf]
        %v484 = vld [vmem:[%s305 + $0x2bc] sm:$0xf]
        %v485 = vld [vmem:[%s305 + $0x2c0] sm:$0xf]
        %v486 = vld [vmem:[%s305 + $0x2c4] sm:$0xf]
        %v487 = vld [vmem:[%s305 + $0x2c8] sm:$0xf]
        %v488 = vld [vmem:[%s305 + $0x2cc] sm:$0xf]
        %v489 = vld [vmem:[%s305 + $0x2d0] sm:$0xf]
        %v490 = vld [vmem:[%s305 + $0x2d4] sm:$0xf]
        %v491 = vld [vmem:[%s305 + $0x2d8] sm:$0xf]
        %v492 = vld [vmem:[%s305 + $0x2dc] sm:$0xf]
        %v493 = vld [vmem:[%s305 + $0x2e0] sm:$0xf]
        %v494 = vld [vmem:[%s305 + $0x2e4] sm:$0xf]
        %v495 = vld [vmem:[%s305 + $0x2e8] sm:$0xf]
        %v496 = vld [vmem:[%s305 + $0x2ec] sm:$0xf]
        %v497 = vld [vmem:[%s305 + $0x2f0] sm:$0xf]
        %v498 = vld [vmem:[%s305 + $0x2f4] sm:$0xf]
        %v499 = vld [vmem:[%s305 + $0x2f8] sm:$0xf]
        %v500 = vld [vmem:[%s305 + $0x2fc] sm:$0xf]
        %v501 = vld [vmem:[%s305 + $0x300] sm:$0xf]
        %v502 = vld [vmem:[%s305 + $0x304] sm:$0xf]
        %v503 = vld [vmem:[%s305 + $0x308] sm:$0xf]
        %v504 = vld [vmem:[%s305 + $0x30c] sm:$0xf]
        %v505 = vld [vmem:[%s305 + $0x310] sm:$0xf]
        %v506 = vld [vmem:[%s305 + $0x314] sm:$0xf]
        %v507 = vld [vmem:[%s305 + $0x318] sm:$0xf]
        %v508 = vld [vmem:[%s305 + $0x31c] sm:$0xf]
        %v509 = vld [vmem:[%s305 + $0x320] sm:$0xf]
        %v510 = vld [vmem:[%s305 + $0x324] sm:$0xf]
        %v511 = vld [vmem:[%s305 + $0x328] sm:$0xf]
        %v512 = vld [vmem:[%s305 + $0x32c] sm:$0xf]
        %v513 = vld [vmem:[%s305 + $0x330] sm:$0xf]
        %v514 = vld [vmem:[%s305 + $0x334] sm:$0xf]
        %v515 = vld [vmem:[%s305 + $0x338] sm:$0xf]
        %v516 = vld [vmem:[%s305 + $0x33c] sm:$0xf]
        %v517 = vld [vmem:[%s305 + $0x340] sm:$0xf]
        %v518 = vld [vmem:[%s305 + $0x344] sm:$0xf]
        %v519 = vld [vmem:[%s305 + $0x348] sm:$0xf]
        %v520 = vld [vmem:[%s305 + $0x34c] sm:$0xf]
        %v521 = vld [vmem:[%s305 + $0x350] sm:$0xf]
        %v522 = vld [vmem:[%s305 + $0x354] sm:$0xf]
        %v523 = vld [vmem:[%s305 + $0x358] sm:$0xf]
        %v524 = vld [vmem:[%s305 + $0x35c] sm:$0xf]
        %v525 = vld [vmem:[%s305 + $0x360] sm:$0xf]
        %v526 = vld [vmem:[%s305 + $0x364] sm:$0xf]
        %v527 = vld [vmem:[%s305 + $0x368] sm:$0xf]
        %v528 = vld [vmem:[%s305 + $0x36c] sm:$0xf]
        %v529 = vld [vmem:[%s305 + $0x370] sm:$0xf]
        %v530 = vld [vmem:[%s305 + $0x374] sm:$0xf]
        %v531 = vld [vmem:[%s305 + $0x378] sm:$0xf]
        %v532 = vld [vmem:[%s305 + $0x37c] sm:$0xf]
        %v533 = vld [vmem:[%s305 + $0x380] sm:$0xf]
        %v534 = vld [vmem:[%s305 + $0x384] sm:$0xf]
        %v535 = vld [vmem:[%s305 + $0x388] sm:$0xf]
        %v536 = vld [vmem:[%s305 + $0x38c] sm:$0xf]
        %v537 = vld [vmem:[%s305 + $0x390] sm:$0xf]
        %v538 = vld [vmem:[%s305 + $0x394] sm:$0xf]
        %v539 = vld [vmem:[%s305 + $0x398] sm:$0xf]
        %v540 = vld [vmem:[%s305 + $0x39c] sm:$0xf]
        %v541 = vld [vmem:[%s305 + $0x3a0] sm:$0xf]
        %v542 = vld [vmem:[%s305 + $0x3a4] sm:$0xf]
        %v543 = vld [vmem:[%s305 + $0x3a8] sm:$0xf]
        %v544 = vld [vmem:[%s305 + $0x3ac] sm:$0xf]
        %v545 = vld [vmem:[%s305 + $0x3b0] sm:$0xf]
        %v546 = vld [vmem:[%s305 + $0x3b4] sm:$0xf]
        %v547 = vld [vmem:[%s305 + $0x3b8] sm:$0xf]
        %v548 = vld [vmem:[%s305 + $0x3bc] sm:$0xf]
        %v549 = vld [vmem:[%s305 + $0x3c0] sm:$0xf]
        %v550 = vld [vmem:[%s305 + $0x3c4] sm:$0xf]
        %v551 = vld [vmem:[%s305 + $0x3c8] sm:$0xf]
        %v552 = vld [vmem:[%s305 + $0x3cc] sm:$0xf]
        %v553 = vld [vmem:[%s305 + $0x3d0] sm:$0xf]
        %v554 = vld [vmem:[%s305 + $0x3d4] sm:$0xf]
        %v555 = vld [vmem:[%s305 + $0x3d8] sm:$0xf]
        %v556 = vld [vmem:[%s305 + $0x3dc] sm:$0xf]
        %v557 = vld [vmem:[%s305 + $0x3e0] sm:$0xf]
        %v558 = vld [vmem:[%s305 + $0x3e4] sm:$0xf]
        %v559 = vld [vmem:[%s305 + $0x3e8] sm:$0xf]
        %v560 = vld [vmem:[%s305 + $0x3ec] sm:$0xf]
        %v561 = vld [vmem:[%s305 + $0x3f0] sm:$0xf]
        %v562 = vld [vmem:[%s305 + $0x3f4] sm:$0xf]
        %v563 = vld [vmem:[%s305 + $0x3f8] sm:$0xf]
        %v564 = vld [vmem:[%s305 + $0x3fc] sm:$0xf]
        %v565 = vld [vmem:[%s1] sm:$0xf]
        %v566 = vld [vmem:[%s1 + $0x4] sm:$0x3]
        %v567 = vld [vmem:[%s2] sm:$0x1]
        %v569 = vlaneseq
        %v570 = vshrl.u32 %v569, 7
        %v571 = vsub.s32 0, %v570
        %v572 = vrot.slane %v567, %v571
        %v830 = vunpack.c.l.b16 %v309
        %v831 = vunpack.c.l.b16 %v310
        %v832 = vunpack.c.l.b16 %v311
        %v833 = vunpack.c.l.b16 %v312
        %v834 = vunpack.c.l.b16 %v313
        %v835 = vunpack.c.l.b16 %v314
        %v836 = vunpack.c.l.b16 %v315
        %v837 = vunpack.c.l.b16 %v316
        %v838 = vunpack.c.l.b16 %v317
        %v839 = vunpack.c.l.b16 %v318
        %v840 = vunpack.c.l.b16 %v319
        %v841 = vunpack.c.l.b16 %v320
        %v842 = vunpack.c.l.b16 %v321
        %v843 = vunpack.c.l.b16 %v322
        %v844 = vunpack.c.l.b16 %v323
        %v845 = vunpack.c.l.b16 %v324
        %v846 = vunpack.c.l.b16 %v325
        %v847 = vunpack.c.l.b16 %v326
        %v848 = vunpack.c.l.b16 %v327
        %v849 = vunpack.c.l.b16 %v328
        %v850 = vunpack.c.l.b16 %v329
        %v851 = vunpack.c.l.b16 %v330
        %v852 = vunpack.c.l.b16 %v331
        %v853 = vunpack.c.l.b16 %v332
        %v854 = vunpack.c.l.b16 %v333
        %v855 = vunpack.c.l.b16 %v334
        %v856 = vunpack.c.l.b16 %v335
        %v857 = vunpack.c.l.b16 %v336
        %v858 = vunpack.c.l.b16 %v337
        %v859 = vunpack.c.l.b16 %v338
        %v860 = vunpack.c.l.b16 %v339
        %v861 = vunpack.c.l.b16 %v340
        %v862 = vunpack.c.l.b16 %v341
        %v863 = vunpack.c.l.b16 %v342
        %v864 = vunpack.c.l.b16 %v343
        %v865 = vunpack.c.l.b16 %v344
        %v866 = vunpack.c.l.b16 %v345
        %v867 = vunpack.c.l.b16 %v346
        %v868 = vunpack.c.l.b16 %v347
        %v869 = vunpack.c.l.b16 %v348
        %v870 = vunpack.c.l.b16 %v349
        %v871 = vunpack.c.l.b16 %v350
        %v872 = vunpack.c.l.b16 %v351
        %v873 = vunpack.c.l.b16 %v352
        %v874 = vunpack.c.l.b16 %v353
        %v875 = vunpack.c.l.b16 %v354
        %v876 = vunpack.c.l.b16 %v355
        %v877 = vunpack.c.l.b16 %v356
        %v878 = vunpack.c.l.b16 %v357
        %v879 = vunpack.c.l.b16 %v358
        %v880 = vunpack.c.l.b16 %v359
        %v881 = vunpack.c.l.b16 %v360
        %v882 = vunpack.c.l.b16 %v361
        %v883 = vunpack.c.l.b16 %v362
        %v884 = vunpack.c.l.b16 %v363
        %v885 = vunpack.c.l.b16 %v364
        %v886 = vunpack.c.l.b16 %v365
        %v887 = vunpack.c.l.b16 %v366
        %v888 = vunpack.c.l.b16 %v367
        %v889 = vunpack.c.l.b16 %v368
        %v890 = vunpack.c.l.b16 %v369
        %v891 = vunpack.c.l.b16 %v370
        %v892 = vunpack.c.l.b16 %v371
        %v893 = vunpack.c.l.b16 %v372
        %v894 = vunpack.c.l.b16 %v373
        %v895 = vunpack.c.l.b16 %v374
        %v896 = vunpack.c.l.b16 %v375
        %v897 = vunpack.c.l.b16 %v376
        %v898 = vunpack.c.l.b16 %v377
        %v899 = vunpack.c.l.b16 %v378
        %v900 = vunpack.c.l.b16 %v379
        %v901 = vunpack.c.l.b16 %v380
        %v902 = vunpack.c.l.b16 %v381
        %v903 = vunpack.c.l.b16 %v382
        %v904 = vunpack.c.l.b16 %v383
        %v905 = vunpack.c.l.b16 %v384
        %v906 = vunpack.c.l.b16 %v385
        %v907 = vunpack.c.l.b16 %v386
        %v908 = vunpack.c.l.b16 %v387
        %v909 = vunpack.c.l.b16 %v388
        %v910 = vunpack.c.l.b16 %v389
        %v911 = vunpack.c.l.b16 %v390
        %v912 = vunpack.c.l.b16 %v391
        %v913 = vunpack.c.l.b16 %v392
        %v914 = vunpack.c.l.b16 %v393
        %v915 = vunpack.c.l.b16 %v394
        %v916 = vunpack.c.l.b16 %v395
        %v917 = vunpack.c.l.b16 %v396
        %v918 = vunpack.c.l.b16 %v397
        %v919 = vunpack.c.l.b16 %v398
        %v920 = vunpack.c.l.b16 %v399
        %v921 = vunpack.c.l.b16 %v400
        %v922 = vunpack.c.l.b16 %v401
        %v923 = vunpack.c.l.b16 %v402
        %v924 = vunpack.c.l.b16 %v403
        %v925 = vunpack.c.l.b16 %v404
        %v926 = vunpack.c.l.b16 %v405
        %v927 = vunpack.c.l.b16 %v406
        %v928 = vunpack.c.l.b16 %v407
        %v929 = vunpack.c.l.b16 %v408
        %v930 = vunpack.c.l.b16 %v409
        %v931 = vunpack.c.l.b16 %v410
        %v932 = vunpack.c.l.b16 %v411
        %v933 = vunpack.c.l.b16 %v412
        %v934 = vunpack.c.l.b16 %v413
        %v935 = vunpack.c.l.b16 %v414
        %v936 = vunpack.c.l.b16 %v415
        %v937 = vunpack.c.l.b16 %v416
        %v938 = vunpack.c.l.b16 %v417
        %v939 = vunpack.c.l.b16 %v418
        %v940 = vunpack.c.l.b16 %v419
        %v941 = vunpack.c.l.b16 %v420
        %v942 = vunpack.c.l.b16 %v421
        %v943 = vunpack.c.l.b16 %v422
        %v944 = vunpack.c.l.b16 %v423
        %v945 = vunpack.c.l.b16 %v424
        %v946 = vunpack.c.l.b16 %v425
        %v947 = vunpack.c.l.b16 %v426
        %v948 = vunpack.c.l.b16 %v427
        %v949 = vunpack.c.l.b16 %v428
        %v950 = vunpack.c.l.b16 %v429
        %v951 = vunpack.c.l.b16 %v430
        %v952 = vunpack.c.l.b16 %v431
        %v953 = vunpack.c.l.b16 %v432
        %v954 = vunpack.c.l.b16 %v433
        %v955 = vunpack.c.l.b16 %v434
        %v956 = vunpack.c.l.b16 %v435
        %v957 = vunpack.c.l.b16 %v436
        %v958 = vunpack.c.l.b16 %v437
        %v959 = vunpack.c.l.b16 %v438
        %v960 = vunpack.c.l.b16 %v439
        %v961 = vunpack.c.l.b16 %v440
        %v962 = vunpack.c.l.b16 %v441
        %v963 = vunpack.c.l.b16 %v442
        %v964 = vunpack.c.l.b16 %v443
        %v965 = vunpack.c.l.b16 %v444
        %v966 = vunpack.c.l.b16 %v445
        %v967 = vunpack.c.l.b16 %v446
        %v968 = vunpack.c.l.b16 %v447
        %v969 = vunpack.c.l.b16 %v448
        %v970 = vunpack.c.l.b16 %v449
        %v971 = vunpack.c.l.b16 %v450
        %v972 = vunpack.c.l.b16 %v451
        %v973 = vunpack.c.l.b16 %v452
        %v974 = vunpack.c.l.b16 %v453
        %v975 = vunpack.c.l.b16 %v454
        %v976 = vunpack.c.l.b16 %v455
        %v977 = vunpack.c.l.b16 %v456
        %v978 = vunpack.c.l.b16 %v457
        %v979 = vunpack.c.l.b16 %v458
        %v980 = vunpack.c.l.b16 %v459
        %v981 = vunpack.c.l.b16 %v460
        %v982 = vunpack.c.l.b16 %v461
        %v983 = vunpack.c.l.b16 %v462
        %v984 = vunpack.c.l.b16 %v463
        %v985 = vunpack.c.l.b16 %v464
        %v986 = vunpack.c.l.b16 %v465
        %v987 = vunpack.c.l.b16 %v466
        %v988 = vunpack.c.l.b16 %v467
        %v989 = vunpack.c.l.b16 %v468
        %v990 = vunpack.c.l.b16 %v469
        %v991 = vunpack.c.l.b16 %v470
        %v992 = vunpack.c.l.b16 %v471
        %v993 = vunpack.c.l.b16 %v472
        %v994 = vunpack.c.l.b16 %v473
        %v995 = vunpack.c.l.b16 %v474
        %v996 = vunpack.c.l.b16 %v475
        %v997 = vunpack.c.l.b16 %v476
        %v998 = vunpack.c.l.b16 %v477
        %v999 = vunpack.c.l.b16 %v478
        %v1000 = vunpack.c.l.b16 %v479
        %v1001 = vunpack.c.l.b16 %v480
        %v1002 = vunpack.c.l.b16 %v481
        %v1003 = vunpack.c.l.b16 %v482
        %v1004 = vunpack.c.l.b16 %v483
        %v1005 = vunpack.c.l.b16 %v484
        %v1006 = vunpack.c.l.b16 %v485
        %v1007 = vunpack.c.l.b16 %v486
        %v1008 = vunpack.c.l.b16 %v487
        %v1009 = vunpack.c.l.b16 %v488
        %v1010 = vunpack.c.l.b16 %v489
        %v1011 = vunpack.c.l.b16 %v490
        %v1012 = vunpack.c.l.b16 %v491
        %v1013 = vunpack.c.l.b16 %v492
        %v1014 = vunpack.c.l.b16 %v493
        %v1015 = vunpack.c.l.b16 %v494
        %v1016 = vunpack.c.l.b16 %v495
        %v1017 = vunpack.c.l.b16 %v496
        %v1018 = vunpack.c.l.b16 %v497
        %v1019 = vunpack.c.l.b16 %v498
        %v1020 = vunpack.c.l.b16 %v499
        %v1021 = vunpack.c.l.b16 %v500
        %v1022 = vunpack.c.l.b16 %v501
        %v1023 = vunpack.c.l.b16 %v502
        %v1024 = vunpack.c.l.b16 %v503
        %v1025 = vunpack.c.l.b16 %v504
        %v1026 = vunpack.c.l.b16 %v505
        %v1027 = vunpack.c.l.b16 %v506
        %v1028 = vunpack.c.l.b16 %v507
        %v1029 = vunpack.c.l.b16 %v508
        %v1030 = vunpack.c.l.b16 %v509
        %v1031 = vunpack.c.l.b16 %v510
        %v1032 = vunpack.c.l.b16 %v511
        %v1033 = vunpack.c.l.b16 %v512
        %v1034 = vunpack.c.l.b16 %v513
        %v1035 = vunpack.c.l.b16 %v514
        %v1036 = vunpack.c.l.b16 %v515
        %v1037 = vunpack.c.l.b16 %v516
        %v1038 = vunpack.c.l.b16 %v517
        %v1039 = vunpack.c.l.b16 %v518
        %v1040 = vunpack.c.l.b16 %v519
        %v1041 = vunpack.c.l.b16 %v520
        %v1042 = vunpack.c.l.b16 %v521
        %v1043 = vunpack.c.l.b16 %v522
        %v1044 = vunpack.c.l.b16 %v523
        %v1045 = vunpack.c.l.b16 %v524
        %v1046 = vunpack.c.l.b16 %v525
        %v1047 = vunpack.c.l.b16 %v526
        %v1048 = vunpack.c.l.b16 %v527
        %v1049 = vunpack.c.l.b16 %v528
        %v1050 = vunpack.c.l.b16 %v529
        %v1051 = vunpack.c.l.b16 %v530
        %v1052 = vunpack.c.l.b16 %v531
        %v1053 = vunpack.c.l.b16 %v532
        %v1054 = vunpack.c.l.b16 %v533
        %v1055 = vunpack.c.l.b16 %v534
        %v1056 = vunpack.c.l.b16 %v535
        %v1057 = vunpack.c.l.b16 %v536
        %v1058 = vunpack.c.l.b16 %v537
        %v1059 = vunpack.c.l.b16 %v538
        %v1060 = vunpack.c.l.b16 %v539
        %v1061 = vunpack.c.l.b16 %v540
        %v1062 = vunpack.c.l.b16 %v541
        %v1063 = vunpack.c.l.b16 %v542
        %v1064 = vunpack.c.l.b16 %v543
        %v1065 = vunpack.c.l.b16 %v544
        %v1066 = vunpack.c.l.b16 %v545
        %v1067 = vunpack.c.l.b16 %v546
        %v1068 = vunpack.c.l.b16 %v547
        %v1069 = vunpack.c.l.b16 %v548
        %v1070 = vunpack.c.l.b16 %v549
        %v1071 = vunpack.c.l.b16 %v550
        %v1072 = vunpack.c.l.b16 %v551
        %v1073 = vunpack.c.l.b16 %v552
        %v1074 = vunpack.c.l.b16 %v553
        %v1075 = vunpack.c.l.b16 %v554
        %v1076 = vunpack.c.l.b16 %v555
        %v1077 = vunpack.c.l.b16 %v556
        %v1078 = vunpack.c.l.b16 %v557
        %v1079 = vunpack.c.l.b16 %v558
        %v1080 = vunpack.c.l.b16 %v559
        %v1081 = vunpack.c.l.b16 %v560
        %v1082 = vunpack.c.l.b16 %v561
        %v1083 = vunpack.c.l.b16 %v562
        %v1084 = vunpack.c.l.b16 %v563
        %v1085 = vunpack.c.l.b16 %v564
        %v1086 = vpack.c.b16 %v831, %v830
        %v1087 = vpack.c.b16 %v833, %v832
        %v1088 = vpack.c.b16 %v835, %v834
        %v1089 = vpack.c.b16 %v837, %v836
        %v1090 = vpack.c.b16 %v839, %v838
        %v1091 = vpack.c.b16 %v841, %v840
        %v1092 = vpack.c.b16 %v843, %v842
        %v1093 = vpack.c.b16 %v845, %v844
        %v1094 = vpack.c.b16 %v847, %v846
        %v1095 = vpack.c.b16 %v849, %v848
        %v1096 = vpack.c.b16 %v851, %v850
        %v1097 = vpack.c.b16 %v853, %v852
        %v1098 = vpack.c.b16 %v855, %v854
        %v1099 = vpack.c.b16 %v857, %v856
        %v1100 = vpack.c.b16 %v859, %v858
        %v1101 = vpack.c.b16 %v861, %v860
        %v1102 = vpack.c.b16 %v863, %v862
        %v1103 = vpack.c.b16 %v865, %v864
        %v1104 = vpack.c.b16 %v867, %v866
        %v1105 = vpack.c.b16 %v869, %v868
        %v1106 = vpack.c.b16 %v871, %v870
        %v1107 = vpack.c.b16 %v873, %v872
        %v1108 = vpack.c.b16 %v875, %v874
        %v1109 = vpack.c.b16 %v877, %v876
        %v1110 = vpack.c.b16 %v879, %v878
        %v1111 = vpack.c.b16 %v881, %v880
        %v1112 = vpack.c.b16 %v883, %v882
        %v1113 = vpack.c.b16 %v885, %v884
        %v1114 = vpack.c.b16 %v887, %v886
        %v1115 = vpack.c.b16 %v889, %v888
        %v1116 = vpack.c.b16 %v891, %v890
        %v1117 = vpack.c.b16 %v893, %v892
        %v1118 = vpack.c.b16 %v895, %v894
        %v1119 = vpack.c.b16 %v897, %v896
        %v1120 = vpack.c.b16 %v899, %v898
        %v1121 = vpack.c.b16 %v901, %v900
        %v1122 = vpack.c.b16 %v903, %v902
        %v1123 = vpack.c.b16 %v905, %v904
        %v1124 = vpack.c.b16 %v907, %v906
        %v1125 = vpack.c.b16 %v909, %v908
        %v1126 = vpack.c.b16 %v911, %v910
        %v1127 = vpack.c.b16 %v913, %v912
        %v1128 = vpack.c.b16 %v915, %v914
        %v1129 = vpack.c.b16 %v917, %v916
        %v1130 = vpack.c.b16 %v919, %v918
        %v1131 = vpack.c.b16 %v921, %v920
        %v1132 = vpack.c.b16 %v923, %v922
        %v1133 = vpack.c.b16 %v925, %v924
        %v1134 = vpack.c.b16 %v927, %v926
        %v1135 = vpack.c.b16 %v929, %v928
        %v1136 = vpack.c.b16 %v931, %v930
        %v1137 = vpack.c.b16 %v933, %v932
        %v1138 = vpack.c.b16 %v935, %v934
        %v1139 = vpack.c.b16 %v937, %v936
        %v1140 = vpack.c.b16 %v939, %v938
        %v1141 = vpack.c.b16 %v941, %v940
        %v1142 = vpack.c.b16 %v943, %v942
        %v1143 = vpack.c.b16 %v945, %v944
        %v1144 = vpack.c.b16 %v947, %v946
        %v1145 = vpack.c.b16 %v949, %v948
        %v1146 = vpack.c.b16 %v951, %v950
        %v1147 = vpack.c.b16 %v953, %v952
        %v1148 = vpack.c.b16 %v955, %v954
        %v1149 = vpack.c.b16 %v957, %v956
        %v1150 = vpack.c.b16 %v959, %v958
        %v1151 = vpack.c.b16 %v961, %v960
        %v1152 = vpack.c.b16 %v963, %v962
        %v1153 = vpack.c.b16 %v965, %v964
        %v1154 = vpack.c.b16 %v967, %v966
        %v1155 = vpack.c.b16 %v969, %v968
        %v1156 = vpack.c.b16 %v971, %v970
        %v1157 = vpack.c.b16 %v973, %v972
        %v1158 = vpack.c.b16 %v975, %v974
        %v1159 = vpack.c.b16 %v977, %v976
        %v1160 = vpack.c.b16 %v979, %v978
        %v1161 = vpack.c.b16 %v981, %v980
        %v1162 = vpack.c.b16 %v983, %v982
        %v1163 = vpack.c.b16 %v985, %v984
        %v1164 = vpack.c.b16 %v987, %v986
        %v1165 = vpack.c.b16 %v989, %v988
        %v1166 = vpack.c.b16 %v991, %v990
        %v1167 = vpack.c.b16 %v993, %v992
        %v1168 = vpack.c.b16 %v995, %v994
        %v1169 = vpack.c.b16 %v997, %v996
        %v1170 = vpack.c.b16 %v999, %v998
        %v1171 = vpack.c.b16 %v1001, %v1000
        %v1172 = vpack.c.b16 %v1003, %v1002
        %v1173 = vpack.c.b16 %v1005, %v1004
        %v1174 = vpack.c.b16 %v1007, %v1006
        %v1175 = vpack.c.b16 %v1009, %v1008
        %v1176 = vpack.c.b16 %v1011, %v1010
        %v1177 = vpack.c.b16 %v1013, %v1012
        %v1178 = vpack.c.b16 %v1015, %v1014
        %v1179 = vpack.c.b16 %v1017, %v1016
        %v1180 = vpack.c.b16 %v1019, %v1018
        %v1181 = vpack.c.b16 %v1021, %v1020
        %v1182 = vpack.c.b16 %v1023, %v1022
        %v1183 = vpack.c.b16 %v1025, %v1024
        %v1184 = vpack.c.b16 %v1027, %v1026
        %v1185 = vpack.c.b16 %v1029, %v1028
        %v1186 = vpack.c.b16 %v1031, %v1030
        %v1187 = vpack.c.b16 %v1033, %v1032
        %v1188 = vpack.c.b16 %v1035, %v1034
        %v1189 = vpack.c.b16 %v1037, %v1036
        %v1190 = vpack.c.b16 %v1039, %v1038
        %v1191 = vpack.c.b16 %v1041, %v1040
        %v1192 = vpack.c.b16 %v1043, %v1042
        %v1193 = vpack.c.b16 %v1045, %v1044
        %v1194 = vpack.c.b16 %v1047, %v1046
        %v1195 = vpack.c.b16 %v1049, %v1048
        %v1196 = vpack.c.b16 %v1051, %v1050
        %v1197 = vpack.c.b16 %v1053, %v1052
        %v1198 = vpack.c.b16 %v1055, %v1054
        %v1199 = vpack.c.b16 %v1057, %v1056
        %v1200 = vpack.c.b16 %v1059, %v1058
        %v1201 = vpack.c.b16 %v1061, %v1060
        %v1202 = vpack.c.b16 %v1063, %v1062
        %v1203 = vpack.c.b16 %v1065, %v1064
        %v1204 = vpack.c.b16 %v1067, %v1066
        %v1205 = vpack.c.b16 %v1069, %v1068
        %v1206 = vpack.c.b16 %v1071, %v1070
        %v1207 = vpack.c.b16 %v1073, %v1072
        %v1208 = vpack.c.b16 %v1075, %v1074
        %v1209 = vpack.c.b16 %v1077, %v1076
        %v1210 = vpack.c.b16 %v1079, %v1078
        %v1211 = vpack.c.b16 %v1081, %v1080
        %v1212 = vpack.c.b16 %v1083, %v1082
        %v1213 = vpack.c.b16 %v1085, %v1084
        %v1216 = vunpack.c.l.b16 %v565
        %v1217 = vunpack.c.l.b16 %v566
        %v1218 = vpack.c.b16 %v1217, %v1216
        %vm1219 = vcmask 97280
        %v1221 = vsel %vm1219, %v1086, 0
        %v1224 = vsel %vm1219, %v1087, 0
        %v1227 = vsel %vm1219, %v1088, 0
        %v1230 = vsel %vm1219, %v1089, 0
        %v1233 = vsel %vm1219, %v1090, 0
        %v1236 = vsel %vm1219, %v1091, 0
        %v1239 = vsel %vm1219, %v1092, 0
        %v1242 = vsel %vm1219, %v1093, 0
        %v1245 = vsel %vm1219, %v1094, 0
        %v1248 = vsel %vm1219, %v1095, 0
        %v1251 = vsel %vm1219, %v1096, 0
        %v1254 = vsel %vm1219, %v1097, 0
        %v1257 = vsel %vm1219, %v1098, 0
        %v1260 = vsel %vm1219, %v1099, 0
        %v1263 = vsel %vm1219, %v1100, 0
        %v1266 = vsel %vm1219, %v1101, 0
        %v1269 = vsel %vm1219, %v1102, 0
        %v1272 = vsel %vm1219, %v1103, 0
        %v1275 = vsel %vm1219, %v1104, 0
        %v1278 = vsel %vm1219, %v1105, 0
        %v1281 = vsel %vm1219, %v1106, 0
        %v1284 = vsel %vm1219, %v1107, 0
        %v1287 = vsel %vm1219, %v1108, 0
        %v1290 = vsel %vm1219, %v1109, 0
        %v1293 = vsel %vm1219, %v1110, 0
        %v1296 = vsel %vm1219, %v1111, 0
        %v1299 = vsel %vm1219, %v1112, 0
        %v1302 = vsel %vm1219, %v1113, 0
        %v1305 = vsel %vm1219, %v1114, 0
        %v1308 = vsel %vm1219, %v1115, 0
        %v1311 = vsel %vm1219, %v1116, 0
        %v1314 = vsel %vm1219, %v1117, 0
        %v1317 = vsel %vm1219, %v1118, 0
        %v1320 = vsel %vm1219, %v1119, 0
        %v1323 = vsel %vm1219, %v1120, 0
        %v1326 = vsel %vm1219, %v1121, 0
        %v1329 = vsel %vm1219, %v1122, 0
        %v1332 = vsel %vm1219, %v1123, 0
        %v1335 = vsel %vm1219, %v1124, 0
        %v1338 = vsel %vm1219, %v1125, 0
        %v1341 = vsel %vm1219, %v1126, 0
        %v1344 = vsel %vm1219, %v1127, 0
        %v1347 = vsel %vm1219, %v1128, 0
        %v1350 = vsel %vm1219, %v1129, 0
        %v1353 = vsel %vm1219, %v1130, 0
        %v1356 = vsel %vm1219, %v1131, 0
        %v1359 = vsel %vm1219, %v1132, 0
        %v1362 = vsel %vm1219, %v1133, 0
        %v1365 = vsel %vm1219, %v1134, 0
        %v1368 = vsel %vm1219, %v1135, 0
        %v1371 = vsel %vm1219, %v1136, 0
        %v1374 = vsel %vm1219, %v1137, 0
        %v1377 = vsel %vm1219, %v1138, 0
        %v1380 = vsel %vm1219, %v1139, 0
        %v1383 = vsel %vm1219, %v1140, 0
        %v1386 = vsel %vm1219, %v1141, 0
        %v1389 = vsel %vm1219, %v1142, 0
        %v1392 = vsel %vm1219, %v1143, 0
        %v1395 = vsel %vm1219, %v1144, 0
        %v1398 = vsel %vm1219, %v1145, 0
        %v1401 = vsel %vm1219, %v1146, 0
        %v1404 = vsel %vm1219, %v1147, 0
        %v1407 = vsel %vm1219, %v1148, 0
        %v1410 = vsel %vm1219, %v1149, 0
        %v1413 = vsel %vm1219, %v1150, 0
        %v1416 = vsel %vm1219, %v1151, 0
        %v1419 = vsel %vm1219, %v1152, 0
        %v1422 = vsel %vm1219, %v1153, 0
        %v1425 = vsel %vm1219, %v1154, 0
        %v1428 = vsel %vm1219, %v1155, 0
        %v1431 = vsel %vm1219, %v1156, 0
        %v1434 = vsel %vm1219, %v1157, 0
        %v1437 = vsel %vm1219, %v1158, 0
        %v1440 = vsel %vm1219, %v1159, 0
        %v1443 = vsel %vm1219, %v1160, 0
        %v1446 = vsel %vm1219, %v1161, 0
        %v1449 = vsel %vm1219, %v1162, 0
        %v1452 = vsel %vm1219, %v1163, 0
        %v1455 = vsel %vm1219, %v1164, 0
        %v1458 = vsel %vm1219, %v1165, 0
        %v1461 = vsel %vm1219, %v1166, 0
        %v1464 = vsel %vm1219, %v1167, 0
        %v1467 = vsel %vm1219, %v1168, 0
        %v1470 = vsel %vm1219, %v1169, 0
        %v1473 = vsel %vm1219, %v1170, 0
        %v1476 = vsel %vm1219, %v1171, 0
        %v1479 = vsel %vm1219, %v1172, 0
        %v1482 = vsel %vm1219, %v1173, 0
        %v1485 = vsel %vm1219, %v1174, 0
        %v1488 = vsel %vm1219, %v1175, 0
        %v1491 = vsel %vm1219, %v1176, 0
        %v1494 = vsel %vm1219, %v1177, 0
        %v1497 = vsel %vm1219, %v1178, 0
        %v1500 = vsel %vm1219, %v1179, 0
        %v1503 = vsel %vm1219, %v1180, 0
        %v1506 = vsel %vm1219, %v1181, 0
        %v1509 = vsel %vm1219, %v1182, 0
        %v1512 = vsel %vm1219, %v1183, 0
        %v1515 = vsel %vm1219, %v1184, 0
        %v1518 = vsel %vm1219, %v1185, 0
        %v1521 = vsel %vm1219, %v1186, 0
        %v1524 = vsel %vm1219, %v1187, 0
        %v1527 = vsel %vm1219, %v1188, 0
        %v1530 = vsel %vm1219, %v1189, 0
        %v1533 = vsel %vm1219, %v1190, 0
        %v1536 = vsel %vm1219, %v1191, 0
        %v1539 = vsel %vm1219, %v1192, 0
        %v1542 = vsel %vm1219, %v1193, 0
        %v1545 = vsel %vm1219, %v1194, 0
        %v1548 = vsel %vm1219, %v1195, 0
        %v1551 = vsel %vm1219, %v1196, 0
        %v1554 = vsel %vm1219, %v1197, 0
        %v1557 = vsel %vm1219, %v1198, 0
        %v1560 = vsel %vm1219, %v1199, 0
        %v1563 = vsel %vm1219, %v1200, 0
        %v1566 = vsel %vm1219, %v1201, 0
        %v1569 = vsel %vm1219, %v1202, 0
        %v1572 = vsel %vm1219, %v1203, 0
        %v1575 = vsel %vm1219, %v1204, 0
        %v1578 = vsel %vm1219, %v1205, 0
        %v1581 = vsel %vm1219, %v1206, 0
        %v1584 = vsel %vm1219, %v1207, 0
        %v1587 = vsel %vm1219, %v1208, 0
        %v1590 = vsel %vm1219, %v1209, 0
        %v1593 = vsel %vm1219, %v1210, 0
        %v1596 = vsel %vm1219, %v1211, 0
        %v1599 = vsel %vm1219, %v1212, 0
        %v1602 = vsel %vm1219, %v1213, 0
        %vm1604 = vcmask 1045504
        %v1606 = vsel %vm1604, %v1218, 0
        %1608 = vmatprep.subr.bf16.mxu0 0
        %1609 = vmatpush1.bf16.msra.mxu0 %v1606
        %1610 = vmatprep.subr.bf16.mxu0 0
        %1611 = vmatpush1.bf16.msra.mxu0 0
        %1612 = vmatprep.subr.bf16.mxu0 0
        %1613 = vmatpush1.bf16.msra.mxu0 0
        %1614 = vmatprep.subr.bf16.mxu0 0
        %1615 = vmatpush1.bf16.msra.mxu0 0
        %1616 = vmatprep.subr.bf16.mxu0 0
        %1617 = vmatpush1.bf16.msra.mxu0 0
        %1618 = vmatprep.subr.bf16.mxu0 0
        %1619 = vmatpush1.bf16.msra.mxu0 0
        %1620 = vmatprep.subr.bf16.mxu0 0
        %1621 = vmatpush1.bf16.msra.mxu0 0
        %1622 = vmatprep.subr.bf16.mxu0 0
        %1623 = vmatpush1.bf16.msra.mxu0 0
        %1624 = vmatprep.subr.bf16.mxu0 0
        %1625 = vmatpush1.bf16.msra.mxu0 0
        %1626 = vmatprep.subr.bf16.mxu0 0
        %1627 = vmatpush1.bf16.msra.mxu0 0
        %1628 = vmatprep.subr.bf16.mxu0 0
        %1629 = vmatpush1.bf16.msra.mxu0 0
        %1630 = vmatprep.subr.bf16.mxu0 0
        %1631 = vmatpush1.bf16.msra.mxu0 0
        %1632 = vmatprep.subr.bf16.mxu0 0
        %1633 = vmatpush1.bf16.msra.mxu0 0
        %1634 = vmatprep.subr.bf16.mxu0 0
        %1635 = vmatpush1.bf16.msra.mxu0 0
        %1636 = vmatprep.subr.bf16.mxu0 0
        %1637 = vmatpush1.bf16.msra.mxu0 0
        %1638 = vmatprep.subr.bf16.mxu0 0
        %1639 = vmatpush1.bf16.msra.mxu0 0
        %1640 = vmatprep.mubr.bf16.mxu0 0
        %1641 = vmatmul.mubr.bf16.gmra.mrb[0].mxu0 %v1221
        %v1642 = vpop.f32.mrb[0].mxu0
        %v1643 = vadd.f32 %v572, %v1642
        %v1644 = vpop.f32.mrb[0].mxu0
        %v1645 = vpop.f32.mrb[0].mxu0
        %v1646 = vadd.f32 %v572, %v1645
        %v1647 = vpop.f32.mrb[0].mxu0
        %1648 = vmatprep.mubr.bf16.mxu0 0
        %1649 = vmatmul.mubr.bf16.gmra.mrb[0].mxu0 %v1224
        %v1650 = vpop.f32.mrb[0].mxu0
        %v1651 = vadd.f32 %v572, %v1650
        %v1652 = vpop.f32.mrb[0].mxu0
        %v1653 = vpop.f32.mrb[0].mxu0
        %v1654 = vadd.f32 %v572, %v1653
        %v1655 = vpop.f32.mrb[0].mxu0
        %1656 = vmatprep.mubr.bf16.mxu0 0
        %1657 = vmatmul.mubr.bf16.gmra.mrb[0].mxu0 %v1227
        %v1658 = vpop.f32.mrb[0].mxu0
        %v1659 = vadd.f32 %v572, %v1658
        %v1660 = vpop.f32.mrb[0].mxu0
        %v1661 = vpop.f32.mrb[0].mxu0
        %v1662 = vadd.f32 %v572, %v1661
        %v1663 = vpop.f32.mrb[0].mxu0
        %1664 = vmatprep.mubr.bf16.mxu0 0
        %1665 = vmatmul.mubr.bf16.gmra.mrb[0].mxu0 %v1230
        %v1666 = vpop.f32.mrb[0].mxu0
        %v1667 = vadd.f32 %v572, %v1666
        %v1668 = vpop.f32.mrb[0].mxu0
        %v1669 = vpop.f32.mrb[0].mxu0
        %v1670 = vadd.f32 %v572, %v1669
        %v1671 = vpop.f32.mrb[0].mxu0
        %1672 = vmatprep.mubr.bf16.mxu0 0
        %1673 = vmatmul.mubr.bf16.gmra.mrb[0].mxu0 %v1233
        %v1674 = vpop.f32.mrb[0].mxu0
        %v1675 = vadd.f32 %v572, %v1674
        %v1676 = vpop.f32.mrb[0].mxu0
        %v1677 = vpop.f32.mrb[0].mxu0
        %v1678 = vadd.f32 %v572, %v1677
        %v1679 = vpop.f32.mrb[0].mxu0
        %1680 = vmatprep.mubr.bf16.mxu0 0
        %1681 = vmatmul.mubr.bf16.gmra.mrb[0].mxu0 %v1236
        %v1682 = vpop.f32.mrb[0].mxu0
        %v1683 = vadd.f32 %v572, %v1682
        %v1684 = vpop.f32.mrb[0].mxu0
        %v1685 = vpop.f32.mrb[0].mxu0
        %v1686 = vadd.f32 %v572, %v1685
        %v1687 = vpop.f32.mrb[0].mxu0
        %1688 = vmatprep.mubr.bf16.mxu0 0
        %1689 = vmatmul.mubr.bf16.gmra.mrb[0].mxu0 %v1239
        %v1690 = vpop.f32.mrb[0].mxu0
        %v1691 = vadd.f32 %v572, %v1690
        %v1692 = vpop.f32.mrb[0].mxu0
        %v1693 = vpop.f32.mrb[0].mxu0
        %v1694 = vadd.f32 %v572, %v1693
        %v1695 = vpop.f32.mrb[0].mxu0
        %1696 = vmatprep.mubr.bf16.mxu0 0
        %1697 = vmatmul.mubr.bf16.gmra.mrb[0].mxu0 %v1242
        %v1698 = vpop.f32.mrb[0].mxu0
        %v1699 = vadd.f32 %v572, %v1698
        %v1700 = vpop.f32.mrb[0].mxu0
        %v1701 = vpop.f32.mrb[0].mxu0
        %v1702 = vadd.f32 %v572, %v1701
        %v1703 = vpop.f32.mrb[0].mxu0
        %1704 = vmatprep.mubr.bf16.mxu0 0
        %1705 = vmatmul.mubr.bf16.gmra.mrb[0].mxu0 %v1245
        %v1706 = vpop.f32.mrb[0].mxu0
        %v1707 = vadd.f32 %v572, %v1706
        %v1708 = vpop.f32.mrb[0].mxu0
        %v1709 = vpop.f32.mrb[0].mxu0
        %v1710 = vadd.f32 %v572, %v1709
        %v1711 = vpop.f32.mrb[0].mxu0
        %1712 = vmatprep.mubr.bf16.mxu0 0
        %1713 = vmatmul.mubr.bf16.gmra.mrb[0].mxu0 %v1248
        %v1714 = vpop.f32.mrb[0].mxu0
        %v1715 = vadd.f32 %v572, %v1714
        %v1716 = vpop.f32.mrb[0].mxu0
        %v1717 = vpop.f32.mrb[0].mxu0
        %v1718 = vadd.f32 %v572, %v1717
        %v1719 = vpop.f32.mrb[0].mxu0
        %1720 = vmatprep.mubr.bf16.mxu0 0
        %1721 = vmatmul.mubr.bf16.gmra.mrb[0].mxu0 %v1251
        %v1722 = vpop.f32.mrb[0].mxu0
        %v1723 = vadd.f32 %v572, %v1722
        %v1724 = vpop.f32.mrb[0].mxu0
        %v1725 = vpop.f32.mrb[0].mxu0
        %v1726 = vadd.f32 %v572, %v1725
        %v1727 = vpop.f32.mrb[0].mxu0
        %1728 = vmatprep.mubr.bf16.mxu0 0
        %1729 = vmatmul.mubr.bf16.gmra.mrb[0].mxu0 %v1254
        %v1730 = vpop.f32.mrb[0].mxu0
        %v1731 = vadd.f32 %v572, %v1730
        %v1732 = vpop.f32.mrb[0].mxu0
        %v1733 = vpop.f32.mrb[0].mxu0
        %v1734 = vadd.f32 %v572, %v1733
        %v1735 = vpop.f32.mrb[0].mxu0
        %1736 = vmatprep.mubr.bf16.mxu0 0
        %1737 = vmatmul.mubr.bf16.gmra.mrb[0].mxu0 %v1257
        %v1738 = vpop.f32.mrb[0].mxu0
        %v1739 = vadd.f32 %v572, %v1738
        %v1740 = vpop.f32.mrb[0].mxu0
        %v1741 = vpop.f32.mrb[0].mxu0
        %v1742 = vadd.f32 %v572, %v1741
        %v1743 = vpop.f32.mrb[0].mxu0
        %1744 = vmatprep.mubr.bf16.mxu0 0
        %1745 = vmatmul.mubr.bf16.gmra.mrb[0].mxu0 %v1260
        %v1746 = vpop.f32.mrb[0].mxu0
        %v1747 = vadd.f32 %v572, %v1746
        %v1748 = vpop.f32.mrb[0].mxu0
        %v1749 = vpop.f32.mrb[0].mxu0
        %v1750 = vadd.f32 %v572, %v1749
        %v1751 = vpop.f32.mrb[0].mxu0
        %1752 = vmatprep.mubr.bf16.mxu0 0
        %1753 = vmatmul.mubr.bf16.gmra.mrb[0].mxu0 %v1263
        %v1754 = vpop.f32.mrb[0].mxu0
        %v1755 = vadd.f32 %v572, %v1754
        %v1756 = vpop.f32.mrb[0].mxu0
        %v1757 = vpop.f32.mrb[0].mxu0
        %v1758 = vadd.f32 %v572, %v1757
        %v1759 = vpop.f32.mrb[0].mxu0
        %1760 = vmatprep.mubr.bf16.mxu0 0
        %1761 = vmatmul.mubr.bf16.gmra.mrb[0].mxu0 %v1266
        %v1762 = vpop.f32.mrb[0].mxu0
        %v1763 = vadd.f32 %v572, %v1762
        %v1764 = vpop.f32.mrb[0].mxu0
        %v1765 = vpop.f32.mrb[0].mxu0
        %v1766 = vadd.f32 %v572, %v1765
        %v1767 = vpop.f32.mrb[0].mxu0
        %1768 = vmatprep.mubr.bf16.mxu0 0
        %1769 = vmatmul.mubr.bf16.gmra.mrb[0].mxu0 %v1269
        %v1770 = vpop.f32.mrb[0].mxu0
        %v1771 = vadd.f32 %v572, %v1770
        %v1772 = vpop.f32.mrb[0].mxu0
        %v1773 = vpop.f32.mrb[0].mxu0
        %v1774 = vadd.f32 %v572, %v1773
        %v1775 = vpop.f32.mrb[0].mxu0
        %1776 = vmatprep.mubr.bf16.mxu0 0
        %1777 = vmatmul.mubr.bf16.gmra.mrb[0].mxu0 %v1272
        %v1778 = vpop.f32.mrb[0].mxu0
        %v1779 = vadd.f32 %v572, %v1778
        %v1780 = vpop.f32.mrb[0].mxu0
        %v1781 = vpop.f32.mrb[0].mxu0
        %v1782 = vadd.f32 %v572, %v1781
        %v1783 = vpop.f32.mrb[0].mxu0
        %1784 = vmatprep.mubr.bf16.mxu0 0
        %1785 = vmatmul.mubr.bf16.gmra.mrb[0].mxu0 %v1275
        %v1786 = vpop.f32.mrb[0].mxu0
        %v1787 = vadd.f32 %v572, %v1786
        %v1788 = vpop.f32.mrb[0].mxu0
        %v1789 = vpop.f32.mrb[0].mxu0
        %v1790 = vadd.f32 %v572, %v1789
        %v1791 = vpop.f32.mrb[0].mxu0
        %1792 = vmatprep.mubr.bf16.mxu0 0
        %1793 = vmatmul.mubr.bf16.gmra.mrb[0].mxu0 %v1278
        %v1794 = vpop.f32.mrb[0].mxu0
        %v1795 = vadd.f32 %v572, %v1794
        %v1796 = vpop.f32.mrb[0].mxu0
        %v1797 = vpop.f32.mrb[0].mxu0
        %v1798 = vadd.f32 %v572, %v1797
        %v1799 = vpop.f32.mrb[0].mxu0
        %1800 = vmatprep.mubr.bf16.mxu0 0
        %1801 = vmatmul.mubr.bf16.gmra.mrb[0].mxu0 %v1281
        %v1802 = vpop.f32.mrb[0].mxu0
        %v1803 = vadd.f32 %v572, %v1802
        %v1804 = vpop.f32.mrb[0].mxu0
        %v1805 = vpop.f32.mrb[0].mxu0
        %v1806 = vadd.f32 %v572, %v1805
        %v1807 = vpop.f32.mrb[0].mxu0
        %1808 = vmatprep.mubr.bf16.mxu0 0
        %1809 = vmatmul.mubr.bf16.gmra.mrb[0].mxu0 %v1284
        %v1810 = vpop.f32.mrb[0].mxu0
        %v1811 = vadd.f32 %v572, %v1810
        %v1812 = vpop.f32.mrb[0].mxu0
        %v1813 = vpop.f32.mrb[0].mxu0
        %v1814 = vadd.f32 %v572, %v1813
        %v1815 = vpop.f32.mrb[0].mxu0
        %1816 = vmatprep.mubr.bf16.mxu0 0
        %1817 = vmatmul.mubr.bf16.gmra.mrb[0].mxu0 %v1287
        %v1818 = vpop.f32.mrb[0].mxu0
        %v1819 = vadd.f32 %v572, %v1818
        %v1820 = vpop.f32.mrb[0].mxu0
        %v1821 = vpop.f32.mrb[0].mxu0
        %v1822 = vadd.f32 %v572, %v1821
        %v1823 = vpop.f32.mrb[0].mxu0
        %1824 = vmatprep.mubr.bf16.mxu0 0
        %1825 = vmatmul.mubr.bf16.gmra.mrb[0].mxu0 %v1290
        %v1826 = vpop.f32.mrb[0].mxu0
        %v1827 = vadd.f32 %v572, %v1826
        %v1828 = vpop.f32.mrb[0].mxu0
        %v1829 = vpop.f32.mrb[0].mxu0
        %v1830 = vadd.f32 %v572, %v1829
        %v1831 = vpop.f32.mrb[0].mxu0
        %1832 = vmatprep.mubr.bf16.mxu0 0
        %1833 = vmatmul.mubr.bf16.gmra.mrb[0].mxu0 %v1293
        %v1834 = vpop.f32.mrb[0].mxu0
        %v1835 = vadd.f32 %v572, %v1834
        %v1836 = vpop.f32.mrb[0].mxu0
        %v1837 = vpop.f32.mrb[0].mxu0
        %v1838 = vadd.f32 %v572, %v1837
        %v1839 = vpop.f32.mrb[0].mxu0
        %1840 = vmatprep.mubr.bf16.mxu0 0
        %1841 = vmatmul.mubr.bf16.gmra.mrb[0].mxu0 %v1296
        %v1842 = vpop.f32.mrb[0].mxu0
        %v1843 = vadd.f32 %v572, %v1842
        %v1844 = vpop.f32.mrb[0].mxu0
        %v1845 = vpop.f32.mrb[0].mxu0
        %v1846 = vadd.f32 %v572, %v1845
        %v1847 = vpop.f32.mrb[0].mxu0
        %1848 = vmatprep.mubr.bf16.mxu0 0
        %1849 = vmatmul.mubr.bf16.gmra.mrb[0].mxu0 %v1299
        %v1850 = vpop.f32.mrb[0].mxu0
        %v1851 = vadd.f32 %v572, %v1850
        %v1852 = vpop.f32.mrb[0].mxu0
        %v1853 = vpop.f32.mrb[0].mxu0
        %v1854 = vadd.f32 %v572, %v1853
        %v1855 = vpop.f32.mrb[0].mxu0
        %1856 = vmatprep.mubr.bf16.mxu0 0
        %1857 = vmatmul.mubr.bf16.gmra.mrb[0].mxu0 %v1302
        %v1858 = vpop.f32.mrb[0].mxu0
        %v1859 = vadd.f32 %v572, %v1858
        %v1860 = vpop.f32.mrb[0].mxu0
        %v1861 = vpop.f32.mrb[0].mxu0
        %v1862 = vadd.f32 %v572, %v1861
        %v1863 = vpop.f32.mrb[0].mxu0
        %1864 = vmatprep.mubr.bf16.mxu0 0
        %1865 = vmatmul.mubr.bf16.gmra.mrb[0].mxu0 %v1305
        %v1866 = vpop.f32.mrb[0].mxu0
        %v1867 = vadd.f32 %v572, %v1866
        %v1868 = vpop.f32.mrb[0].mxu0
        %v1869 = vpop.f32.mrb[0].mxu0
        %v1870 = vadd.f32 %v572, %v1869
        %v1871 = vpop.f32.mrb[0].mxu0
        %1872 = vmatprep.mubr.bf16.mxu0 0
        %1873 = vmatmul.mubr.bf16.gmra.mrb[0].mxu0 %v1308
        %v1874 = vpop.f32.mrb[0].mxu0
        %v1875 = vadd.f32 %v572, %v1874
        %v1876 = vpop.f32.mrb[0].mxu0
        %v1877 = vpop.f32.mrb[0].mxu0
        %v1878 = vadd.f32 %v572, %v1877
        %v1879 = vpop.f32.mrb[0].mxu0
        %1880 = vmatprep.mubr.bf16.mxu0 0
        %1881 = vmatmul.mubr.bf16.gmra.mrb[0].mxu0 %v1311
        %v1882 = vpop.f32.mrb[0].mxu0
        %v1883 = vadd.f32 %v572, %v1882
        %v1884 = vpop.f32.mrb[0].mxu0
        %v1885 = vpop.f32.mrb[0].mxu0
        %v1886 = vadd.f32 %v572, %v1885
        %v1887 = vpop.f32.mrb[0].mxu0
        %1888 = vmatprep.mubr.bf16.mxu0 0
        %1889 = vmatmul.mubr.bf16.gmra.mrb[0].mxu0 %v1314
        %v1890 = vpop.f32.mrb[0].mxu0
        %v1891 = vadd.f32 %v572, %v1890
        %v1892 = vpop.f32.mrb[0].mxu0
        %v1893 = vpop.f32.mrb[0].mxu0
        %v1894 = vadd.f32 %v572, %v1893
        %v1895 = vpop.f32.mrb[0].mxu0
        %1896 = vmatprep.mubr.bf16.mxu0 0
        %1897 = vmatmul.mubr.bf16.gmra.mrb[0].mxu0 %v1317
        %v1898 = vpop.f32.mrb[0].mxu0
        %v1899 = vadd.f32 %v572, %v1898
        %v1900 = vpop.f32.mrb[0].mxu0
        %v1901 = vpop.f32.mrb[0].mxu0
        %v1902 = vadd.f32 %v572, %v1901
        %v1903 = vpop.f32.mrb[0].mxu0
        %1904 = vmatprep.mubr.bf16.mxu0 0
        %1905 = vmatmul.mubr.bf16.gmra.mrb[0].mxu0 %v1320
        %v1906 = vpop.f32.mrb[0].mxu0
        %v1907 = vadd.f32 %v572, %v1906
        %v1908 = vpop.f32.mrb[0].mxu0
        %v1909 = vpop.f32.mrb[0].mxu0
        %v1910 = vadd.f32 %v572, %v1909
        %v1911 = vpop.f32.mrb[0].mxu0
        %1912 = vmatprep.mubr.bf16.mxu0 0
        %1913 = vmatmul.mubr.bf16.gmra.mrb[0].mxu0 %v1323
        %v1914 = vpop.f32.mrb[0].mxu0
        %v1915 = vadd.f32 %v572, %v1914
        %v1916 = vpop.f32.mrb[0].mxu0
        %v1917 = vpop.f32.mrb[0].mxu0
        %v1918 = vadd.f32 %v572, %v1917
        %v1919 = vpop.f32.mrb[0].mxu0
        %1920 = vmatprep.mubr.bf16.mxu0 0
        %1921 = vmatmul.mubr.bf16.gmra.mrb[0].mxu0 %v1326
        %v1922 = vpop.f32.mrb[0].mxu0
        %v1923 = vadd.f32 %v572, %v1922
        %v1924 = vpop.f32.mrb[0].mxu0
        %v1925 = vpop.f32.mrb[0].mxu0
        %v1926 = vadd.f32 %v572, %v1925
        %v1927 = vpop.f32.mrb[0].mxu0
        %1928 = vmatprep.mubr.bf16.mxu0 0
        %1929 = vmatmul.mubr.bf16.gmra.mrb[0].mxu0 %v1329
        %v1930 = vpop.f32.mrb[0].mxu0
        %v1931 = vadd.f32 %v572, %v1930
        %v1932 = vpop.f32.mrb[0].mxu0
        %v1933 = vpop.f32.mrb[0].mxu0
        %v1934 = vadd.f32 %v572, %v1933
        %v1935 = vpop.f32.mrb[0].mxu0
        %1936 = vmatprep.mubr.bf16.mxu0 0
        %1937 = vmatmul.mubr.bf16.gmra.mrb[0].mxu0 %v1332
        %v1938 = vpop.f32.mrb[0].mxu0
        %v1939 = vadd.f32 %v572, %v1938
        %v1940 = vpop.f32.mrb[0].mxu0
        %v1941 = vpop.f32.mrb[0].mxu0
        %v1942 = vadd.f32 %v572, %v1941
        %v1943 = vpop.f32.mrb[0].mxu0
        %1944 = vmatprep.mubr.bf16.mxu0 0
        %1945 = vmatmul.mubr.bf16.gmra.mrb[0].mxu0 %v1335
        %v1946 = vpop.f32.mrb[0].mxu0
        %v1947 = vadd.f32 %v572, %v1946
        %v1948 = vpop.f32.mrb[0].mxu0
        %v1949 = vpop.f32.mrb[0].mxu0
        %v1950 = vadd.f32 %v572, %v1949
        %v1951 = vpop.f32.mrb[0].mxu0
        %1952 = vmatprep.mubr.bf16.mxu0 0
        %1953 = vmatmul.mubr.bf16.gmra.mrb[0].mxu0 %v1338
        %v1954 = vpop.f32.mrb[0].mxu0
        %v1955 = vadd.f32 %v572, %v1954
        %v1956 = vpop.f32.mrb[0].mxu0
        %v1957 = vpop.f32.mrb[0].mxu0
        %v1958 = vadd.f32 %v572, %v1957
        %v1959 = vpop.f32.mrb[0].mxu0
        %1960 = vmatprep.mubr.bf16.mxu0 0
        %1961 = vmatmul.mubr.bf16.gmra.mrb[0].mxu0 %v1341
        %v1962 = vpop.f32.mrb[0].mxu0
        %v1963 = vadd.f32 %v572, %v1962
        %v1964 = vpop.f32.mrb[0].mxu0
        %v1965 = vpop.f32.mrb[0].mxu0
        %v1966 = vadd.f32 %v572, %v1965
        %v1967 = vpop.f32.mrb[0].mxu0
        %1968 = vmatprep.mubr.bf16.mxu0 0
        %1969 = vmatmul.mubr.bf16.gmra.mrb[0].mxu0 %v1344
        %v1970 = vpop.f32.mrb[0].mxu0
        %v1971 = vadd.f32 %v572, %v1970
        %v1972 = vpop.f32.mrb[0].mxu0
        %v1973 = vpop.f32.mrb[0].mxu0
        %v1974 = vadd.f32 %v572, %v1973
        %v1975 = vpop.f32.mrb[0].mxu0
        %1976 = vmatprep.mubr.bf16.mxu0 0
        %1977 = vmatmul.mubr.bf16.gmra.mrb[0].mxu0 %v1347
        %v1978 = vpop.f32.mrb[0].mxu0
        %v1979 = vadd.f32 %v572, %v1978
        %v1980 = vpop.f32.mrb[0].mxu0
        %v1981 = vpop.f32.mrb[0].mxu0
        %v1982 = vadd.f32 %v572, %v1981
        %v1983 = vpop.f32.mrb[0].mxu0
        %1984 = vmatprep.mubr.bf16.mxu0 0
        %1985 = vmatmul.mubr.bf16.gmra.mrb[0].mxu0 %v1350
        %v1986 = vpop.f32.mrb[0].mxu0
        %v1987 = vadd.f32 %v572, %v1986
        %v1988 = vpop.f32.mrb[0].mxu0
        %v1989 = vpop.f32.mrb[0].mxu0
        %v1990 = vadd.f32 %v572, %v1989
        %v1991 = vpop.f32.mrb[0].mxu0
        %1992 = vmatprep.mubr.bf16.mxu0 0
        %1993 = vmatmul.mubr.bf16.gmra.mrb[0].mxu0 %v1353
        %v1994 = vpop.f32.mrb[0].mxu0
        %v1995 = vadd.f32 %v572, %v1994
        %v1996 = vpop.f32.mrb[0].mxu0
        %v1997 = vpop.f32.mrb[0].mxu0
        %v1998 = vadd.f32 %v572, %v1997
        %v1999 = vpop.f32.mrb[0].mxu0
        %2000 = vmatprep.mubr.bf16.mxu0 0
        %2001 = vmatmul.mubr.bf16.gmra.mrb[0].mxu0 %v1356
        %v2002 = vpop.f32.mrb[0].mxu0
        %v2003 = vadd.f32 %v572, %v2002
        %v2004 = vpop.f32.mrb[0].mxu0
        %v2005 = vpop.f32.mrb[0].mxu0
        %v2006 = vadd.f32 %v572, %v2005
        %v2007 = vpop.f32.mrb[0].mxu0
        %2008 = vmatprep.mubr.bf16.mxu0 0
        %2009 = vmatmul.mubr.bf16.gmra.mrb[0].mxu0 %v1359
        %v2010 = vpop.f32.mrb[0].mxu0
        %v2011 = vadd.f32 %v572, %v2010
        %v2012 = vpop.f32.mrb[0].mxu0
        %v2013 = vpop.f32.mrb[0].mxu0
        %v2014 = vadd.f32 %v572, %v2013
        %v2015 = vpop.f32.mrb[0].mxu0
        %2016 = vmatprep.mubr.bf16.mxu0 0
        %2017 = vmatmul.mubr.bf16.gmra.mrb[0].mxu0 %v1362
        %v2018 = vpop.f32.mrb[0].mxu0
        %v2019 = vadd.f32 %v572, %v2018
        %v2020 = vpop.f32.mrb[0].mxu0
        %v2021 = vpop.f32.mrb[0].mxu0
        %v2022 = vadd.f32 %v572, %v2021
        %v2023 = vpop.f32.mrb[0].mxu0
        %2024 = vmatprep.mubr.bf16.mxu0 0
        %2025 = vmatmul.mubr.bf16.gmra.mrb[0].mxu0 %v1365
        %v2026 = vpop.f32.mrb[0].mxu0
        %v2027 = vadd.f32 %v572, %v2026
        %v2028 = vpop.f32.mrb[0].mxu0
        %v2029 = vpop.f32.mrb[0].mxu0
        %v2030 = vadd.f32 %v572, %v2029
        %v2031 = vpop.f32.mrb[0].mxu0
        %2032 = vmatprep.mubr.bf16.mxu0 0
        %2033 = vmatmul.mubr.bf16.gmra.mrb[0].mxu0 %v1368
        %v2034 = vpop.f32.mrb[0].mxu0
        %v2035 = vadd.f32 %v572, %v2034
        %v2036 = vpop.f32.mrb[0].mxu0
        %v2037 = vpop.f32.mrb[0].mxu0
        %v2038 = vadd.f32 %v572, %v2037
        %v2039 = vpop.f32.mrb[0].mxu0
        %2040 = vmatprep.mubr.bf16.mxu0 0
        %2041 = vmatmul.mubr.bf16.gmra.mrb[0].mxu0 %v1371
        %v2042 = vpop.f32.mrb[0].mxu0
        %v2043 = vadd.f32 %v572, %v2042
        %v2044 = vpop.f32.mrb[0].mxu0
        %v2045 = vpop.f32.mrb[0].mxu0
        %v2046 = vadd.f32 %v572, %v2045
        %v2047 = vpop.f32.mrb[0].mxu0
        %2048 = vmatprep.mubr.bf16.mxu0 0
        %2049 = vmatmul.mubr.bf16.gmra.mrb[0].mxu0 %v1374
        %v2050 = vpop.f32.mrb[0].mxu0
        %v2051 = vadd.f32 %v572, %v2050
        %v2052 = vpop.f32.mrb[0].mxu0
        %v2053 = vpop.f32.mrb[0].mxu0
        %v2054 = vadd.f32 %v572, %v2053
        %v2055 = vpop.f32.mrb[0].mxu0
        %2056 = vmatprep.mubr.bf16.mxu0 0
        %2057 = vmatmul.mubr.bf16.gmra.mrb[0].mxu0 %v1377
        %v2058 = vpop.f32.mrb[0].mxu0
        %v2059 = vadd.f32 %v572, %v2058
        %v2060 = vpop.f32.mrb[0].mxu0
        %v2061 = vpop.f32.mrb[0].mxu0
        %v2062 = vadd.f32 %v572, %v2061
        %v2063 = vpop.f32.mrb[0].mxu0
        %2064 = vmatprep.mubr.bf16.mxu0 0
        %2065 = vmatmul.mubr.bf16.gmra.mrb[0].mxu0 %v1380
        %v2066 = vpop.f32.mrb[0].mxu0
        %v2067 = vadd.f32 %v572, %v2066
        %v2068 = vpop.f32.mrb[0].mxu0
        %v2069 = vpop.f32.mrb[0].mxu0
        %v2070 = vadd.f32 %v572, %v2069
        %v2071 = vpop.f32.mrb[0].mxu0
        %2072 = vmatprep.mubr.bf16.mxu0 0
        %2073 = vmatmul.mubr.bf16.gmra.mrb[0].mxu0 %v1383
        %v2074 = vpop.f32.mrb[0].mxu0
        %v2075 = vadd.f32 %v572, %v2074
        %v2076 = vpop.f32.mrb[0].mxu0
        %v2077 = vpop.f32.mrb[0].mxu0
        %v2078 = vadd.f32 %v572, %v2077
        %v2079 = vpop.f32.mrb[0].mxu0
        %2080 = vmatprep.mubr.bf16.mxu0 0
        %2081 = vmatmul.mubr.bf16.gmra.mrb[0].mxu0 %v1386
        %v2082 = vpop.f32.mrb[0].mxu0
        %v2083 = vadd.f32 %v572, %v2082
        %v2084 = vpop.f32.mrb[0].mxu0
        %v2085 = vpop.f32.mrb[0].mxu0
        %v2086 = vadd.f32 %v572, %v2085
        %v2087 = vpop.f32.mrb[0].mxu0
        %2088 = vmatprep.mubr.bf16.mxu0 0
        %2089 = vmatmul.mubr.bf16.gmra.mrb[0].mxu0 %v1389
        %v2090 = vpop.f32.mrb[0].mxu0
        %v2091 = vadd.f32 %v572, %v2090
        %v2092 = vpop.f32.mrb[0].mxu0
        %v2093 = vpop.f32.mrb[0].mxu0
        %v2094 = vadd.f32 %v572, %v2093
        %v2095 = vpop.f32.mrb[0].mxu0
        %2096 = vmatprep.mubr.bf16.mxu0 0
        %2097 = vmatmul.mubr.bf16.gmra.mrb[0].mxu0 %v1392
        %v2098 = vpop.f32.mrb[0].mxu0
        %v2099 = vadd.f32 %v572, %v2098
        %v2100 = vpop.f32.mrb[0].mxu0
        %v2101 = vpop.f32.mrb[0].mxu0
        %v2102 = vadd.f32 %v572, %v2101
        %v2103 = vpop.f32.mrb[0].mxu0
        %2104 = vmatprep.mubr.bf16.mxu0 0
        %2105 = vmatmul.mubr.bf16.gmra.mrb[0].mxu0 %v1395
        %v2106 = vpop.f32.mrb[0].mxu0
        %v2107 = vadd.f32 %v572, %v2106
        %v2108 = vpop.f32.mrb[0].mxu0
        %v2109 = vpop.f32.mrb[0].mxu0
        %v2110 = vadd.f32 %v572, %v2109
        %v2111 = vpop.f32.mrb[0].mxu0
        %2112 = vmatprep.mubr.bf16.mxu0 0
        %2113 = vmatmul.mubr.bf16.gmra.mrb[0].mxu0 %v1398
        %v2114 = vpop.f32.mrb[0].mxu0
        %v2115 = vadd.f32 %v572, %v2114
        %v2116 = vpop.f32.mrb[0].mxu0
        %v2117 = vpop.f32.mrb[0].mxu0
        %v2118 = vadd.f32 %v572, %v2117
        %v2119 = vpop.f32.mrb[0].mxu0
        %2120 = vmatprep.mubr.bf16.mxu0 0
        %2121 = vmatmul.mubr.bf16.gmra.mrb[0].mxu0 %v1401
        %v2122 = vpop.f32.mrb[0].mxu0
        %v2123 = vadd.f32 %v572, %v2122
        %v2124 = vpop.f32.mrb[0].mxu0
        %v2125 = vpop.f32.mrb[0].mxu0
        %v2126 = vadd.f32 %v572, %v2125
        %v2127 = vpop.f32.mrb[0].mxu0
        %2128 = vmatprep.mubr.bf16.mxu0 0
        %2129 = vmatmul.mubr.bf16.gmra.mrb[0].mxu0 %v1404
        %v2130 = vpop.f32.mrb[0].mxu0
        %v2131 = vadd.f32 %v572, %v2130
        %v2132 = vpop.f32.mrb[0].mxu0
        %v2133 = vpop.f32.mrb[0].mxu0
        %v2134 = vadd.f32 %v572, %v2133
        %v2135 = vpop.f32.mrb[0].mxu0
        %2136 = vmatprep.mubr.bf16.mxu0 0
        %2137 = vmatmul.mubr.bf16.gmra.mrb[0].mxu0 %v1407
        %v2138 = vpop.f32.mrb[0].mxu0
        %v2139 = vadd.f32 %v572, %v2138
        %v2140 = vpop.f32.mrb[0].mxu0
        %v2141 = vpop.f32.mrb[0].mxu0
        %v2142 = vadd.f32 %v572, %v2141
        %v2143 = vpop.f32.mrb[0].mxu0
        %2144 = vmatprep.mubr.bf16.mxu0 0
        %2145 = vmatmul.mubr.bf16.gmra.mrb[0].mxu0 %v1410
        %v2146 = vpop.f32.mrb[0].mxu0
        %v2147 = vadd.f32 %v572, %v2146
        %v2148 = vpop.f32.mrb[0].mxu0
        %v2149 = vpop.f32.mrb[0].mxu0
        %v2150 = vadd.f32 %v572, %v2149
        %v2151 = vpop.f32.mrb[0].mxu0
        %2152 = vmatprep.mubr.bf16.mxu0 0
        %2153 = vmatmul.mubr.bf16.gmra.mrb[0].mxu0 %v1413
        %v2154 = vpop.f32.mrb[0].mxu0
        %v2155 = vadd.f32 %v572, %v2154
        %v2156 = vpop.f32.mrb[0].mxu0
        %v2157 = vpop.f32.mrb[0].mxu0
        %v2158 = vadd.f32 %v572, %v2157
        %v2159 = vpop.f32.mrb[0].mxu0
        %2160 = vmatprep.mubr.bf16.mxu0 0
        %2161 = vmatmul.mubr.bf16.gmra.mrb[0].mxu0 %v1416
        %v2162 = vpop.f32.mrb[0].mxu0
        %v2163 = vadd.f32 %v572, %v2162
        %v2164 = vpop.f32.mrb[0].mxu0
        %v2165 = vpop.f32.mrb[0].mxu0
        %v2166 = vadd.f32 %v572, %v2165
        %v2167 = vpop.f32.mrb[0].mxu0
        %2168 = vmatprep.mubr.bf16.mxu0 0
        %2169 = vmatmul.mubr.bf16.gmra.mrb[0].mxu0 %v1419
        %v2170 = vpop.f32.mrb[0].mxu0
        %v2171 = vadd.f32 %v572, %v2170
        %v2172 = vpop.f32.mrb[0].mxu0
        %v2173 = vpop.f32.mrb[0].mxu0
        %v2174 = vadd.f32 %v572, %v2173
        %v2175 = vpop.f32.mrb[0].mxu0
        %2176 = vmatprep.mubr.bf16.mxu0 0
        %2177 = vmatmul.mubr.bf16.gmra.mrb[0].mxu0 %v1422
        %v2178 = vpop.f32.mrb[0].mxu0
        %v2179 = vadd.f32 %v572, %v2178
        %v2180 = vpop.f32.mrb[0].mxu0
        %v2181 = vpop.f32.mrb[0].mxu0
        %v2182 = vadd.f32 %v572, %v2181
        %v2183 = vpop.f32.mrb[0].mxu0
        %2184 = vmatprep.mubr.bf16.mxu0 0
        %2185 = vmatmul.mubr.bf16.gmra.mrb[0].mxu0 %v1425
        %v2186 = vpop.f32.mrb[0].mxu0
        %v2187 = vadd.f32 %v572, %v2186
        %v2188 = vpop.f32.mrb[0].mxu0
        %v2189 = vpop.f32.mrb[0].mxu0
        %v2190 = vadd.f32 %v572, %v2189
        %v2191 = vpop.f32.mrb[0].mxu0
        %2192 = vmatprep.mubr.bf16.mxu0 0
        %2193 = vmatmul.mubr.bf16.gmra.mrb[0].mxu0 %v1428
        %v2194 = vpop.f32.mrb[0].mxu0
        %v2195 = vadd.f32 %v572, %v2194
        %v2196 = vpop.f32.mrb[0].mxu0
        %v2197 = vpop.f32.mrb[0].mxu0
        %v2198 = vadd.f32 %v572, %v2197
        %v2199 = vpop.f32.mrb[0].mxu0
        %2200 = vmatprep.mubr.bf16.mxu0 0
        %2201 = vmatmul.mubr.bf16.gmra.mrb[0].mxu0 %v1431
        %v2202 = vpop.f32.mrb[0].mxu0
        %v2203 = vadd.f32 %v572, %v2202
        %v2204 = vpop.f32.mrb[0].mxu0
        %v2205 = vpop.f32.mrb[0].mxu0
        %v2206 = vadd.f32 %v572, %v2205
        %v2207 = vpop.f32.mrb[0].mxu0
        %2208 = vmatprep.mubr.bf16.mxu0 0
        %2209 = vmatmul.mubr.bf16.gmra.mrb[0].mxu0 %v1434
        %v2210 = vpop.f32.mrb[0].mxu0
        %v2211 = vadd.f32 %v572, %v2210
        %v2212 = vpop.f32.mrb[0].mxu0
        %v2213 = vpop.f32.mrb[0].mxu0
        %v2214 = vadd.f32 %v572, %v2213
        %v2215 = vpop.f32.mrb[0].mxu0
        %2216 = vmatprep.mubr.bf16.mxu0 0
        %2217 = vmatmul.mubr.bf16.gmra.mrb[0].mxu0 %v1437
        %v2218 = vpop.f32.mrb[0].mxu0
        %v2219 = vadd.f32 %v572, %v2218
        %v2220 = vpop.f32.mrb[0].mxu0
        %v2221 = vpop.f32.mrb[0].mxu0
        %v2222 = vadd.f32 %v572, %v2221
        %v2223 = vpop.f32.mrb[0].mxu0
        %2224 = vmatprep.mubr.bf16.mxu0 0
        %2225 = vmatmul.mubr.bf16.gmra.mrb[0].mxu0 %v1440
        %v2226 = vpop.f32.mrb[0].mxu0
        %v2227 = vadd.f32 %v572, %v2226
        %v2228 = vpop.f32.mrb[0].mxu0
        %v2229 = vpop.f32.mrb[0].mxu0
        %v2230 = vadd.f32 %v572, %v2229
        %v2231 = vpop.f32.mrb[0].mxu0
        %2232 = vmatprep.mubr.bf16.mxu0 0
        %2233 = vmatmul.mubr.bf16.gmra.mrb[0].mxu0 %v1443
        %v2234 = vpop.f32.mrb[0].mxu0
        %v2235 = vadd.f32 %v572, %v2234
        %v2236 = vpop.f32.mrb[0].mxu0
        %v2237 = vpop.f32.mrb[0].mxu0
        %v2238 = vadd.f32 %v572, %v2237
        %v2239 = vpop.f32.mrb[0].mxu0
        %2240 = vmatprep.mubr.bf16.mxu0 0
        %2241 = vmatmul.mubr.bf16.gmra.mrb[0].mxu0 %v1446
        %v2242 = vpop.f32.mrb[0].mxu0
        %v2243 = vadd.f32 %v572, %v2242
        %v2244 = vpop.f32.mrb[0].mxu0
        %v2245 = vpop.f32.mrb[0].mxu0
        %v2246 = vadd.f32 %v572, %v2245
        %v2247 = vpop.f32.mrb[0].mxu0
        %2248 = vmatprep.mubr.bf16.mxu0 0
        %2249 = vmatmul.mubr.bf16.gmra.mrb[0].mxu0 %v1449
        %v2250 = vpop.f32.mrb[0].mxu0
        %v2251 = vadd.f32 %v572, %v2250
        %v2252 = vpop.f32.mrb[0].mxu0
        %v2253 = vpop.f32.mrb[0].mxu0
        %v2254 = vadd.f32 %v572, %v2253
        %v2255 = vpop.f32.mrb[0].mxu0
        %2256 = vmatprep.mubr.bf16.mxu0 0
        %2257 = vmatmul.mubr.bf16.gmra.mrb[0].mxu0 %v1452
        %v2258 = vpop.f32.mrb[0].mxu0
        %v2259 = vadd.f32 %v572, %v2258
        %v2260 = vpop.f32.mrb[0].mxu0
        %v2261 = vpop.f32.mrb[0].mxu0
        %v2262 = vadd.f32 %v572, %v2261
        %v2263 = vpop.f32.mrb[0].mxu0
        %2264 = vmatprep.mubr.bf16.mxu0 0
        %2265 = vmatmul.mubr.bf16.gmra.mrb[0].mxu0 %v1455
        %v2266 = vpop.f32.mrb[0].mxu0
        %v2267 = vadd.f32 %v572, %v2266
        %v2268 = vpop.f32.mrb[0].mxu0
        %v2269 = vpop.f32.mrb[0].mxu0
        %v2270 = vadd.f32 %v572, %v2269
        %v2271 = vpop.f32.mrb[0].mxu0
        %2272 = vmatprep.mubr.bf16.mxu0 0
        %2273 = vmatmul.mubr.bf16.gmra.mrb[0].mxu0 %v1458
        %v2274 = vpop.f32.mrb[0].mxu0
        %v2275 = vadd.f32 %v572, %v2274
        %v2276 = vpop.f32.mrb[0].mxu0
        %v2277 = vpop.f32.mrb[0].mxu0
        %v2278 = vadd.f32 %v572, %v2277
        %v2279 = vpop.f32.mrb[0].mxu0
        %2280 = vmatprep.mubr.bf16.mxu0 0
        %2281 = vmatmul.mubr.bf16.gmra.mrb[0].mxu0 %v1461
        %v2282 = vpop.f32.mrb[0].mxu0
        %v2283 = vadd.f32 %v572, %v2282
        %v2284 = vpop.f32.mrb[0].mxu0
        %v2285 = vpop.f32.mrb[0].mxu0
        %v2286 = vadd.f32 %v572, %v2285
        %v2287 = vpop.f32.mrb[0].mxu0
        %2288 = vmatprep.mubr.bf16.mxu0 0
        %2289 = vmatmul.mubr.bf16.gmra.mrb[0].mxu0 %v1464
        %v2290 = vpop.f32.mrb[0].mxu0
        %v2291 = vadd.f32 %v572, %v2290
        %v2292 = vpop.f32.mrb[0].mxu0
        %v2293 = vpop.f32.mrb[0].mxu0
        %v2294 = vadd.f32 %v572, %v2293
        %v2295 = vpop.f32.mrb[0].mxu0
        %2296 = vmatprep.mubr.bf16.mxu0 0
        %2297 = vmatmul.mubr.bf16.gmra.mrb[0].mxu0 %v1467
        %v2298 = vpop.f32.mrb[0].mxu0
        %v2299 = vadd.f32 %v572, %v2298
        %v2300 = vpop.f32.mrb[0].mxu0
        %v2301 = vpop.f32.mrb[0].mxu0
        %v2302 = vadd.f32 %v572, %v2301
        %v2303 = vpop.f32.mrb[0].mxu0
        %2304 = vmatprep.mubr.bf16.mxu0 0
        %2305 = vmatmul.mubr.bf16.gmra.mrb[0].mxu0 %v1470
        %v2306 = vpop.f32.mrb[0].mxu0
        %v2307 = vadd.f32 %v572, %v2306
        %v2308 = vpop.f32.mrb[0].mxu0
        %v2309 = vpop.f32.mrb[0].mxu0
        %v2310 = vadd.f32 %v572, %v2309
        %v2311 = vpop.f32.mrb[0].mxu0
        %2312 = vmatprep.mubr.bf16.mxu0 0
        %2313 = vmatmul.mubr.bf16.gmra.mrb[0].mxu0 %v1473
        %v2314 = vpop.f32.mrb[0].mxu0
        %v2315 = vadd.f32 %v572, %v2314
        %v2316 = vpop.f32.mrb[0].mxu0
        %v2317 = vpop.f32.mrb[0].mxu0
        %v2318 = vadd.f32 %v572, %v2317
        %v2319 = vpop.f32.mrb[0].mxu0
        %2320 = vmatprep.mubr.bf16.mxu0 0
        %2321 = vmatmul.mubr.bf16.gmra.mrb[0].mxu0 %v1476
        %v2322 = vpop.f32.mrb[0].mxu0
        %v2323 = vadd.f32 %v572, %v2322
        %v2324 = vpop.f32.mrb[0].mxu0
        %v2325 = vpop.f32.mrb[0].mxu0
        %v2326 = vadd.f32 %v572, %v2325
        %v2327 = vpop.f32.mrb[0].mxu0
        %2328 = vmatprep.mubr.bf16.mxu0 0
        %2329 = vmatmul.mubr.bf16.gmra.mrb[0].mxu0 %v1479
        %v2330 = vpop.f32.mrb[0].mxu0
        %v2331 = vadd.f32 %v572, %v2330
        %v2332 = vpop.f32.mrb[0].mxu0
        %v2333 = vpop.f32.mrb[0].mxu0
        %v2334 = vadd.f32 %v572, %v2333
        %v2335 = vpop.f32.mrb[0].mxu0
        %2336 = vmatprep.mubr.bf16.mxu0 0
        %2337 = vmatmul.mubr.bf16.gmra.mrb[0].mxu0 %v1482
        %v2338 = vpop.f32.mrb[0].mxu0
        %v2339 = vadd.f32 %v572, %v2338
        %v2340 = vpop.f32.mrb[0].mxu0
        %v2341 = vpop.f32.mrb[0].mxu0
        %v2342 = vadd.f32 %v572, %v2341
        %v2343 = vpop.f32.mrb[0].mxu0
        %2344 = vmatprep.mubr.bf16.mxu0 0
        %2345 = vmatmul.mubr.bf16.gmra.mrb[0].mxu0 %v1485
        %v2346 = vpop.f32.mrb[0].mxu0
        %v2347 = vadd.f32 %v572, %v2346
        %v2348 = vpop.f32.mrb[0].mxu0
        %v2349 = vpop.f32.mrb[0].mxu0
        %v2350 = vadd.f32 %v572, %v2349
        %v2351 = vpop.f32.mrb[0].mxu0
        %2352 = vmatprep.mubr.bf16.mxu0 0
        %2353 = vmatmul.mubr.bf16.gmra.mrb[0].mxu0 %v1488
        %v2354 = vpop.f32.mrb[0].mxu0
        %v2355 = vadd.f32 %v572, %v2354
        %v2356 = vpop.f32.mrb[0].mxu0
        %v2357 = vpop.f32.mrb[0].mxu0
        %v2358 = vadd.f32 %v572, %v2357
        %v2359 = vpop.f32.mrb[0].mxu0
        %2360 = vmatprep.mubr.bf16.mxu0 0
        %2361 = vmatmul.mubr.bf16.gmra.mrb[0].mxu0 %v1491
        %v2362 = vpop.f32.mrb[0].mxu0
        %v2363 = vadd.f32 %v572, %v2362
        %v2364 = vpop.f32.mrb[0].mxu0
        %v2365 = vpop.f32.mrb[0].mxu0
        %v2366 = vadd.f32 %v572, %v2365
        %v2367 = vpop.f32.mrb[0].mxu0
        %2368 = vmatprep.mubr.bf16.mxu0 0
        %2369 = vmatmul.mubr.bf16.gmra.mrb[0].mxu0 %v1494
        %v2370 = vpop.f32.mrb[0].mxu0
        %v2371 = vadd.f32 %v572, %v2370
        %v2372 = vpop.f32.mrb[0].mxu0
        %v2373 = vpop.f32.mrb[0].mxu0
        %v2374 = vadd.f32 %v572, %v2373
        %v2375 = vpop.f32.mrb[0].mxu0
        %2376 = vmatprep.mubr.bf16.mxu0 0
        %2377 = vmatmul.mubr.bf16.gmra.mrb[0].mxu0 %v1497
        %v2378 = vpop.f32.mrb[0].mxu0
        %v2379 = vadd.f32 %v572, %v2378
        %v2380 = vpop.f32.mrb[0].mxu0
        %v2381 = vpop.f32.mrb[0].mxu0
        %v2382 = vadd.f32 %v572, %v2381
        %v2383 = vpop.f32.mrb[0].mxu0
        %2384 = vmatprep.mubr.bf16.mxu0 0
        %2385 = vmatmul.mubr.bf16.gmra.mrb[0].mxu0 %v1500
        %v2386 = vpop.f32.mrb[0].mxu0
        %v2387 = vadd.f32 %v572, %v2386
        %v2388 = vpop.f32.mrb[0].mxu0
        %v2389 = vpop.f32.mrb[0].mxu0
        %v2390 = vadd.f32 %v572, %v2389
        %v2391 = vpop.f32.mrb[0].mxu0
        %2392 = vmatprep.mubr.bf16.mxu0 0
        %2393 = vmatmul.mubr.bf16.gmra.mrb[0].mxu0 %v1503
        %v2394 = vpop.f32.mrb[0].mxu0
        %v2395 = vadd.f32 %v572, %v2394
        %v2396 = vpop.f32.mrb[0].mxu0
        %v2397 = vpop.f32.mrb[0].mxu0
        %v2398 = vadd.f32 %v572, %v2397
        %v2399 = vpop.f32.mrb[0].mxu0
        %2400 = vmatprep.mubr.bf16.mxu0 0
        %2401 = vmatmul.mubr.bf16.gmra.mrb[0].mxu0 %v1506
        %v2402 = vpop.f32.mrb[0].mxu0
        %v2403 = vadd.f32 %v572, %v2402
        %v2404 = vpop.f32.mrb[0].mxu0
        %v2405 = vpop.f32.mrb[0].mxu0
        %v2406 = vadd.f32 %v572, %v2405
        %v2407 = vpop.f32.mrb[0].mxu0
        %2408 = vmatprep.mubr.bf16.mxu0 0
        %2409 = vmatmul.mubr.bf16.gmra.mrb[0].mxu0 %v1509
        %v2410 = vpop.f32.mrb[0].mxu0
        %v2411 = vadd.f32 %v572, %v2410
        %v2412 = vpop.f32.mrb[0].mxu0
        %v2413 = vpop.f32.mrb[0].mxu0
        %v2414 = vadd.f32 %v572, %v2413
        %v2415 = vpop.f32.mrb[0].mxu0
        %2416 = vmatprep.mubr.bf16.mxu0 0
        %2417 = vmatmul.mubr.bf16.gmra.mrb[0].mxu0 %v1512
        %v2418 = vpop.f32.mrb[0].mxu0
        %v2419 = vadd.f32 %v572, %v2418
        %v2420 = vpop.f32.mrb[0].mxu0
        %v2421 = vpop.f32.mrb[0].mxu0
        %v2422 = vadd.f32 %v572, %v2421
        %v2423 = vpop.f32.mrb[0].mxu0
        %2424 = vmatprep.mubr.bf16.mxu0 0
        %2425 = vmatmul.mubr.bf16.gmra.mrb[0].mxu0 %v1515
        %v2426 = vpop.f32.mrb[0].mxu0
        %v2427 = vadd.f32 %v572, %v2426
        %v2428 = vpop.f32.mrb[0].mxu0
        %v2429 = vpop.f32.mrb[0].mxu0
        %v2430 = vadd.f32 %v572, %v2429
        %v2431 = vpop.f32.mrb[0].mxu0
        %2432 = vmatprep.mubr.bf16.mxu0 0
        %2433 = vmatmul.mubr.bf16.gmra.mrb[0].mxu0 %v1518
        %v2434 = vpop.f32.mrb[0].mxu0
        %v2435 = vadd.f32 %v572, %v2434
        %v2436 = vpop.f32.mrb[0].mxu0
        %v2437 = vpop.f32.mrb[0].mxu0
        %v2438 = vadd.f32 %v572, %v2437
        %v2439 = vpop.f32.mrb[0].mxu0
        %2440 = vmatprep.mubr.bf16.mxu0 0
        %2441 = vmatmul.mubr.bf16.gmra.mrb[0].mxu0 %v1521
        %v2442 = vpop.f32.mrb[0].mxu0
        %v2443 = vadd.f32 %v572, %v2442
        %v2444 = vpop.f32.mrb[0].mxu0
        %v2445 = vpop.f32.mrb[0].mxu0
        %v2446 = vadd.f32 %v572, %v2445
        %v2447 = vpop.f32.mrb[0].mxu0
        %2448 = vmatprep.mubr.bf16.mxu0 0
        %2449 = vmatmul.mubr.bf16.gmra.mrb[0].mxu0 %v1524
        %v2450 = vpop.f32.mrb[0].mxu0
        %v2451 = vadd.f32 %v572, %v2450
        %v2452 = vpop.f32.mrb[0].mxu0
        %v2453 = vpop.f32.mrb[0].mxu0
        %v2454 = vadd.f32 %v572, %v2453
        %v2455 = vpop.f32.mrb[0].mxu0
        %2456 = vmatprep.mubr.bf16.mxu0 0
        %2457 = vmatmul.mubr.bf16.gmra.mrb[0].mxu0 %v1527
        %v2458 = vpop.f32.mrb[0].mxu0
        %v2459 = vadd.f32 %v572, %v2458
        %v2460 = vpop.f32.mrb[0].mxu0
        %v2461 = vpop.f32.mrb[0].mxu0
        %v2462 = vadd.f32 %v572, %v2461
        %v2463 = vpop.f32.mrb[0].mxu0
        %2464 = vmatprep.mubr.bf16.mxu0 0
        %2465 = vmatmul.mubr.bf16.gmra.mrb[0].mxu0 %v1530
        %v2466 = vpop.f32.mrb[0].mxu0
        %v2467 = vadd.f32 %v572, %v2466
        %v2468 = vpop.f32.mrb[0].mxu0
        %v2469 = vpop.f32.mrb[0].mxu0
        %v2470 = vadd.f32 %v572, %v2469
        %v2471 = vpop.f32.mrb[0].mxu0
        %2472 = vmatprep.mubr.bf16.mxu0 0
        %2473 = vmatmul.mubr.bf16.gmra.mrb[0].mxu0 %v1533
        %v2474 = vpop.f32.mrb[0].mxu0
        %v2475 = vadd.f32 %v572, %v2474
        %v2476 = vpop.f32.mrb[0].mxu0
        %v2477 = vpop.f32.mrb[0].mxu0
        %v2478 = vadd.f32 %v572, %v2477
        %v2479 = vpop.f32.mrb[0].mxu0
        %2480 = vmatprep.mubr.bf16.mxu0 0
        %2481 = vmatmul.mubr.bf16.gmra.mrb[0].mxu0 %v1536
        %v2482 = vpop.f32.mrb[0].mxu0
        %v2483 = vadd.f32 %v572, %v2482
        %v2484 = vpop.f32.mrb[0].mxu0
        %v2485 = vpop.f32.mrb[0].mxu0
        %v2486 = vadd.f32 %v572, %v2485
        %v2487 = vpop.f32.mrb[0].mxu0
        %2488 = vmatprep.mubr.bf16.mxu0 0
        %2489 = vmatmul.mubr.bf16.gmra.mrb[0].mxu0 %v1539
        %v2490 = vpop.f32.mrb[0].mxu0
        %v2491 = vadd.f32 %v572, %v2490
        %v2492 = vpop.f32.mrb[0].mxu0
        %v2493 = vpop.f32.mrb[0].mxu0
        %v2494 = vadd.f32 %v572, %v2493
        %v2495 = vpop.f32.mrb[0].mxu0
        %2496 = vmatprep.mubr.bf16.mxu0 0
        %2497 = vmatmul.mubr.bf16.gmra.mrb[0].mxu0 %v1542
        %v2498 = vpop.f32.mrb[0].mxu0
        %v2499 = vadd.f32 %v572, %v2498
        %v2500 = vpop.f32.mrb[0].mxu0
        %v2501 = vpop.f32.mrb[0].mxu0
        %v2502 = vadd.f32 %v572, %v2501
        %v2503 = vpop.f32.mrb[0].mxu0
        %2504 = vmatprep.mubr.bf16.mxu0 0
        %2505 = vmatmul.mubr.bf16.gmra.mrb[0].mxu0 %v1545
        %v2506 = vpop.f32.mrb[0].mxu0
        %v2507 = vadd.f32 %v572, %v2506
        %v2508 = vpop.f32.mrb[0].mxu0
        %v2509 = vpop.f32.mrb[0].mxu0
        %v2510 = vadd.f32 %v572, %v2509
        %v2511 = vpop.f32.mrb[0].mxu0
        %2512 = vmatprep.mubr.bf16.mxu0 0
        %2513 = vmatmul.mubr.bf16.gmra.mrb[0].mxu0 %v1548
        %v2514 = vpop.f32.mrb[0].mxu0
        %v2515 = vadd.f32 %v572, %v2514
        %v2516 = vpop.f32.mrb[0].mxu0
        %v2517 = vpop.f32.mrb[0].mxu0
        %v2518 = vadd.f32 %v572, %v2517
        %v2519 = vpop.f32.mrb[0].mxu0
        %2520 = vmatprep.mubr.bf16.mxu0 0
        %2521 = vmatmul.mubr.bf16.gmra.mrb[0].mxu0 %v1551
        %v2522 = vpop.f32.mrb[0].mxu0
        %v2523 = vadd.f32 %v572, %v2522
        %v2524 = vpop.f32.mrb[0].mxu0
        %v2525 = vpop.f32.mrb[0].mxu0
        %v2526 = vadd.f32 %v572, %v2525
        %v2527 = vpop.f32.mrb[0].mxu0
        %2528 = vmatprep.mubr.bf16.mxu0 0
        %2529 = vmatmul.mubr.bf16.gmra.mrb[0].mxu0 %v1554
        %v2530 = vpop.f32.mrb[0].mxu0
        %v2531 = vadd.f32 %v572, %v2530
        %v2532 = vpop.f32.mrb[0].mxu0
        %v2533 = vpop.f32.mrb[0].mxu0
        %v2534 = vadd.f32 %v572, %v2533
        %v2535 = vpop.f32.mrb[0].mxu0
        %2536 = vmatprep.mubr.bf16.mxu0 0
        %2537 = vmatmul.mubr.bf16.gmra.mrb[0].mxu0 %v1557
        %v2538 = vpop.f32.mrb[0].mxu0
        %v2539 = vadd.f32 %v572, %v2538
        %v2540 = vpop.f32.mrb[0].mxu0
        %v2541 = vpop.f32.mrb[0].mxu0
        %v2542 = vadd.f32 %v572, %v2541
        %v2543 = vpop.f32.mrb[0].mxu0
        %2544 = vmatprep.mubr.bf16.mxu0 0
        %2545 = vmatmul.mubr.bf16.gmra.mrb[0].mxu0 %v1560
        %v2546 = vpop.f32.mrb[0].mxu0
        %v2547 = vadd.f32 %v572, %v2546
        %v2548 = vpop.f32.mrb[0].mxu0
        %v2549 = vpop.f32.mrb[0].mxu0
        %v2550 = vadd.f32 %v572, %v2549
        %v2551 = vpop.f32.mrb[0].mxu0
        %2552 = vmatprep.mubr.bf16.mxu0 0
        %2553 = vmatmul.mubr.bf16.gmra.mrb[0].mxu0 %v1563
        %v2554 = vpop.f32.mrb[0].mxu0
        %v2555 = vadd.f32 %v572, %v2554
        %v2556 = vpop.f32.mrb[0].mxu0
        %v2557 = vpop.f32.mrb[0].mxu0
        %v2558 = vadd.f32 %v572, %v2557
        %v2559 = vpop.f32.mrb[0].mxu0
        %2560 = vmatprep.mubr.bf16.mxu0 0
        %2561 = vmatmul.mubr.bf16.gmra.mrb[0].mxu0 %v1566
        %v2562 = vpop.f32.mrb[0].mxu0
        %v2563 = vadd.f32 %v572, %v2562
        %v2564 = vpop.f32.mrb[0].mxu0
        %v2565 = vpop.f32.mrb[0].mxu0
        %v2566 = vadd.f32 %v572, %v2565
        %v2567 = vpop.f32.mrb[0].mxu0
        %2568 = vmatprep.mubr.bf16.mxu0 0
        %2569 = vmatmul.mubr.bf16.gmra.mrb[0].mxu0 %v1569
        %v2570 = vpop.f32.mrb[0].mxu0
        %v2571 = vadd.f32 %v572, %v2570
        %v2572 = vpop.f32.mrb[0].mxu0
        %v2573 = vpop.f32.mrb[0].mxu0
        %v2574 = vadd.f32 %v572, %v2573
        %v2575 = vpop.f32.mrb[0].mxu0
        %2576 = vmatprep.mubr.bf16.mxu0 0
        %2577 = vmatmul.mubr.bf16.gmra.mrb[0].mxu0 %v1572
        %v2578 = vpop.f32.mrb[0].mxu0
        %v2579 = vadd.f32 %v572, %v2578
        %v2580 = vpop.f32.mrb[0].mxu0
        %v2581 = vpop.f32.mrb[0].mxu0
        %v2582 = vadd.f32 %v572, %v2581
        %v2583 = vpop.f32.mrb[0].mxu0
        %2584 = vmatprep.mubr.bf16.mxu0 0
        %2585 = vmatmul.mubr.bf16.gmra.mrb[0].mxu0 %v1575
        %v2586 = vpop.f32.mrb[0].mxu0
        %v2587 = vadd.f32 %v572, %v2586
        %v2588 = vpop.f32.mrb[0].mxu0
        %v2589 = vpop.f32.mrb[0].mxu0
        %v2590 = vadd.f32 %v572, %v2589
        %v2591 = vpop.f32.mrb[0].mxu0
        %2592 = vmatprep.mubr.bf16.mxu0 0
        %2593 = vmatmul.mubr.bf16.gmra.mrb[0].mxu0 %v1578
        %v2594 = vpop.f32.mrb[0].mxu0
        %v2595 = vadd.f32 %v572, %v2594
        %v2596 = vpop.f32.mrb[0].mxu0
        %v2597 = vpop.f32.mrb[0].mxu0
        %v2598 = vadd.f32 %v572, %v2597
        %v2599 = vpop.f32.mrb[0].mxu0
        %2600 = vmatprep.mubr.bf16.mxu0 0
        %2601 = vmatmul.mubr.bf16.gmra.mrb[0].mxu0 %v1581
        %v2602 = vpop.f32.mrb[0].mxu0
        %v2603 = vadd.f32 %v572, %v2602
        %v2604 = vpop.f32.mrb[0].mxu0
        %v2605 = vpop.f32.mrb[0].mxu0
        %v2606 = vadd.f32 %v572, %v2605
        %v2607 = vpop.f32.mrb[0].mxu0
        %2608 = vmatprep.mubr.bf16.mxu0 0
        %2609 = vmatmul.mubr.bf16.gmra.mrb[0].mxu0 %v1584
        %v2610 = vpop.f32.mrb[0].mxu0
        %v2611 = vadd.f32 %v572, %v2610
        %v2612 = vpop.f32.mrb[0].mxu0
        %v2613 = vpop.f32.mrb[0].mxu0
        %v2614 = vadd.f32 %v572, %v2613
        %v2615 = vpop.f32.mrb[0].mxu0
        %2616 = vmatprep.mubr.bf16.mxu0 0
        %2617 = vmatmul.mubr.bf16.gmra.mrb[0].mxu0 %v1587
        %v2618 = vpop.f32.mrb[0].mxu0
        %v2619 = vadd.f32 %v572, %v2618
        %v2620 = vpop.f32.mrb[0].mxu0
        %v2621 = vpop.f32.mrb[0].mxu0
        %v2622 = vadd.f32 %v572, %v2621
        %v2623 = vpop.f32.mrb[0].mxu0
        %2624 = vmatprep.mubr.bf16.mxu0 0
        %2625 = vmatmul.mubr.bf16.gmra.mrb[0].mxu0 %v1590
        %v2626 = vpop.f32.mrb[0].mxu0
        %v2627 = vadd.f32 %v572, %v2626
        %v2628 = vpop.f32.mrb[0].mxu0
        %v2629 = vpop.f32.mrb[0].mxu0
        %v2630 = vadd.f32 %v572, %v2629
        %v2631 = vpop.f32.mrb[0].mxu0
        %2632 = vmatprep.mubr.bf16.mxu0 0
        %2633 = vmatmul.mubr.bf16.gmra.mrb[0].mxu0 %v1593
        %v2634 = vpop.f32.mrb[0].mxu0
        %v2635 = vadd.f32 %v572, %v2634
        %v2636 = vpop.f32.mrb[0].mxu0
        %v2637 = vpop.f32.mrb[0].mxu0
        %v2638 = vadd.f32 %v572, %v2637
        %v2639 = vpop.f32.mrb[0].mxu0
        %2640 = vmatprep.mubr.bf16.mxu0 0
        %2641 = vmatmul.mubr.bf16.gmra.mrb[0].mxu0 %v1596
        %v2642 = vpop.f32.mrb[0].mxu0
        %v2643 = vadd.f32 %v572, %v2642
        %v2644 = vpop.f32.mrb[0].mxu0
        %v2645 = vpop.f32.mrb[0].mxu0
        %v2646 = vadd.f32 %v572, %v2645
        %v2647 = vpop.f32.mrb[0].mxu0
        %2648 = vmatprep.mubr.bf16.mxu0 0
        %2649 = vmatmul.mubr.bf16.gmra.mrb[0].mxu0 %v1599
        %v2650 = vpop.f32.mrb[0].mxu0
        %v2651 = vadd.f32 %v572, %v2650
        %v2652 = vpop.f32.mrb[0].mxu0
        %v2653 = vpop.f32.mrb[0].mxu0
        %v2654 = vadd.f32 %v572, %v2653
        %v2655 = vpop.f32.mrb[0].mxu0
        %2656 = vmatprep.mubr.bf16.mxu0 0
        %2657 = vmatmul.mubr.bf16.gmra.mrb[0].mxu0 %v1602
        %v2658 = vpop.f32.mrb[0].mxu0
        %v2659 = vadd.f32 %v572, %v2658
        %v2660 = vpop.f32.mrb[0].mxu0
        %v2661 = vpop.f32.mrb[0].mxu0
        %v2662 = vadd.f32 %v572, %v2661
        %v2663 = vpop.f32.mrb[0].mxu0
        %2664 = vdwg.mxu0
        %v2665 = vmax.f32 %v1643, 0.0
        %v2666 = vmax.f32 %v1646, 0.0
        %v2667 = vmax.f32 %v1651, 0.0
        %v2668 = vmax.f32 %v1654, 0.0
        %v2669 = vmax.f32 %v1659, 0.0
        %v2670 = vmax.f32 %v1662, 0.0
        %v2671 = vmax.f32 %v1667, 0.0
        %v2672 = vmax.f32 %v1670, 0.0
        %v2673 = vmax.f32 %v1675, 0.0
        %v2674 = vmax.f32 %v1678, 0.0
        %v2675 = vmax.f32 %v1683, 0.0
        %v2676 = vmax.f32 %v1686, 0.0
        %v2677 = vmax.f32 %v1691, 0.0
        %v2678 = vmax.f32 %v1694, 0.0
        %v2679 = vmax.f32 %v1699, 0.0
        %v2680 = vmax.f32 %v1702, 0.0
        %v2681 = vmax.f32 %v1707, 0.0
        %v2682 = vmax.f32 %v1710, 0.0
        %v2683 = vmax.f32 %v1715, 0.0
        %v2684 = vmax.f32 %v1718, 0.0
        %v2685 = vmax.f32 %v1723, 0.0
        %v2686 = vmax.f32 %v1726, 0.0
        %v2687 = vmax.f32 %v1731, 0.0
        %v2688 = vmax.f32 %v1734, 0.0
        %v2689 = vmax.f32 %v1739, 0.0
        %v2690 = vmax.f32 %v1742, 0.0
        %v2691 = vmax.f32 %v1747, 0.0
        %v2692 = vmax.f32 %v1750, 0.0
        %v2693 = vmax.f32 %v1755, 0.0
        %v2694 = vmax.f32 %v1758, 0.0
        %v2695 = vmax.f32 %v1763, 0.0
        %v2696 = vmax.f32 %v1766, 0.0
        %v2697 = vmax.f32 %v1771, 0.0
        %v2698 = vmax.f32 %v1774, 0.0
        %v2699 = vmax.f32 %v1779, 0.0
        %v2700 = vmax.f32 %v1782, 0.0
        %v2701 = vmax.f32 %v1787, 0.0
        %v2702 = vmax.f32 %v1790, 0.0
        %v2703 = vmax.f32 %v1795, 0.0
        %v2704 = vmax.f32 %v1798, 0.0
        %v2705 = vmax.f32 %v1803, 0.0
        %v2706 = vmax.f32 %v1806, 0.0
        %v2707 = vmax.f32 %v1811, 0.0
        %v2708 = vmax.f32 %v1814, 0.0
        %v2709 = vmax.f32 %v1819, 0.0
        %v2710 = vmax.f32 %v1822, 0.0
        %v2711 = vmax.f32 %v1827, 0.0
        %v2712 = vmax.f32 %v1830, 0.0
        %v2713 = vmax.f32 %v1835, 0.0
        %v2714 = vmax.f32 %v1838, 0.0
        %v2715 = vmax.f32 %v1843, 0.0
        %v2716 = vmax.f32 %v1846, 0.0
        %v2717 = vmax.f32 %v1851, 0.0
        %v2718 = vmax.f32 %v1854, 0.0
        %v2719 = vmax.f32 %v1859, 0.0
        %v2720 = vmax.f32 %v1862, 0.0
        %v2721 = vmax.f32 %v1867, 0.0
        %v2722 = vmax.f32 %v1870, 0.0
        %v2723 = vmax.f32 %v1875, 0.0
        %v2724 = vmax.f32 %v1878, 0.0
        %v2725 = vmax.f32 %v1883, 0.0
        %v2726 = vmax.f32 %v1886, 0.0
        %v2727 = vmax.f32 %v1891, 0.0
        %v2728 = vmax.f32 %v1894, 0.0
        %v2729 = vmax.f32 %v1899, 0.0
        %v2730 = vmax.f32 %v1902, 0.0
        %v2731 = vmax.f32 %v1907, 0.0
        %v2732 = vmax.f32 %v1910, 0.0
        %v2733 = vmax.f32 %v1915, 0.0
        %v2734 = vmax.f32 %v1918, 0.0
        %v2735 = vmax.f32 %v1923, 0.0
        %v2736 = vmax.f32 %v1926, 0.0
        %v2737 = vmax.f32 %v1931, 0.0
        %v2738 = vmax.f32 %v1934, 0.0
        %v2739 = vmax.f32 %v1939, 0.0
        %v2740 = vmax.f32 %v1942, 0.0
        %v2741 = vmax.f32 %v1947, 0.0
        %v2742 = vmax.f32 %v1950, 0.0
        %v2743 = vmax.f32 %v1955, 0.0
        %v2744 = vmax.f32 %v1958, 0.0
        %v2745 = vmax.f32 %v1963, 0.0
        %v2746 = vmax.f32 %v1966, 0.0
        %v2747 = vmax.f32 %v1971, 0.0
        %v2748 = vmax.f32 %v1974, 0.0
        %v2749 = vmax.f32 %v1979, 0.0
        %v2750 = vmax.f32 %v1982, 0.0
        %v2751 = vmax.f32 %v1987, 0.0
        %v2752 = vmax.f32 %v1990, 0.0
        %v2753 = vmax.f32 %v1995, 0.0
        %v2754 = vmax.f32 %v1998, 0.0
        %v2755 = vmax.f32 %v2003, 0.0
        %v2756 = vmax.f32 %v2006, 0.0
        %v2757 = vmax.f32 %v2011, 0.0
        %v2758 = vmax.f32 %v2014, 0.0
        %v2759 = vmax.f32 %v2019, 0.0
        %v2760 = vmax.f32 %v2022, 0.0
        %v2761 = vmax.f32 %v2027, 0.0
        %v2762 = vmax.f32 %v2030, 0.0
        %v2763 = vmax.f32 %v2035, 0.0
        %v2764 = vmax.f32 %v2038, 0.0
        %v2765 = vmax.f32 %v2043, 0.0
        %v2766 = vmax.f32 %v2046, 0.0
        %v2767 = vmax.f32 %v2051, 0.0
        %v2768 = vmax.f32 %v2054, 0.0
        %v2769 = vmax.f32 %v2059, 0.0
        %v2770 = vmax.f32 %v2062, 0.0
        %v2771 = vmax.f32 %v2067, 0.0
        %v2772 = vmax.f32 %v2070, 0.0
        %v2773 = vmax.f32 %v2075, 0.0
        %v2774 = vmax.f32 %v2078, 0.0
        %v2775 = vmax.f32 %v2083, 0.0
        %v2776 = vmax.f32 %v2086, 0.0
        %v2777 = vmax.f32 %v2091, 0.0
        %v2778 = vmax.f32 %v2094, 0.0
        %v2779 = vmax.f32 %v2099, 0.0
        %v2780 = vmax.f32 %v2102, 0.0
        %v2781 = vmax.f32 %v2107, 0.0
        %v2782 = vmax.f32 %v2110, 0.0
        %v2783 = vmax.f32 %v2115, 0.0
        %v2784 = vmax.f32 %v2118, 0.0
        %v2785 = vmax.f32 %v2123, 0.0
        %v2786 = vmax.f32 %v2126, 0.0
        %v2787 = vmax.f32 %v2131, 0.0
        %v2788 = vmax.f32 %v2134, 0.0
        %v2789 = vmax.f32 %v2139, 0.0
        %v2790 = vmax.f32 %v2142, 0.0
        %v2791 = vmax.f32 %v2147, 0.0
        %v2792 = vmax.f32 %v2150, 0.0
        %v2793 = vmax.f32 %v2155, 0.0
        %v2794 = vmax.f32 %v2158, 0.0
        %v2795 = vmax.f32 %v2163, 0.0
        %v2796 = vmax.f32 %v2166, 0.0
        %v2797 = vmax.f32 %v2171, 0.0
        %v2798 = vmax.f32 %v2174, 0.0
        %v2799 = vmax.f32 %v2179, 0.0
        %v2800 = vmax.f32 %v2182, 0.0
        %v2801 = vmax.f32 %v2187, 0.0
        %v2802 = vmax.f32 %v2190, 0.0
        %v2803 = vmax.f32 %v2195, 0.0
        %v2804 = vmax.f32 %v2198, 0.0
        %v2805 = vmax.f32 %v2203, 0.0
        %v2806 = vmax.f32 %v2206, 0.0
        %v2807 = vmax.f32 %v2211, 0.0
        %v2808 = vmax.f32 %v2214, 0.0
        %v2809 = vmax.f32 %v2219, 0.0
        %v2810 = vmax.f32 %v2222, 0.0
        %v2811 = vmax.f32 %v2227, 0.0
        %v2812 = vmax.f32 %v2230, 0.0
        %v2813 = vmax.f32 %v2235, 0.0
        %v2814 = vmax.f32 %v2238, 0.0
        %v2815 = vmax.f32 %v2243, 0.0
        %v2816 = vmax.f32 %v2246, 0.0
        %v2817 = vmax.f32 %v2251, 0.0
        %v2818 = vmax.f32 %v2254, 0.0
        %v2819 = vmax.f32 %v2259, 0.0
        %v2820 = vmax.f32 %v2262, 0.0
        %v2821 = vmax.f32 %v2267, 0.0
        %v2822 = vmax.f32 %v2270, 0.0
        %v2823 = vmax.f32 %v2275, 0.0
        %v2824 = vmax.f32 %v2278, 0.0
        %v2825 = vmax.f32 %v2283, 0.0
        %v2826 = vmax.f32 %v2286, 0.0
        %v2827 = vmax.f32 %v2291, 0.0
        %v2828 = vmax.f32 %v2294, 0.0
        %v2829 = vmax.f32 %v2299, 0.0
        %v2830 = vmax.f32 %v2302, 0.0
        %v2831 = vmax.f32 %v2307, 0.0
        %v2832 = vmax.f32 %v2310, 0.0
        %v2833 = vmax.f32 %v2315, 0.0
        %v2834 = vmax.f32 %v2318, 0.0
        %v2835 = vmax.f32 %v2323, 0.0
        %v2836 = vmax.f32 %v2326, 0.0
        %v2837 = vmax.f32 %v2331, 0.0
        %v2838 = vmax.f32 %v2334, 0.0
        %v2839 = vmax.f32 %v2339, 0.0
        %v2840 = vmax.f32 %v2342, 0.0
        %v2841 = vmax.f32 %v2347, 0.0
        %v2842 = vmax.f32 %v2350, 0.0
        %v2843 = vmax.f32 %v2355, 0.0
        %v2844 = vmax.f32 %v2358, 0.0
        %v2845 = vmax.f32 %v2363, 0.0
        %v2846 = vmax.f32 %v2366, 0.0
        %v2847 = vmax.f32 %v2371, 0.0
        %v2848 = vmax.f32 %v2374, 0.0
        %v2849 = vmax.f32 %v2379, 0.0
        %v2850 = vmax.f32 %v2382, 0.0
        %v2851 = vmax.f32 %v2387, 0.0
        %v2852 = vmax.f32 %v2390, 0.0
        %v2853 = vmax.f32 %v2395, 0.0
        %v2854 = vmax.f32 %v2398, 0.0
        %v2855 = vmax.f32 %v2403, 0.0
        %v2856 = vmax.f32 %v2406, 0.0
        %v2857 = vmax.f32 %v2411, 0.0
        %v2858 = vmax.f32 %v2414, 0.0
        %v2859 = vmax.f32 %v2419, 0.0
        %v2860 = vmax.f32 %v2422, 0.0
        %v2861 = vmax.f32 %v2427, 0.0
        %v2862 = vmax.f32 %v2430, 0.0
        %v2863 = vmax.f32 %v2435, 0.0
        %v2864 = vmax.f32 %v2438, 0.0
        %v2865 = vmax.f32 %v2443, 0.0
        %v2866 = vmax.f32 %v2446, 0.0
        %v2867 = vmax.f32 %v2451, 0.0
        %v2868 = vmax.f32 %v2454, 0.0
        %v2869 = vmax.f32 %v2459, 0.0
        %v2870 = vmax.f32 %v2462, 0.0
        %v2871 = vmax.f32 %v2467, 0.0
        %v2872 = vmax.f32 %v2470, 0.0
        %v2873 = vmax.f32 %v2475, 0.0
        %v2874 = vmax.f32 %v2478, 0.0
        %v2875 = vmax.f32 %v2483, 0.0
        %v2876 = vmax.f32 %v2486, 0.0
        %v2877 = vmax.f32 %v2491, 0.0
        %v2878 = vmax.f32 %v2494, 0.0
        %v2879 = vmax.f32 %v2499, 0.0
        %v2880 = vmax.f32 %v2502, 0.0
        %v2881 = vmax.f32 %v2507, 0.0
        %v2882 = vmax.f32 %v2510, 0.0
        %v2883 = vmax.f32 %v2515, 0.0
        %v2884 = vmax.f32 %v2518, 0.0
        %v2885 = vmax.f32 %v2523, 0.0
        %v2886 = vmax.f32 %v2526, 0.0
        %v2887 = vmax.f32 %v2531, 0.0
        %v2888 = vmax.f32 %v2534, 0.0
        %v2889 = vmax.f32 %v2539, 0.0
        %v2890 = vmax.f32 %v2542, 0.0
        %v2891 = vmax.f32 %v2547, 0.0
        %v2892 = vmax.f32 %v2550, 0.0
        %v2893 = vmax.f32 %v2555, 0.0
        %v2894 = vmax.f32 %v2558, 0.0
        %v2895 = vmax.f32 %v2563, 0.0
        %v2896 = vmax.f32 %v2566, 0.0
        %v2897 = vmax.f32 %v2571, 0.0
        %v2898 = vmax.f32 %v2574, 0.0
        %v2899 = vmax.f32 %v2579, 0.0
        %v2900 = vmax.f32 %v2582, 0.0
        %v2901 = vmax.f32 %v2587, 0.0
        %v2902 = vmax.f32 %v2590, 0.0
        %v2903 = vmax.f32 %v2595, 0.0
        %v2904 = vmax.f32 %v2598, 0.0
        %v2905 = vmax.f32 %v2603, 0.0
        %v2906 = vmax.f32 %v2606, 0.0
        %v2907 = vmax.f32 %v2611, 0.0
        %v2908 = vmax.f32 %v2614, 0.0
        %v2909 = vmax.f32 %v2619, 0.0
        %v2910 = vmax.f32 %v2622, 0.0
        %v2911 = vmax.f32 %v2627, 0.0
        %v2912 = vmax.f32 %v2630, 0.0
        %v2913 = vmax.f32 %v2635, 0.0
        %v2914 = vmax.f32 %v2638, 0.0
        %v2915 = vmax.f32 %v2643, 0.0
        %v2916 = vmax.f32 %v2646, 0.0
        %v2917 = vmax.f32 %v2651, 0.0
        %v2918 = vmax.f32 %v2654, 0.0
        %v2919 = vmax.f32 %v2659, 0.0
        %v2920 = vmax.f32 %v2662, 0.0
        %v2921 = vpack.c.bf16 %v2666, %v2665
        %v2922 = vpack.c.bf16 %v2668, %v2667
        %v2923 = vpack.c.bf16 %v2670, %v2669
        %v2924 = vpack.c.bf16 %v2672, %v2671
        %v2925 = vpack.c.bf16 %v2674, %v2673
        %v2926 = vpack.c.bf16 %v2676, %v2675
        %v2927 = vpack.c.bf16 %v2678, %v2677
        %v2928 = vpack.c.bf16 %v2680, %v2679
        %v2929 = vpack.c.bf16 %v2682, %v2681
        %v2930 = vpack.c.bf16 %v2684, %v2683
        %v2931 = vpack.c.bf16 %v2686, %v2685
        %v2932 = vpack.c.bf16 %v2688, %v2687
        %v2933 = vpack.c.bf16 %v2690, %v2689
        %v2934 = vpack.c.bf16 %v2692, %v2691
        %v2935 = vpack.c.bf16 %v2694, %v2693
        %v2936 = vpack.c.bf16 %v2696, %v2695
        %v2937 = vpack.c.bf16 %v2698, %v2697
        %v2938 = vpack.c.bf16 %v2700, %v2699
        %v2939 = vpack.c.bf16 %v2702, %v2701
        %v2940 = vpack.c.bf16 %v2704, %v2703
        %v2941 = vpack.c.bf16 %v2706, %v2705
        %v2942 = vpack.c.bf16 %v2708, %v2707
        %v2943 = vpack.c.bf16 %v2710, %v2709
        %v2944 = vpack.c.bf16 %v2712, %v2711
        %v2945 = vpack.c.bf16 %v2714, %v2713
        %v2946 = vpack.c.bf16 %v2716, %v2715
        %v2947 = vpack.c.bf16 %v2718, %v2717
        %v2948 = vpack.c.bf16 %v2720, %v2719
        %v2949 = vpack.c.bf16 %v2722, %v2721
        %v2950 = vpack.c.bf16 %v2724, %v2723
        %v2951 = vpack.c.bf16 %v2726, %v2725
        %v2952 = vpack.c.bf16 %v2728, %v2727
        %v2953 = vpack.c.bf16 %v2730, %v2729
        %v2954 = vpack.c.bf16 %v2732, %v2731
        %v2955 = vpack.c.bf16 %v2734, %v2733
        %v2956 = vpack.c.bf16 %v2736, %v2735
        %v2957 = vpack.c.bf16 %v2738, %v2737
        %v2958 = vpack.c.bf16 %v2740, %v2739
        %v2959 = vpack.c.bf16 %v2742, %v2741
        %v2960 = vpack.c.bf16 %v2744, %v2743
        %v2961 = vpack.c.bf16 %v2746, %v2745
        %v2962 = vpack.c.bf16 %v2748, %v2747
        %v2963 = vpack.c.bf16 %v2750, %v2749
        %v2964 = vpack.c.bf16 %v2752, %v2751
        %v2965 = vpack.c.bf16 %v2754, %v2753
        %v2966 = vpack.c.bf16 %v2756, %v2755
        %v2967 = vpack.c.bf16 %v2758, %v2757
        %v2968 = vpack.c.bf16 %v2760, %v2759
        %v2969 = vpack.c.bf16 %v2762, %v2761
        %v2970 = vpack.c.bf16 %v2764, %v2763
        %v2971 = vpack.c.bf16 %v2766, %v2765
        %v2972 = vpack.c.bf16 %v2768, %v2767
        %v2973 = vpack.c.bf16 %v2770, %v2769
        %v2974 = vpack.c.bf16 %v2772, %v2771
        %v2975 = vpack.c.bf16 %v2774, %v2773
        %v2976 = vpack.c.bf16 %v2776, %v2775
        %v2977 = vpack.c.bf16 %v2778, %v2777
        %v2978 = vpack.c.bf16 %v2780, %v2779
        %v2979 = vpack.c.bf16 %v2782, %v2781
        %v2980 = vpack.c.bf16 %v2784, %v2783
        %v2981 = vpack.c.bf16 %v2786, %v2785
        %v2982 = vpack.c.bf16 %v2788, %v2787
        %v2983 = vpack.c.bf16 %v2790, %v2789
        %v2984 = vpack.c.bf16 %v2792, %v2791
        %v2985 = vpack.c.bf16 %v2794, %v2793
        %v2986 = vpack.c.bf16 %v2796, %v2795
        %v2987 = vpack.c.bf16 %v2798, %v2797
        %v2988 = vpack.c.bf16 %v2800, %v2799
        %v2989 = vpack.c.bf16 %v2802, %v2801
        %v2990 = vpack.c.bf16 %v2804, %v2803
        %v2991 = vpack.c.bf16 %v2806, %v2805
        %v2992 = vpack.c.bf16 %v2808, %v2807
        %v2993 = vpack.c.bf16 %v2810, %v2809
        %v2994 = vpack.c.bf16 %v2812, %v2811
        %v2995 = vpack.c.bf16 %v2814, %v2813
        %v2996 = vpack.c.bf16 %v2816, %v2815
        %v2997 = vpack.c.bf16 %v2818, %v2817
        %v2998 = vpack.c.bf16 %v2820, %v2819
        %v2999 = vpack.c.bf16 %v2822, %v2821
        %v3000 = vpack.c.bf16 %v2824, %v2823
        %v3001 = vpack.c.bf16 %v2826, %v2825
        %v3002 = vpack.c.bf16 %v2828, %v2827
        %v3003 = vpack.c.bf16 %v2830, %v2829
        %v3004 = vpack.c.bf16 %v2832, %v2831
        %v3005 = vpack.c.bf16 %v2834, %v2833
        %v3006 = vpack.c.bf16 %v2836, %v2835
        %v3007 = vpack.c.bf16 %v2838, %v2837
        %v3008 = vpack.c.bf16 %v2840, %v2839
        %v3009 = vpack.c.bf16 %v2842, %v2841
        %v3010 = vpack.c.bf16 %v2844, %v2843
        %v3011 = vpack.c.bf16 %v2846, %v2845
        %v3012 = vpack.c.bf16 %v2848, %v2847
        %v3013 = vpack.c.bf16 %v2850, %v2849
        %v3014 = vpack.c.bf16 %v2852, %v2851
        %v3015 = vpack.c.bf16 %v2854, %v2853
        %v3016 = vpack.c.bf16 %v2856, %v2855
        %v3017 = vpack.c.bf16 %v2858, %v2857
        %v3018 = vpack.c.bf16 %v2860, %v2859
        %v3019 = vpack.c.bf16 %v2862, %v2861
        %v3020 = vpack.c.bf16 %v2864, %v2863
        %v3021 = vpack.c.bf16 %v2866, %v2865
        %v3022 = vpack.c.bf16 %v2868, %v2867
        %v3023 = vpack.c.bf16 %v2870, %v2869
        %v3024 = vpack.c.bf16 %v2872, %v2871
        %v3025 = vpack.c.bf16 %v2874, %v2873
        %v3026 = vpack.c.bf16 %v2876, %v2875
        %v3027 = vpack.c.bf16 %v2878, %v2877
        %v3028 = vpack.c.bf16 %v2880, %v2879
        %v3029 = vpack.c.bf16 %v2882, %v2881
        %v3030 = vpack.c.bf16 %v2884, %v2883
        %v3031 = vpack.c.bf16 %v2886, %v2885
        %v3032 = vpack.c.bf16 %v2888, %v2887
        %v3033 = vpack.c.bf16 %v2890, %v2889
        %v3034 = vpack.c.bf16 %v2892, %v2891
        %v3035 = vpack.c.bf16 %v2894, %v2893
        %v3036 = vpack.c.bf16 %v2896, %v2895
        %v3037 = vpack.c.bf16 %v2898, %v2897
        %v3038 = vpack.c.bf16 %v2900, %v2899
        %v3039 = vpack.c.bf16 %v2902, %v2901
        %v3040 = vpack.c.bf16 %v2904, %v2903
        %v3041 = vpack.c.bf16 %v2906, %v2905
        %v3042 = vpack.c.bf16 %v2908, %v2907
        %v3043 = vpack.c.bf16 %v2910, %v2909
        %v3044 = vpack.c.bf16 %v2912, %v2911
        %v3045 = vpack.c.bf16 %v2914, %v2913
        %v3046 = vpack.c.bf16 %v2916, %v2915
        %v3047 = vpack.c.bf16 %v2918, %v2917
        %v3048 = vpack.c.bf16 %v2920, %v2919
        %v3049 = vld [vmem:[%s3] sm:$0xf]
        %v3050 = vld [vmem:[%s3 + $0x4] sm:$0xf]
        %v3051 = vld [vmem:[%s3 + $0x8] sm:$0xf]
        %v3052 = vld [vmem:[%s3 + $0xc] sm:$0xf]
        %v3053 = vld [vmem:[%s3 + $0x10] sm:$0xf]
        %v3054 = vld [vmem:[%s3 + $0x14] sm:$0xf]
        %v3055 = vld [vmem:[%s3 + $0x18] sm:$0xf]
        %v3056 = vld [vmem:[%s3 + $0x1c] sm:$0xf]
        %v3057 = vld [vmem:[%s3 + $0x20] sm:$0xf]
        %v3058 = vld [vmem:[%s3 + $0x24] sm:$0xf]
        %v3059 = vld [vmem:[%s3 + $0x28] sm:$0xf]
        %v3060 = vld [vmem:[%s3 + $0x2c] sm:$0xf]
        %v3061 = vld [vmem:[%s3 + $0x30] sm:$0xf]
        %v3062 = vld [vmem:[%s3 + $0x34] sm:$0xf]
        %v3063 = vld [vmem:[%s3 + $0x38] sm:$0xf]
        %v3064 = vld [vmem:[%s3 + $0x3c] sm:$0xf]
        %v3065 = vld [vmem:[%s4] sm:$0x1]
        %v3067 = vlaneseq
        %v3068 = vshrl.u32 %v3067, 7
        %v3069 = vsub.s32 0, %v3068
        %v3070 = vrot.slane %v3065, %v3069
        %v3088 = vunpack.c.l.b16 %v3049
        %v3089 = vunpack.c.l.b16 %v3050
        %v3090 = vunpack.c.l.b16 %v3051
        %v3091 = vunpack.c.l.b16 %v3052
        %v3092 = vunpack.c.l.b16 %v3053
        %v3093 = vunpack.c.l.b16 %v3054
        %v3094 = vunpack.c.l.b16 %v3055
        %v3095 = vunpack.c.l.b16 %v3056
        %v3096 = vunpack.c.l.b16 %v3057
        %v3097 = vunpack.c.l.b16 %v3058
        %v3098 = vunpack.c.l.b16 %v3059
        %v3099 = vunpack.c.l.b16 %v3060
        %v3100 = vunpack.c.l.b16 %v3061
        %v3101 = vunpack.c.l.b16 %v3062
        %v3102 = vunpack.c.l.b16 %v3063
        %v3103 = vunpack.c.l.b16 %v3064
        %v3104 = vpack.c.b16 %v3089, %v3088
        %v3105 = vpack.c.b16 %v3091, %v3090
        %v3106 = vpack.c.b16 %v3093, %v3092
        %v3107 = vpack.c.b16 %v3095, %v3094
        %v3108 = vpack.c.b16 %v3097, %v3096
        %v3109 = vpack.c.b16 %v3099, %v3098
        %v3110 = vpack.c.b16 %v3101, %v3100
        %v3111 = vpack.c.b16 %v3103, %v3102
        %3120 = vmatprep.subr.bf16.mxu0 0
        %3121 = vmatpush1.bf16.msra.mxu0 %v3104
        %3122 = vmatprep.subr.bf16.mxu0 0
        %3123 = vmatpush1.bf16.msra.mxu0 %v3105
        %3124 = vmatprep.subr.bf16.mxu0 0
        %3125 = vmatpush1.bf16.msra.mxu0 %v3106
        %3126 = vmatprep.subr.bf16.mxu0 0
        %3127 = vmatpush1.bf16.msra.mxu0 %v3107
        %3128 = vmatprep.subr.bf16.mxu0 0
        %3129 = vmatpush1.bf16.msra.mxu0 %v3108
        %3130 = vmatprep.subr.bf16.mxu0 0
        %3131 = vmatpush1.bf16.msra.mxu0 %v3109
        %3132 = vmatprep.subr.bf16.mxu0 0
        %3133 = vmatpush1.bf16.msra.mxu0 %v3110
        %3134 = vmatprep.subr.bf16.mxu0 0
        %3135 = vmatpush1.bf16.msra.mxu0 %v3111
        %3136 = vmatprep.subr.bf16.mxu0 0
        %3137 = vmatpush1.bf16.msra.mxu0 0
        %3138 = vmatprep.subr.bf16.mxu0 0
        %3139 = vmatpush1.bf16.msra.mxu0 0
        %3140 = vmatprep.subr.bf16.mxu0 0
        %3141 = vmatpush1.bf16.msra.mxu0 0
        %3142 = vmatprep.subr.bf16.mxu0 0
        %3143 = vmatpush1.bf16.msra.mxu0 0
        %3144 = vmatprep.subr.bf16.mxu0 0
        %3145 = vmatpush1.bf16.msra.mxu0 0
        %3146 = vmatprep.subr.bf16.mxu0 0
        %3147 = vmatpush1.bf16.msra.mxu0 0
        %3148 = vmatprep.subr.bf16.mxu0 0
        %3149 = vmatpush1.bf16.msra.mxu0 0
        %3150 = vmatprep.subr.bf16.mxu0 0
        %3151 = vmatpush1.bf16.msra.mxu0 0
        %3152 = vmatprep.mubr.bf16.mxu0 0
        %3153 = vmatmul.mubr.bf16.gmra.mrb[0].mxu0 %v2921
        %v3154 = vpop.f32.mrb[0].mxu0
        %v3155 = vadd.f32 %v3070, %v3154
        %v3156 = vpop.f32.mrb[0].mxu0
        %v3157 = vpop.f32.mrb[0].mxu0
        %v3158 = vadd.f32 %v3070, %v3157
        %v3159 = vpop.f32.mrb[0].mxu0
        %3160 = vmatprep.mubr.bf16.mxu0 0
        %3161 = vmatmul.mubr.bf16.gmra.mrb[0].mxu0 %v2922
        %v3162 = vpop.f32.mrb[0].mxu0
        %v3163 = vadd.f32 %v3070, %v3162
        %v3164 = vpop.f32.mrb[0].mxu0
        %v3165 = vpop.f32.mrb[0].mxu0
        %v3166 = vadd.f32 %v3070, %v3165
        %v3167 = vpop.f32.mrb[0].mxu0
        %3168 = vmatprep.mubr.bf16.mxu0 0
        %3169 = vmatmul.mubr.bf16.gmra.mrb[0].mxu0 %v2923
        %v3170 = vpop.f32.mrb[0].mxu0
        %v3171 = vadd.f32 %v3070, %v3170
        %v3172 = vpop.f32.mrb[0].mxu0
        %v3173 = vpop.f32.mrb[0].mxu0
        %v3174 = vadd.f32 %v3070, %v3173
        %v3175 = vpop.f32.mrb[0].mxu0
        %3176 = vmatprep.mubr.bf16.mxu0 0
        %3177 = vmatmul.mubr.bf16.gmra.mrb[0].mxu0 %v2924
        %v3178 = vpop.f32.mrb[0].mxu0
        %v3179 = vadd.f32 %v3070, %v3178
        %v3180 = vpop.f32.mrb[0].mxu0
        %v3181 = vpop.f32.mrb[0].mxu0
        %v3182 = vadd.f32 %v3070, %v3181
        %v3183 = vpop.f32.mrb[0].mxu0
        %3184 = vmatprep.mubr.bf16.mxu0 0
        %3185 = vmatmul.mubr.bf16.gmra.mrb[0].mxu0 %v2925
        %v3186 = vpop.f32.mrb[0].mxu0
        %v3187 = vadd.f32 %v3070, %v3186
        %v3188 = vpop.f32.mrb[0].mxu0
        %v3189 = vpop.f32.mrb[0].mxu0
        %v3190 = vadd.f32 %v3070, %v3189
        %v3191 = vpop.f32.mrb[0].mxu0
        %3192 = vmatprep.mubr.bf16.mxu0 0
        %3193 = vmatmul.mubr.bf16.gmra.mrb[0].mxu0 %v2926
        %v3194 = vpop.f32.mrb[0].mxu0
        %v3195 = vadd.f32 %v3070, %v3194
        %v3196 = vpop.f32.mrb[0].mxu0
        %v3197 = vpop.f32.mrb[0].mxu0
        %v3198 = vadd.f32 %v3070, %v3197
        %v3199 = vpop.f32.mrb[0].mxu0
        %3200 = vmatprep.mubr.bf16.mxu0 0
        %3201 = vmatmul.mubr.bf16.gmra.mrb[0].mxu0 %v2927
        %v3202 = vpop.f32.mrb[0].mxu0
        %v3203 = vadd.f32 %v3070, %v3202
        %v3204 = vpop.f32.mrb[0].mxu0
        %v3205 = vpop.f32.mrb[0].mxu0
        %v3206 = vadd.f32 %v3070, %v3205
        %v3207 = vpop.f32.mrb[0].mxu0
        %3208 = vmatprep.mubr.bf16.mxu0 0
        %3209 = vmatmul.mubr.bf16.gmra.mrb[0].mxu0 %v2928
        %v3210 = vpop.f32.mrb[0].mxu0
        %v3211 = vadd.f32 %v3070, %v3210
        %v3212 = vpop.f32.mrb[0].mxu0
        %v3213 = vpop.f32.mrb[0].mxu0
        %v3214 = vadd.f32 %v3070, %v3213
        %v3215 = vpop.f32.mrb[0].mxu0
        %3216 = vmatprep.mubr.bf16.mxu0 0
        %3217 = vmatmul.mubr.bf16.gmra.mrb[0].mxu0 %v2929
        %v3218 = vpop.f32.mrb[0].mxu0
        %v3219 = vadd.f32 %v3070, %v3218
        %v3220 = vpop.f32.mrb[0].mxu0
        %v3221 = vpop.f32.mrb[0].mxu0
        %v3222 = vadd.f32 %v3070, %v3221
        %v3223 = vpop.f32.mrb[0].mxu0
        %3224 = vmatprep.mubr.bf16.mxu0 0
        %3225 = vmatmul.mubr.bf16.gmra.mrb[0].mxu0 %v2930
        %v3226 = vpop.f32.mrb[0].mxu0
        %v3227 = vadd.f32 %v3070, %v3226
        %v3228 = vpop.f32.mrb[0].mxu0
        %v3229 = vpop.f32.mrb[0].mxu0
        %v3230 = vadd.f32 %v3070, %v3229
        %v3231 = vpop.f32.mrb[0].mxu0
        %3232 = vmatprep.mubr.bf16.mxu0 0
        %3233 = vmatmul.mubr.bf16.gmra.mrb[0].mxu0 %v2931
        %v3234 = vpop.f32.mrb[0].mxu0
        %v3235 = vadd.f32 %v3070, %v3234
        %v3236 = vpop.f32.mrb[0].mxu0
        %v3237 = vpop.f32.mrb[0].mxu0
        %v3238 = vadd.f32 %v3070, %v3237
        %v3239 = vpop.f32.mrb[0].mxu0
        %3240 = vmatprep.mubr.bf16.mxu0 0
        %3241 = vmatmul.mubr.bf16.gmra.mrb[0].mxu0 %v2932
        %v3242 = vpop.f32.mrb[0].mxu0
        %v3243 = vadd.f32 %v3070, %v3242
        %v3244 = vpop.f32.mrb[0].mxu0
        %v3245 = vpop.f32.mrb[0].mxu0
        %v3246 = vadd.f32 %v3070, %v3245
        %v3247 = vpop.f32.mrb[0].mxu0
        %3248 = vmatprep.mubr.bf16.mxu0 0
        %3249 = vmatmul.mubr.bf16.gmra.mrb[0].mxu0 %v2933
        %v3250 = vpop.f32.mrb[0].mxu0
        %v3251 = vadd.f32 %v3070, %v3250
        %v3252 = vpop.f32.mrb[0].mxu0
        %v3253 = vpop.f32.mrb[0].mxu0
        %v3254 = vadd.f32 %v3070, %v3253
        %v3255 = vpop.f32.mrb[0].mxu0
        %3256 = vmatprep.mubr.bf16.mxu0 0
        %3257 = vmatmul.mubr.bf16.gmra.mrb[0].mxu0 %v2934
        %v3258 = vpop.f32.mrb[0].mxu0
        %v3259 = vadd.f32 %v3070, %v3258
        %v3260 = vpop.f32.mrb[0].mxu0
        %v3261 = vpop.f32.mrb[0].mxu0
        %v3262 = vadd.f32 %v3070, %v3261
        %v3263 = vpop.f32.mrb[0].mxu0
        %3264 = vmatprep.mubr.bf16.mxu0 0
        %3265 = vmatmul.mubr.bf16.gmra.mrb[0].mxu0 %v2935
        %v3266 = vpop.f32.mrb[0].mxu0
        %v3267 = vadd.f32 %v3070, %v3266
        %v3268 = vpop.f32.mrb[0].mxu0
        %v3269 = vpop.f32.mrb[0].mxu0
        %v3270 = vadd.f32 %v3070, %v3269
        %v3271 = vpop.f32.mrb[0].mxu0
        %3272 = vmatprep.mubr.bf16.mxu0 0
        %3273 = vmatmul.mubr.bf16.gmra.mrb[0].mxu0 %v2936
        %v3274 = vpop.f32.mrb[0].mxu0
        %v3275 = vadd.f32 %v3070, %v3274
        %v3276 = vpop.f32.mrb[0].mxu0
        %v3277 = vpop.f32.mrb[0].mxu0
        %v3278 = vadd.f32 %v3070, %v3277
        %v3279 = vpop.f32.mrb[0].mxu0
        %3280 = vmatprep.mubr.bf16.mxu0 0
        %3281 = vmatmul.mubr.bf16.gmra.mrb[0].mxu0 %v2937
        %v3282 = vpop.f32.mrb[0].mxu0
        %v3283 = vadd.f32 %v3070, %v3282
        %v3284 = vpop.f32.mrb[0].mxu0
        %v3285 = vpop.f32.mrb[0].mxu0
        %v3286 = vadd.f32 %v3070, %v3285
        %v3287 = vpop.f32.mrb[0].mxu0
        %3288 = vmatprep.mubr.bf16.mxu0 0
        %3289 = vmatmul.mubr.bf16.gmra.mrb[0].mxu0 %v2938
        %v3290 = vpop.f32.mrb[0].mxu0
        %v3291 = vadd.f32 %v3070, %v3290
        %v3292 = vpop.f32.mrb[0].mxu0
        %v3293 = vpop.f32.mrb[0].mxu0
        %v3294 = vadd.f32 %v3070, %v3293
        %v3295 = vpop.f32.mrb[0].mxu0
        %3296 = vmatprep.mubr.bf16.mxu0 0
        %3297 = vmatmul.mubr.bf16.gmra.mrb[0].mxu0 %v2939
        %v3298 = vpop.f32.mrb[0].mxu0
        %v3299 = vadd.f32 %v3070, %v3298
        %v3300 = vpop.f32.mrb[0].mxu0
        %v3301 = vpop.f32.mrb[0].mxu0
        %v3302 = vadd.f32 %v3070, %v3301
        %v3303 = vpop.f32.mrb[0].mxu0
        %3304 = vmatprep.mubr.bf16.mxu0 0
        %3305 = vmatmul.mubr.bf16.gmra.mrb[0].mxu0 %v2940
        %v3306 = vpop.f32.mrb[0].mxu0
        %v3307 = vadd.f32 %v3070, %v3306
        %v3308 = vpop.f32.mrb[0].mxu0
        %v3309 = vpop.f32.mrb[0].mxu0
        %v3310 = vadd.f32 %v3070, %v3309
        %v3311 = vpop.f32.mrb[0].mxu0
        %3312 = vmatprep.mubr.bf16.mxu0 0
        %3313 = vmatmul.mubr.bf16.gmra.mrb[0].mxu0 %v2941
        %v3314 = vpop.f32.mrb[0].mxu0
        %v3315 = vadd.f32 %v3070, %v3314
        %v3316 = vpop.f32.mrb[0].mxu0
        %v3317 = vpop.f32.mrb[0].mxu0
        %v3318 = vadd.f32 %v3070, %v3317
        %v3319 = vpop.f32.mrb[0].mxu0
        %3320 = vmatprep.mubr.bf16.mxu0 0
        %3321 = vmatmul.mubr.bf16.gmra.mrb[0].mxu0 %v2942
        %v3322 = vpop.f32.mrb[0].mxu0
        %v3323 = vadd.f32 %v3070, %v3322
        %v3324 = vpop.f32.mrb[0].mxu0
        %v3325 = vpop.f32.mrb[0].mxu0
        %v3326 = vadd.f32 %v3070, %v3325
        %v3327 = vpop.f32.mrb[0].mxu0
        %3328 = vmatprep.mubr.bf16.mxu0 0
        %3329 = vmatmul.mubr.bf16.gmra.mrb[0].mxu0 %v2943
        %v3330 = vpop.f32.mrb[0].mxu0
        %v3331 = vadd.f32 %v3070, %v3330
        %v3332 = vpop.f32.mrb[0].mxu0
        %v3333 = vpop.f32.mrb[0].mxu0
        %v3334 = vadd.f32 %v3070, %v3333
        %v3335 = vpop.f32.mrb[0].mxu0
        %3336 = vmatprep.mubr.bf16.mxu0 0
        %3337 = vmatmul.mubr.bf16.gmra.mrb[0].mxu0 %v2944
        %v3338 = vpop.f32.mrb[0].mxu0
        %v3339 = vadd.f32 %v3070, %v3338
        %v3340 = vpop.f32.mrb[0].mxu0
        %v3341 = vpop.f32.mrb[0].mxu0
        %v3342 = vadd.f32 %v3070, %v3341
        %v3343 = vpop.f32.mrb[0].mxu0
        %3344 = vmatprep.mubr.bf16.mxu0 0
        %3345 = vmatmul.mubr.bf16.gmra.mrb[0].mxu0 %v2945
        %v3346 = vpop.f32.mrb[0].mxu0
        %v3347 = vadd.f32 %v3070, %v3346
        %v3348 = vpop.f32.mrb[0].mxu0
        %v3349 = vpop.f32.mrb[0].mxu0
        %v3350 = vadd.f32 %v3070, %v3349
        %v3351 = vpop.f32.mrb[0].mxu0
        %3352 = vmatprep.mubr.bf16.mxu0 0
        %3353 = vmatmul.mubr.bf16.gmra.mrb[0].mxu0 %v2946
        %v3354 = vpop.f32.mrb[0].mxu0
        %v3355 = vadd.f32 %v3070, %v3354
        %v3356 = vpop.f32.mrb[0].mxu0
        %v3357 = vpop.f32.mrb[0].mxu0
        %v3358 = vadd.f32 %v3070, %v3357
        %v3359 = vpop.f32.mrb[0].mxu0
        %3360 = vmatprep.mubr.bf16.mxu0 0
        %3361 = vmatmul.mubr.bf16.gmra.mrb[0].mxu0 %v2947
        %v3362 = vpop.f32.mrb[0].mxu0
        %v3363 = vadd.f32 %v3070, %v3362
        %v3364 = vpop.f32.mrb[0].mxu0
        %v3365 = vpop.f32.mrb[0].mxu0
        %v3366 = vadd.f32 %v3070, %v3365
        %v3367 = vpop.f32.mrb[0].mxu0
        %3368 = vmatprep.mubr.bf16.mxu0 0
        %3369 = vmatmul.mubr.bf16.gmra.mrb[0].mxu0 %v2948
        %v3370 = vpop.f32.mrb[0].mxu0
        %v3371 = vadd.f32 %v3070, %v3370
        %v3372 = vpop.f32.mrb[0].mxu0
        %v3373 = vpop.f32.mrb[0].mxu0
        %v3374 = vadd.f32 %v3070, %v3373
        %v3375 = vpop.f32.mrb[0].mxu0
        %3376 = vmatprep.mubr.bf16.mxu0 0
        %3377 = vmatmul.mubr.bf16.gmra.mrb[0].mxu0 %v2949
        %v3378 = vpop.f32.mrb[0].mxu0
        %v3379 = vadd.f32 %v3070, %v3378
        %v3380 = vpop.f32.mrb[0].mxu0
        %v3381 = vpop.f32.mrb[0].mxu0
        %v3382 = vadd.f32 %v3070, %v3381
        %v3383 = vpop.f32.mrb[0].mxu0
        %3384 = vmatprep.mubr.bf16.mxu0 0
        %3385 = vmatmul.mubr.bf16.gmra.mrb[0].mxu0 %v2950
        %v3386 = vpop.f32.mrb[0].mxu0
        %v3387 = vadd.f32 %v3070, %v3386
        %v3388 = vpop.f32.mrb[0].mxu0
        %v3389 = vpop.f32.mrb[0].mxu0
        %v3390 = vadd.f32 %v3070, %v3389
        %v3391 = vpop.f32.mrb[0].mxu0
        %3392 = vmatprep.mubr.bf16.mxu0 0
        %3393 = vmatmul.mubr.bf16.gmra.mrb[0].mxu0 %v2951
        %v3394 = vpop.f32.mrb[0].mxu0
        %v3395 = vadd.f32 %v3070, %v3394
        %v3396 = vpop.f32.mrb[0].mxu0
        %v3397 = vpop.f32.mrb[0].mxu0
        %v3398 = vadd.f32 %v3070, %v3397
        %v3399 = vpop.f32.mrb[0].mxu0
        %3400 = vmatprep.mubr.bf16.mxu0 0
        %3401 = vmatmul.mubr.bf16.gmra.mrb[0].mxu0 %v2952
        %v3402 = vpop.f32.mrb[0].mxu0
        %v3403 = vadd.f32 %v3070, %v3402
        %v3404 = vpop.f32.mrb[0].mxu0
        %v3405 = vpop.f32.mrb[0].mxu0
        %v3406 = vadd.f32 %v3070, %v3405
        %v3407 = vpop.f32.mrb[0].mxu0
        %3408 = vmatprep.mubr.bf16.mxu0 0
        %3409 = vmatmul.mubr.bf16.gmra.mrb[0].mxu0 %v2953
        %v3410 = vpop.f32.mrb[0].mxu0
        %v3411 = vadd.f32 %v3070, %v3410
        %v3412 = vpop.f32.mrb[0].mxu0
        %v3413 = vpop.f32.mrb[0].mxu0
        %v3414 = vadd.f32 %v3070, %v3413
        %v3415 = vpop.f32.mrb[0].mxu0
        %3416 = vmatprep.mubr.bf16.mxu0 0
        %3417 = vmatmul.mubr.bf16.gmra.mrb[0].mxu0 %v2954
        %v3418 = vpop.f32.mrb[0].mxu0
        %v3419 = vadd.f32 %v3070, %v3418
        %v3420 = vpop.f32.mrb[0].mxu0
        %v3421 = vpop.f32.mrb[0].mxu0
        %v3422 = vadd.f32 %v3070, %v3421
        %v3423 = vpop.f32.mrb[0].mxu0
        %3424 = vmatprep.mubr.bf16.mxu0 0
        %3425 = vmatmul.mubr.bf16.gmra.mrb[0].mxu0 %v2955
        %v3426 = vpop.f32.mrb[0].mxu0
        %v3427 = vadd.f32 %v3070, %v3426
        %v3428 = vpop.f32.mrb[0].mxu0
        %v3429 = vpop.f32.mrb[0].mxu0
        %v3430 = vadd.f32 %v3070, %v3429
        %v3431 = vpop.f32.mrb[0].mxu0
        %3432 = vmatprep.mubr.bf16.mxu0 0
        %3433 = vmatmul.mubr.bf16.gmra.mrb[0].mxu0 %v2956
        %v3434 = vpop.f32.mrb[0].mxu0
        %v3435 = vadd.f32 %v3070, %v3434
        %v3436 = vpop.f32.mrb[0].mxu0
        %v3437 = vpop.f32.mrb[0].mxu0
        %v3438 = vadd.f32 %v3070, %v3437
        %v3439 = vpop.f32.mrb[0].mxu0
        %3440 = vmatprep.mubr.bf16.mxu0 0
        %3441 = vmatmul.mubr.bf16.gmra.mrb[0].mxu0 %v2957
        %v3442 = vpop.f32.mrb[0].mxu0
        %v3443 = vadd.f32 %v3070, %v3442
        %v3444 = vpop.f32.mrb[0].mxu0
        %v3445 = vpop.f32.mrb[0].mxu0
        %v3446 = vadd.f32 %v3070, %v3445
        %v3447 = vpop.f32.mrb[0].mxu0
        %3448 = vmatprep.mubr.bf16.mxu0 0
        %3449 = vmatmul.mubr.bf16.gmra.mrb[0].mxu0 %v2958
        %v3450 = vpop.f32.mrb[0].mxu0
        %v3451 = vadd.f32 %v3070, %v3450
        %v3452 = vpop.f32.mrb[0].mxu0
        %v3453 = vpop.f32.mrb[0].mxu0
        %v3454 = vadd.f32 %v3070, %v3453
        %v3455 = vpop.f32.mrb[0].mxu0
        %3456 = vmatprep.mubr.bf16.mxu0 0
        %3457 = vmatmul.mubr.bf16.gmra.mrb[0].mxu0 %v2959
        %v3458 = vpop.f32.mrb[0].mxu0
        %v3459 = vadd.f32 %v3070, %v3458
        %v3460 = vpop.f32.mrb[0].mxu0
        %v3461 = vpop.f32.mrb[0].mxu0
        %v3462 = vadd.f32 %v3070, %v3461
        %v3463 = vpop.f32.mrb[0].mxu0
        %3464 = vmatprep.mubr.bf16.mxu0 0
        %3465 = vmatmul.mubr.bf16.gmra.mrb[0].mxu0 %v2960
        %v3466 = vpop.f32.mrb[0].mxu0
        %v3467 = vadd.f32 %v3070, %v3466
        %v3468 = vpop.f32.mrb[0].mxu0
        %v3469 = vpop.f32.mrb[0].mxu0
        %v3470 = vadd.f32 %v3070, %v3469
        %v3471 = vpop.f32.mrb[0].mxu0
        %3472 = vmatprep.mubr.bf16.mxu0 0
        %3473 = vmatmul.mubr.bf16.gmra.mrb[0].mxu0 %v2961
        %v3474 = vpop.f32.mrb[0].mxu0
        %v3475 = vadd.f32 %v3070, %v3474
        %v3476 = vpop.f32.mrb[0].mxu0
        %v3477 = vpop.f32.mrb[0].mxu0
        %v3478 = vadd.f32 %v3070, %v3477
        %v3479 = vpop.f32.mrb[0].mxu0
        %3480 = vmatprep.mubr.bf16.mxu0 0
        %3481 = vmatmul.mubr.bf16.gmra.mrb[0].mxu0 %v2962
        %v3482 = vpop.f32.mrb[0].mxu0
        %v3483 = vadd.f32 %v3070, %v3482
        %v3484 = vpop.f32.mrb[0].mxu0
        %v3485 = vpop.f32.mrb[0].mxu0
        %v3486 = vadd.f32 %v3070, %v3485
        %v3487 = vpop.f32.mrb[0].mxu0
        %3488 = vmatprep.mubr.bf16.mxu0 0
        %3489 = vmatmul.mubr.bf16.gmra.mrb[0].mxu0 %v2963
        %v3490 = vpop.f32.mrb[0].mxu0
        %v3491 = vadd.f32 %v3070, %v3490
        %v3492 = vpop.f32.mrb[0].mxu0
        %v3493 = vpop.f32.mrb[0].mxu0
        %v3494 = vadd.f32 %v3070, %v3493
        %v3495 = vpop.f32.mrb[0].mxu0
        %3496 = vmatprep.mubr.bf16.mxu0 0
        %3497 = vmatmul.mubr.bf16.gmra.mrb[0].mxu0 %v2964
        %v3498 = vpop.f32.mrb[0].mxu0
        %v3499 = vadd.f32 %v3070, %v3498
        %v3500 = vpop.f32.mrb[0].mxu0
        %v3501 = vpop.f32.mrb[0].mxu0
        %v3502 = vadd.f32 %v3070, %v3501
        %v3503 = vpop.f32.mrb[0].mxu0
        %3504 = vmatprep.mubr.bf16.mxu0 0
        %3505 = vmatmul.mubr.bf16.gmra.mrb[0].mxu0 %v2965
        %v3506 = vpop.f32.mrb[0].mxu0
        %v3507 = vadd.f32 %v3070, %v3506
        %v3508 = vpop.f32.mrb[0].mxu0
        %v3509 = vpop.f32.mrb[0].mxu0
        %v3510 = vadd.f32 %v3070, %v3509
        %v3511 = vpop.f32.mrb[0].mxu0
        %3512 = vmatprep.mubr.bf16.mxu0 0
        %3513 = vmatmul.mubr.bf16.gmra.mrb[0].mxu0 %v2966
        %v3514 = vpop.f32.mrb[0].mxu0
        %v3515 = vadd.f32 %v3070, %v3514
        %v3516 = vpop.f32.mrb[0].mxu0
        %v3517 = vpop.f32.mrb[0].mxu0
        %v3518 = vadd.f32 %v3070, %v3517
        %v3519 = vpop.f32.mrb[0].mxu0
        %3520 = vmatprep.mubr.bf16.mxu0 0
        %3521 = vmatmul.mubr.bf16.gmra.mrb[0].mxu0 %v2967
        %v3522 = vpop.f32.mrb[0].mxu0
        %v3523 = vadd.f32 %v3070, %v3522
        %v3524 = vpop.f32.mrb[0].mxu0
        %v3525 = vpop.f32.mrb[0].mxu0
        %v3526 = vadd.f32 %v3070, %v3525
        %v3527 = vpop.f32.mrb[0].mxu0
        %3528 = vmatprep.mubr.bf16.mxu0 0
        %3529 = vmatmul.mubr.bf16.gmra.mrb[0].mxu0 %v2968
        %v3530 = vpop.f32.mrb[0].mxu0
        %v3531 = vadd.f32 %v3070, %v3530
        %v3532 = vpop.f32.mrb[0].mxu0
        %v3533 = vpop.f32.mrb[0].mxu0
        %v3534 = vadd.f32 %v3070, %v3533
        %v3535 = vpop.f32.mrb[0].mxu0
        %3536 = vmatprep.mubr.bf16.mxu0 0
        %3537 = vmatmul.mubr.bf16.gmra.mrb[0].mxu0 %v2969
        %v3538 = vpop.f32.mrb[0].mxu0
        %v3539 = vadd.f32 %v3070, %v3538
        %v3540 = vpop.f32.mrb[0].mxu0
        %v3541 = vpop.f32.mrb[0].mxu0
        %v3542 = vadd.f32 %v3070, %v3541
        %v3543 = vpop.f32.mrb[0].mxu0
        %3544 = vmatprep.mubr.bf16.mxu0 0
        %3545 = vmatmul.mubr.bf16.gmra.mrb[0].mxu0 %v2970
        %v3546 = vpop.f32.mrb[0].mxu0
        %v3547 = vadd.f32 %v3070, %v3546
        %v3548 = vpop.f32.mrb[0].mxu0
        %v3549 = vpop.f32.mrb[0].mxu0
        %v3550 = vadd.f32 %v3070, %v3549
        %v3551 = vpop.f32.mrb[0].mxu0
        %3552 = vmatprep.mubr.bf16.mxu0 0
        %3553 = vmatmul.mubr.bf16.gmra.mrb[0].mxu0 %v2971
        %v3554 = vpop.f32.mrb[0].mxu0
        %v3555 = vadd.f32 %v3070, %v3554
        %v3556 = vpop.f32.mrb[0].mxu0
        %v3557 = vpop.f32.mrb[0].mxu0
        %v3558 = vadd.f32 %v3070, %v3557
        %v3559 = vpop.f32.mrb[0].mxu0
        %3560 = vmatprep.mubr.bf16.mxu0 0
        %3561 = vmatmul.mubr.bf16.gmra.mrb[0].mxu0 %v2972
        %v3562 = vpop.f32.mrb[0].mxu0
        %v3563 = vadd.f32 %v3070, %v3562
        %v3564 = vpop.f32.mrb[0].mxu0
        %v3565 = vpop.f32.mrb[0].mxu0
        %v3566 = vadd.f32 %v3070, %v3565
        %v3567 = vpop.f32.mrb[0].mxu0
        %3568 = vmatprep.mubr.bf16.mxu0 0
        %3569 = vmatmul.mubr.bf16.gmra.mrb[0].mxu0 %v2973
        %v3570 = vpop.f32.mrb[0].mxu0
        %v3571 = vadd.f32 %v3070, %v3570
        %v3572 = vpop.f32.mrb[0].mxu0
        %v3573 = vpop.f32.mrb[0].mxu0
        %v3574 = vadd.f32 %v3070, %v3573
        %v3575 = vpop.f32.mrb[0].mxu0
        %3576 = vmatprep.mubr.bf16.mxu0 0
        %3577 = vmatmul.mubr.bf16.gmra.mrb[0].mxu0 %v2974
        %v3578 = vpop.f32.mrb[0].mxu0
        %v3579 = vadd.f32 %v3070, %v3578
        %v3580 = vpop.f32.mrb[0].mxu0
        %v3581 = vpop.f32.mrb[0].mxu0
        %v3582 = vadd.f32 %v3070, %v3581
        %v3583 = vpop.f32.mrb[0].mxu0
        %3584 = vmatprep.mubr.bf16.mxu0 0
        %3585 = vmatmul.mubr.bf16.gmra.mrb[0].mxu0 %v2975
        %v3586 = vpop.f32.mrb[0].mxu0
        %v3587 = vadd.f32 %v3070, %v3586
        %v3588 = vpop.f32.mrb[0].mxu0
        %v3589 = vpop.f32.mrb[0].mxu0
        %v3590 = vadd.f32 %v3070, %v3589
        %v3591 = vpop.f32.mrb[0].mxu0
        %3592 = vmatprep.mubr.bf16.mxu0 0
        %3593 = vmatmul.mubr.bf16.gmra.mrb[0].mxu0 %v2976
        %v3594 = vpop.f32.mrb[0].mxu0
        %v3595 = vadd.f32 %v3070, %v3594
        %v3596 = vpop.f32.mrb[0].mxu0
        %v3597 = vpop.f32.mrb[0].mxu0
        %v3598 = vadd.f32 %v3070, %v3597
        %v3599 = vpop.f32.mrb[0].mxu0
        %3600 = vmatprep.mubr.bf16.mxu0 0
        %3601 = vmatmul.mubr.bf16.gmra.mrb[0].mxu0 %v2977
        %v3602 = vpop.f32.mrb[0].mxu0
        %v3603 = vadd.f32 %v3070, %v3602
        %v3604 = vpop.f32.mrb[0].mxu0
        %v3605 = vpop.f32.mrb[0].mxu0
        %v3606 = vadd.f32 %v3070, %v3605
        %v3607 = vpop.f32.mrb[0].mxu0
        %3608 = vmatprep.mubr.bf16.mxu0 0
        %3609 = vmatmul.mubr.bf16.gmra.mrb[0].mxu0 %v2978
        %v3610 = vpop.f32.mrb[0].mxu0
        %v3611 = vadd.f32 %v3070, %v3610
        %v3612 = vpop.f32.mrb[0].mxu0
        %v3613 = vpop.f32.mrb[0].mxu0
        %v3614 = vadd.f32 %v3070, %v3613
        %v3615 = vpop.f32.mrb[0].mxu0
        %3616 = vmatprep.mubr.bf16.mxu0 0
        %3617 = vmatmul.mubr.bf16.gmra.mrb[0].mxu0 %v2979
        %v3618 = vpop.f32.mrb[0].mxu0
        %v3619 = vadd.f32 %v3070, %v3618
        %v3620 = vpop.f32.mrb[0].mxu0
        %v3621 = vpop.f32.mrb[0].mxu0
        %v3622 = vadd.f32 %v3070, %v3621
        %v3623 = vpop.f32.mrb[0].mxu0
        %3624 = vmatprep.mubr.bf16.mxu0 0
        %3625 = vmatmul.mubr.bf16.gmra.mrb[0].mxu0 %v2980
        %v3626 = vpop.f32.mrb[0].mxu0
        %v3627 = vadd.f32 %v3070, %v3626
        %v3628 = vpop.f32.mrb[0].mxu0
        %v3629 = vpop.f32.mrb[0].mxu0
        %v3630 = vadd.f32 %v3070, %v3629
        %v3631 = vpop.f32.mrb[0].mxu0
        %3632 = vmatprep.mubr.bf16.mxu0 0
        %3633 = vmatmul.mubr.bf16.gmra.mrb[0].mxu0 %v2981
        %v3634 = vpop.f32.mrb[0].mxu0
        %v3635 = vadd.f32 %v3070, %v3634
        %v3636 = vpop.f32.mrb[0].mxu0
        %v3637 = vpop.f32.mrb[0].mxu0
        %v3638 = vadd.f32 %v3070, %v3637
        %v3639 = vpop.f32.mrb[0].mxu0
        %3640 = vmatprep.mubr.bf16.mxu0 0
        %3641 = vmatmul.mubr.bf16.gmra.mrb[0].mxu0 %v2982
        %v3642 = vpop.f32.mrb[0].mxu0
        %v3643 = vadd.f32 %v3070, %v3642
        %v3644 = vpop.f32.mrb[0].mxu0
        %v3645 = vpop.f32.mrb[0].mxu0
        %v3646 = vadd.f32 %v3070, %v3645
        %v3647 = vpop.f32.mrb[0].mxu0
        %3648 = vmatprep.mubr.bf16.mxu0 0
        %3649 = vmatmul.mubr.bf16.gmra.mrb[0].mxu0 %v2983
        %v3650 = vpop.f32.mrb[0].mxu0
        %v3651 = vadd.f32 %v3070, %v3650
        %v3652 = vpop.f32.mrb[0].mxu0
        %v3653 = vpop.f32.mrb[0].mxu0
        %v3654 = vadd.f32 %v3070, %v3653
        %v3655 = vpop.f32.mrb[0].mxu0
        %3656 = vmatprep.mubr.bf16.mxu0 0
        %3657 = vmatmul.mubr.bf16.gmra.mrb[0].mxu0 %v2984
        %v3658 = vpop.f32.mrb[0].mxu0
        %v3659 = vadd.f32 %v3070, %v3658
        %v3660 = vpop.f32.mrb[0].mxu0
        %v3661 = vpop.f32.mrb[0].mxu0
        %v3662 = vadd.f32 %v3070, %v3661
        %v3663 = vpop.f32.mrb[0].mxu0
        %3664 = vmatprep.mubr.bf16.mxu0 0
        %3665 = vmatmul.mubr.bf16.gmra.mrb[0].mxu0 %v2985
        %v3666 = vpop.f32.mrb[0].mxu0
        %v3667 = vadd.f32 %v3070, %v3666
        %v3668 = vpop.f32.mrb[0].mxu0
        %v3669 = vpop.f32.mrb[0].mxu0
        %v3670 = vadd.f32 %v3070, %v3669
        %v3671 = vpop.f32.mrb[0].mxu0
        %3672 = vmatprep.mubr.bf16.mxu0 0
        %3673 = vmatmul.mubr.bf16.gmra.mrb[0].mxu0 %v2986
        %v3674 = vpop.f32.mrb[0].mxu0
        %v3675 = vadd.f32 %v3070, %v3674
        %v3676 = vpop.f32.mrb[0].mxu0
        %v3677 = vpop.f32.mrb[0].mxu0
        %v3678 = vadd.f32 %v3070, %v3677
        %v3679 = vpop.f32.mrb[0].mxu0
        %3680 = vmatprep.mubr.bf16.mxu0 0
        %3681 = vmatmul.mubr.bf16.gmra.mrb[0].mxu0 %v2987
        %v3682 = vpop.f32.mrb[0].mxu0
        %v3683 = vadd.f32 %v3070, %v3682
        %v3684 = vpop.f32.mrb[0].mxu0
        %v3685 = vpop.f32.mrb[0].mxu0
        %v3686 = vadd.f32 %v3070, %v3685
        %v3687 = vpop.f32.mrb[0].mxu0
        %3688 = vmatprep.mubr.bf16.mxu0 0
        %3689 = vmatmul.mubr.bf16.gmra.mrb[0].mxu0 %v2988
        %v3690 = vpop.f32.mrb[0].mxu0
        %v3691 = vadd.f32 %v3070, %v3690
        %v3692 = vpop.f32.mrb[0].mxu0
        %v3693 = vpop.f32.mrb[0].mxu0
        %v3694 = vadd.f32 %v3070, %v3693
        %v3695 = vpop.f32.mrb[0].mxu0
        %3696 = vmatprep.mubr.bf16.mxu0 0
        %3697 = vmatmul.mubr.bf16.gmra.mrb[0].mxu0 %v2989
        %v3698 = vpop.f32.mrb[0].mxu0
        %v3699 = vadd.f32 %v3070, %v3698
        %v3700 = vpop.f32.mrb[0].mxu0
        %v3701 = vpop.f32.mrb[0].mxu0
        %v3702 = vadd.f32 %v3070, %v3701
        %v3703 = vpop.f32.mrb[0].mxu0
        %3704 = vmatprep.mubr.bf16.mxu0 0
        %3705 = vmatmul.mubr.bf16.gmra.mrb[0].mxu0 %v2990
        %v3706 = vpop.f32.mrb[0].mxu0
        %v3707 = vadd.f32 %v3070, %v3706
        %v3708 = vpop.f32.mrb[0].mxu0
        %v3709 = vpop.f32.mrb[0].mxu0
        %v3710 = vadd.f32 %v3070, %v3709
        %v3711 = vpop.f32.mrb[0].mxu0
        %3712 = vmatprep.mubr.bf16.mxu0 0
        %3713 = vmatmul.mubr.bf16.gmra.mrb[0].mxu0 %v2991
        %v3714 = vpop.f32.mrb[0].mxu0
        %v3715 = vadd.f32 %v3070, %v3714
        %v3716 = vpop.f32.mrb[0].mxu0
        %v3717 = vpop.f32.mrb[0].mxu0
        %v3718 = vadd.f32 %v3070, %v3717
        %v3719 = vpop.f32.mrb[0].mxu0
        %3720 = vmatprep.mubr.bf16.mxu0 0
        %3721 = vmatmul.mubr.bf16.gmra.mrb[0].mxu0 %v2992
        %v3722 = vpop.f32.mrb[0].mxu0
        %v3723 = vadd.f32 %v3070, %v3722
        %v3724 = vpop.f32.mrb[0].mxu0
        %v3725 = vpop.f32.mrb[0].mxu0
        %v3726 = vadd.f32 %v3070, %v3725
        %v3727 = vpop.f32.mrb[0].mxu0
        %3728 = vmatprep.mubr.bf16.mxu0 0
        %3729 = vmatmul.mubr.bf16.gmra.mrb[0].mxu0 %v2993
        %v3730 = vpop.f32.mrb[0].mxu0
        %v3731 = vadd.f32 %v3070, %v3730
        %v3732 = vpop.f32.mrb[0].mxu0
        %v3733 = vpop.f32.mrb[0].mxu0
        %v3734 = vadd.f32 %v3070, %v3733
        %v3735 = vpop.f32.mrb[0].mxu0
        %3736 = vmatprep.mubr.bf16.mxu0 0
        %3737 = vmatmul.mubr.bf16.gmra.mrb[0].mxu0 %v2994
        %v3738 = vpop.f32.mrb[0].mxu0
        %v3739 = vadd.f32 %v3070, %v3738
        %v3740 = vpop.f32.mrb[0].mxu0
        %v3741 = vpop.f32.mrb[0].mxu0
        %v3742 = vadd.f32 %v3070, %v3741
        %v3743 = vpop.f32.mrb[0].mxu0
        %3744 = vmatprep.mubr.bf16.mxu0 0
        %3745 = vmatmul.mubr.bf16.gmra.mrb[0].mxu0 %v2995
        %v3746 = vpop.f32.mrb[0].mxu0
        %v3747 = vadd.f32 %v3070, %v3746
        %v3748 = vpop.f32.mrb[0].mxu0
        %v3749 = vpop.f32.mrb[0].mxu0
        %v3750 = vadd.f32 %v3070, %v3749
        %v3751 = vpop.f32.mrb[0].mxu0
        %3752 = vmatprep.mubr.bf16.mxu0 0
        %3753 = vmatmul.mubr.bf16.gmra.mrb[0].mxu0 %v2996
        %v3754 = vpop.f32.mrb[0].mxu0
        %v3755 = vadd.f32 %v3070, %v3754
        %v3756 = vpop.f32.mrb[0].mxu0
        %v3757 = vpop.f32.mrb[0].mxu0
        %v3758 = vadd.f32 %v3070, %v3757
        %v3759 = vpop.f32.mrb[0].mxu0
        %3760 = vmatprep.mubr.bf16.mxu0 0
        %3761 = vmatmul.mubr.bf16.gmra.mrb[0].mxu0 %v2997
        %v3762 = vpop.f32.mrb[0].mxu0
        %v3763 = vadd.f32 %v3070, %v3762
        %v3764 = vpop.f32.mrb[0].mxu0
        %v3765 = vpop.f32.mrb[0].mxu0
        %v3766 = vadd.f32 %v3070, %v3765
        %v3767 = vpop.f32.mrb[0].mxu0
        %3768 = vmatprep.mubr.bf16.mxu0 0
        %3769 = vmatmul.mubr.bf16.gmra.mrb[0].mxu0 %v2998
        %v3770 = vpop.f32.mrb[0].mxu0
        %v3771 = vadd.f32 %v3070, %v3770
        %v3772 = vpop.f32.mrb[0].mxu0
        %v3773 = vpop.f32.mrb[0].mxu0
        %v3774 = vadd.f32 %v3070, %v3773
        %v3775 = vpop.f32.mrb[0].mxu0
        %3776 = vmatprep.mubr.bf16.mxu0 0
        %3777 = vmatmul.mubr.bf16.gmra.mrb[0].mxu0 %v2999
        %v3778 = vpop.f32.mrb[0].mxu0
        %v3779 = vadd.f32 %v3070, %v3778
        %v3780 = vpop.f32.mrb[0].mxu0
        %v3781 = vpop.f32.mrb[0].mxu0
        %v3782 = vadd.f32 %v3070, %v3781
        %v3783 = vpop.f32.mrb[0].mxu0
        %3784 = vmatprep.mubr.bf16.mxu0 0
        %3785 = vmatmul.mubr.bf16.gmra.mrb[0].mxu0 %v3000
        %v3786 = vpop.f32.mrb[0].mxu0
        %v3787 = vadd.f32 %v3070, %v3786
        %v3788 = vpop.f32.mrb[0].mxu0
        %v3789 = vpop.f32.mrb[0].mxu0
        %v3790 = vadd.f32 %v3070, %v3789
        %v3791 = vpop.f32.mrb[0].mxu0
        %3792 = vmatprep.mubr.bf16.mxu0 0
        %3793 = vmatmul.mubr.bf16.gmra.mrb[0].mxu0 %v3001
        %v3794 = vpop.f32.mrb[0].mxu0
        %v3795 = vadd.f32 %v3070, %v3794
        %v3796 = vpop.f32.mrb[0].mxu0
        %v3797 = vpop.f32.mrb[0].mxu0
        %v3798 = vadd.f32 %v3070, %v3797
        %v3799 = vpop.f32.mrb[0].mxu0
        %3800 = vmatprep.mubr.bf16.mxu0 0
        %3801 = vmatmul.mubr.bf16.gmra.mrb[0].mxu0 %v3002
        %v3802 = vpop.f32.mrb[0].mxu0
        %v3803 = vadd.f32 %v3070, %v3802
        %v3804 = vpop.f32.mrb[0].mxu0
        %v3805 = vpop.f32.mrb[0].mxu0
        %v3806 = vadd.f32 %v3070, %v3805
        %v3807 = vpop.f32.mrb[0].mxu0
        %3808 = vmatprep.mubr.bf16.mxu0 0
        %3809 = vmatmul.mubr.bf16.gmra.mrb[0].mxu0 %v3003
        %v3810 = vpop.f32.mrb[0].mxu0
        %v3811 = vadd.f32 %v3070, %v3810
        %v3812 = vpop.f32.mrb[0].mxu0
        %v3813 = vpop.f32.mrb[0].mxu0
        %v3814 = vadd.f32 %v3070, %v3813
        %v3815 = vpop.f32.mrb[0].mxu0
        %3816 = vmatprep.mubr.bf16.mxu0 0
        %3817 = vmatmul.mubr.bf16.gmra.mrb[0].mxu0 %v3004
        %v3818 = vpop.f32.mrb[0].mxu0
        %v3819 = vadd.f32 %v3070, %v3818
        %v3820 = vpop.f32.mrb[0].mxu0
        %v3821 = vpop.f32.mrb[0].mxu0
        %v3822 = vadd.f32 %v3070, %v3821
        %v3823 = vpop.f32.mrb[0].mxu0
        %3824 = vmatprep.mubr.bf16.mxu0 0
        %3825 = vmatmul.mubr.bf16.gmra.mrb[0].mxu0 %v3005
        %v3826 = vpop.f32.mrb[0].mxu0
        %v3827 = vadd.f32 %v3070, %v3826
        %v3828 = vpop.f32.mrb[0].mxu0
        %v3829 = vpop.f32.mrb[0].mxu0
        %v3830 = vadd.f32 %v3070, %v3829
        %v3831 = vpop.f32.mrb[0].mxu0
        %3832 = vmatprep.mubr.bf16.mxu0 0
        %3833 = vmatmul.mubr.bf16.gmra.mrb[0].mxu0 %v3006
        %v3834 = vpop.f32.mrb[0].mxu0
        %v3835 = vadd.f32 %v3070, %v3834
        %v3836 = vpop.f32.mrb[0].mxu0
        %v3837 = vpop.f32.mrb[0].mxu0
        %v3838 = vadd.f32 %v3070, %v3837
        %v3839 = vpop.f32.mrb[0].mxu0
        %3840 = vmatprep.mubr.bf16.mxu0 0
        %3841 = vmatmul.mubr.bf16.gmra.mrb[0].mxu0 %v3007
        %v3842 = vpop.f32.mrb[0].mxu0
        %v3843 = vadd.f32 %v3070, %v3842
        %v3844 = vpop.f32.mrb[0].mxu0
        %v3845 = vpop.f32.mrb[0].mxu0
        %v3846 = vadd.f32 %v3070, %v3845
        %v3847 = vpop.f32.mrb[0].mxu0
        %3848 = vmatprep.mubr.bf16.mxu0 0
        %3849 = vmatmul.mubr.bf16.gmra.mrb[0].mxu0 %v3008
        %v3850 = vpop.f32.mrb[0].mxu0
        %v3851 = vadd.f32 %v3070, %v3850
        %v3852 = vpop.f32.mrb[0].mxu0
        %v3853 = vpop.f32.mrb[0].mxu0
        %v3854 = vadd.f32 %v3070, %v3853
        %v3855 = vpop.f32.mrb[0].mxu0
        %3856 = vmatprep.mubr.bf16.mxu0 0
        %3857 = vmatmul.mubr.bf16.gmra.mrb[0].mxu0 %v3009
        %v3858 = vpop.f32.mrb[0].mxu0
        %v3859 = vadd.f32 %v3070, %v3858
        %v3860 = vpop.f32.mrb[0].mxu0
        %v3861 = vpop.f32.mrb[0].mxu0
        %v3862 = vadd.f32 %v3070, %v3861
        %v3863 = vpop.f32.mrb[0].mxu0
        %3864 = vmatprep.mubr.bf16.mxu0 0
        %3865 = vmatmul.mubr.bf16.gmra.mrb[0].mxu0 %v3010
        %v3866 = vpop.f32.mrb[0].mxu0
        %v3867 = vadd.f32 %v3070, %v3866
        %v3868 = vpop.f32.mrb[0].mxu0
        %v3869 = vpop.f32.mrb[0].mxu0
        %v3870 = vadd.f32 %v3070, %v3869
        %v3871 = vpop.f32.mrb[0].mxu0
        %3872 = vmatprep.mubr.bf16.mxu0 0
        %3873 = vmatmul.mubr.bf16.gmra.mrb[0].mxu0 %v3011
        %v3874 = vpop.f32.mrb[0].mxu0
        %v3875 = vadd.f32 %v3070, %v3874
        %v3876 = vpop.f32.mrb[0].mxu0
        %v3877 = vpop.f32.mrb[0].mxu0
        %v3878 = vadd.f32 %v3070, %v3877
        %v3879 = vpop.f32.mrb[0].mxu0
        %3880 = vmatprep.mubr.bf16.mxu0 0
        %3881 = vmatmul.mubr.bf16.gmra.mrb[0].mxu0 %v3012
        %v3882 = vpop.f32.mrb[0].mxu0
        %v3883 = vadd.f32 %v3070, %v3882
        %v3884 = vpop.f32.mrb[0].mxu0
        %v3885 = vpop.f32.mrb[0].mxu0
        %v3886 = vadd.f32 %v3070, %v3885
        %v3887 = vpop.f32.mrb[0].mxu0
        %3888 = vmatprep.mubr.bf16.mxu0 0
        %3889 = vmatmul.mubr.bf16.gmra.mrb[0].mxu0 %v3013
        %v3890 = vpop.f32.mrb[0].mxu0
        %v3891 = vadd.f32 %v3070, %v3890
        %v3892 = vpop.f32.mrb[0].mxu0
        %v3893 = vpop.f32.mrb[0].mxu0
        %v3894 = vadd.f32 %v3070, %v3893
        %v3895 = vpop.f32.mrb[0].mxu0
        %3896 = vmatprep.mubr.bf16.mxu0 0
        %3897 = vmatmul.mubr.bf16.gmra.mrb[0].mxu0 %v3014
        %v3898 = vpop.f32.mrb[0].mxu0
        %v3899 = vadd.f32 %v3070, %v3898
        %v3900 = vpop.f32.mrb[0].mxu0
        %v3901 = vpop.f32.mrb[0].mxu0
        %v3902 = vadd.f32 %v3070, %v3901
        %v3903 = vpop.f32.mrb[0].mxu0
        %3904 = vmatprep.mubr.bf16.mxu0 0
        %3905 = vmatmul.mubr.bf16.gmra.mrb[0].mxu0 %v3015
        %v3906 = vpop.f32.mrb[0].mxu0
        %v3907 = vadd.f32 %v3070, %v3906
        %v3908 = vpop.f32.mrb[0].mxu0
        %v3909 = vpop.f32.mrb[0].mxu0
        %v3910 = vadd.f32 %v3070, %v3909
        %v3911 = vpop.f32.mrb[0].mxu0
        %3912 = vmatprep.mubr.bf16.mxu0 0
        %3913 = vmatmul.mubr.bf16.gmra.mrb[0].mxu0 %v3016
        %v3914 = vpop.f32.mrb[0].mxu0
        %v3915 = vadd.f32 %v3070, %v3914
        %v3916 = vpop.f32.mrb[0].mxu0
        %v3917 = vpop.f32.mrb[0].mxu0
        %v3918 = vadd.f32 %v3070, %v3917
        %v3919 = vpop.f32.mrb[0].mxu0
        %3920 = vmatprep.mubr.bf16.mxu0 0
        %3921 = vmatmul.mubr.bf16.gmra.mrb[0].mxu0 %v3017
        %v3922 = vpop.f32.mrb[0].mxu0
        %v3923 = vadd.f32 %v3070, %v3922
        %v3924 = vpop.f32.mrb[0].mxu0
        %v3925 = vpop.f32.mrb[0].mxu0
        %v3926 = vadd.f32 %v3070, %v3925
        %v3927 = vpop.f32.mrb[0].mxu0
        %3928 = vmatprep.mubr.bf16.mxu0 0
        %3929 = vmatmul.mubr.bf16.gmra.mrb[0].mxu0 %v3018
        %v3930 = vpop.f32.mrb[0].mxu0
        %v3931 = vadd.f32 %v3070, %v3930
        %v3932 = vpop.f32.mrb[0].mxu0
        %v3933 = vpop.f32.mrb[0].mxu0
        %v3934 = vadd.f32 %v3070, %v3933
        %v3935 = vpop.f32.mrb[0].mxu0
        %3936 = vmatprep.mubr.bf16.mxu0 0
        %3937 = vmatmul.mubr.bf16.gmra.mrb[0].mxu0 %v3019
        %v3938 = vpop.f32.mrb[0].mxu0
        %v3939 = vadd.f32 %v3070, %v3938
        %v3940 = vpop.f32.mrb[0].mxu0
        %v3941 = vpop.f32.mrb[0].mxu0
        %v3942 = vadd.f32 %v3070, %v3941
        %v3943 = vpop.f32.mrb[0].mxu0
        %3944 = vmatprep.mubr.bf16.mxu0 0
        %3945 = vmatmul.mubr.bf16.gmra.mrb[0].mxu0 %v3020
        %v3946 = vpop.f32.mrb[0].mxu0
        %v3947 = vadd.f32 %v3070, %v3946
        %v3948 = vpop.f32.mrb[0].mxu0
        %v3949 = vpop.f32.mrb[0].mxu0
        %v3950 = vadd.f32 %v3070, %v3949
        %v3951 = vpop.f32.mrb[0].mxu0
        %3952 = vmatprep.mubr.bf16.mxu0 0
        %3953 = vmatmul.mubr.bf16.gmra.mrb[0].mxu0 %v3021
        %v3954 = vpop.f32.mrb[0].mxu0
        %v3955 = vadd.f32 %v3070, %v3954
        %v3956 = vpop.f32.mrb[0].mxu0
        %v3957 = vpop.f32.mrb[0].mxu0
        %v3958 = vadd.f32 %v3070, %v3957
        %v3959 = vpop.f32.mrb[0].mxu0
        %3960 = vmatprep.mubr.bf16.mxu0 0
        %3961 = vmatmul.mubr.bf16.gmra.mrb[0].mxu0 %v3022
        %v3962 = vpop.f32.mrb[0].mxu0
        %v3963 = vadd.f32 %v3070, %v3962
        %v3964 = vpop.f32.mrb[0].mxu0
        %v3965 = vpop.f32.mrb[0].mxu0
        %v3966 = vadd.f32 %v3070, %v3965
        %v3967 = vpop.f32.mrb[0].mxu0
        %3968 = vmatprep.mubr.bf16.mxu0 0
        %3969 = vmatmul.mubr.bf16.gmra.mrb[0].mxu0 %v3023
        %v3970 = vpop.f32.mrb[0].mxu0
        %v3971 = vadd.f32 %v3070, %v3970
        %v3972 = vpop.f32.mrb[0].mxu0
        %v3973 = vpop.f32.mrb[0].mxu0
        %v3974 = vadd.f32 %v3070, %v3973
        %v3975 = vpop.f32.mrb[0].mxu0
        %3976 = vmatprep.mubr.bf16.mxu0 0
        %3977 = vmatmul.mubr.bf16.gmra.mrb[0].mxu0 %v3024
        %v3978 = vpop.f32.mrb[0].mxu0
        %v3979 = vadd.f32 %v3070, %v3978
        %v3980 = vpop.f32.mrb[0].mxu0
        %v3981 = vpop.f32.mrb[0].mxu0
        %v3982 = vadd.f32 %v3070, %v3981
        %v3983 = vpop.f32.mrb[0].mxu0
        %3984 = vmatprep.mubr.bf16.mxu0 0
        %3985 = vmatmul.mubr.bf16.gmra.mrb[0].mxu0 %v3025
        %v3986 = vpop.f32.mrb[0].mxu0
        %v3987 = vadd.f32 %v3070, %v3986
        %v3988 = vpop.f32.mrb[0].mxu0
        %v3989 = vpop.f32.mrb[0].mxu0
        %v3990 = vadd.f32 %v3070, %v3989
        %v3991 = vpop.f32.mrb[0].mxu0
        %3992 = vmatprep.mubr.bf16.mxu0 0
        %3993 = vmatmul.mubr.bf16.gmra.mrb[0].mxu0 %v3026
        %v3994 = vpop.f32.mrb[0].mxu0
        %v3995 = vadd.f32 %v3070, %v3994
        %v3996 = vpop.f32.mrb[0].mxu0
        %v3997 = vpop.f32.mrb[0].mxu0
        %v3998 = vadd.f32 %v3070, %v3997
        %v3999 = vpop.f32.mrb[0].mxu0
        %4000 = vmatprep.mubr.bf16.mxu0 0
        %4001 = vmatmul.mubr.bf16.gmra.mrb[0].mxu0 %v3027
        %v4002 = vpop.f32.mrb[0].mxu0
        %v4003 = vadd.f32 %v3070, %v4002
        %v4004 = vpop.f32.mrb[0].mxu0
        %v4005 = vpop.f32.mrb[0].mxu0
        %v4006 = vadd.f32 %v3070, %v4005
        %v4007 = vpop.f32.mrb[0].mxu0
        %4008 = vmatprep.mubr.bf16.mxu0 0
        %4009 = vmatmul.mubr.bf16.gmra.mrb[0].mxu0 %v3028
        %v4010 = vpop.f32.mrb[0].mxu0
        %v4011 = vadd.f32 %v3070, %v4010
        %v4012 = vpop.f32.mrb[0].mxu0
        %v4013 = vpop.f32.mrb[0].mxu0
        %v4014 = vadd.f32 %v3070, %v4013
        %v4015 = vpop.f32.mrb[0].mxu0
        %4016 = vmatprep.mubr.bf16.mxu0 0
        %4017 = vmatmul.mubr.bf16.gmra.mrb[0].mxu0 %v3029
        %v4018 = vpop.f32.mrb[0].mxu0
        %v4019 = vadd.f32 %v3070, %v4018
        %v4020 = vpop.f32.mrb[0].mxu0
        %v4021 = vpop.f32.mrb[0].mxu0
        %v4022 = vadd.f32 %v3070, %v4021
        %v4023 = vpop.f32.mrb[0].mxu0
        %4024 = vmatprep.mubr.bf16.mxu0 0
        %4025 = vmatmul.mubr.bf16.gmra.mrb[0].mxu0 %v3030
        %v4026 = vpop.f32.mrb[0].mxu0
        %v4027 = vadd.f32 %v3070, %v4026
        %v4028 = vpop.f32.mrb[0].mxu0
        %v4029 = vpop.f32.mrb[0].mxu0
        %v4030 = vadd.f32 %v3070, %v4029
        %v4031 = vpop.f32.mrb[0].mxu0
        %4032 = vmatprep.mubr.bf16.mxu0 0
        %4033 = vmatmul.mubr.bf16.gmra.mrb[0].mxu0 %v3031
        %v4034 = vpop.f32.mrb[0].mxu0
        %v4035 = vadd.f32 %v3070, %v4034
        %v4036 = vpop.f32.mrb[0].mxu0
        %v4037 = vpop.f32.mrb[0].mxu0
        %v4038 = vadd.f32 %v3070, %v4037
        %v4039 = vpop.f32.mrb[0].mxu0
        %4040 = vmatprep.mubr.bf16.mxu0 0
        %4041 = vmatmul.mubr.bf16.gmra.mrb[0].mxu0 %v3032
        %v4042 = vpop.f32.mrb[0].mxu0
        %v4043 = vadd.f32 %v3070, %v4042
        %v4044 = vpop.f32.mrb[0].mxu0
        %v4045 = vpop.f32.mrb[0].mxu0
        %v4046 = vadd.f32 %v3070, %v4045
        %v4047 = vpop.f32.mrb[0].mxu0
        %4048 = vmatprep.mubr.bf16.mxu0 0
        %4049 = vmatmul.mubr.bf16.gmra.mrb[0].mxu0 %v3033
        %v4050 = vpop.f32.mrb[0].mxu0
        %v4051 = vadd.f32 %v3070, %v4050
        %v4052 = vpop.f32.mrb[0].mxu0
        %v4053 = vpop.f32.mrb[0].mxu0
        %v4054 = vadd.f32 %v3070, %v4053
        %v4055 = vpop.f32.mrb[0].mxu0
        %4056 = vmatprep.mubr.bf16.mxu0 0
        %4057 = vmatmul.mubr.bf16.gmra.mrb[0].mxu0 %v3034
        %v4058 = vpop.f32.mrb[0].mxu0
        %v4059 = vadd.f32 %v3070, %v4058
        %v4060 = vpop.f32.mrb[0].mxu0
        %v4061 = vpop.f32.mrb[0].mxu0
        %v4062 = vadd.f32 %v3070, %v4061
        %v4063 = vpop.f32.mrb[0].mxu0
        %4064 = vmatprep.mubr.bf16.mxu0 0
        %4065 = vmatmul.mubr.bf16.gmra.mrb[0].mxu0 %v3035
        %v4066 = vpop.f32.mrb[0].mxu0
        %v4067 = vadd.f32 %v3070, %v4066
        %v4068 = vpop.f32.mrb[0].mxu0
        %v4069 = vpop.f32.mrb[0].mxu0
        %v4070 = vadd.f32 %v3070, %v4069
        %v4071 = vpop.f32.mrb[0].mxu0
        %4072 = vmatprep.mubr.bf16.mxu0 0
        %4073 = vmatmul.mubr.bf16.gmra.mrb[0].mxu0 %v3036
        %v4074 = vpop.f32.mrb[0].mxu0
        %v4075 = vadd.f32 %v3070, %v4074
        %v4076 = vpop.f32.mrb[0].mxu0
        %v4077 = vpop.f32.mrb[0].mxu0
        %v4078 = vadd.f32 %v3070, %v4077
        %v4079 = vpop.f32.mrb[0].mxu0
        %4080 = vmatprep.mubr.bf16.mxu0 0
        %4081 = vmatmul.mubr.bf16.gmra.mrb[0].mxu0 %v3037
        %v4082 = vpop.f32.mrb[0].mxu0
        %v4083 = vadd.f32 %v3070, %v4082
        %v4084 = vpop.f32.mrb[0].mxu0
        %v4085 = vpop.f32.mrb[0].mxu0
        %v4086 = vadd.f32 %v3070, %v4085
        %v4087 = vpop.f32.mrb[0].mxu0
        %4088 = vmatprep.mubr.bf16.mxu0 0
        %4089 = vmatmul.mubr.bf16.gmra.mrb[0].mxu0 %v3038
        %v4090 = vpop.f32.mrb[0].mxu0
        %v4091 = vadd.f32 %v3070, %v4090
        %v4092 = vpop.f32.mrb[0].mxu0
        %v4093 = vpop.f32.mrb[0].mxu0
        %v4094 = vadd.f32 %v3070, %v4093
        %v4095 = vpop.f32.mrb[0].mxu0
        %4096 = vmatprep.mubr.bf16.mxu0 0
        %4097 = vmatmul.mubr.bf16.gmra.mrb[0].mxu0 %v3039
        %v4098 = vpop.f32.mrb[0].mxu0
        %v4099 = vadd.f32 %v3070, %v4098
        %v4100 = vpop.f32.mrb[0].mxu0
        %v4101 = vpop.f32.mrb[0].mxu0
        %v4102 = vadd.f32 %v3070, %v4101
        %v4103 = vpop.f32.mrb[0].mxu0
        %4104 = vmatprep.mubr.bf16.mxu0 0
        %4105 = vmatmul.mubr.bf16.gmra.mrb[0].mxu0 %v3040
        %v4106 = vpop.f32.mrb[0].mxu0
        %v4107 = vadd.f32 %v3070, %v4106
        %v4108 = vpop.f32.mrb[0].mxu0
        %v4109 = vpop.f32.mrb[0].mxu0
        %v4110 = vadd.f32 %v3070, %v4109
        %v4111 = vpop.f32.mrb[0].mxu0
        %4112 = vmatprep.mubr.bf16.mxu0 0
        %4113 = vmatmul.mubr.bf16.gmra.mrb[0].mxu0 %v3041
        %v4114 = vpop.f32.mrb[0].mxu0
        %v4115 = vadd.f32 %v3070, %v4114
        %v4116 = vpop.f32.mrb[0].mxu0
        %v4117 = vpop.f32.mrb[0].mxu0
        %v4118 = vadd.f32 %v3070, %v4117
        %v4119 = vpop.f32.mrb[0].mxu0
        %4120 = vmatprep.mubr.bf16.mxu0 0
        %4121 = vmatmul.mubr.bf16.gmra.mrb[0].mxu0 %v3042
        %v4122 = vpop.f32.mrb[0].mxu0
        %v4123 = vadd.f32 %v3070, %v4122
        %v4124 = vpop.f32.mrb[0].mxu0
        %v4125 = vpop.f32.mrb[0].mxu0
        %v4126 = vadd.f32 %v3070, %v4125
        %v4127 = vpop.f32.mrb[0].mxu0
        %4128 = vmatprep.mubr.bf16.mxu0 0
        %4129 = vmatmul.mubr.bf16.gmra.mrb[0].mxu0 %v3043
        %v4130 = vpop.f32.mrb[0].mxu0
        %v4131 = vadd.f32 %v3070, %v4130
        %v4132 = vpop.f32.mrb[0].mxu0
        %v4133 = vpop.f32.mrb[0].mxu0
        %v4134 = vadd.f32 %v3070, %v4133
        %v4135 = vpop.f32.mrb[0].mxu0
        %4136 = vmatprep.mubr.bf16.mxu0 0
        %4137 = vmatmul.mubr.bf16.gmra.mrb[0].mxu0 %v3044
        %v4138 = vpop.f32.mrb[0].mxu0
        %v4139 = vadd.f32 %v3070, %v4138
        %v4140 = vpop.f32.mrb[0].mxu0
        %v4141 = vpop.f32.mrb[0].mxu0
        %v4142 = vadd.f32 %v3070, %v4141
        %v4143 = vpop.f32.mrb[0].mxu0
        %4144 = vmatprep.mubr.bf16.mxu0 0
        %4145 = vmatmul.mubr.bf16.gmra.mrb[0].mxu0 %v3045
        %v4146 = vpop.f32.mrb[0].mxu0
        %v4147 = vadd.f32 %v3070, %v4146
        %v4148 = vpop.f32.mrb[0].mxu0
        %v4149 = vpop.f32.mrb[0].mxu0
        %v4150 = vadd.f32 %v3070, %v4149
        %v4151 = vpop.f32.mrb[0].mxu0
        %4152 = vmatprep.mubr.bf16.mxu0 0
        %4153 = vmatmul.mubr.bf16.gmra.mrb[0].mxu0 %v3046
        %v4154 = vpop.f32.mrb[0].mxu0
        %v4155 = vadd.f32 %v3070, %v4154
        %v4156 = vpop.f32.mrb[0].mxu0
        %v4157 = vpop.f32.mrb[0].mxu0
        %v4158 = vadd.f32 %v3070, %v4157
        %v4159 = vpop.f32.mrb[0].mxu0
        %4160 = vmatprep.mubr.bf16.mxu0 0
        %4161 = vmatmul.mubr.bf16.gmra.mrb[0].mxu0 %v3047
        %v4162 = vpop.f32.mrb[0].mxu0
        %v4163 = vadd.f32 %v3070, %v4162
        %v4164 = vpop.f32.mrb[0].mxu0
        %v4165 = vpop.f32.mrb[0].mxu0
        %v4166 = vadd.f32 %v3070, %v4165
        %v4167 = vpop.f32.mrb[0].mxu0
        %4168 = vmatprep.mubr.bf16.mxu0 0
        %4169 = vmatmul.mubr.bf16.gmra.mrb[0].mxu0 %v3048
        %v4170 = vpop.f32.mrb[0].mxu0
        %v4171 = vadd.f32 %v3070, %v4170
        %v4172 = vpop.f32.mrb[0].mxu0
        %v4173 = vpop.f32.mrb[0].mxu0
        %v4174 = vadd.f32 %v3070, %v4173
        %v4175 = vpop.f32.mrb[0].mxu0
        %4176 = vdwg.mxu0
        %v4177 = vmax.f32 %v3155, 0.0
        %v4178 = vmax.f32 %v3158, 0.0
        %v4179 = vmax.f32 %v3163, 0.0
        %v4180 = vmax.f32 %v3166, 0.0
        %v4181 = vmax.f32 %v3171, 0.0
        %v4182 = vmax.f32 %v3174, 0.0
        %v4183 = vmax.f32 %v3179, 0.0
        %v4184 = vmax.f32 %v3182, 0.0
        %v4185 = vmax.f32 %v3187, 0.0
        %v4186 = vmax.f32 %v3190, 0.0
        %v4187 = vmax.f32 %v3195, 0.0
        %v4188 = vmax.f32 %v3198, 0.0
        %v4189 = vmax.f32 %v3203, 0.0
        %v4190 = vmax.f32 %v3206, 0.0
        %v4191 = vmax.f32 %v3211, 0.0
        %v4192 = vmax.f32 %v3214, 0.0
        %v4193 = vmax.f32 %v3219, 0.0
        %v4194 = vmax.f32 %v3222, 0.0
        %v4195 = vmax.f32 %v3227, 0.0
        %v4196 = vmax.f32 %v3230, 0.0
        %v4197 = vmax.f32 %v3235, 0.0
        %v4198 = vmax.f32 %v3238, 0.0
        %v4199 = vmax.f32 %v3243, 0.0
        %v4200 = vmax.f32 %v3246, 0.0
        %v4201 = vmax.f32 %v3251, 0.0
        %v4202 = vmax.f32 %v3254, 0.0
        %v4203 = vmax.f32 %v3259, 0.0
        %v4204 = vmax.f32 %v3262, 0.0
        %v4205 = vmax.f32 %v3267, 0.0
        %v4206 = vmax.f32 %v3270, 0.0
        %v4207 = vmax.f32 %v3275, 0.0
        %v4208 = vmax.f32 %v3278, 0.0
        %v4209 = vmax.f32 %v3283, 0.0
        %v4210 = vmax.f32 %v3286, 0.0
        %v4211 = vmax.f32 %v3291, 0.0
        %v4212 = vmax.f32 %v3294, 0.0
        %v4213 = vmax.f32 %v3299, 0.0
        %v4214 = vmax.f32 %v3302, 0.0
        %v4215 = vmax.f32 %v3307, 0.0
        %v4216 = vmax.f32 %v3310, 0.0
        %v4217 = vmax.f32 %v3315, 0.0
        %v4218 = vmax.f32 %v3318, 0.0
        %v4219 = vmax.f32 %v3323, 0.0
        %v4220 = vmax.f32 %v3326, 0.0
        %v4221 = vmax.f32 %v3331, 0.0
        %v4222 = vmax.f32 %v3334, 0.0
        %v4223 = vmax.f32 %v3339, 0.0
        %v4224 = vmax.f32 %v3342, 0.0
        %v4225 = vmax.f32 %v3347, 0.0
        %v4226 = vmax.f32 %v3350, 0.0
        %v4227 = vmax.f32 %v3355, 0.0
        %v4228 = vmax.f32 %v3358, 0.0
        %v4229 = vmax.f32 %v3363, 0.0
        %v4230 = vmax.f32 %v3366, 0.0
        %v4231 = vmax.f32 %v3371, 0.0
        %v4232 = vmax.f32 %v3374, 0.0
        %v4233 = vmax.f32 %v3379, 0.0
        %v4234 = vmax.f32 %v3382, 0.0
        %v4235 = vmax.f32 %v3387, 0.0
        %v4236 = vmax.f32 %v3390, 0.0
        %v4237 = vmax.f32 %v3395, 0.0
        %v4238 = vmax.f32 %v3398, 0.0
        %v4239 = vmax.f32 %v3403, 0.0
        %v4240 = vmax.f32 %v3406, 0.0
        %v4241 = vmax.f32 %v3411, 0.0
        %v4242 = vmax.f32 %v3414, 0.0
        %v4243 = vmax.f32 %v3419, 0.0
        %v4244 = vmax.f32 %v3422, 0.0
        %v4245 = vmax.f32 %v3427, 0.0
        %v4246 = vmax.f32 %v3430, 0.0
        %v4247 = vmax.f32 %v3435, 0.0
        %v4248 = vmax.f32 %v3438, 0.0
        %v4249 = vmax.f32 %v3443, 0.0
        %v4250 = vmax.f32 %v3446, 0.0
        %v4251 = vmax.f32 %v3451, 0.0
        %v4252 = vmax.f32 %v3454, 0.0
        %v4253 = vmax.f32 %v3459, 0.0
        %v4254 = vmax.f32 %v3462, 0.0
        %v4255 = vmax.f32 %v3467, 0.0
        %v4256 = vmax.f32 %v3470, 0.0
        %v4257 = vmax.f32 %v3475, 0.0
        %v4258 = vmax.f32 %v3478, 0.0
        %v4259 = vmax.f32 %v3483, 0.0
        %v4260 = vmax.f32 %v3486, 0.0
        %v4261 = vmax.f32 %v3491, 0.0
        %v4262 = vmax.f32 %v3494, 0.0
        %v4263 = vmax.f32 %v3499, 0.0
        %v4264 = vmax.f32 %v3502, 0.0
        %v4265 = vmax.f32 %v3507, 0.0
        %v4266 = vmax.f32 %v3510, 0.0
        %v4267 = vmax.f32 %v3515, 0.0
        %v4268 = vmax.f32 %v3518, 0.0
        %v4269 = vmax.f32 %v3523, 0.0
        %v4270 = vmax.f32 %v3526, 0.0
        %v4271 = vmax.f32 %v3531, 0.0
        %v4272 = vmax.f32 %v3534, 0.0
        %v4273 = vmax.f32 %v3539, 0.0
        %v4274 = vmax.f32 %v3542, 0.0
        %v4275 = vmax.f32 %v3547, 0.0
        %v4276 = vmax.f32 %v3550, 0.0
        %v4277 = vmax.f32 %v3555, 0.0
        %v4278 = vmax.f32 %v3558, 0.0
        %v4279 = vmax.f32 %v3563, 0.0
        %v4280 = vmax.f32 %v3566, 0.0
        %v4281 = vmax.f32 %v3571, 0.0
        %v4282 = vmax.f32 %v3574, 0.0
        %v4283 = vmax.f32 %v3579, 0.0
        %v4284 = vmax.f32 %v3582, 0.0
        %v4285 = vmax.f32 %v3587, 0.0
        %v4286 = vmax.f32 %v3590, 0.0
        %v4287 = vmax.f32 %v3595, 0.0
        %v4288 = vmax.f32 %v3598, 0.0
        %v4289 = vmax.f32 %v3603, 0.0
        %v4290 = vmax.f32 %v3606, 0.0
        %v4291 = vmax.f32 %v3611, 0.0
        %v4292 = vmax.f32 %v3614, 0.0
        %v4293 = vmax.f32 %v3619, 0.0
        %v4294 = vmax.f32 %v3622, 0.0
        %v4295 = vmax.f32 %v3627, 0.0
        %v4296 = vmax.f32 %v3630, 0.0
        %v4297 = vmax.f32 %v3635, 0.0
        %v4298 = vmax.f32 %v3638, 0.0
        %v4299 = vmax.f32 %v3643, 0.0
        %v4300 = vmax.f32 %v3646, 0.0
        %v4301 = vmax.f32 %v3651, 0.0
        %v4302 = vmax.f32 %v3654, 0.0
        %v4303 = vmax.f32 %v3659, 0.0
        %v4304 = vmax.f32 %v3662, 0.0
        %v4305 = vmax.f32 %v3667, 0.0
        %v4306 = vmax.f32 %v3670, 0.0
        %v4307 = vmax.f32 %v3675, 0.0
        %v4308 = vmax.f32 %v3678, 0.0
        %v4309 = vmax.f32 %v3683, 0.0
        %v4310 = vmax.f32 %v3686, 0.0
        %v4311 = vmax.f32 %v3691, 0.0
        %v4312 = vmax.f32 %v3694, 0.0
        %v4313 = vmax.f32 %v3699, 0.0
        %v4314 = vmax.f32 %v3702, 0.0
        %v4315 = vmax.f32 %v3707, 0.0
        %v4316 = vmax.f32 %v3710, 0.0
        %v4317 = vmax.f32 %v3715, 0.0
        %v4318 = vmax.f32 %v3718, 0.0
        %v4319 = vmax.f32 %v3723, 0.0
        %v4320 = vmax.f32 %v3726, 0.0
        %v4321 = vmax.f32 %v3731, 0.0
        %v4322 = vmax.f32 %v3734, 0.0
        %v4323 = vmax.f32 %v3739, 0.0
        %v4324 = vmax.f32 %v3742, 0.0
        %v4325 = vmax.f32 %v3747, 0.0
        %v4326 = vmax.f32 %v3750, 0.0
        %v4327 = vmax.f32 %v3755, 0.0
        %v4328 = vmax.f32 %v3758, 0.0
        %v4329 = vmax.f32 %v3763, 0.0
        %v4330 = vmax.f32 %v3766, 0.0
        %v4331 = vmax.f32 %v3771, 0.0
        %v4332 = vmax.f32 %v3774, 0.0
        %v4333 = vmax.f32 %v3779, 0.0
        %v4334 = vmax.f32 %v3782, 0.0
        %v4335 = vmax.f32 %v3787, 0.0
        %v4336 = vmax.f32 %v3790, 0.0
        %v4337 = vmax.f32 %v3795, 0.0
        %v4338 = vmax.f32 %v3798, 0.0
        %v4339 = vmax.f32 %v3803, 0.0
        %v4340 = vmax.f32 %v3806, 0.0
        %v4341 = vmax.f32 %v3811, 0.0
        %v4342 = vmax.f32 %v3814, 0.0
        %v4343 = vmax.f32 %v3819, 0.0
        %v4344 = vmax.f32 %v3822, 0.0
        %v4345 = vmax.f32 %v3827, 0.0
        %v4346 = vmax.f32 %v3830, 0.0
        %v4347 = vmax.f32 %v3835, 0.0
        %v4348 = vmax.f32 %v3838, 0.0
        %v4349 = vmax.f32 %v3843, 0.0
        %v4350 = vmax.f32 %v3846, 0.0
        %v4351 = vmax.f32 %v3851, 0.0
        %v4352 = vmax.f32 %v3854, 0.0
        %v4353 = vmax.f32 %v3859, 0.0
        %v4354 = vmax.f32 %v3862, 0.0
        %v4355 = vmax.f32 %v3867, 0.0
        %v4356 = vmax.f32 %v3870, 0.0
        %v4357 = vmax.f32 %v3875, 0.0
        %v4358 = vmax.f32 %v3878, 0.0
        %v4359 = vmax.f32 %v3883, 0.0
        %v4360 = vmax.f32 %v3886, 0.0
        %v4361 = vmax.f32 %v3891, 0.0
        %v4362 = vmax.f32 %v3894, 0.0
        %v4363 = vmax.f32 %v3899, 0.0
        %v4364 = vmax.f32 %v3902, 0.0
        %v4365 = vmax.f32 %v3907, 0.0
        %v4366 = vmax.f32 %v3910, 0.0
        %v4367 = vmax.f32 %v3915, 0.0
        %v4368 = vmax.f32 %v3918, 0.0
        %v4369 = vmax.f32 %v3923, 0.0
        %v4370 = vmax.f32 %v3926, 0.0
        %v4371 = vmax.f32 %v3931, 0.0
        %v4372 = vmax.f32 %v3934, 0.0
        %v4373 = vmax.f32 %v3939, 0.0
        %v4374 = vmax.f32 %v3942, 0.0
        %v4375 = vmax.f32 %v3947, 0.0
        %v4376 = vmax.f32 %v3950, 0.0
        %v4377 = vmax.f32 %v3955, 0.0
        %v4378 = vmax.f32 %v3958, 0.0
        %v4379 = vmax.f32 %v3963, 0.0
        %v4380 = vmax.f32 %v3966, 0.0
        %v4381 = vmax.f32 %v3971, 0.0
        %v4382 = vmax.f32 %v3974, 0.0
        %v4383 = vmax.f32 %v3979, 0.0
        %v4384 = vmax.f32 %v3982, 0.0
        %v4385 = vmax.f32 %v3987, 0.0
        %v4386 = vmax.f32 %v3990, 0.0
        %v4387 = vmax.f32 %v3995, 0.0
        %v4388 = vmax.f32 %v3998, 0.0
        %v4389 = vmax.f32 %v4003, 0.0
        %v4390 = vmax.f32 %v4006, 0.0
        %v4391 = vmax.f32 %v4011, 0.0
        %v4392 = vmax.f32 %v4014, 0.0
        %v4393 = vmax.f32 %v4019, 0.0
        %v4394 = vmax.f32 %v4022, 0.0
        %v4395 = vmax.f32 %v4027, 0.0
        %v4396 = vmax.f32 %v4030, 0.0
        %v4397 = vmax.f32 %v4035, 0.0
        %v4398 = vmax.f32 %v4038, 0.0
        %v4399 = vmax.f32 %v4043, 0.0
        %v4400 = vmax.f32 %v4046, 0.0
        %v4401 = vmax.f32 %v4051, 0.0
        %v4402 = vmax.f32 %v4054, 0.0
        %v4403 = vmax.f32 %v4059, 0.0
        %v4404 = vmax.f32 %v4062, 0.0
        %v4405 = vmax.f32 %v4067, 0.0
        %v4406 = vmax.f32 %v4070, 0.0
        %v4407 = vmax.f32 %v4075, 0.0
        %v4408 = vmax.f32 %v4078, 0.0
        %v4409 = vmax.f32 %v4083, 0.0
        %v4410 = vmax.f32 %v4086, 0.0
        %v4411 = vmax.f32 %v4091, 0.0
        %v4412 = vmax.f32 %v4094, 0.0
        %v4413 = vmax.f32 %v4099, 0.0
        %v4414 = vmax.f32 %v4102, 0.0
        %v4415 = vmax.f32 %v4107, 0.0
        %v4416 = vmax.f32 %v4110, 0.0
        %v4417 = vmax.f32 %v4115, 0.0
        %v4418 = vmax.f32 %v4118, 0.0
        %v4419 = vmax.f32 %v4123, 0.0
        %v4420 = vmax.f32 %v4126, 0.0
        %v4421 = vmax.f32 %v4131, 0.0
        %v4422 = vmax.f32 %v4134, 0.0
        %v4423 = vmax.f32 %v4139, 0.0
        %v4424 = vmax.f32 %v4142, 0.0
        %v4425 = vmax.f32 %v4147, 0.0
        %v4426 = vmax.f32 %v4150, 0.0
        %v4427 = vmax.f32 %v4155, 0.0
        %v4428 = vmax.f32 %v4158, 0.0
        %v4429 = vmax.f32 %v4163, 0.0
        %v4430 = vmax.f32 %v4166, 0.0
        %v4431 = vmax.f32 %v4171, 0.0
        %v4432 = vmax.f32 %v4174, 0.0
        %v4433 = vpack.c.bf16 %v4178, %v4177
        %v4434 = vpack.c.bf16 %v4180, %v4179
        %v4435 = vpack.c.bf16 %v4182, %v4181
        %v4436 = vpack.c.bf16 %v4184, %v4183
        %v4437 = vpack.c.bf16 %v4186, %v4185
        %v4438 = vpack.c.bf16 %v4188, %v4187
        %v4439 = vpack.c.bf16 %v4190, %v4189
        %v4440 = vpack.c.bf16 %v4192, %v4191
        %v4441 = vpack.c.bf16 %v4194, %v4193
        %v4442 = vpack.c.bf16 %v4196, %v4195
        %v4443 = vpack.c.bf16 %v4198, %v4197
        %v4444 = vpack.c.bf16 %v4200, %v4199
        %v4445 = vpack.c.bf16 %v4202, %v4201
        %v4446 = vpack.c.bf16 %v4204, %v4203
        %v4447 = vpack.c.bf16 %v4206, %v4205
        %v4448 = vpack.c.bf16 %v4208, %v4207
        %v4449 = vpack.c.bf16 %v4210, %v4209
        %v4450 = vpack.c.bf16 %v4212, %v4211
        %v4451 = vpack.c.bf16 %v4214, %v4213
        %v4452 = vpack.c.bf16 %v4216, %v4215
        %v4453 = vpack.c.bf16 %v4218, %v4217
        %v4454 = vpack.c.bf16 %v4220, %v4219
        %v4455 = vpack.c.bf16 %v4222, %v4221
        %v4456 = vpack.c.bf16 %v4224, %v4223
        %v4457 = vpack.c.bf16 %v4226, %v4225
        %v4458 = vpack.c.bf16 %v4228, %v4227
        %v4459 = vpack.c.bf16 %v4230, %v4229
        %v4460 = vpack.c.bf16 %v4232, %v4231
        %v4461 = vpack.c.bf16 %v4234, %v4233
        %v4462 = vpack.c.bf16 %v4236, %v4235
        %v4463 = vpack.c.bf16 %v4238, %v4237
        %v4464 = vpack.c.bf16 %v4240, %v4239
        %v4465 = vpack.c.bf16 %v4242, %v4241
        %v4466 = vpack.c.bf16 %v4244, %v4243
        %v4467 = vpack.c.bf16 %v4246, %v4245
        %v4468 = vpack.c.bf16 %v4248, %v4247
        %v4469 = vpack.c.bf16 %v4250, %v4249
        %v4470 = vpack.c.bf16 %v4252, %v4251
        %v4471 = vpack.c.bf16 %v4254, %v4253
        %v4472 = vpack.c.bf16 %v4256, %v4255
        %v4473 = vpack.c.bf16 %v4258, %v4257
        %v4474 = vpack.c.bf16 %v4260, %v4259
        %v4475 = vpack.c.bf16 %v4262, %v4261
        %v4476 = vpack.c.bf16 %v4264, %v4263
        %v4477 = vpack.c.bf16 %v4266, %v4265
        %v4478 = vpack.c.bf16 %v4268, %v4267
        %v4479 = vpack.c.bf16 %v4270, %v4269
        %v4480 = vpack.c.bf16 %v4272, %v4271
        %v4481 = vpack.c.bf16 %v4274, %v4273
        %v4482 = vpack.c.bf16 %v4276, %v4275
        %v4483 = vpack.c.bf16 %v4278, %v4277
        %v4484 = vpack.c.bf16 %v4280, %v4279
        %v4485 = vpack.c.bf16 %v4282, %v4281
        %v4486 = vpack.c.bf16 %v4284, %v4283
        %v4487 = vpack.c.bf16 %v4286, %v4285
        %v4488 = vpack.c.bf16 %v4288, %v4287
        %v4489 = vpack.c.bf16 %v4290, %v4289
        %v4490 = vpack.c.bf16 %v4292, %v4291
        %v4491 = vpack.c.bf16 %v4294, %v4293
        %v4492 = vpack.c.bf16 %v4296, %v4295
        %v4493 = vpack.c.bf16 %v4298, %v4297
        %v4494 = vpack.c.bf16 %v4300, %v4299
        %v4495 = vpack.c.bf16 %v4302, %v4301
        %v4496 = vpack.c.bf16 %v4304, %v4303
        %v4497 = vpack.c.bf16 %v4306, %v4305
        %v4498 = vpack.c.bf16 %v4308, %v4307
        %v4499 = vpack.c.bf16 %v4310, %v4309
        %v4500 = vpack.c.bf16 %v4312, %v4311
        %v4501 = vpack.c.bf16 %v4314, %v4313
        %v4502 = vpack.c.bf16 %v4316, %v4315
        %v4503 = vpack.c.bf16 %v4318, %v4317
        %v4504 = vpack.c.bf16 %v4320, %v4319
        %v4505 = vpack.c.bf16 %v4322, %v4321
        %v4506 = vpack.c.bf16 %v4324, %v4323
        %v4507 = vpack.c.bf16 %v4326, %v4325
        %v4508 = vpack.c.bf16 %v4328, %v4327
        %v4509 = vpack.c.bf16 %v4330, %v4329
        %v4510 = vpack.c.bf16 %v4332, %v4331
        %v4511 = vpack.c.bf16 %v4334, %v4333
        %v4512 = vpack.c.bf16 %v4336, %v4335
        %v4513 = vpack.c.bf16 %v4338, %v4337
        %v4514 = vpack.c.bf16 %v4340, %v4339
        %v4515 = vpack.c.bf16 %v4342, %v4341
        %v4516 = vpack.c.bf16 %v4344, %v4343
        %v4517 = vpack.c.bf16 %v4346, %v4345
        %v4518 = vpack.c.bf16 %v4348, %v4347
        %v4519 = vpack.c.bf16 %v4350, %v4349
        %v4520 = vpack.c.bf16 %v4352, %v4351
        %v4521 = vpack.c.bf16 %v4354, %v4353
        %v4522 = vpack.c.bf16 %v4356, %v4355
        %v4523 = vpack.c.bf16 %v4358, %v4357
        %v4524 = vpack.c.bf16 %v4360, %v4359
        %v4525 = vpack.c.bf16 %v4362, %v4361
        %v4526 = vpack.c.bf16 %v4364, %v4363
        %v4527 = vpack.c.bf16 %v4366, %v4365
        %v4528 = vpack.c.bf16 %v4368, %v4367
        %v4529 = vpack.c.bf16 %v4370, %v4369
        %v4530 = vpack.c.bf16 %v4372, %v4371
        %v4531 = vpack.c.bf16 %v4374, %v4373
        %v4532 = vpack.c.bf16 %v4376, %v4375
        %v4533 = vpack.c.bf16 %v4378, %v4377
        %v4534 = vpack.c.bf16 %v4380, %v4379
        %v4535 = vpack.c.bf16 %v4382, %v4381
        %v4536 = vpack.c.bf16 %v4384, %v4383
        %v4537 = vpack.c.bf16 %v4386, %v4385
        %v4538 = vpack.c.bf16 %v4388, %v4387
        %v4539 = vpack.c.bf16 %v4390, %v4389
        %v4540 = vpack.c.bf16 %v4392, %v4391
        %v4541 = vpack.c.bf16 %v4394, %v4393
        %v4542 = vpack.c.bf16 %v4396, %v4395
        %v4543 = vpack.c.bf16 %v4398, %v4397
        %v4544 = vpack.c.bf16 %v4400, %v4399
        %v4545 = vpack.c.bf16 %v4402, %v4401
        %v4546 = vpack.c.bf16 %v4404, %v4403
        %v4547 = vpack.c.bf16 %v4406, %v4405
        %v4548 = vpack.c.bf16 %v4408, %v4407
        %v4549 = vpack.c.bf16 %v4410, %v4409
        %v4550 = vpack.c.bf16 %v4412, %v4411
        %v4551 = vpack.c.bf16 %v4414, %v4413
        %v4552 = vpack.c.bf16 %v4416, %v4415
        %v4553 = vpack.c.bf16 %v4418, %v4417
        %v4554 = vpack.c.bf16 %v4420, %v4419
        %v4555 = vpack.c.bf16 %v4422, %v4421
        %v4556 = vpack.c.bf16 %v4424, %v4423
        %v4557 = vpack.c.bf16 %v4426, %v4425
        %v4558 = vpack.c.bf16 %v4428, %v4427
        %v4559 = vpack.c.bf16 %v4430, %v4429
        %v4560 = vpack.c.bf16 %v4432, %v4431
        %v4561 = vld [vmem:[%s5] sm:$0xf]
        %v4562 = vld [vmem:[%s5 + $0x4] sm:$0xf]
        %v4563 = vld [vmem:[%s5 + $0x8] sm:$0xf]
        %v4564 = vld [vmem:[%s5 + $0xc] sm:$0xf]
        %v4565 = vld [vmem:[%s5 + $0x10] sm:$0xf]
        %v4566 = vld [vmem:[%s5 + $0x14] sm:$0xf]
        %v4567 = vld [vmem:[%s5 + $0x18] sm:$0xf]
        %v4568 = vld [vmem:[%s5 + $0x1c] sm:$0xf]
        %v4569 = vld [vmem:[%s5 + $0x20] sm:$0xf]
        %v4570 = vld [vmem:[%s5 + $0x24] sm:$0xf]
        %v4571 = vld [vmem:[%s5 + $0x28] sm:$0xf]
        %v4572 = vld [vmem:[%s5 + $0x2c] sm:$0xf]
        %v4573 = vld [vmem:[%s5 + $0x30] sm:$0xf]
        %v4574 = vld [vmem:[%s5 + $0x34] sm:$0xf]
        %v4575 = vld [vmem:[%s5 + $0x38] sm:$0xf]
        %v4576 = vld [vmem:[%s5 + $0x3c] sm:$0xf]
        %v4577 = vld [vmem:[%s6] sm:$0x1]
        %v4579 = vlaneseq
        %v4580 = vshrl.u32 %v4579, 7
        %v4581 = vsub.s32 0, %v4580
        %v4582 = vrot.slane %v4577, %v4581
        %v4600 = vunpack.c.l.b16 %v4561
        %v4601 = vunpack.c.l.b16 %v4562
        %v4602 = vunpack.c.l.b16 %v4563
        %v4603 = vunpack.c.l.b16 %v4564
        %v4604 = vunpack.c.l.b16 %v4565
        %v4605 = vunpack.c.l.b16 %v4566
        %v4606 = vunpack.c.l.b16 %v4567
        %v4607 = vunpack.c.l.b16 %v4568
        %v4608 = vunpack.c.l.b16 %v4569
        %v4609 = vunpack.c.l.b16 %v4570
        %v4610 = vunpack.c.l.b16 %v4571
        %v4611 = vunpack.c.l.b16 %v4572
        %v4612 = vunpack.c.l.b16 %v4573
        %v4613 = vunpack.c.l.b16 %v4574
        %v4614 = vunpack.c.l.b16 %v4575
        %v4615 = vunpack.c.l.b16 %v4576
        %v4616 = vpack.c.b16 %v4601, %v4600
        %v4617 = vpack.c.b16 %v4603, %v4602
        %v4618 = vpack.c.b16 %v4605, %v4604
        %v4619 = vpack.c.b16 %v4607, %v4606
        %v4620 = vpack.c.b16 %v4609, %v4608
        %v4621 = vpack.c.b16 %v4611, %v4610
        %v4622 = vpack.c.b16 %v4613, %v4612
        %v4623 = vpack.c.b16 %v4615, %v4614
        %4632 = vmatprep.subr.bf16.mxu0 0
        %4633 = vmatpush1.bf16.msra.mxu0 %v4616
        %4634 = vmatprep.subr.bf16.mxu0 0
        %4635 = vmatpush1.bf16.msra.mxu0 %v4617
        %4636 = vmatprep.subr.bf16.mxu0 0
        %4637 = vmatpush1.bf16.msra.mxu0 %v4618
        %4638 = vmatprep.subr.bf16.mxu0 0
        %4639 = vmatpush1.bf16.msra.mxu0 %v4619
        %4640 = vmatprep.subr.bf16.mxu0 0
        %4641 = vmatpush1.bf16.msra.mxu0 %v4620
        %4642 = vmatprep.subr.bf16.mxu0 0
        %4643 = vmatpush1.bf16.msra.mxu0 %v4621
        %4644 = vmatprep.subr.bf16.mxu0 0
        %4645 = vmatpush1.bf16.msra.mxu0 %v4622
        %4646 = vmatprep.subr.bf16.mxu0 0
        %4647 = vmatpush1.bf16.msra.mxu0 %v4623
        %4648 = vmatprep.subr.bf16.mxu0 0
        %4649 = vmatpush1.bf16.msra.mxu0 0
        %4650 = vmatprep.subr.bf16.mxu0 0
        %4651 = vmatpush1.bf16.msra.mxu0 0
        %4652 = vmatprep.subr.bf16.mxu0 0
        %4653 = vmatpush1.bf16.msra.mxu0 0
        %4654 = vmatprep.subr.bf16.mxu0 0
        %4655 = vmatpush1.bf16.msra.mxu0 0
        %4656 = vmatprep.subr.bf16.mxu0 0
        %4657 = vmatpush1.bf16.msra.mxu0 0
        %4658 = vmatprep.subr.bf16.mxu0 0
        %4659 = vmatpush1.bf16.msra.mxu0 0
        %4660 = vmatprep.subr.bf16.mxu0 0
        %4661 = vmatpush1.bf16.msra.mxu0 0
        %4662 = vmatprep.subr.bf16.mxu0 0
        %4663 = vmatpush1.bf16.msra.mxu0 0
        %4664 = vmatprep.mubr.bf16.mxu0 0
        %4665 = vmatmul.mubr.bf16.gmra.mrb[0].mxu0 %v4433
        %v4666 = vpop.f32.mrb[0].mxu0
        %v4667 = vadd.f32 %v4582, %v4666
        %v4668 = vpop.f32.mrb[0].mxu0
        %v4669 = vpop.f32.mrb[0].mxu0
        %v4670 = vadd.f32 %v4582, %v4669
        %v4671 = vpop.f32.mrb[0].mxu0
        %4672 = vmatprep.mubr.bf16.mxu0 0
        %4673 = vmatmul.mubr.bf16.gmra.mrb[0].mxu0 %v4434
        %v4674 = vpop.f32.mrb[0].mxu0
        %v4675 = vadd.f32 %v4582, %v4674
        %v4676 = vpop.f32.mrb[0].mxu0
        %v4677 = vpop.f32.mrb[0].mxu0
        %v4678 = vadd.f32 %v4582, %v4677
        %v4679 = vpop.f32.mrb[0].mxu0
        %4680 = vmatprep.mubr.bf16.mxu0 0
        %4681 = vmatmul.mubr.bf16.gmra.mrb[0].mxu0 %v4435
        %v4682 = vpop.f32.mrb[0].mxu0
        %v4683 = vadd.f32 %v4582, %v4682
        %v4684 = vpop.f32.mrb[0].mxu0
        %v4685 = vpop.f32.mrb[0].mxu0
        %v4686 = vadd.f32 %v4582, %v4685
        %v4687 = vpop.f32.mrb[0].mxu0
        %4688 = vmatprep.mubr.bf16.mxu0 0
        %4689 = vmatmul.mubr.bf16.gmra.mrb[0].mxu0 %v4436
        %v4690 = vpop.f32.mrb[0].mxu0
        %v4691 = vadd.f32 %v4582, %v4690
        %v4692 = vpop.f32.mrb[0].mxu0
        %v4693 = vpop.f32.mrb[0].mxu0
        %v4694 = vadd.f32 %v4582, %v4693
        %v4695 = vpop.f32.mrb[0].mxu0
        %4696 = vmatprep.mubr.bf16.mxu0 0
        %4697 = vmatmul.mubr.bf16.gmra.mrb[0].mxu0 %v4437
        %v4698 = vpop.f32.mrb[0].mxu0
        %v4699 = vadd.f32 %v4582, %v4698
        %v4700 = vpop.f32.mrb[0].mxu0
        %v4701 = vpop.f32.mrb[0].mxu0
        %v4702 = vadd.f32 %v4582, %v4701
        %v4703 = vpop.f32.mrb[0].mxu0
        %4704 = vmatprep.mubr.bf16.mxu0 0
        %4705 = vmatmul.mubr.bf16.gmra.mrb[0].mxu0 %v4438
        %v4706 = vpop.f32.mrb[0].mxu0
        %v4707 = vadd.f32 %v4582, %v4706
        %v4708 = vpop.f32.mrb[0].mxu0
        %v4709 = vpop.f32.mrb[0].mxu0
        %v4710 = vadd.f32 %v4582, %v4709
        %v4711 = vpop.f32.mrb[0].mxu0
        %4712 = vmatprep.mubr.bf16.mxu0 0
        %4713 = vmatmul.mubr.bf16.gmra.mrb[0].mxu0 %v4439
        %v4714 = vpop.f32.mrb[0].mxu0
        %v4715 = vadd.f32 %v4582, %v4714
        %v4716 = vpop.f32.mrb[0].mxu0
        %v4717 = vpop.f32.mrb[0].mxu0
        %v4718 = vadd.f32 %v4582, %v4717
        %v4719 = vpop.f32.mrb[0].mxu0
        %4720 = vmatprep.mubr.bf16.mxu0 0
        %4721 = vmatmul.mubr.bf16.gmra.mrb[0].mxu0 %v4440
        %v4722 = vpop.f32.mrb[0].mxu0
        %v4723 = vadd.f32 %v4582, %v4722
        %v4724 = vpop.f32.mrb[0].mxu0
        %v4725 = vpop.f32.mrb[0].mxu0
        %v4726 = vadd.f32 %v4582, %v4725
        %v4727 = vpop.f32.mrb[0].mxu0
        %4728 = vmatprep.mubr.bf16.mxu0 0
        %4729 = vmatmul.mubr.bf16.gmra.mrb[0].mxu0 %v4441
        %v4730 = vpop.f32.mrb[0].mxu0
        %v4731 = vadd.f32 %v4582, %v4730
        %v4732 = vpop.f32.mrb[0].mxu0
        %v4733 = vpop.f32.mrb[0].mxu0
        %v4734 = vadd.f32 %v4582, %v4733
        %v4735 = vpop.f32.mrb[0].mxu0
        %4736 = vmatprep.mubr.bf16.mxu0 0
        %4737 = vmatmul.mubr.bf16.gmra.mrb[0].mxu0 %v4442
        %v4738 = vpop.f32.mrb[0].mxu0
        %v4739 = vadd.f32 %v4582, %v4738
        %v4740 = vpop.f32.mrb[0].mxu0
        %v4741 = vpop.f32.mrb[0].mxu0
        %v4742 = vadd.f32 %v4582, %v4741
        %v4743 = vpop.f32.mrb[0].mxu0
        %4744 = vmatprep.mubr.bf16.mxu0 0
        %4745 = vmatmul.mubr.bf16.gmra.mrb[0].mxu0 %v4443
        %v4746 = vpop.f32.mrb[0].mxu0
        %v4747 = vadd.f32 %v4582, %v4746
        %v4748 = vpop.f32.mrb[0].mxu0
        %v4749 = vpop.f32.mrb[0].mxu0
        %v4750 = vadd.f32 %v4582, %v4749
        %v4751 = vpop.f32.mrb[0].mxu0
        %4752 = vmatprep.mubr.bf16.mxu0 0
        %4753 = vmatmul.mubr.bf16.gmra.mrb[0].mxu0 %v4444
        %v4754 = vpop.f32.mrb[0].mxu0
        %v4755 = vadd.f32 %v4582, %v4754
        %v4756 = vpop.f32.mrb[0].mxu0
        %v4757 = vpop.f32.mrb[0].mxu0
        %v4758 = vadd.f32 %v4582, %v4757
        %v4759 = vpop.f32.mrb[0].mxu0
        %4760 = vmatprep.mubr.bf16.mxu0 0
        %4761 = vmatmul.mubr.bf16.gmra.mrb[0].mxu0 %v4445
        %v4762 = vpop.f32.mrb[0].mxu0
        %v4763 = vadd.f32 %v4582, %v4762
        %v4764 = vpop.f32.mrb[0].mxu0
        %v4765 = vpop.f32.mrb[0].mxu0
        %v4766 = vadd.f32 %v4582, %v4765
        %v4767 = vpop.f32.mrb[0].mxu0
        %4768 = vmatprep.mubr.bf16.mxu0 0
        %4769 = vmatmul.mubr.bf16.gmra.mrb[0].mxu0 %v4446
        %v4770 = vpop.f32.mrb[0].mxu0
        %v4771 = vadd.f32 %v4582, %v4770
        %v4772 = vpop.f32.mrb[0].mxu0
        %v4773 = vpop.f32.mrb[0].mxu0
        %v4774 = vadd.f32 %v4582, %v4773
        %v4775 = vpop.f32.mrb[0].mxu0
        %4776 = vmatprep.mubr.bf16.mxu0 0
        %4777 = vmatmul.mubr.bf16.gmra.mrb[0].mxu0 %v4447
        %v4778 = vpop.f32.mrb[0].mxu0
        %v4779 = vadd.f32 %v4582, %v4778
        %v4780 = vpop.f32.mrb[0].mxu0
        %v4781 = vpop.f32.mrb[0].mxu0
        %v4782 = vadd.f32 %v4582, %v4781
        %v4783 = vpop.f32.mrb[0].mxu0
        %4784 = vmatprep.mubr.bf16.mxu0 0
        %4785 = vmatmul.mubr.bf16.gmra.mrb[0].mxu0 %v4448
        %v4786 = vpop.f32.mrb[0].mxu0
        %v4787 = vadd.f32 %v4582, %v4786
        %v4788 = vpop.f32.mrb[0].mxu0
        %v4789 = vpop.f32.mrb[0].mxu0
        %v4790 = vadd.f32 %v4582, %v4789
        %v4791 = vpop.f32.mrb[0].mxu0
        %4792 = vmatprep.mubr.bf16.mxu0 0
        %4793 = vmatmul.mubr.bf16.gmra.mrb[0].mxu0 %v4449
        %v4794 = vpop.f32.mrb[0].mxu0
        %v4795 = vadd.f32 %v4582, %v4794
        %v4796 = vpop.f32.mrb[0].mxu0
        %v4797 = vpop.f32.mrb[0].mxu0
        %v4798 = vadd.f32 %v4582, %v4797
        %v4799 = vpop.f32.mrb[0].mxu0
        %4800 = vmatprep.mubr.bf16.mxu0 0
        %4801 = vmatmul.mubr.bf16.gmra.mrb[0].mxu0 %v4450
        %v4802 = vpop.f32.mrb[0].mxu0
        %v4803 = vadd.f32 %v4582, %v4802
        %v4804 = vpop.f32.mrb[0].mxu0
        %v4805 = vpop.f32.mrb[0].mxu0
        %v4806 = vadd.f32 %v4582, %v4805
        %v4807 = vpop.f32.mrb[0].mxu0
        %4808 = vmatprep.mubr.bf16.mxu0 0
        %4809 = vmatmul.mubr.bf16.gmra.mrb[0].mxu0 %v4451
        %v4810 = vpop.f32.mrb[0].mxu0
        %v4811 = vadd.f32 %v4582, %v4810
        %v4812 = vpop.f32.mrb[0].mxu0
        %v4813 = vpop.f32.mrb[0].mxu0
        %v4814 = vadd.f32 %v4582, %v4813
        %v4815 = vpop.f32.mrb[0].mxu0
        %4816 = vmatprep.mubr.bf16.mxu0 0
        %4817 = vmatmul.mubr.bf16.gmra.mrb[0].mxu0 %v4452
        %v4818 = vpop.f32.mrb[0].mxu0
        %v4819 = vadd.f32 %v4582, %v4818
        %v4820 = vpop.f32.mrb[0].mxu0
        %v4821 = vpop.f32.mrb[0].mxu0
        %v4822 = vadd.f32 %v4582, %v4821
        %v4823 = vpop.f32.mrb[0].mxu0
        %4824 = vmatprep.mubr.bf16.mxu0 0
        %4825 = vmatmul.mubr.bf16.gmra.mrb[0].mxu0 %v4453
        %v4826 = vpop.f32.mrb[0].mxu0
        %v4827 = vadd.f32 %v4582, %v4826
        %v4828 = vpop.f32.mrb[0].mxu0
        %v4829 = vpop.f32.mrb[0].mxu0
        %v4830 = vadd.f32 %v4582, %v4829
        %v4831 = vpop.f32.mrb[0].mxu0
        %4832 = vmatprep.mubr.bf16.mxu0 0
        %4833 = vmatmul.mubr.bf16.gmra.mrb[0].mxu0 %v4454
        %v4834 = vpop.f32.mrb[0].mxu0
        %v4835 = vadd.f32 %v4582, %v4834
        %v4836 = vpop.f32.mrb[0].mxu0
        %v4837 = vpop.f32.mrb[0].mxu0
        %v4838 = vadd.f32 %v4582, %v4837
        %v4839 = vpop.f32.mrb[0].mxu0
        %4840 = vmatprep.mubr.bf16.mxu0 0
        %4841 = vmatmul.mubr.bf16.gmra.mrb[0].mxu0 %v4455
        %v4842 = vpop.f32.mrb[0].mxu0
        %v4843 = vadd.f32 %v4582, %v4842
        %v4844 = vpop.f32.mrb[0].mxu0
        %v4845 = vpop.f32.mrb[0].mxu0
        %v4846 = vadd.f32 %v4582, %v4845
        %v4847 = vpop.f32.mrb[0].mxu0
        %4848 = vmatprep.mubr.bf16.mxu0 0
        %4849 = vmatmul.mubr.bf16.gmra.mrb[0].mxu0 %v4456
        %v4850 = vpop.f32.mrb[0].mxu0
        %v4851 = vadd.f32 %v4582, %v4850
        %v4852 = vpop.f32.mrb[0].mxu0
        %v4853 = vpop.f32.mrb[0].mxu0
        %v4854 = vadd.f32 %v4582, %v4853
        %v4855 = vpop.f32.mrb[0].mxu0
        %4856 = vmatprep.mubr.bf16.mxu0 0
        %4857 = vmatmul.mubr.bf16.gmra.mrb[0].mxu0 %v4457
        %v4858 = vpop.f32.mrb[0].mxu0
        %v4859 = vadd.f32 %v4582, %v4858
        %v4860 = vpop.f32.mrb[0].mxu0
        %v4861 = vpop.f32.mrb[0].mxu0
        %v4862 = vadd.f32 %v4582, %v4861
        %v4863 = vpop.f32.mrb[0].mxu0
        %4864 = vmatprep.mubr.bf16.mxu0 0
        %4865 = vmatmul.mubr.bf16.gmra.mrb[0].mxu0 %v4458
        %v4866 = vpop.f32.mrb[0].mxu0
        %v4867 = vadd.f32 %v4582, %v4866
        %v4868 = vpop.f32.mrb[0].mxu0
        %v4869 = vpop.f32.mrb[0].mxu0
        %v4870 = vadd.f32 %v4582, %v4869
        %v4871 = vpop.f32.mrb[0].mxu0
        %4872 = vmatprep.mubr.bf16.mxu0 0
        %4873 = vmatmul.mubr.bf16.gmra.mrb[0].mxu0 %v4459
        %v4874 = vpop.f32.mrb[0].mxu0
        %v4875 = vadd.f32 %v4582, %v4874
        %v4876 = vpop.f32.mrb[0].mxu0
        %v4877 = vpop.f32.mrb[0].mxu0
        %v4878 = vadd.f32 %v4582, %v4877
        %v4879 = vpop.f32.mrb[0].mxu0
        %4880 = vmatprep.mubr.bf16.mxu0 0
        %4881 = vmatmul.mubr.bf16.gmra.mrb[0].mxu0 %v4460
        %v4882 = vpop.f32.mrb[0].mxu0
        %v4883 = vadd.f32 %v4582, %v4882
        %v4884 = vpop.f32.mrb[0].mxu0
        %v4885 = vpop.f32.mrb[0].mxu0
        %v4886 = vadd.f32 %v4582, %v4885
        %v4887 = vpop.f32.mrb[0].mxu0
        %4888 = vmatprep.mubr.bf16.mxu0 0
        %4889 = vmatmul.mubr.bf16.gmra.mrb[0].mxu0 %v4461
        %v4890 = vpop.f32.mrb[0].mxu0
        %v4891 = vadd.f32 %v4582, %v4890
        %v4892 = vpop.f32.mrb[0].mxu0
        %v4893 = vpop.f32.mrb[0].mxu0
        %v4894 = vadd.f32 %v4582, %v4893
        %v4895 = vpop.f32.mrb[0].mxu0
        %4896 = vmatprep.mubr.bf16.mxu0 0
        %4897 = vmatmul.mubr.bf16.gmra.mrb[0].mxu0 %v4462
        %v4898 = vpop.f32.mrb[0].mxu0
        %v4899 = vadd.f32 %v4582, %v4898
        %v4900 = vpop.f32.mrb[0].mxu0
        %v4901 = vpop.f32.mrb[0].mxu0
        %v4902 = vadd.f32 %v4582, %v4901
        %v4903 = vpop.f32.mrb[0].mxu0
        %4904 = vmatprep.mubr.bf16.mxu0 0
        %4905 = vmatmul.mubr.bf16.gmra.mrb[0].mxu0 %v4463
        %v4906 = vpop.f32.mrb[0].mxu0
        %v4907 = vadd.f32 %v4582, %v4906
        %v4908 = vpop.f32.mrb[0].mxu0
        %v4909 = vpop.f32.mrb[0].mxu0
        %v4910 = vadd.f32 %v4582, %v4909
        %v4911 = vpop.f32.mrb[0].mxu0
        %4912 = vmatprep.mubr.bf16.mxu0 0
        %4913 = vmatmul.mubr.bf16.gmra.mrb[0].mxu0 %v4464
        %v4914 = vpop.f32.mrb[0].mxu0
        %v4915 = vadd.f32 %v4582, %v4914
        %v4916 = vpop.f32.mrb[0].mxu0
        %v4917 = vpop.f32.mrb[0].mxu0
        %v4918 = vadd.f32 %v4582, %v4917
        %v4919 = vpop.f32.mrb[0].mxu0
        %4920 = vmatprep.mubr.bf16.mxu0 0
        %4921 = vmatmul.mubr.bf16.gmra.mrb[0].mxu0 %v4465
        %v4922 = vpop.f32.mrb[0].mxu0
        %v4923 = vadd.f32 %v4582, %v4922
        %v4924 = vpop.f32.mrb[0].mxu0
        %v4925 = vpop.f32.mrb[0].mxu0
        %v4926 = vadd.f32 %v4582, %v4925
        %v4927 = vpop.f32.mrb[0].mxu0
        %4928 = vmatprep.mubr.bf16.mxu0 0
        %4929 = vmatmul.mubr.bf16.gmra.mrb[0].mxu0 %v4466
        %v4930 = vpop.f32.mrb[0].mxu0
        %v4931 = vadd.f32 %v4582, %v4930
        %v4932 = vpop.f32.mrb[0].mxu0
        %v4933 = vpop.f32.mrb[0].mxu0
        %v4934 = vadd.f32 %v4582, %v4933
        %v4935 = vpop.f32.mrb[0].mxu0
        %4936 = vmatprep.mubr.bf16.mxu0 0
        %4937 = vmatmul.mubr.bf16.gmra.mrb[0].mxu0 %v4467
        %v4938 = vpop.f32.mrb[0].mxu0
        %v4939 = vadd.f32 %v4582, %v4938
        %v4940 = vpop.f32.mrb[0].mxu0
        %v4941 = vpop.f32.mrb[0].mxu0
        %v4942 = vadd.f32 %v4582, %v4941
        %v4943 = vpop.f32.mrb[0].mxu0
        %4944 = vmatprep.mubr.bf16.mxu0 0
        %4945 = vmatmul.mubr.bf16.gmra.mrb[0].mxu0 %v4468
        %v4946 = vpop.f32.mrb[0].mxu0
        %v4947 = vadd.f32 %v4582, %v4946
        %v4948 = vpop.f32.mrb[0].mxu0
        %v4949 = vpop.f32.mrb[0].mxu0
        %v4950 = vadd.f32 %v4582, %v4949
        %v4951 = vpop.f32.mrb[0].mxu0
        %4952 = vmatprep.mubr.bf16.mxu0 0
        %4953 = vmatmul.mubr.bf16.gmra.mrb[0].mxu0 %v4469
        %v4954 = vpop.f32.mrb[0].mxu0
        %v4955 = vadd.f32 %v4582, %v4954
        %v4956 = vpop.f32.mrb[0].mxu0
        %v4957 = vpop.f32.mrb[0].mxu0
        %v4958 = vadd.f32 %v4582, %v4957
        %v4959 = vpop.f32.mrb[0].mxu0
        %4960 = vmatprep.mubr.bf16.mxu0 0
        %4961 = vmatmul.mubr.bf16.gmra.mrb[0].mxu0 %v4470
        %v4962 = vpop.f32.mrb[0].mxu0
        %v4963 = vadd.f32 %v4582, %v4962
        %v4964 = vpop.f32.mrb[0].mxu0
        %v4965 = vpop.f32.mrb[0].mxu0
        %v4966 = vadd.f32 %v4582, %v4965
        %v4967 = vpop.f32.mrb[0].mxu0
        %4968 = vmatprep.mubr.bf16.mxu0 0
        %4969 = vmatmul.mubr.bf16.gmra.mrb[0].mxu0 %v4471
        %v4970 = vpop.f32.mrb[0].mxu0
        %v4971 = vadd.f32 %v4582, %v4970
        %v4972 = vpop.f32.mrb[0].mxu0
        %v4973 = vpop.f32.mrb[0].mxu0
        %v4974 = vadd.f32 %v4582, %v4973
        %v4975 = vpop.f32.mrb[0].mxu0
        %4976 = vmatprep.mubr.bf16.mxu0 0
        %4977 = vmatmul.mubr.bf16.gmra.mrb[0].mxu0 %v4472
        %v4978 = vpop.f32.mrb[0].mxu0
        %v4979 = vadd.f32 %v4582, %v4978
        %v4980 = vpop.f32.mrb[0].mxu0
        %v4981 = vpop.f32.mrb[0].mxu0
        %v4982 = vadd.f32 %v4582, %v4981
        %v4983 = vpop.f32.mrb[0].mxu0
        %4984 = vmatprep.mubr.bf16.mxu0 0
        %4985 = vmatmul.mubr.bf16.gmra.mrb[0].mxu0 %v4473
        %v4986 = vpop.f32.mrb[0].mxu0
        %v4987 = vadd.f32 %v4582, %v4986
        %v4988 = vpop.f32.mrb[0].mxu0
        %v4989 = vpop.f32.mrb[0].mxu0
        %v4990 = vadd.f32 %v4582, %v4989
        %v4991 = vpop.f32.mrb[0].mxu0
        %4992 = vmatprep.mubr.bf16.mxu0 0
        %4993 = vmatmul.mubr.bf16.gmra.mrb[0].mxu0 %v4474
        %v4994 = vpop.f32.mrb[0].mxu0
        %v4995 = vadd.f32 %v4582, %v4994
        %v4996 = vpop.f32.mrb[0].mxu0
        %v4997 = vpop.f32.mrb[0].mxu0
        %v4998 = vadd.f32 %v4582, %v4997
        %v4999 = vpop.f32.mrb[0].mxu0
        %5000 = vmatprep.mubr.bf16.mxu0 0
        %5001 = vmatmul.mubr.bf16.gmra.mrb[0].mxu0 %v4475
        %v5002 = vpop.f32.mrb[0].mxu0
        %v5003 = vadd.f32 %v4582, %v5002
        %v5004 = vpop.f32.mrb[0].mxu0
        %v5005 = vpop.f32.mrb[0].mxu0
        %v5006 = vadd.f32 %v4582, %v5005
        %v5007 = vpop.f32.mrb[0].mxu0
        %5008 = vmatprep.mubr.bf16.mxu0 0
        %5009 = vmatmul.mubr.bf16.gmra.mrb[0].mxu0 %v4476
        %v5010 = vpop.f32.mrb[0].mxu0
        %v5011 = vadd.f32 %v4582, %v5010
        %v5012 = vpop.f32.mrb[0].mxu0
        %v5013 = vpop.f32.mrb[0].mxu0
        %v5014 = vadd.f32 %v4582, %v5013
        %v5015 = vpop.f32.mrb[0].mxu0
        %5016 = vmatprep.mubr.bf16.mxu0 0
        %5017 = vmatmul.mubr.bf16.gmra.mrb[0].mxu0 %v4477
        %v5018 = vpop.f32.mrb[0].mxu0
        %v5019 = vadd.f32 %v4582, %v5018
        %v5020 = vpop.f32.mrb[0].mxu0
        %v5021 = vpop.f32.mrb[0].mxu0
        %v5022 = vadd.f32 %v4582, %v5021
        %v5023 = vpop.f32.mrb[0].mxu0
        %5024 = vmatprep.mubr.bf16.mxu0 0
        %5025 = vmatmul.mubr.bf16.gmra.mrb[0].mxu0 %v4478
        %v5026 = vpop.f32.mrb[0].mxu0
        %v5027 = vadd.f32 %v4582, %v5026
        %v5028 = vpop.f32.mrb[0].mxu0
        %v5029 = vpop.f32.mrb[0].mxu0
        %v5030 = vadd.f32 %v4582, %v5029
        %v5031 = vpop.f32.mrb[0].mxu0
        %5032 = vmatprep.mubr.bf16.mxu0 0
        %5033 = vmatmul.mubr.bf16.gmra.mrb[0].mxu0 %v4479
        %v5034 = vpop.f32.mrb[0].mxu0
        %v5035 = vadd.f32 %v4582, %v5034
        %v5036 = vpop.f32.mrb[0].mxu0
        %v5037 = vpop.f32.mrb[0].mxu0
        %v5038 = vadd.f32 %v4582, %v5037
        %v5039 = vpop.f32.mrb[0].mxu0
        %5040 = vmatprep.mubr.bf16.mxu0 0
        %5041 = vmatmul.mubr.bf16.gmra.mrb[0].mxu0 %v4480
        %v5042 = vpop.f32.mrb[0].mxu0
        %v5043 = vadd.f32 %v4582, %v5042
        %v5044 = vpop.f32.mrb[0].mxu0
        %v5045 = vpop.f32.mrb[0].mxu0
        %v5046 = vadd.f32 %v4582, %v5045
        %v5047 = vpop.f32.mrb[0].mxu0
        %5048 = vmatprep.mubr.bf16.mxu0 0
        %5049 = vmatmul.mubr.bf16.gmra.mrb[0].mxu0 %v4481
        %v5050 = vpop.f32.mrb[0].mxu0
        %v5051 = vadd.f32 %v4582, %v5050
        %v5052 = vpop.f32.mrb[0].mxu0
        %v5053 = vpop.f32.mrb[0].mxu0
        %v5054 = vadd.f32 %v4582, %v5053
        %v5055 = vpop.f32.mrb[0].mxu0
        %5056 = vmatprep.mubr.bf16.mxu0 0
        %5057 = vmatmul.mubr.bf16.gmra.mrb[0].mxu0 %v4482
        %v5058 = vpop.f32.mrb[0].mxu0
        %v5059 = vadd.f32 %v4582, %v5058
        %v5060 = vpop.f32.mrb[0].mxu0
        %v5061 = vpop.f32.mrb[0].mxu0
        %v5062 = vadd.f32 %v4582, %v5061
        %v5063 = vpop.f32.mrb[0].mxu0
        %5064 = vmatprep.mubr.bf16.mxu0 0
        %5065 = vmatmul.mubr.bf16.gmra.mrb[0].mxu0 %v4483
        %v5066 = vpop.f32.mrb[0].mxu0
        %v5067 = vadd.f32 %v4582, %v5066
        %v5068 = vpop.f32.mrb[0].mxu0
        %v5069 = vpop.f32.mrb[0].mxu0
        %v5070 = vadd.f32 %v4582, %v5069
        %v5071 = vpop.f32.mrb[0].mxu0
        %5072 = vmatprep.mubr.bf16.mxu0 0
        %5073 = vmatmul.mubr.bf16.gmra.mrb[0].mxu0 %v4484
        %v5074 = vpop.f32.mrb[0].mxu0
        %v5075 = vadd.f32 %v4582, %v5074
        %v5076 = vpop.f32.mrb[0].mxu0
        %v5077 = vpop.f32.mrb[0].mxu0
        %v5078 = vadd.f32 %v4582, %v5077
        %v5079 = vpop.f32.mrb[0].mxu0
        %5080 = vmatprep.mubr.bf16.mxu0 0
        %5081 = vmatmul.mubr.bf16.gmra.mrb[0].mxu0 %v4485
        %v5082 = vpop.f32.mrb[0].mxu0
        %v5083 = vadd.f32 %v4582, %v5082
        %v5084 = vpop.f32.mrb[0].mxu0
        %v5085 = vpop.f32.mrb[0].mxu0
        %v5086 = vadd.f32 %v4582, %v5085
        %v5087 = vpop.f32.mrb[0].mxu0
        %5088 = vmatprep.mubr.bf16.mxu0 0
        %5089 = vmatmul.mubr.bf16.gmra.mrb[0].mxu0 %v4486
        %v5090 = vpop.f32.mrb[0].mxu0
        %v5091 = vadd.f32 %v4582, %v5090
        %v5092 = vpop.f32.mrb[0].mxu0
        %v5093 = vpop.f32.mrb[0].mxu0
        %v5094 = vadd.f32 %v4582, %v5093
        %v5095 = vpop.f32.mrb[0].mxu0
        %5096 = vmatprep.mubr.bf16.mxu0 0
        %5097 = vmatmul.mubr.bf16.gmra.mrb[0].mxu0 %v4487
        %v5098 = vpop.f32.mrb[0].mxu0
        %v5099 = vadd.f32 %v4582, %v5098
        %v5100 = vpop.f32.mrb[0].mxu0
        %v5101 = vpop.f32.mrb[0].mxu0
        %v5102 = vadd.f32 %v4582, %v5101
        %v5103 = vpop.f32.mrb[0].mxu0
        %5104 = vmatprep.mubr.bf16.mxu0 0
        %5105 = vmatmul.mubr.bf16.gmra.mrb[0].mxu0 %v4488
        %v5106 = vpop.f32.mrb[0].mxu0
        %v5107 = vadd.f32 %v4582, %v5106
        %v5108 = vpop.f32.mrb[0].mxu0
        %v5109 = vpop.f32.mrb[0].mxu0
        %v5110 = vadd.f32 %v4582, %v5109
        %v5111 = vpop.f32.mrb[0].mxu0
        %5112 = vmatprep.mubr.bf16.mxu0 0
        %5113 = vmatmul.mubr.bf16.gmra.mrb[0].mxu0 %v4489
        %v5114 = vpop.f32.mrb[0].mxu0
        %v5115 = vadd.f32 %v4582, %v5114
        %v5116 = vpop.f32.mrb[0].mxu0
        %v5117 = vpop.f32.mrb[0].mxu0
        %v5118 = vadd.f32 %v4582, %v5117
        %v5119 = vpop.f32.mrb[0].mxu0
        %5120 = vmatprep.mubr.bf16.mxu0 0
        %5121 = vmatmul.mubr.bf16.gmra.mrb[0].mxu0 %v4490
        %v5122 = vpop.f32.mrb[0].mxu0
        %v5123 = vadd.f32 %v4582, %v5122
        %v5124 = vpop.f32.mrb[0].mxu0
        %v5125 = vpop.f32.mrb[0].mxu0
        %v5126 = vadd.f32 %v4582, %v5125
        %v5127 = vpop.f32.mrb[0].mxu0
        %5128 = vmatprep.mubr.bf16.mxu0 0
        %5129 = vmatmul.mubr.bf16.gmra.mrb[0].mxu0 %v4491
        %v5130 = vpop.f32.mrb[0].mxu0
        %v5131 = vadd.f32 %v4582, %v5130
        %v5132 = vpop.f32.mrb[0].mxu0
        %v5133 = vpop.f32.mrb[0].mxu0
        %v5134 = vadd.f32 %v4582, %v5133
        %v5135 = vpop.f32.mrb[0].mxu0
        %5136 = vmatprep.mubr.bf16.mxu0 0
        %5137 = vmatmul.mubr.bf16.gmra.mrb[0].mxu0 %v4492
        %v5138 = vpop.f32.mrb[0].mxu0
        %v5139 = vadd.f32 %v4582, %v5138
        %v5140 = vpop.f32.mrb[0].mxu0
        %v5141 = vpop.f32.mrb[0].mxu0
        %v5142 = vadd.f32 %v4582, %v5141
        %v5143 = vpop.f32.mrb[0].mxu0
        %5144 = vmatprep.mubr.bf16.mxu0 0
        %5145 = vmatmul.mubr.bf16.gmra.mrb[0].mxu0 %v4493
        %v5146 = vpop.f32.mrb[0].mxu0
        %v5147 = vadd.f32 %v4582, %v5146
        %v5148 = vpop.f32.mrb[0].mxu0
        %v5149 = vpop.f32.mrb[0].mxu0
        %v5150 = vadd.f32 %v4582, %v5149
        %v5151 = vpop.f32.mrb[0].mxu0
        %5152 = vmatprep.mubr.bf16.mxu0 0
        %5153 = vmatmul.mubr.bf16.gmra.mrb[0].mxu0 %v4494
        %v5154 = vpop.f32.mrb[0].mxu0
        %v5155 = vadd.f32 %v4582, %v5154
        %v5156 = vpop.f32.mrb[0].mxu0
        %v5157 = vpop.f32.mrb[0].mxu0
        %v5158 = vadd.f32 %v4582, %v5157
        %v5159 = vpop.f32.mrb[0].mxu0
        %5160 = vmatprep.mubr.bf16.mxu0 0
        %5161 = vmatmul.mubr.bf16.gmra.mrb[0].mxu0 %v4495
        %v5162 = vpop.f32.mrb[0].mxu0
        %v5163 = vadd.f32 %v4582, %v5162
        %v5164 = vpop.f32.mrb[0].mxu0
        %v5165 = vpop.f32.mrb[0].mxu0
        %v5166 = vadd.f32 %v4582, %v5165
        %v5167 = vpop.f32.mrb[0].mxu0
        %5168 = vmatprep.mubr.bf16.mxu0 0
        %5169 = vmatmul.mubr.bf16.gmra.mrb[0].mxu0 %v4496
        %v5170 = vpop.f32.mrb[0].mxu0
        %v5171 = vadd.f32 %v4582, %v5170
        %v5172 = vpop.f32.mrb[0].mxu0
        %v5173 = vpop.f32.mrb[0].mxu0
        %v5174 = vadd.f32 %v4582, %v5173
        %v5175 = vpop.f32.mrb[0].mxu0
        %5176 = vmatprep.mubr.bf16.mxu0 0
        %5177 = vmatmul.mubr.bf16.gmra.mrb[0].mxu0 %v4497
        %v5178 = vpop.f32.mrb[0].mxu0
        %v5179 = vadd.f32 %v4582, %v5178
        %v5180 = vpop.f32.mrb[0].mxu0
        %v5181 = vpop.f32.mrb[0].mxu0
        %v5182 = vadd.f32 %v4582, %v5181
        %v5183 = vpop.f32.mrb[0].mxu0
        %5184 = vmatprep.mubr.bf16.mxu0 0
        %5185 = vmatmul.mubr.bf16.gmra.mrb[0].mxu0 %v4498
        %v5186 = vpop.f32.mrb[0].mxu0
        %v5187 = vadd.f32 %v4582, %v5186
        %v5188 = vpop.f32.mrb[0].mxu0
        %v5189 = vpop.f32.mrb[0].mxu0
        %v5190 = vadd.f32 %v4582, %v5189
        %v5191 = vpop.f32.mrb[0].mxu0
        %5192 = vmatprep.mubr.bf16.mxu0 0
        %5193 = vmatmul.mubr.bf16.gmra.mrb[0].mxu0 %v4499
        %v5194 = vpop.f32.mrb[0].mxu0
        %v5195 = vadd.f32 %v4582, %v5194
        %v5196 = vpop.f32.mrb[0].mxu0
        %v5197 = vpop.f32.mrb[0].mxu0
        %v5198 = vadd.f32 %v4582, %v5197
        %v5199 = vpop.f32.mrb[0].mxu0
        %5200 = vmatprep.mubr.bf16.mxu0 0
        %5201 = vmatmul.mubr.bf16.gmra.mrb[0].mxu0 %v4500
        %v5202 = vpop.f32.mrb[0].mxu0
        %v5203 = vadd.f32 %v4582, %v5202
        %v5204 = vpop.f32.mrb[0].mxu0
        %v5205 = vpop.f32.mrb[0].mxu0
        %v5206 = vadd.f32 %v4582, %v5205
        %v5207 = vpop.f32.mrb[0].mxu0
        %5208 = vmatprep.mubr.bf16.mxu0 0
        %5209 = vmatmul.mubr.bf16.gmra.mrb[0].mxu0 %v4501
        %v5210 = vpop.f32.mrb[0].mxu0
        %v5211 = vadd.f32 %v4582, %v5210
        %v5212 = vpop.f32.mrb[0].mxu0
        %v5213 = vpop.f32.mrb[0].mxu0
        %v5214 = vadd.f32 %v4582, %v5213
        %v5215 = vpop.f32.mrb[0].mxu0
        %5216 = vmatprep.mubr.bf16.mxu0 0
        %5217 = vmatmul.mubr.bf16.gmra.mrb[0].mxu0 %v4502
        %v5218 = vpop.f32.mrb[0].mxu0
        %v5219 = vadd.f32 %v4582, %v5218
        %v5220 = vpop.f32.mrb[0].mxu0
        %v5221 = vpop.f32.mrb[0].mxu0
        %v5222 = vadd.f32 %v4582, %v5221
        %v5223 = vpop.f32.mrb[0].mxu0
        %5224 = vmatprep.mubr.bf16.mxu0 0
        %5225 = vmatmul.mubr.bf16.gmra.mrb[0].mxu0 %v4503
        %v5226 = vpop.f32.mrb[0].mxu0
        %v5227 = vadd.f32 %v4582, %v5226
        %v5228 = vpop.f32.mrb[0].mxu0
        %v5229 = vpop.f32.mrb[0].mxu0
        %v5230 = vadd.f32 %v4582, %v5229
        %v5231 = vpop.f32.mrb[0].mxu0
        %5232 = vmatprep.mubr.bf16.mxu0 0
        %5233 = vmatmul.mubr.bf16.gmra.mrb[0].mxu0 %v4504
        %v5234 = vpop.f32.mrb[0].mxu0
        %v5235 = vadd.f32 %v4582, %v5234
        %v5236 = vpop.f32.mrb[0].mxu0
        %v5237 = vpop.f32.mrb[0].mxu0
        %v5238 = vadd.f32 %v4582, %v5237
        %v5239 = vpop.f32.mrb[0].mxu0
        %5240 = vmatprep.mubr.bf16.mxu0 0
        %5241 = vmatmul.mubr.bf16.gmra.mrb[0].mxu0 %v4505
        %v5242 = vpop.f32.mrb[0].mxu0
        %v5243 = vadd.f32 %v4582, %v5242
        %v5244 = vpop.f32.mrb[0].mxu0
        %v5245 = vpop.f32.mrb[0].mxu0
        %v5246 = vadd.f32 %v4582, %v5245
        %v5247 = vpop.f32.mrb[0].mxu0
        %5248 = vmatprep.mubr.bf16.mxu0 0
        %5249 = vmatmul.mubr.bf16.gmra.mrb[0].mxu0 %v4506
        %v5250 = vpop.f32.mrb[0].mxu0
        %v5251 = vadd.f32 %v4582, %v5250
        %v5252 = vpop.f32.mrb[0].mxu0
        %v5253 = vpop.f32.mrb[0].mxu0
        %v5254 = vadd.f32 %v4582, %v5253
        %v5255 = vpop.f32.mrb[0].mxu0
        %5256 = vmatprep.mubr.bf16.mxu0 0
        %5257 = vmatmul.mubr.bf16.gmra.mrb[0].mxu0 %v4507
        %v5258 = vpop.f32.mrb[0].mxu0
        %v5259 = vadd.f32 %v4582, %v5258
        %v5260 = vpop.f32.mrb[0].mxu0
        %v5261 = vpop.f32.mrb[0].mxu0
        %v5262 = vadd.f32 %v4582, %v5261
        %v5263 = vpop.f32.mrb[0].mxu0
        %5264 = vmatprep.mubr.bf16.mxu0 0
        %5265 = vmatmul.mubr.bf16.gmra.mrb[0].mxu0 %v4508
        %v5266 = vpop.f32.mrb[0].mxu0
        %v5267 = vadd.f32 %v4582, %v5266
        %v5268 = vpop.f32.mrb[0].mxu0
        %v5269 = vpop.f32.mrb[0].mxu0
        %v5270 = vadd.f32 %v4582, %v5269
        %v5271 = vpop.f32.mrb[0].mxu0
        %5272 = vmatprep.mubr.bf16.mxu0 0
        %5273 = vmatmul.mubr.bf16.gmra.mrb[0].mxu0 %v4509
        %v5274 = vpop.f32.mrb[0].mxu0
        %v5275 = vadd.f32 %v4582, %v5274
        %v5276 = vpop.f32.mrb[0].mxu0
        %v5277 = vpop.f32.mrb[0].mxu0
        %v5278 = vadd.f32 %v4582, %v5277
        %v5279 = vpop.f32.mrb[0].mxu0
        %5280 = vmatprep.mubr.bf16.mxu0 0
        %5281 = vmatmul.mubr.bf16.gmra.mrb[0].mxu0 %v4510
        %v5282 = vpop.f32.mrb[0].mxu0
        %v5283 = vadd.f32 %v4582, %v5282
        %v5284 = vpop.f32.mrb[0].mxu0
        %v5285 = vpop.f32.mrb[0].mxu0
        %v5286 = vadd.f32 %v4582, %v5285
        %v5287 = vpop.f32.mrb[0].mxu0
        %5288 = vmatprep.mubr.bf16.mxu0 0
        %5289 = vmatmul.mubr.bf16.gmra.mrb[0].mxu0 %v4511
        %v5290 = vpop.f32.mrb[0].mxu0
        %v5291 = vadd.f32 %v4582, %v5290
        %v5292 = vpop.f32.mrb[0].mxu0
        %v5293 = vpop.f32.mrb[0].mxu0
        %v5294 = vadd.f32 %v4582, %v5293
        %v5295 = vpop.f32.mrb[0].mxu0
        %5296 = vmatprep.mubr.bf16.mxu0 0
        %5297 = vmatmul.mubr.bf16.gmra.mrb[0].mxu0 %v4512
        %v5298 = vpop.f32.mrb[0].mxu0
        %v5299 = vadd.f32 %v4582, %v5298
        %v5300 = vpop.f32.mrb[0].mxu0
        %v5301 = vpop.f32.mrb[0].mxu0
        %v5302 = vadd.f32 %v4582, %v5301
        %v5303 = vpop.f32.mrb[0].mxu0
        %5304 = vmatprep.mubr.bf16.mxu0 0
        %5305 = vmatmul.mubr.bf16.gmra.mrb[0].mxu0 %v4513
        %v5306 = vpop.f32.mrb[0].mxu0
        %v5307 = vadd.f32 %v4582, %v5306
        %v5308 = vpop.f32.mrb[0].mxu0
        %v5309 = vpop.f32.mrb[0].mxu0
        %v5310 = vadd.f32 %v4582, %v5309
        %v5311 = vpop.f32.mrb[0].mxu0
        %5312 = vmatprep.mubr.bf16.mxu0 0
        %5313 = vmatmul.mubr.bf16.gmra.mrb[0].mxu0 %v4514
        %v5314 = vpop.f32.mrb[0].mxu0
        %v5315 = vadd.f32 %v4582, %v5314
        %v5316 = vpop.f32.mrb[0].mxu0
        %v5317 = vpop.f32.mrb[0].mxu0
        %v5318 = vadd.f32 %v4582, %v5317
        %v5319 = vpop.f32.mrb[0].mxu0
        %5320 = vmatprep.mubr.bf16.mxu0 0
        %5321 = vmatmul.mubr.bf16.gmra.mrb[0].mxu0 %v4515
        %v5322 = vpop.f32.mrb[0].mxu0
        %v5323 = vadd.f32 %v4582, %v5322
        %v5324 = vpop.f32.mrb[0].mxu0
        %v5325 = vpop.f32.mrb[0].mxu0
        %v5326 = vadd.f32 %v4582, %v5325
        %v5327 = vpop.f32.mrb[0].mxu0
        %5328 = vmatprep.mubr.bf16.mxu0 0
        %5329 = vmatmul.mubr.bf16.gmra.mrb[0].mxu0 %v4516
        %v5330 = vpop.f32.mrb[0].mxu0
        %v5331 = vadd.f32 %v4582, %v5330
        %v5332 = vpop.f32.mrb[0].mxu0
        %v5333 = vpop.f32.mrb[0].mxu0
        %v5334 = vadd.f32 %v4582, %v5333
        %v5335 = vpop.f32.mrb[0].mxu0
        %5336 = vmatprep.mubr.bf16.mxu0 0
        %5337 = vmatmul.mubr.bf16.gmra.mrb[0].mxu0 %v4517
        %v5338 = vpop.f32.mrb[0].mxu0
        %v5339 = vadd.f32 %v4582, %v5338
        %v5340 = vpop.f32.mrb[0].mxu0
        %v5341 = vpop.f32.mrb[0].mxu0
        %v5342 = vadd.f32 %v4582, %v5341
        %v5343 = vpop.f32.mrb[0].mxu0
        %5344 = vmatprep.mubr.bf16.mxu0 0
        %5345 = vmatmul.mubr.bf16.gmra.mrb[0].mxu0 %v4518
        %v5346 = vpop.f32.mrb[0].mxu0
        %v5347 = vadd.f32 %v4582, %v5346
        %v5348 = vpop.f32.mrb[0].mxu0
        %v5349 = vpop.f32.mrb[0].mxu0
        %v5350 = vadd.f32 %v4582, %v5349
        %v5351 = vpop.f32.mrb[0].mxu0
        %5352 = vmatprep.mubr.bf16.mxu0 0
        %5353 = vmatmul.mubr.bf16.gmra.mrb[0].mxu0 %v4519
        %v5354 = vpop.f32.mrb[0].mxu0
        %v5355 = vadd.f32 %v4582, %v5354
        %v5356 = vpop.f32.mrb[0].mxu0
        %v5357 = vpop.f32.mrb[0].mxu0
        %v5358 = vadd.f32 %v4582, %v5357
        %v5359 = vpop.f32.mrb[0].mxu0
        %5360 = vmatprep.mubr.bf16.mxu0 0
        %5361 = vmatmul.mubr.bf16.gmra.mrb[0].mxu0 %v4520
        %v5362 = vpop.f32.mrb[0].mxu0
        %v5363 = vadd.f32 %v4582, %v5362
        %v5364 = vpop.f32.mrb[0].mxu0
        %v5365 = vpop.f32.mrb[0].mxu0
        %v5366 = vadd.f32 %v4582, %v5365
        %v5367 = vpop.f32.mrb[0].mxu0
        %5368 = vmatprep.mubr.bf16.mxu0 0
        %5369 = vmatmul.mubr.bf16.gmra.mrb[0].mxu0 %v4521
        %v5370 = vpop.f32.mrb[0].mxu0
        %v5371 = vadd.f32 %v4582, %v5370
        %v5372 = vpop.f32.mrb[0].mxu0
        %v5373 = vpop.f32.mrb[0].mxu0
        %v5374 = vadd.f32 %v4582, %v5373
        %v5375 = vpop.f32.mrb[0].mxu0
        %5376 = vmatprep.mubr.bf16.mxu0 0
        %5377 = vmatmul.mubr.bf16.gmra.mrb[0].mxu0 %v4522
        %v5378 = vpop.f32.mrb[0].mxu0
        %v5379 = vadd.f32 %v4582, %v5378
        %v5380 = vpop.f32.mrb[0].mxu0
        %v5381 = vpop.f32.mrb[0].mxu0
        %v5382 = vadd.f32 %v4582, %v5381
        %v5383 = vpop.f32.mrb[0].mxu0
        %5384 = vmatprep.mubr.bf16.mxu0 0
        %5385 = vmatmul.mubr.bf16.gmra.mrb[0].mxu0 %v4523
        %v5386 = vpop.f32.mrb[0].mxu0
        %v5387 = vadd.f32 %v4582, %v5386
        %v5388 = vpop.f32.mrb[0].mxu0
        %v5389 = vpop.f32.mrb[0].mxu0
        %v5390 = vadd.f32 %v4582, %v5389
        %v5391 = vpop.f32.mrb[0].mxu0
        %5392 = vmatprep.mubr.bf16.mxu0 0
        %5393 = vmatmul.mubr.bf16.gmra.mrb[0].mxu0 %v4524
        %v5394 = vpop.f32.mrb[0].mxu0
        %v5395 = vadd.f32 %v4582, %v5394
        %v5396 = vpop.f32.mrb[0].mxu0
        %v5397 = vpop.f32.mrb[0].mxu0
        %v5398 = vadd.f32 %v4582, %v5397
        %v5399 = vpop.f32.mrb[0].mxu0
        %5400 = vmatprep.mubr.bf16.mxu0 0
        %5401 = vmatmul.mubr.bf16.gmra.mrb[0].mxu0 %v4525
        %v5402 = vpop.f32.mrb[0].mxu0
        %v5403 = vadd.f32 %v4582, %v5402
        %v5404 = vpop.f32.mrb[0].mxu0
        %v5405 = vpop.f32.mrb[0].mxu0
        %v5406 = vadd.f32 %v4582, %v5405
        %v5407 = vpop.f32.mrb[0].mxu0
        %5408 = vmatprep.mubr.bf16.mxu0 0
        %5409 = vmatmul.mubr.bf16.gmra.mrb[0].mxu0 %v4526
        %v5410 = vpop.f32.mrb[0].mxu0
        %v5411 = vadd.f32 %v4582, %v5410
        %v5412 = vpop.f32.mrb[0].mxu0
        %v5413 = vpop.f32.mrb[0].mxu0
        %v5414 = vadd.f32 %v4582, %v5413
        %v5415 = vpop.f32.mrb[0].mxu0
        %5416 = vmatprep.mubr.bf16.mxu0 0
        %5417 = vmatmul.mubr.bf16.gmra.mrb[0].mxu0 %v4527
        %v5418 = vpop.f32.mrb[0].mxu0
        %v5419 = vadd.f32 %v4582, %v5418
        %v5420 = vpop.f32.mrb[0].mxu0
        %v5421 = vpop.f32.mrb[0].mxu0
        %v5422 = vadd.f32 %v4582, %v5421
        %v5423 = vpop.f32.mrb[0].mxu0
        %5424 = vmatprep.mubr.bf16.mxu0 0
        %5425 = vmatmul.mubr.bf16.gmra.mrb[0].mxu0 %v4528
        %v5426 = vpop.f32.mrb[0].mxu0
        %v5427 = vadd.f32 %v4582, %v5426
        %v5428 = vpop.f32.mrb[0].mxu0
        %v5429 = vpop.f32.mrb[0].mxu0
        %v5430 = vadd.f32 %v4582, %v5429
        %v5431 = vpop.f32.mrb[0].mxu0
        %5432 = vmatprep.mubr.bf16.mxu0 0
        %5433 = vmatmul.mubr.bf16.gmra.mrb[0].mxu0 %v4529
        %v5434 = vpop.f32.mrb[0].mxu0
        %v5435 = vadd.f32 %v4582, %v5434
        %v5436 = vpop.f32.mrb[0].mxu0
        %v5437 = vpop.f32.mrb[0].mxu0
        %v5438 = vadd.f32 %v4582, %v5437
        %v5439 = vpop.f32.mrb[0].mxu0
        %5440 = vmatprep.mubr.bf16.mxu0 0
        %5441 = vmatmul.mubr.bf16.gmra.mrb[0].mxu0 %v4530
        %v5442 = vpop.f32.mrb[0].mxu0
        %v5443 = vadd.f32 %v4582, %v5442
        %v5444 = vpop.f32.mrb[0].mxu0
        %v5445 = vpop.f32.mrb[0].mxu0
        %v5446 = vadd.f32 %v4582, %v5445
        %v5447 = vpop.f32.mrb[0].mxu0
        %5448 = vmatprep.mubr.bf16.mxu0 0
        %5449 = vmatmul.mubr.bf16.gmra.mrb[0].mxu0 %v4531
        %v5450 = vpop.f32.mrb[0].mxu0
        %v5451 = vadd.f32 %v4582, %v5450
        %v5452 = vpop.f32.mrb[0].mxu0
        %v5453 = vpop.f32.mrb[0].mxu0
        %v5454 = vadd.f32 %v4582, %v5453
        %v5455 = vpop.f32.mrb[0].mxu0
        %5456 = vmatprep.mubr.bf16.mxu0 0
        %5457 = vmatmul.mubr.bf16.gmra.mrb[0].mxu0 %v4532
        %v5458 = vpop.f32.mrb[0].mxu0
        %v5459 = vadd.f32 %v4582, %v5458
        %v5460 = vpop.f32.mrb[0].mxu0
        %v5461 = vpop.f32.mrb[0].mxu0
        %v5462 = vadd.f32 %v4582, %v5461
        %v5463 = vpop.f32.mrb[0].mxu0
        %5464 = vmatprep.mubr.bf16.mxu0 0
        %5465 = vmatmul.mubr.bf16.gmra.mrb[0].mxu0 %v4533
        %v5466 = vpop.f32.mrb[0].mxu0
        %v5467 = vadd.f32 %v4582, %v5466
        %v5468 = vpop.f32.mrb[0].mxu0
        %v5469 = vpop.f32.mrb[0].mxu0
        %v5470 = vadd.f32 %v4582, %v5469
        %v5471 = vpop.f32.mrb[0].mxu0
        %5472 = vmatprep.mubr.bf16.mxu0 0
        %5473 = vmatmul.mubr.bf16.gmra.mrb[0].mxu0 %v4534
        %v5474 = vpop.f32.mrb[0].mxu0
        %v5475 = vadd.f32 %v4582, %v5474
        %v5476 = vpop.f32.mrb[0].mxu0
        %v5477 = vpop.f32.mrb[0].mxu0
        %v5478 = vadd.f32 %v4582, %v5477
        %v5479 = vpop.f32.mrb[0].mxu0
        %5480 = vmatprep.mubr.bf16.mxu0 0
        %5481 = vmatmul.mubr.bf16.gmra.mrb[0].mxu0 %v4535
        %v5482 = vpop.f32.mrb[0].mxu0
        %v5483 = vadd.f32 %v4582, %v5482
        %v5484 = vpop.f32.mrb[0].mxu0
        %v5485 = vpop.f32.mrb[0].mxu0
        %v5486 = vadd.f32 %v4582, %v5485
        %v5487 = vpop.f32.mrb[0].mxu0
        %5488 = vmatprep.mubr.bf16.mxu0 0
        %5489 = vmatmul.mubr.bf16.gmra.mrb[0].mxu0 %v4536
        %v5490 = vpop.f32.mrb[0].mxu0
        %v5491 = vadd.f32 %v4582, %v5490
        %v5492 = vpop.f32.mrb[0].mxu0
        %v5493 = vpop.f32.mrb[0].mxu0
        %v5494 = vadd.f32 %v4582, %v5493
        %v5495 = vpop.f32.mrb[0].mxu0
        %5496 = vmatprep.mubr.bf16.mxu0 0
        %5497 = vmatmul.mubr.bf16.gmra.mrb[0].mxu0 %v4537
        %v5498 = vpop.f32.mrb[0].mxu0
        %v5499 = vadd.f32 %v4582, %v5498
        %v5500 = vpop.f32.mrb[0].mxu0
        %v5501 = vpop.f32.mrb[0].mxu0
        %v5502 = vadd.f32 %v4582, %v5501
        %v5503 = vpop.f32.mrb[0].mxu0
        %5504 = vmatprep.mubr.bf16.mxu0 0
        %5505 = vmatmul.mubr.bf16.gmra.mrb[0].mxu0 %v4538
        %v5506 = vpop.f32.mrb[0].mxu0
        %v5507 = vadd.f32 %v4582, %v5506
        %v5508 = vpop.f32.mrb[0].mxu0
        %v5509 = vpop.f32.mrb[0].mxu0
        %v5510 = vadd.f32 %v4582, %v5509
        %v5511 = vpop.f32.mrb[0].mxu0
        %5512 = vmatprep.mubr.bf16.mxu0 0
        %5513 = vmatmul.mubr.bf16.gmra.mrb[0].mxu0 %v4539
        %v5514 = vpop.f32.mrb[0].mxu0
        %v5515 = vadd.f32 %v4582, %v5514
        %v5516 = vpop.f32.mrb[0].mxu0
        %v5517 = vpop.f32.mrb[0].mxu0
        %v5518 = vadd.f32 %v4582, %v5517
        %v5519 = vpop.f32.mrb[0].mxu0
        %5520 = vmatprep.mubr.bf16.mxu0 0
        %5521 = vmatmul.mubr.bf16.gmra.mrb[0].mxu0 %v4540
        %v5522 = vpop.f32.mrb[0].mxu0
        %v5523 = vadd.f32 %v4582, %v5522
        %v5524 = vpop.f32.mrb[0].mxu0
        %v5525 = vpop.f32.mrb[0].mxu0
        %v5526 = vadd.f32 %v4582, %v5525
        %v5527 = vpop.f32.mrb[0].mxu0
        %5528 = vmatprep.mubr.bf16.mxu0 0
        %5529 = vmatmul.mubr.bf16.gmra.mrb[0].mxu0 %v4541
        %v5530 = vpop.f32.mrb[0].mxu0
        %v5531 = vadd.f32 %v4582, %v5530
        %v5532 = vpop.f32.mrb[0].mxu0
        %v5533 = vpop.f32.mrb[0].mxu0
        %v5534 = vadd.f32 %v4582, %v5533
        %v5535 = vpop.f32.mrb[0].mxu0
        %5536 = vmatprep.mubr.bf16.mxu0 0
        %5537 = vmatmul.mubr.bf16.gmra.mrb[0].mxu0 %v4542
        %v5538 = vpop.f32.mrb[0].mxu0
        %v5539 = vadd.f32 %v4582, %v5538
        %v5540 = vpop.f32.mrb[0].mxu0
        %v5541 = vpop.f32.mrb[0].mxu0
        %v5542 = vadd.f32 %v4582, %v5541
        %v5543 = vpop.f32.mrb[0].mxu0
        %5544 = vmatprep.mubr.bf16.mxu0 0
        %5545 = vmatmul.mubr.bf16.gmra.mrb[0].mxu0 %v4543
        %v5546 = vpop.f32.mrb[0].mxu0
        %v5547 = vadd.f32 %v4582, %v5546
        %v5548 = vpop.f32.mrb[0].mxu0
        %v5549 = vpop.f32.mrb[0].mxu0
        %v5550 = vadd.f32 %v4582, %v5549
        %v5551 = vpop.f32.mrb[0].mxu0
        %5552 = vmatprep.mubr.bf16.mxu0 0
        %5553 = vmatmul.mubr.bf16.gmra.mrb[0].mxu0 %v4544
        %v5554 = vpop.f32.mrb[0].mxu0
        %v5555 = vadd.f32 %v4582, %v5554
        %v5556 = vpop.f32.mrb[0].mxu0
        %v5557 = vpop.f32.mrb[0].mxu0
        %v5558 = vadd.f32 %v4582, %v5557
        %v5559 = vpop.f32.mrb[0].mxu0
        %5560 = vmatprep.mubr.bf16.mxu0 0
        %5561 = vmatmul.mubr.bf16.gmra.mrb[0].mxu0 %v4545
        %v5562 = vpop.f32.mrb[0].mxu0
        %v5563 = vadd.f32 %v4582, %v5562
        %v5564 = vpop.f32.mrb[0].mxu0
        %v5565 = vpop.f32.mrb[0].mxu0
        %v5566 = vadd.f32 %v4582, %v5565
        %v5567 = vpop.f32.mrb[0].mxu0
        %5568 = vmatprep.mubr.bf16.mxu0 0
        %5569 = vmatmul.mubr.bf16.gmra.mrb[0].mxu0 %v4546
        %v5570 = vpop.f32.mrb[0].mxu0
        %v5571 = vadd.f32 %v4582, %v5570
        %v5572 = vpop.f32.mrb[0].mxu0
        %v5573 = vpop.f32.mrb[0].mxu0
        %v5574 = vadd.f32 %v4582, %v5573
        %v5575 = vpop.f32.mrb[0].mxu0
        %5576 = vmatprep.mubr.bf16.mxu0 0
        %5577 = vmatmul.mubr.bf16.gmra.mrb[0].mxu0 %v4547
        %v5578 = vpop.f32.mrb[0].mxu0
        %v5579 = vadd.f32 %v4582, %v5578
        %v5580 = vpop.f32.mrb[0].mxu0
        %v5581 = vpop.f32.mrb[0].mxu0
        %v5582 = vadd.f32 %v4582, %v5581
        %v5583 = vpop.f32.mrb[0].mxu0
        %5584 = vmatprep.mubr.bf16.mxu0 0
        %5585 = vmatmul.mubr.bf16.gmra.mrb[0].mxu0 %v4548
        %v5586 = vpop.f32.mrb[0].mxu0
        %v5587 = vadd.f32 %v4582, %v5586
        %v5588 = vpop.f32.mrb[0].mxu0
        %v5589 = vpop.f32.mrb[0].mxu0
        %v5590 = vadd.f32 %v4582, %v5589
        %v5591 = vpop.f32.mrb[0].mxu0
        %5592 = vmatprep.mubr.bf16.mxu0 0
        %5593 = vmatmul.mubr.bf16.gmra.mrb[0].mxu0 %v4549
        %v5594 = vpop.f32.mrb[0].mxu0
        %v5595 = vadd.f32 %v4582, %v5594
        %v5596 = vpop.f32.mrb[0].mxu0
        %v5597 = vpop.f32.mrb[0].mxu0
        %v5598 = vadd.f32 %v4582, %v5597
        %v5599 = vpop.f32.mrb[0].mxu0
        %5600 = vmatprep.mubr.bf16.mxu0 0
        %5601 = vmatmul.mubr.bf16.gmra.mrb[0].mxu0 %v4550
        %v5602 = vpop.f32.mrb[0].mxu0
        %v5603 = vadd.f32 %v4582, %v5602
        %v5604 = vpop.f32.mrb[0].mxu0
        %v5605 = vpop.f32.mrb[0].mxu0
        %v5606 = vadd.f32 %v4582, %v5605
        %v5607 = vpop.f32.mrb[0].mxu0
        %5608 = vmatprep.mubr.bf16.mxu0 0
        %5609 = vmatmul.mubr.bf16.gmra.mrb[0].mxu0 %v4551
        %v5610 = vpop.f32.mrb[0].mxu0
        %v5611 = vadd.f32 %v4582, %v5610
        %v5612 = vpop.f32.mrb[0].mxu0
        %v5613 = vpop.f32.mrb[0].mxu0
        %v5614 = vadd.f32 %v4582, %v5613
        %v5615 = vpop.f32.mrb[0].mxu0
        %5616 = vmatprep.mubr.bf16.mxu0 0
        %5617 = vmatmul.mubr.bf16.gmra.mrb[0].mxu0 %v4552
        %v5618 = vpop.f32.mrb[0].mxu0
        %v5619 = vadd.f32 %v4582, %v5618
        %v5620 = vpop.f32.mrb[0].mxu0
        %v5621 = vpop.f32.mrb[0].mxu0
        %v5622 = vadd.f32 %v4582, %v5621
        %v5623 = vpop.f32.mrb[0].mxu0
        %5624 = vmatprep.mubr.bf16.mxu0 0
        %5625 = vmatmul.mubr.bf16.gmra.mrb[0].mxu0 %v4553
        %v5626 = vpop.f32.mrb[0].mxu0
        %v5627 = vadd.f32 %v4582, %v5626
        %v5628 = vpop.f32.mrb[0].mxu0
        %v5629 = vpop.f32.mrb[0].mxu0
        %v5630 = vadd.f32 %v4582, %v5629
        %v5631 = vpop.f32.mrb[0].mxu0
        %5632 = vmatprep.mubr.bf16.mxu0 0
        %5633 = vmatmul.mubr.bf16.gmra.mrb[0].mxu0 %v4554
        %v5634 = vpop.f32.mrb[0].mxu0
        %v5635 = vadd.f32 %v4582, %v5634
        %v5636 = vpop.f32.mrb[0].mxu0
        %v5637 = vpop.f32.mrb[0].mxu0
        %v5638 = vadd.f32 %v4582, %v5637
        %v5639 = vpop.f32.mrb[0].mxu0
        %5640 = vmatprep.mubr.bf16.mxu0 0
        %5641 = vmatmul.mubr.bf16.gmra.mrb[0].mxu0 %v4555
        %v5642 = vpop.f32.mrb[0].mxu0
        %v5643 = vadd.f32 %v4582, %v5642
        %v5644 = vpop.f32.mrb[0].mxu0
        %v5645 = vpop.f32.mrb[0].mxu0
        %v5646 = vadd.f32 %v4582, %v5645
        %v5647 = vpop.f32.mrb[0].mxu0
        %5648 = vmatprep.mubr.bf16.mxu0 0
        %5649 = vmatmul.mubr.bf16.gmra.mrb[0].mxu0 %v4556
        %v5650 = vpop.f32.mrb[0].mxu0
        %v5651 = vadd.f32 %v4582, %v5650
        %v5652 = vpop.f32.mrb[0].mxu0
        %v5653 = vpop.f32.mrb[0].mxu0
        %v5654 = vadd.f32 %v4582, %v5653
        %v5655 = vpop.f32.mrb[0].mxu0
        %5656 = vmatprep.mubr.bf16.mxu0 0
        %5657 = vmatmul.mubr.bf16.gmra.mrb[0].mxu0 %v4557
        %v5658 = vpop.f32.mrb[0].mxu0
        %v5659 = vadd.f32 %v4582, %v5658
        %v5660 = vpop.f32.mrb[0].mxu0
        %v5661 = vpop.f32.mrb[0].mxu0
        %v5662 = vadd.f32 %v4582, %v5661
        %v5663 = vpop.f32.mrb[0].mxu0
        %5664 = vmatprep.mubr.bf16.mxu0 0
        %5665 = vmatmul.mubr.bf16.gmra.mrb[0].mxu0 %v4558
        %v5666 = vpop.f32.mrb[0].mxu0
        %v5667 = vadd.f32 %v4582, %v5666
        %v5668 = vpop.f32.mrb[0].mxu0
        %v5669 = vpop.f32.mrb[0].mxu0
        %v5670 = vadd.f32 %v4582, %v5669
        %v5671 = vpop.f32.mrb[0].mxu0
        %5672 = vmatprep.mubr.bf16.mxu0 0
        %5673 = vmatmul.mubr.bf16.gmra.mrb[0].mxu0 %v4559
        %v5674 = vpop.f32.mrb[0].mxu0
        %v5675 = vadd.f32 %v4582, %v5674
        %v5676 = vpop.f32.mrb[0].mxu0
        %v5677 = vpop.f32.mrb[0].mxu0
        %v5678 = vadd.f32 %v4582, %v5677
        %v5679 = vpop.f32.mrb[0].mxu0
        %5680 = vmatprep.mubr.bf16.mxu0 0
        %5681 = vmatmul.mubr.bf16.gmra.mrb[0].mxu0 %v4560
        %v5682 = vpop.f32.mrb[0].mxu0
        %v5683 = vadd.f32 %v4582, %v5682
        %v5684 = vpop.f32.mrb[0].mxu0
        %v5685 = vpop.f32.mrb[0].mxu0
        %v5686 = vadd.f32 %v4582, %v5685
        %v5687 = vpop.f32.mrb[0].mxu0
        %5688 = vdwg.mxu0
        %v5689 = vmax.f32 %v4667, 0.0
        %v5690 = vmax.f32 %v4670, 0.0
        %v5691 = vmax.f32 %v4675, 0.0
        %v5692 = vmax.f32 %v4678, 0.0
        %v5693 = vmax.f32 %v4683, 0.0
        %v5694 = vmax.f32 %v4686, 0.0
        %v5695 = vmax.f32 %v4691, 0.0
        %v5696 = vmax.f32 %v4694, 0.0
        %v5697 = vmax.f32 %v4699, 0.0
        %v5698 = vmax.f32 %v4702, 0.0
        %v5699 = vmax.f32 %v4707, 0.0
        %v5700 = vmax.f32 %v4710, 0.0
        %v5701 = vmax.f32 %v4715, 0.0
        %v5702 = vmax.f32 %v4718, 0.0
        %v5703 = vmax.f32 %v4723, 0.0
        %v5704 = vmax.f32 %v4726, 0.0
        %v5705 = vmax.f32 %v4731, 0.0
        %v5706 = vmax.f32 %v4734, 0.0
        %v5707 = vmax.f32 %v4739, 0.0
        %v5708 = vmax.f32 %v4742, 0.0
        %v5709 = vmax.f32 %v4747, 0.0
        %v5710 = vmax.f32 %v4750, 0.0
        %v5711 = vmax.f32 %v4755, 0.0
        %v5712 = vmax.f32 %v4758, 0.0
        %v5713 = vmax.f32 %v4763, 0.0
        %v5714 = vmax.f32 %v4766, 0.0
        %v5715 = vmax.f32 %v4771, 0.0
        %v5716 = vmax.f32 %v4774, 0.0
        %v5717 = vmax.f32 %v4779, 0.0
        %v5718 = vmax.f32 %v4782, 0.0
        %v5719 = vmax.f32 %v4787, 0.0
        %v5720 = vmax.f32 %v4790, 0.0
        %v5721 = vmax.f32 %v4795, 0.0
        %v5722 = vmax.f32 %v4798, 0.0
        %v5723 = vmax.f32 %v4803, 0.0
        %v5724 = vmax.f32 %v4806, 0.0
        %v5725 = vmax.f32 %v4811, 0.0
        %v5726 = vmax.f32 %v4814, 0.0
        %v5727 = vmax.f32 %v4819, 0.0
        %v5728 = vmax.f32 %v4822, 0.0
        %v5729 = vmax.f32 %v4827, 0.0
        %v5730 = vmax.f32 %v4830, 0.0
        %v5731 = vmax.f32 %v4835, 0.0
        %v5732 = vmax.f32 %v4838, 0.0
        %v5733 = vmax.f32 %v4843, 0.0
        %v5734 = vmax.f32 %v4846, 0.0
        %v5735 = vmax.f32 %v4851, 0.0
        %v5736 = vmax.f32 %v4854, 0.0
        %v5737 = vmax.f32 %v4859, 0.0
        %v5738 = vmax.f32 %v4862, 0.0
        %v5739 = vmax.f32 %v4867, 0.0
        %v5740 = vmax.f32 %v4870, 0.0
        %v5741 = vmax.f32 %v4875, 0.0
        %v5742 = vmax.f32 %v4878, 0.0
        %v5743 = vmax.f32 %v4883, 0.0
        %v5744 = vmax.f32 %v4886, 0.0
        %v5745 = vmax.f32 %v4891, 0.0
        %v5746 = vmax.f32 %v4894, 0.0
        %v5747 = vmax.f32 %v4899, 0.0
        %v5748 = vmax.f32 %v4902, 0.0
        %v5749 = vmax.f32 %v4907, 0.0
        %v5750 = vmax.f32 %v4910, 0.0
        %v5751 = vmax.f32 %v4915, 0.0
        %v5752 = vmax.f32 %v4918, 0.0
        %v5753 = vmax.f32 %v4923, 0.0
        %v5754 = vmax.f32 %v4926, 0.0
        %v5755 = vmax.f32 %v4931, 0.0
        %v5756 = vmax.f32 %v4934, 0.0
        %v5757 = vmax.f32 %v4939, 0.0
        %v5758 = vmax.f32 %v4942, 0.0
        %v5759 = vmax.f32 %v4947, 0.0
        %v5760 = vmax.f32 %v4950, 0.0
        %v5761 = vmax.f32 %v4955, 0.0
        %v5762 = vmax.f32 %v4958, 0.0
        %v5763 = vmax.f32 %v4963, 0.0
        %v5764 = vmax.f32 %v4966, 0.0
        %v5765 = vmax.f32 %v4971, 0.0
        %v5766 = vmax.f32 %v4974, 0.0
        %v5767 = vmax.f32 %v4979, 0.0
        %v5768 = vmax.f32 %v4982, 0.0
        %v5769 = vmax.f32 %v4987, 0.0
        %v5770 = vmax.f32 %v4990, 0.0
        %v5771 = vmax.f32 %v4995, 0.0
        %v5772 = vmax.f32 %v4998, 0.0
        %v5773 = vmax.f32 %v5003, 0.0
        %v5774 = vmax.f32 %v5006, 0.0
        %v5775 = vmax.f32 %v5011, 0.0
        %v5776 = vmax.f32 %v5014, 0.0
        %v5777 = vmax.f32 %v5019, 0.0
        %v5778 = vmax.f32 %v5022, 0.0
        %v5779 = vmax.f32 %v5027, 0.0
        %v5780 = vmax.f32 %v5030, 0.0
        %v5781 = vmax.f32 %v5035, 0.0
        %v5782 = vmax.f32 %v5038, 0.0
        %v5783 = vmax.f32 %v5043, 0.0
        %v5784 = vmax.f32 %v5046, 0.0
        %v5785 = vmax.f32 %v5051, 0.0
        %v5786 = vmax.f32 %v5054, 0.0
        %v5787 = vmax.f32 %v5059, 0.0
        %v5788 = vmax.f32 %v5062, 0.0
        %v5789 = vmax.f32 %v5067, 0.0
        %v5790 = vmax.f32 %v5070, 0.0
        %v5791 = vmax.f32 %v5075, 0.0
        %v5792 = vmax.f32 %v5078, 0.0
        %v5793 = vmax.f32 %v5083, 0.0
        %v5794 = vmax.f32 %v5086, 0.0
        %v5795 = vmax.f32 %v5091, 0.0
        %v5796 = vmax.f32 %v5094, 0.0
        %v5797 = vmax.f32 %v5099, 0.0
        %v5798 = vmax.f32 %v5102, 0.0
        %v5799 = vmax.f32 %v5107, 0.0
        %v5800 = vmax.f32 %v5110, 0.0
        %v5801 = vmax.f32 %v5115, 0.0
        %v5802 = vmax.f32 %v5118, 0.0
        %v5803 = vmax.f32 %v5123, 0.0
        %v5804 = vmax.f32 %v5126, 0.0
        %v5805 = vmax.f32 %v5131, 0.0
        %v5806 = vmax.f32 %v5134, 0.0
        %v5807 = vmax.f32 %v5139, 0.0
        %v5808 = vmax.f32 %v5142, 0.0
        %v5809 = vmax.f32 %v5147, 0.0
        %v5810 = vmax.f32 %v5150, 0.0
        %v5811 = vmax.f32 %v5155, 0.0
        %v5812 = vmax.f32 %v5158, 0.0
        %v5813 = vmax.f32 %v5163, 0.0
        %v5814 = vmax.f32 %v5166, 0.0
        %v5815 = vmax.f32 %v5171, 0.0
        %v5816 = vmax.f32 %v5174, 0.0
        %v5817 = vmax.f32 %v5179, 0.0
        %v5818 = vmax.f32 %v5182, 0.0
        %v5819 = vmax.f32 %v5187, 0.0
        %v5820 = vmax.f32 %v5190, 0.0
        %v5821 = vmax.f32 %v5195, 0.0
        %v5822 = vmax.f32 %v5198, 0.0
        %v5823 = vmax.f32 %v5203, 0.0
        %v5824 = vmax.f32 %v5206, 0.0
        %v5825 = vmax.f32 %v5211, 0.0
        %v5826 = vmax.f32 %v5214, 0.0
        %v5827 = vmax.f32 %v5219, 0.0
        %v5828 = vmax.f32 %v5222, 0.0
        %v5829 = vmax.f32 %v5227, 0.0
        %v5830 = vmax.f32 %v5230, 0.0
        %v5831 = vmax.f32 %v5235, 0.0
        %v5832 = vmax.f32 %v5238, 0.0
        %v5833 = vmax.f32 %v5243, 0.0
        %v5834 = vmax.f32 %v5246, 0.0
        %v5835 = vmax.f32 %v5251, 0.0
        %v5836 = vmax.f32 %v5254, 0.0
        %v5837 = vmax.f32 %v5259, 0.0
        %v5838 = vmax.f32 %v5262, 0.0
        %v5839 = vmax.f32 %v5267, 0.0
        %v5840 = vmax.f32 %v5270, 0.0
        %v5841 = vmax.f32 %v5275, 0.0
        %v5842 = vmax.f32 %v5278, 0.0
        %v5843 = vmax.f32 %v5283, 0.0
        %v5844 = vmax.f32 %v5286, 0.0
        %v5845 = vmax.f32 %v5291, 0.0
        %v5846 = vmax.f32 %v5294, 0.0
        %v5847 = vmax.f32 %v5299, 0.0
        %v5848 = vmax.f32 %v5302, 0.0
        %v5849 = vmax.f32 %v5307, 0.0
        %v5850 = vmax.f32 %v5310, 0.0
        %v5851 = vmax.f32 %v5315, 0.0
        %v5852 = vmax.f32 %v5318, 0.0
        %v5853 = vmax.f32 %v5323, 0.0
        %v5854 = vmax.f32 %v5326, 0.0
        %v5855 = vmax.f32 %v5331, 0.0
        %v5856 = vmax.f32 %v5334, 0.0
        %v5857 = vmax.f32 %v5339, 0.0
        %v5858 = vmax.f32 %v5342, 0.0
        %v5859 = vmax.f32 %v5347, 0.0
        %v5860 = vmax.f32 %v5350, 0.0
        %v5861 = vmax.f32 %v5355, 0.0
        %v5862 = vmax.f32 %v5358, 0.0
        %v5863 = vmax.f32 %v5363, 0.0
        %v5864 = vmax.f32 %v5366, 0.0
        %v5865 = vmax.f32 %v5371, 0.0
        %v5866 = vmax.f32 %v5374, 0.0
        %v5867 = vmax.f32 %v5379, 0.0
        %v5868 = vmax.f32 %v5382, 0.0
        %v5869 = vmax.f32 %v5387, 0.0
        %v5870 = vmax.f32 %v5390, 0.0
        %v5871 = vmax.f32 %v5395, 0.0
        %v5872 = vmax.f32 %v5398, 0.0
        %v5873 = vmax.f32 %v5403, 0.0
        %v5874 = vmax.f32 %v5406, 0.0
        %v5875 = vmax.f32 %v5411, 0.0
        %v5876 = vmax.f32 %v5414, 0.0
        %v5877 = vmax.f32 %v5419, 0.0
        %v5878 = vmax.f32 %v5422, 0.0
        %v5879 = vmax.f32 %v5427, 0.0
        %v5880 = vmax.f32 %v5430, 0.0
        %v5881 = vmax.f32 %v5435, 0.0
        %v5882 = vmax.f32 %v5438, 0.0
        %v5883 = vmax.f32 %v5443, 0.0
        %v5884 = vmax.f32 %v5446, 0.0
        %v5885 = vmax.f32 %v5451, 0.0
        %v5886 = vmax.f32 %v5454, 0.0
        %v5887 = vmax.f32 %v5459, 0.0
        %v5888 = vmax.f32 %v5462, 0.0
        %v5889 = vmax.f32 %v5467, 0.0
        %v5890 = vmax.f32 %v5470, 0.0
        %v5891 = vmax.f32 %v5475, 0.0
        %v5892 = vmax.f32 %v5478, 0.0
        %v5893 = vmax.f32 %v5483, 0.0
        %v5894 = vmax.f32 %v5486, 0.0
        %v5895 = vmax.f32 %v5491, 0.0
        %v5896 = vmax.f32 %v5494, 0.0
        %v5897 = vmax.f32 %v5499, 0.0
        %v5898 = vmax.f32 %v5502, 0.0
        %v5899 = vmax.f32 %v5507, 0.0
        %v5900 = vmax.f32 %v5510, 0.0
        %v5901 = vmax.f32 %v5515, 0.0
        %v5902 = vmax.f32 %v5518, 0.0
        %v5903 = vmax.f32 %v5523, 0.0
        %v5904 = vmax.f32 %v5526, 0.0
        %v5905 = vmax.f32 %v5531, 0.0
        %v5906 = vmax.f32 %v5534, 0.0
        %v5907 = vmax.f32 %v5539, 0.0
        %v5908 = vmax.f32 %v5542, 0.0
        %v5909 = vmax.f32 %v5547, 0.0
        %v5910 = vmax.f32 %v5550, 0.0
        %v5911 = vmax.f32 %v5555, 0.0
        %v5912 = vmax.f32 %v5558, 0.0
        %v5913 = vmax.f32 %v5563, 0.0
        %v5914 = vmax.f32 %v5566, 0.0
        %v5915 = vmax.f32 %v5571, 0.0
        %v5916 = vmax.f32 %v5574, 0.0
        %v5917 = vmax.f32 %v5579, 0.0
        %v5918 = vmax.f32 %v5582, 0.0
        %v5919 = vmax.f32 %v5587, 0.0
        %v5920 = vmax.f32 %v5590, 0.0
        %v5921 = vmax.f32 %v5595, 0.0
        %v5922 = vmax.f32 %v5598, 0.0
        %v5923 = vmax.f32 %v5603, 0.0
        %v5924 = vmax.f32 %v5606, 0.0
        %v5925 = vmax.f32 %v5611, 0.0
        %v5926 = vmax.f32 %v5614, 0.0
        %v5927 = vmax.f32 %v5619, 0.0
        %v5928 = vmax.f32 %v5622, 0.0
        %v5929 = vmax.f32 %v5627, 0.0
        %v5930 = vmax.f32 %v5630, 0.0
        %v5931 = vmax.f32 %v5635, 0.0
        %v5932 = vmax.f32 %v5638, 0.0
        %v5933 = vmax.f32 %v5643, 0.0
        %v5934 = vmax.f32 %v5646, 0.0
        %v5935 = vmax.f32 %v5651, 0.0
        %v5936 = vmax.f32 %v5654, 0.0
        %v5937 = vmax.f32 %v5659, 0.0
        %v5938 = vmax.f32 %v5662, 0.0
        %v5939 = vmax.f32 %v5667, 0.0
        %v5940 = vmax.f32 %v5670, 0.0
        %v5941 = vmax.f32 %v5675, 0.0
        %v5942 = vmax.f32 %v5678, 0.0
        %v5943 = vmax.f32 %v5683, 0.0
        %v5944 = vmax.f32 %v5686, 0.0
        %v5945 = vmax.f32 %v5689, %v5690
        %v5946 = vmax.f32 %v5945, %v5691
        %v5947 = vmax.f32 %v5946, %v5692
        %v5948 = vrot.slane %v5947, 4
        %v5949 = vmax.f32 %v5947, %v5948
        %v5950 = vrot.slane %v5949, 2
        %v5951 = vmax.f32 %v5949, %v5950
        %v5952 = vrot.slane %v5951, 1
        %v5953 = vmax.f32 %v5951, %v5952
        %v5954 = vmax.f32 %v5693, %v5694
        %v5955 = vmax.f32 %v5954, %v5695
        %v5956 = vmax.f32 %v5955, %v5696
        %v5957 = vrot.slane %v5956, 4
        %v5958 = vmax.f32 %v5956, %v5957
        %v5959 = vrot.slane %v5958, 2
        %v5960 = vmax.f32 %v5958, %v5959
        %v5961 = vrot.slane %v5960, 1
        %v5962 = vmax.f32 %v5960, %v5961
        %v5963 = vmax.f32 %v5697, %v5698
        %v5964 = vmax.f32 %v5963, %v5699
        %v5965 = vmax.f32 %v5964, %v5700
        %v5966 = vrot.slane %v5965, 4
        %v5967 = vmax.f32 %v5965, %v5966
        %v5968 = vrot.slane %v5967, 2
        %v5969 = vmax.f32 %v5967, %v5968
        %v5970 = vrot.slane %v5969, 1
        %v5971 = vmax.f32 %v5969, %v5970
        %v5972 = vmax.f32 %v5701, %v5702
        %v5973 = vmax.f32 %v5972, %v5703
        %v5974 = vmax.f32 %v5973, %v5704
        %v5975 = vrot.slane %v5974, 4
        %v5976 = vmax.f32 %v5974, %v5975
        %v5977 = vrot.slane %v5976, 2
        %v5978 = vmax.f32 %v5976, %v5977
        %v5979 = vrot.slane %v5978, 1
        %v5980 = vmax.f32 %v5978, %v5979
        %v5981 = vmax.f32 %v5705, %v5706
        %v5982 = vmax.f32 %v5981, %v5707
        %v5983 = vmax.f32 %v5982, %v5708
        %v5984 = vrot.slane %v5983, 4
        %v5985 = vmax.f32 %v5983, %v5984
        %v5986 = vrot.slane %v5985, 2
        %v5987 = vmax.f32 %v5985, %v5986
        %v5988 = vrot.slane %v5987, 1
        %v5989 = vmax.f32 %v5987, %v5988
        %v5990 = vmax.f32 %v5709, %v5710
        %v5991 = vmax.f32 %v5990, %v5711
        %v5992 = vmax.f32 %v5991, %v5712
        %v5993 = vrot.slane %v5992, 4
        %v5994 = vmax.f32 %v5992, %v5993
        %v5995 = vrot.slane %v5994, 2
        %v5996 = vmax.f32 %v5994, %v5995
        %v5997 = vrot.slane %v5996, 1
        %v5998 = vmax.f32 %v5996, %v5997
        %v5999 = vmax.f32 %v5713, %v5714
        %v6000 = vmax.f32 %v5999, %v5715
        %v6001 = vmax.f32 %v6000, %v5716
        %v6002 = vrot.slane %v6001, 4
        %v6003 = vmax.f32 %v6001, %v6002
        %v6004 = vrot.slane %v6003, 2
        %v6005 = vmax.f32 %v6003, %v6004
        %v6006 = vrot.slane %v6005, 1
        %v6007 = vmax.f32 %v6005, %v6006
        %v6008 = vmax.f32 %v5717, %v5718
        %v6009 = vmax.f32 %v6008, %v5719
        %v6010 = vmax.f32 %v6009, %v5720
        %v6011 = vrot.slane %v6010, 4
        %v6012 = vmax.f32 %v6010, %v6011
        %v6013 = vrot.slane %v6012, 2
        %v6014 = vmax.f32 %v6012, %v6013
        %v6015 = vrot.slane %v6014, 1
        %v6016 = vmax.f32 %v6014, %v6015
        %v6017 = vmax.f32 %v5721, %v5722
        %v6018 = vmax.f32 %v6017, %v5723
        %v6019 = vmax.f32 %v6018, %v5724
        %v6020 = vrot.slane %v6019, 4
        %v6021 = vmax.f32 %v6019, %v6020
        %v6022 = vrot.slane %v6021, 2
        %v6023 = vmax.f32 %v6021, %v6022
        %v6024 = vrot.slane %v6023, 1
        %v6025 = vmax.f32 %v6023, %v6024
        %v6026 = vmax.f32 %v5725, %v5726
        %v6027 = vmax.f32 %v6026, %v5727
        %v6028 = vmax.f32 %v6027, %v5728
        %v6029 = vrot.slane %v6028, 4
        %v6030 = vmax.f32 %v6028, %v6029
        %v6031 = vrot.slane %v6030, 2
        %v6032 = vmax.f32 %v6030, %v6031
        %v6033 = vrot.slane %v6032, 1
        %v6034 = vmax.f32 %v6032, %v6033
        %v6035 = vmax.f32 %v5729, %v5730
        %v6036 = vmax.f32 %v6035, %v5731
        %v6037 = vmax.f32 %v6036, %v5732
        %v6038 = vrot.slane %v6037, 4
        %v6039 = vmax.f32 %v6037, %v6038
        %v6040 = vrot.slane %v6039, 2
        %v6041 = vmax.f32 %v6039, %v6040
        %v6042 = vrot.slane %v6041, 1
        %v6043 = vmax.f32 %v6041, %v6042
        %v6044 = vmax.f32 %v5733, %v5734
        %v6045 = vmax.f32 %v6044, %v5735
        %v6046 = vmax.f32 %v6045, %v5736
        %v6047 = vrot.slane %v6046, 4
        %v6048 = vmax.f32 %v6046, %v6047
        %v6049 = vrot.slane %v6048, 2
        %v6050 = vmax.f32 %v6048, %v6049
        %v6051 = vrot.slane %v6050, 1
        %v6052 = vmax.f32 %v6050, %v6051
        %v6053 = vmax.f32 %v5737, %v5738
        %v6054 = vmax.f32 %v6053, %v5739
        %v6055 = vmax.f32 %v6054, %v5740
        %v6056 = vrot.slane %v6055, 4
        %v6057 = vmax.f32 %v6055, %v6056
        %v6058 = vrot.slane %v6057, 2
        %v6059 = vmax.f32 %v6057, %v6058
        %v6060 = vrot.slane %v6059, 1
        %v6061 = vmax.f32 %v6059, %v6060
        %v6062 = vmax.f32 %v5741, %v5742
        %v6063 = vmax.f32 %v6062, %v5743
        %v6064 = vmax.f32 %v6063, %v5744
        %v6065 = vrot.slane %v6064, 4
        %v6066 = vmax.f32 %v6064, %v6065
        %v6067 = vrot.slane %v6066, 2
        %v6068 = vmax.f32 %v6066, %v6067
        %v6069 = vrot.slane %v6068, 1
        %v6070 = vmax.f32 %v6068, %v6069
        %v6071 = vmax.f32 %v5745, %v5746
        %v6072 = vmax.f32 %v6071, %v5747
        %v6073 = vmax.f32 %v6072, %v5748
        %v6074 = vrot.slane %v6073, 4
        %v6075 = vmax.f32 %v6073, %v6074
        %v6076 = vrot.slane %v6075, 2
        %v6077 = vmax.f32 %v6075, %v6076
        %v6078 = vrot.slane %v6077, 1
        %v6079 = vmax.f32 %v6077, %v6078
        %v6080 = vmax.f32 %v5749, %v5750
        %v6081 = vmax.f32 %v6080, %v5751
        %v6082 = vmax.f32 %v6081, %v5752
        %v6083 = vrot.slane %v6082, 4
        %v6084 = vmax.f32 %v6082, %v6083
        %v6085 = vrot.slane %v6084, 2
        %v6086 = vmax.f32 %v6084, %v6085
        %v6087 = vrot.slane %v6086, 1
        %v6088 = vmax.f32 %v6086, %v6087
        %v6089 = vmax.f32 %v5753, %v5754
        %v6090 = vmax.f32 %v6089, %v5755
        %v6091 = vmax.f32 %v6090, %v5756
        %v6092 = vrot.slane %v6091, 4
        %v6093 = vmax.f32 %v6091, %v6092
        %v6094 = vrot.slane %v6093, 2
        %v6095 = vmax.f32 %v6093, %v6094
        %v6096 = vrot.slane %v6095, 1
        %v6097 = vmax.f32 %v6095, %v6096
        %v6098 = vmax.f32 %v5757, %v5758
        %v6099 = vmax.f32 %v6098, %v5759
        %v6100 = vmax.f32 %v6099, %v5760
        %v6101 = vrot.slane %v6100, 4
        %v6102 = vmax.f32 %v6100, %v6101
        %v6103 = vrot.slane %v6102, 2
        %v6104 = vmax.f32 %v6102, %v6103
        %v6105 = vrot.slane %v6104, 1
        %v6106 = vmax.f32 %v6104, %v6105
        %v6107 = vmax.f32 %v5761, %v5762
        %v6108 = vmax.f32 %v6107, %v5763
        %v6109 = vmax.f32 %v6108, %v5764
        %v6110 = vrot.slane %v6109, 4
        %v6111 = vmax.f32 %v6109, %v6110
        %v6112 = vrot.slane %v6111, 2
        %v6113 = vmax.f32 %v6111, %v6112
        %v6114 = vrot.slane %v6113, 1
        %v6115 = vmax.f32 %v6113, %v6114
        %v6116 = vmax.f32 %v5765, %v5766
        %v6117 = vmax.f32 %v6116, %v5767
        %v6118 = vmax.f32 %v6117, %v5768
        %v6119 = vrot.slane %v6118, 4
        %v6120 = vmax.f32 %v6118, %v6119
        %v6121 = vrot.slane %v6120, 2
        %v6122 = vmax.f32 %v6120, %v6121
        %v6123 = vrot.slane %v6122, 1
        %v6124 = vmax.f32 %v6122, %v6123
        %v6125 = vmax.f32 %v5769, %v5770
        %v6126 = vmax.f32 %v6125, %v5771
        %v6127 = vmax.f32 %v6126, %v5772
        %v6128 = vrot.slane %v6127, 4
        %v6129 = vmax.f32 %v6127, %v6128
        %v6130 = vrot.slane %v6129, 2
        %v6131 = vmax.f32 %v6129, %v6130
        %v6132 = vrot.slane %v6131, 1
        %v6133 = vmax.f32 %v6131, %v6132
        %v6134 = vmax.f32 %v5773, %v5774
        %v6135 = vmax.f32 %v6134, %v5775
        %v6136 = vmax.f32 %v6135, %v5776
        %v6137 = vrot.slane %v6136, 4
        %v6138 = vmax.f32 %v6136, %v6137
        %v6139 = vrot.slane %v6138, 2
        %v6140 = vmax.f32 %v6138, %v6139
        %v6141 = vrot.slane %v6140, 1
        %v6142 = vmax.f32 %v6140, %v6141
        %v6143 = vmax.f32 %v5777, %v5778
        %v6144 = vmax.f32 %v6143, %v5779
        %v6145 = vmax.f32 %v6144, %v5780
        %v6146 = vrot.slane %v6145, 4
        %v6147 = vmax.f32 %v6145, %v6146
        %v6148 = vrot.slane %v6147, 2
        %v6149 = vmax.f32 %v6147, %v6148
        %v6150 = vrot.slane %v6149, 1
        %v6151 = vmax.f32 %v6149, %v6150
        %v6152 = vmax.f32 %v5781, %v5782
        %v6153 = vmax.f32 %v6152, %v5783
        %v6154 = vmax.f32 %v6153, %v5784
        %v6155 = vrot.slane %v6154, 4
        %v6156 = vmax.f32 %v6154, %v6155
        %v6157 = vrot.slane %v6156, 2
        %v6158 = vmax.f32 %v6156, %v6157
        %v6159 = vrot.slane %v6158, 1
        %v6160 = vmax.f32 %v6158, %v6159
        %v6161 = vmax.f32 %v5785, %v5786
        %v6162 = vmax.f32 %v6161, %v5787
        %v6163 = vmax.f32 %v6162, %v5788
        %v6164 = vrot.slane %v6163, 4
        %v6165 = vmax.f32 %v6163, %v6164
        %v6166 = vrot.slane %v6165, 2
        %v6167 = vmax.f32 %v6165, %v6166
        %v6168 = vrot.slane %v6167, 1
        %v6169 = vmax.f32 %v6167, %v6168
        %v6170 = vmax.f32 %v5789, %v5790
        %v6171 = vmax.f32 %v6170, %v5791
        %v6172 = vmax.f32 %v6171, %v5792
        %v6173 = vrot.slane %v6172, 4
        %v6174 = vmax.f32 %v6172, %v6173
        %v6175 = vrot.slane %v6174, 2
        %v6176 = vmax.f32 %v6174, %v6175
        %v6177 = vrot.slane %v6176, 1
        %v6178 = vmax.f32 %v6176, %v6177
        %v6179 = vmax.f32 %v5793, %v5794
        %v6180 = vmax.f32 %v6179, %v5795
        %v6181 = vmax.f32 %v6180, %v5796
        %v6182 = vrot.slane %v6181, 4
        %v6183 = vmax.f32 %v6181, %v6182
        %v6184 = vrot.slane %v6183, 2
        %v6185 = vmax.f32 %v6183, %v6184
        %v6186 = vrot.slane %v6185, 1
        %v6187 = vmax.f32 %v6185, %v6186
        %v6188 = vmax.f32 %v5797, %v5798
        %v6189 = vmax.f32 %v6188, %v5799
        %v6190 = vmax.f32 %v6189, %v5800
        %v6191 = vrot.slane %v6190, 4
        %v6192 = vmax.f32 %v6190, %v6191
        %v6193 = vrot.slane %v6192, 2
        %v6194 = vmax.f32 %v6192, %v6193
        %v6195 = vrot.slane %v6194, 1
        %v6196 = vmax.f32 %v6194, %v6195
        %v6197 = vmax.f32 %v5801, %v5802
        %v6198 = vmax.f32 %v6197, %v5803
        %v6199 = vmax.f32 %v6198, %v5804
        %v6200 = vrot.slane %v6199, 4
        %v6201 = vmax.f32 %v6199, %v6200
        %v6202 = vrot.slane %v6201, 2
        %v6203 = vmax.f32 %v6201, %v6202
        %v6204 = vrot.slane %v6203, 1
        %v6205 = vmax.f32 %v6203, %v6204
        %v6206 = vmax.f32 %v5805, %v5806
        %v6207 = vmax.f32 %v6206, %v5807
        %v6208 = vmax.f32 %v6207, %v5808
        %v6209 = vrot.slane %v6208, 4
        %v6210 = vmax.f32 %v6208, %v6209
        %v6211 = vrot.slane %v6210, 2
        %v6212 = vmax.f32 %v6210, %v6211
        %v6213 = vrot.slane %v6212, 1
        %v6214 = vmax.f32 %v6212, %v6213
        %v6215 = vmax.f32 %v5809, %v5810
        %v6216 = vmax.f32 %v6215, %v5811
        %v6217 = vmax.f32 %v6216, %v5812
        %v6218 = vrot.slane %v6217, 4
        %v6219 = vmax.f32 %v6217, %v6218
        %v6220 = vrot.slane %v6219, 2
        %v6221 = vmax.f32 %v6219, %v6220
        %v6222 = vrot.slane %v6221, 1
        %v6223 = vmax.f32 %v6221, %v6222
        %v6224 = vmax.f32 %v5813, %v5814
        %v6225 = vmax.f32 %v6224, %v5815
        %v6226 = vmax.f32 %v6225, %v5816
        %v6227 = vrot.slane %v6226, 4
        %v6228 = vmax.f32 %v6226, %v6227
        %v6229 = vrot.slane %v6228, 2
        %v6230 = vmax.f32 %v6228, %v6229
        %v6231 = vrot.slane %v6230, 1
        %v6232 = vmax.f32 %v6230, %v6231
        %v6233 = vmax.f32 %v5817, %v5818
        %v6234 = vmax.f32 %v6233, %v5819
        %v6235 = vmax.f32 %v6234, %v5820
        %v6236 = vrot.slane %v6235, 4
        %v6237 = vmax.f32 %v6235, %v6236
        %v6238 = vrot.slane %v6237, 2
        %v6239 = vmax.f32 %v6237, %v6238
        %v6240 = vrot.slane %v6239, 1
        %v6241 = vmax.f32 %v6239, %v6240
        %v6242 = vmax.f32 %v5821, %v5822
        %v6243 = vmax.f32 %v6242, %v5823
        %v6244 = vmax.f32 %v6243, %v5824
        %v6245 = vrot.slane %v6244, 4
        %v6246 = vmax.f32 %v6244, %v6245
        %v6247 = vrot.slane %v6246, 2
        %v6248 = vmax.f32 %v6246, %v6247
        %v6249 = vrot.slane %v6248, 1
        %v6250 = vmax.f32 %v6248, %v6249
        %v6251 = vmax.f32 %v5825, %v5826
        %v6252 = vmax.f32 %v6251, %v5827
        %v6253 = vmax.f32 %v6252, %v5828
        %v6254 = vrot.slane %v6253, 4
        %v6255 = vmax.f32 %v6253, %v6254
        %v6256 = vrot.slane %v6255, 2
        %v6257 = vmax.f32 %v6255, %v6256
        %v6258 = vrot.slane %v6257, 1
        %v6259 = vmax.f32 %v6257, %v6258
        %v6260 = vmax.f32 %v5829, %v5830
        %v6261 = vmax.f32 %v6260, %v5831
        %v6262 = vmax.f32 %v6261, %v5832
        %v6263 = vrot.slane %v6262, 4
        %v6264 = vmax.f32 %v6262, %v6263
        %v6265 = vrot.slane %v6264, 2
        %v6266 = vmax.f32 %v6264, %v6265
        %v6267 = vrot.slane %v6266, 1
        %v6268 = vmax.f32 %v6266, %v6267
        %v6269 = vmax.f32 %v5833, %v5834
        %v6270 = vmax.f32 %v6269, %v5835
        %v6271 = vmax.f32 %v6270, %v5836
        %v6272 = vrot.slane %v6271, 4
        %v6273 = vmax.f32 %v6271, %v6272
        %v6274 = vrot.slane %v6273, 2
        %v6275 = vmax.f32 %v6273, %v6274
        %v6276 = vrot.slane %v6275, 1
        %v6277 = vmax.f32 %v6275, %v6276
        %v6278 = vmax.f32 %v5837, %v5838
        %v6279 = vmax.f32 %v6278, %v5839
        %v6280 = vmax.f32 %v6279, %v5840
        %v6281 = vrot.slane %v6280, 4
        %v6282 = vmax.f32 %v6280, %v6281
        %v6283 = vrot.slane %v6282, 2
        %v6284 = vmax.f32 %v6282, %v6283
        %v6285 = vrot.slane %v6284, 1
        %v6286 = vmax.f32 %v6284, %v6285
        %v6287 = vmax.f32 %v5841, %v5842
        %v6288 = vmax.f32 %v6287, %v5843
        %v6289 = vmax.f32 %v6288, %v5844
        %v6290 = vrot.slane %v6289, 4
        %v6291 = vmax.f32 %v6289, %v6290
        %v6292 = vrot.slane %v6291, 2
        %v6293 = vmax.f32 %v6291, %v6292
        %v6294 = vrot.slane %v6293, 1
        %v6295 = vmax.f32 %v6293, %v6294
        %v6296 = vmax.f32 %v5845, %v5846
        %v6297 = vmax.f32 %v6296, %v5847
        %v6298 = vmax.f32 %v6297, %v5848
        %v6299 = vrot.slane %v6298, 4
        %v6300 = vmax.f32 %v6298, %v6299
        %v6301 = vrot.slane %v6300, 2
        %v6302 = vmax.f32 %v6300, %v6301
        %v6303 = vrot.slane %v6302, 1
        %v6304 = vmax.f32 %v6302, %v6303
        %v6305 = vmax.f32 %v5849, %v5850
        %v6306 = vmax.f32 %v6305, %v5851
        %v6307 = vmax.f32 %v6306, %v5852
        %v6308 = vrot.slane %v6307, 4
        %v6309 = vmax.f32 %v6307, %v6308
        %v6310 = vrot.slane %v6309, 2
        %v6311 = vmax.f32 %v6309, %v6310
        %v6312 = vrot.slane %v6311, 1
        %v6313 = vmax.f32 %v6311, %v6312
        %v6314 = vmax.f32 %v5853, %v5854
        %v6315 = vmax.f32 %v6314, %v5855
        %v6316 = vmax.f32 %v6315, %v5856
        %v6317 = vrot.slane %v6316, 4
        %v6318 = vmax.f32 %v6316, %v6317
        %v6319 = vrot.slane %v6318, 2
        %v6320 = vmax.f32 %v6318, %v6319
        %v6321 = vrot.slane %v6320, 1
        %v6322 = vmax.f32 %v6320, %v6321
        %v6323 = vmax.f32 %v5857, %v5858
        %v6324 = vmax.f32 %v6323, %v5859
        %v6325 = vmax.f32 %v6324, %v5860
        %v6326 = vrot.slane %v6325, 4
        %v6327 = vmax.f32 %v6325, %v6326
        %v6328 = vrot.slane %v6327, 2
        %v6329 = vmax.f32 %v6327, %v6328
        %v6330 = vrot.slane %v6329, 1
        %v6331 = vmax.f32 %v6329, %v6330
        %v6332 = vmax.f32 %v5861, %v5862
        %v6333 = vmax.f32 %v6332, %v5863
        %v6334 = vmax.f32 %v6333, %v5864
        %v6335 = vrot.slane %v6334, 4
        %v6336 = vmax.f32 %v6334, %v6335
        %v6337 = vrot.slane %v6336, 2
        %v6338 = vmax.f32 %v6336, %v6337
        %v6339 = vrot.slane %v6338, 1
        %v6340 = vmax.f32 %v6338, %v6339
        %v6341 = vmax.f32 %v5865, %v5866
        %v6342 = vmax.f32 %v6341, %v5867
        %v6343 = vmax.f32 %v6342, %v5868
        %v6344 = vrot.slane %v6343, 4
        %v6345 = vmax.f32 %v6343, %v6344
        %v6346 = vrot.slane %v6345, 2
        %v6347 = vmax.f32 %v6345, %v6346
        %v6348 = vrot.slane %v6347, 1
        %v6349 = vmax.f32 %v6347, %v6348
        %v6350 = vmax.f32 %v5869, %v5870
        %v6351 = vmax.f32 %v6350, %v5871
        %v6352 = vmax.f32 %v6351, %v5872
        %v6353 = vrot.slane %v6352, 4
        %v6354 = vmax.f32 %v6352, %v6353
        %v6355 = vrot.slane %v6354, 2
        %v6356 = vmax.f32 %v6354, %v6355
        %v6357 = vrot.slane %v6356, 1
        %v6358 = vmax.f32 %v6356, %v6357
        %v6359 = vmax.f32 %v5873, %v5874
        %v6360 = vmax.f32 %v6359, %v5875
        %v6361 = vmax.f32 %v6360, %v5876
        %v6362 = vrot.slane %v6361, 4
        %v6363 = vmax.f32 %v6361, %v6362
        %v6364 = vrot.slane %v6363, 2
        %v6365 = vmax.f32 %v6363, %v6364
        %v6366 = vrot.slane %v6365, 1
        %v6367 = vmax.f32 %v6365, %v6366
        %v6368 = vmax.f32 %v5877, %v5878
        %v6369 = vmax.f32 %v6368, %v5879
        %v6370 = vmax.f32 %v6369, %v5880
        %v6371 = vrot.slane %v6370, 4
        %v6372 = vmax.f32 %v6370, %v6371
        %v6373 = vrot.slane %v6372, 2
        %v6374 = vmax.f32 %v6372, %v6373
        %v6375 = vrot.slane %v6374, 1
        %v6376 = vmax.f32 %v6374, %v6375
        %v6377 = vmax.f32 %v5881, %v5882
        %v6378 = vmax.f32 %v6377, %v5883
        %v6379 = vmax.f32 %v6378, %v5884
        %v6380 = vrot.slane %v6379, 4
        %v6381 = vmax.f32 %v6379, %v6380
        %v6382 = vrot.slane %v6381, 2
        %v6383 = vmax.f32 %v6381, %v6382
        %v6384 = vrot.slane %v6383, 1
        %v6385 = vmax.f32 %v6383, %v6384
        %v6386 = vmax.f32 %v5885, %v5886
        %v6387 = vmax.f32 %v6386, %v5887
        %v6388 = vmax.f32 %v6387, %v5888
        %v6389 = vrot.slane %v6388, 4
        %v6390 = vmax.f32 %v6388, %v6389
        %v6391 = vrot.slane %v6390, 2
        %v6392 = vmax.f32 %v6390, %v6391
        %v6393 = vrot.slane %v6392, 1
        %v6394 = vmax.f32 %v6392, %v6393
        %v6395 = vmax.f32 %v5889, %v5890
        %v6396 = vmax.f32 %v6395, %v5891
        %v6397 = vmax.f32 %v6396, %v5892
        %v6398 = vrot.slane %v6397, 4
        %v6399 = vmax.f32 %v6397, %v6398
        %v6400 = vrot.slane %v6399, 2
        %v6401 = vmax.f32 %v6399, %v6400
        %v6402 = vrot.slane %v6401, 1
        %v6403 = vmax.f32 %v6401, %v6402
        %v6404 = vmax.f32 %v5893, %v5894
        %v6405 = vmax.f32 %v6404, %v5895
        %v6406 = vmax.f32 %v6405, %v5896
        %v6407 = vrot.slane %v6406, 4
        %v6408 = vmax.f32 %v6406, %v6407
        %v6409 = vrot.slane %v6408, 2
        %v6410 = vmax.f32 %v6408, %v6409
        %v6411 = vrot.slane %v6410, 1
        %v6412 = vmax.f32 %v6410, %v6411
        %v6413 = vmax.f32 %v5897, %v5898
        %v6414 = vmax.f32 %v6413, %v5899
        %v6415 = vmax.f32 %v6414, %v5900
        %v6416 = vrot.slane %v6415, 4
        %v6417 = vmax.f32 %v6415, %v6416
        %v6418 = vrot.slane %v6417, 2
        %v6419 = vmax.f32 %v6417, %v6418
        %v6420 = vrot.slane %v6419, 1
        %v6421 = vmax.f32 %v6419, %v6420
        %v6422 = vmax.f32 %v5901, %v5902
        %v6423 = vmax.f32 %v6422, %v5903
        %v6424 = vmax.f32 %v6423, %v5904
        %v6425 = vrot.slane %v6424, 4
        %v6426 = vmax.f32 %v6424, %v6425
        %v6427 = vrot.slane %v6426, 2
        %v6428 = vmax.f32 %v6426, %v6427
        %v6429 = vrot.slane %v6428, 1
        %v6430 = vmax.f32 %v6428, %v6429
        %v6431 = vmax.f32 %v5905, %v5906
        %v6432 = vmax.f32 %v6431, %v5907
        %v6433 = vmax.f32 %v6432, %v5908
        %v6434 = vrot.slane %v6433, 4
        %v6435 = vmax.f32 %v6433, %v6434
        %v6436 = vrot.slane %v6435, 2
        %v6437 = vmax.f32 %v6435, %v6436
        %v6438 = vrot.slane %v6437, 1
        %v6439 = vmax.f32 %v6437, %v6438
        %v6440 = vmax.f32 %v5909, %v5910
        %v6441 = vmax.f32 %v6440, %v5911
        %v6442 = vmax.f32 %v6441, %v5912
        %v6443 = vrot.slane %v6442, 4
        %v6444 = vmax.f32 %v6442, %v6443
        %v6445 = vrot.slane %v6444, 2
        %v6446 = vmax.f32 %v6444, %v6445
        %v6447 = vrot.slane %v6446, 1
        %v6448 = vmax.f32 %v6446, %v6447
        %v6449 = vmax.f32 %v5913, %v5914
        %v6450 = vmax.f32 %v6449, %v5915
        %v6451 = vmax.f32 %v6450, %v5916
        %v6452 = vrot.slane %v6451, 4
        %v6453 = vmax.f32 %v6451, %v6452
        %v6454 = vrot.slane %v6453, 2
        %v6455 = vmax.f32 %v6453, %v6454
        %v6456 = vrot.slane %v6455, 1
        %v6457 = vmax.f32 %v6455, %v6456
        %v6458 = vmax.f32 %v5917, %v5918
        %v6459 = vmax.f32 %v6458, %v5919
        %v6460 = vmax.f32 %v6459, %v5920
        %v6461 = vrot.slane %v6460, 4
        %v6462 = vmax.f32 %v6460, %v6461
        %v6463 = vrot.slane %v6462, 2
        %v6464 = vmax.f32 %v6462, %v6463
        %v6465 = vrot.slane %v6464, 1
        %v6466 = vmax.f32 %v6464, %v6465
        %v6467 = vmax.f32 %v5921, %v5922
        %v6468 = vmax.f32 %v6467, %v5923
        %v6469 = vmax.f32 %v6468, %v5924
        %v6470 = vrot.slane %v6469, 4
        %v6471 = vmax.f32 %v6469, %v6470
        %v6472 = vrot.slane %v6471, 2
        %v6473 = vmax.f32 %v6471, %v6472
        %v6474 = vrot.slane %v6473, 1
        %v6475 = vmax.f32 %v6473, %v6474
        %v6476 = vmax.f32 %v5925, %v5926
        %v6477 = vmax.f32 %v6476, %v5927
        %v6478 = vmax.f32 %v6477, %v5928
        %v6479 = vrot.slane %v6478, 4
        %v6480 = vmax.f32 %v6478, %v6479
        %v6481 = vrot.slane %v6480, 2
        %v6482 = vmax.f32 %v6480, %v6481
        %v6483 = vrot.slane %v6482, 1
        %v6484 = vmax.f32 %v6482, %v6483
        %v6485 = vmax.f32 %v5929, %v5930
        %v6486 = vmax.f32 %v6485, %v5931
        %v6487 = vmax.f32 %v6486, %v5932
        %v6488 = vrot.slane %v6487, 4
        %v6489 = vmax.f32 %v6487, %v6488
        %v6490 = vrot.slane %v6489, 2
        %v6491 = vmax.f32 %v6489, %v6490
        %v6492 = vrot.slane %v6491, 1
        %v6493 = vmax.f32 %v6491, %v6492
        %v6494 = vmax.f32 %v5933, %v5934
        %v6495 = vmax.f32 %v6494, %v5935
        %v6496 = vmax.f32 %v6495, %v5936
        %v6497 = vrot.slane %v6496, 4
        %v6498 = vmax.f32 %v6496, %v6497
        %v6499 = vrot.slane %v6498, 2
        %v6500 = vmax.f32 %v6498, %v6499
        %v6501 = vrot.slane %v6500, 1
        %v6502 = vmax.f32 %v6500, %v6501
        %v6503 = vmax.f32 %v5937, %v5938
        %v6504 = vmax.f32 %v6503, %v5939
        %v6505 = vmax.f32 %v6504, %v5940
        %v6506 = vrot.slane %v6505, 4
        %v6507 = vmax.f32 %v6505, %v6506
        %v6508 = vrot.slane %v6507, 2
        %v6509 = vmax.f32 %v6507, %v6508
        %v6510 = vrot.slane %v6509, 1
        %v6511 = vmax.f32 %v6509, %v6510
        %v6512 = vmax.f32 %v5941, %v5942
        %v6513 = vmax.f32 %v6512, %v5943
        %v6514 = vmax.f32 %v6513, %v5944
        %v6515 = vrot.slane %v6514, 4
        %v6516 = vmax.f32 %v6514, %v6515
        %v6517 = vrot.slane %v6516, 2
        %v6518 = vmax.f32 %v6516, %v6517
        %v6519 = vrot.slane %v6518, 1
        %v6520 = vmax.f32 %v6518, %v6519
        %v6521 = vpack.c.bf16 %v5953, %v5953
        %v6522 = vpack.c.bf16 %v5962, %v5962
        %v6523 = vpack.c.bf16 %v5971, %v5971
        %v6524 = vpack.c.bf16 %v5980, %v5980
        %v6525 = vpack.c.bf16 %v5989, %v5989
        %v6526 = vpack.c.bf16 %v5998, %v5998
        %v6527 = vpack.c.bf16 %v6007, %v6007
        %v6528 = vpack.c.bf16 %v6016, %v6016
        %v6529 = vpack.c.bf16 %v6025, %v6025
        %v6530 = vpack.c.bf16 %v6034, %v6034
        %v6531 = vpack.c.bf16 %v6043, %v6043
        %v6532 = vpack.c.bf16 %v6052, %v6052
        %v6533 = vpack.c.bf16 %v6061, %v6061
        %v6534 = vpack.c.bf16 %v6070, %v6070
        %v6535 = vpack.c.bf16 %v6079, %v6079
        %v6536 = vpack.c.bf16 %v6088, %v6088
        %v6537 = vpack.c.bf16 %v6097, %v6097
        %v6538 = vpack.c.bf16 %v6106, %v6106
        %v6539 = vpack.c.bf16 %v6115, %v6115
        %v6540 = vpack.c.bf16 %v6124, %v6124
        %v6541 = vpack.c.bf16 %v6133, %v6133
        %v6542 = vpack.c.bf16 %v6142, %v6142
        %v6543 = vpack.c.bf16 %v6151, %v6151
        %v6544 = vpack.c.bf16 %v6160, %v6160
        %v6545 = vpack.c.bf16 %v6169, %v6169
        %v6546 = vpack.c.bf16 %v6178, %v6178
        %v6547 = vpack.c.bf16 %v6187, %v6187
        %v6548 = vpack.c.bf16 %v6196, %v6196
        %v6549 = vpack.c.bf16 %v6205, %v6205
        %v6550 = vpack.c.bf16 %v6214, %v6214
        %v6551 = vpack.c.bf16 %v6223, %v6223
        %v6552 = vpack.c.bf16 %v6232, %v6232
        %v6553 = vpack.c.bf16 %v6241, %v6241
        %v6554 = vpack.c.bf16 %v6250, %v6250
        %v6555 = vpack.c.bf16 %v6259, %v6259
        %v6556 = vpack.c.bf16 %v6268, %v6268
        %v6557 = vpack.c.bf16 %v6277, %v6277
        %v6558 = vpack.c.bf16 %v6286, %v6286
        %v6559 = vpack.c.bf16 %v6295, %v6295
        %v6560 = vpack.c.bf16 %v6304, %v6304
        %v6561 = vpack.c.bf16 %v6313, %v6313
        %v6562 = vpack.c.bf16 %v6322, %v6322
        %v6563 = vpack.c.bf16 %v6331, %v6331
        %v6564 = vpack.c.bf16 %v6340, %v6340
        %v6565 = vpack.c.bf16 %v6349, %v6349
        %v6566 = vpack.c.bf16 %v6358, %v6358
        %v6567 = vpack.c.bf16 %v6367, %v6367
        %v6568 = vpack.c.bf16 %v6376, %v6376
        %v6569 = vpack.c.bf16 %v6385, %v6385
        %v6570 = vpack.c.bf16 %v6394, %v6394
        %v6571 = vpack.c.bf16 %v6403, %v6403
        %v6572 = vpack.c.bf16 %v6412, %v6412
        %v6573 = vpack.c.bf16 %v6421, %v6421
        %v6574 = vpack.c.bf16 %v6430, %v6430
        %v6575 = vpack.c.bf16 %v6439, %v6439
        %v6576 = vpack.c.bf16 %v6448, %v6448
        %v6577 = vpack.c.bf16 %v6457, %v6457
        %v6578 = vpack.c.bf16 %v6466, %v6466
        %v6579 = vpack.c.bf16 %v6475, %v6475
        %v6580 = vpack.c.bf16 %v6484, %v6484
        %v6581 = vpack.c.bf16 %v6493, %v6493
        %v6582 = vpack.c.bf16 %v6502, %v6502
        %v6583 = vpack.c.bf16 %v6511, %v6511
        %v6584 = vpack.c.bf16 %v6520, %v6520
        %v6649 = vunpack.c.l.b16 %v6521
        %v6650 = vunpack.c.l.b16 %v6522
        %v6651 = vunpack.c.l.b16 %v6523
        %v6652 = vunpack.c.l.b16 %v6524
        %v6653 = vunpack.c.l.b16 %v6525
        %v6654 = vunpack.c.l.b16 %v6526
        %v6655 = vunpack.c.l.b16 %v6527
        %v6656 = vunpack.c.l.b16 %v6528
        %v6657 = vunpack.c.l.b16 %v6529
        %v6658 = vunpack.c.l.b16 %v6530
        %v6659 = vunpack.c.l.b16 %v6531
        %v6660 = vunpack.c.l.b16 %v6532
        %v6661 = vunpack.c.l.b16 %v6533
        %v6662 = vunpack.c.l.b16 %v6534
        %v6663 = vunpack.c.l.b16 %v6535
        %v6664 = vunpack.c.l.b16 %v6536
        %v6665 = vunpack.c.l.b16 %v6537
        %v6666 = vunpack.c.l.b16 %v6538
        %v6667 = vunpack.c.l.b16 %v6539
        %v6668 = vunpack.c.l.b16 %v6540
        %v6669 = vunpack.c.l.b16 %v6541
        %v6670 = vunpack.c.l.b16 %v6542
        %v6671 = vunpack.c.l.b16 %v6543
        %v6672 = vunpack.c.l.b16 %v6544
        %v6673 = vunpack.c.l.b16 %v6545
        %v6674 = vunpack.c.l.b16 %v6546
        %v6675 = vunpack.c.l.b16 %v6547
        %v6676 = vunpack.c.l.b16 %v6548
        %v6677 = vunpack.c.l.b16 %v6549
        %v6678 = vunpack.c.l.b16 %v6550
        %v6679 = vunpack.c.l.b16 %v6551
        %v6680 = vunpack.c.l.b16 %v6552
        %v6681 = vunpack.c.l.b16 %v6553
        %v6682 = vunpack.c.l.b16 %v6554
        %v6683 = vunpack.c.l.b16 %v6555
        %v6684 = vunpack.c.l.b16 %v6556
        %v6685 = vunpack.c.l.b16 %v6557
        %v6686 = vunpack.c.l.b16 %v6558
        %v6687 = vunpack.c.l.b16 %v6559
        %v6688 = vunpack.c.l.b16 %v6560
        %v6689 = vunpack.c.l.b16 %v6561
        %v6690 = vunpack.c.l.b16 %v6562
        %v6691 = vunpack.c.l.b16 %v6563
        %v6692 = vunpack.c.l.b16 %v6564
        %v6693 = vunpack.c.l.b16 %v6565
        %v6694 = vunpack.c.l.b16 %v6566
        %v6695 = vunpack.c.l.b16 %v6567
        %v6696 = vunpack.c.l.b16 %v6568
        %v6697 = vunpack.c.l.b16 %v6569
        %v6698 = vunpack.c.l.b16 %v6570
        %v6699 = vunpack.c.l.b16 %v6571
        %v6700 = vunpack.c.l.b16 %v6572
        %v6701 = vunpack.c.l.b16 %v6573
        %v6702 = vunpack.c.l.b16 %v6574
        %v6703 = vunpack.c.l.b16 %v6575
        %v6704 = vunpack.c.l.b16 %v6576
        %v6705 = vunpack.c.l.b16 %v6577
        %v6706 = vunpack.c.l.b16 %v6578
        %v6707 = vunpack.c.l.b16 %v6579
        %v6708 = vunpack.c.l.b16 %v6580
        %v6709 = vunpack.c.l.b16 %v6581
        %v6710 = vunpack.c.l.b16 %v6582
        %v6711 = vunpack.c.l.b16 %v6583
        %v6712 = vunpack.c.l.b16 %v6584
        %v6713 = vpack.c.b16 %v6649, %v6649
        %v6714 = vpack.c.b16 %v6650, %v6650
        %v6715 = vpack.c.b16 %v6651, %v6651
        %v6716 = vpack.c.b16 %v6652, %v6652
        %v6717 = vpack.c.b16 %v6653, %v6653
        %v6718 = vpack.c.b16 %v6654, %v6654
        %v6719 = vpack.c.b16 %v6655, %v6655
        %v6720 = vpack.c.b16 %v6656, %v6656
        %v6721 = vpack.c.b16 %v6657, %v6657
        %v6722 = vpack.c.b16 %v6658, %v6658
        %v6723 = vpack.c.b16 %v6659, %v6659
        %v6724 = vpack.c.b16 %v6660, %v6660
        %v6725 = vpack.c.b16 %v6661, %v6661
        %v6726 = vpack.c.b16 %v6662, %v6662
        %v6727 = vpack.c.b16 %v6663, %v6663
        %v6728 = vpack.c.b16 %v6664, %v6664
        %v6729 = vpack.c.b16 %v6665, %v6665
        %v6730 = vpack.c.b16 %v6666, %v6666
        %v6731 = vpack.c.b16 %v6667, %v6667
        %v6732 = vpack.c.b16 %v6668, %v6668
        %v6733 = vpack.c.b16 %v6669, %v6669
        %v6734 = vpack.c.b16 %v6670, %v6670
        %v6735 = vpack.c.b16 %v6671, %v6671
        %v6736 = vpack.c.b16 %v6672, %v6672
        %v6737 = vpack.c.b16 %v6673, %v6673
        %v6738 = vpack.c.b16 %v6674, %v6674
        %v6739 = vpack.c.b16 %v6675, %v6675
        %v6740 = vpack.c.b16 %v6676, %v6676
        %v6741 = vpack.c.b16 %v6677, %v6677
        %v6742 = vpack.c.b16 %v6678, %v6678
        %v6743 = vpack.c.b16 %v6679, %v6679
        %v6744 = vpack.c.b16 %v6680, %v6680
        %v6745 = vpack.c.b16 %v6681, %v6681
        %v6746 = vpack.c.b16 %v6682, %v6682
        %v6747 = vpack.c.b16 %v6683, %v6683
        %v6748 = vpack.c.b16 %v6684, %v6684
        %v6749 = vpack.c.b16 %v6685, %v6685
        %v6750 = vpack.c.b16 %v6686, %v6686
        %v6751 = vpack.c.b16 %v6687, %v6687
        %v6752 = vpack.c.b16 %v6688, %v6688
        %v6753 = vpack.c.b16 %v6689, %v6689
        %v6754 = vpack.c.b16 %v6690, %v6690
        %v6755 = vpack.c.b16 %v6691, %v6691
        %v6756 = vpack.c.b16 %v6692, %v6692
        %v6757 = vpack.c.b16 %v6693, %v6693
        %v6758 = vpack.c.b16 %v6694, %v6694
        %v6759 = vpack.c.b16 %v6695, %v6695
        %v6760 = vpack.c.b16 %v6696, %v6696
        %v6761 = vpack.c.b16 %v6697, %v6697
        %v6762 = vpack.c.b16 %v6698, %v6698
        %v6763 = vpack.c.b16 %v6699, %v6699
        %v6764 = vpack.c.b16 %v6700, %v6700
        %v6765 = vpack.c.b16 %v6701, %v6701
        %v6766 = vpack.c.b16 %v6702, %v6702
        %v6767 = vpack.c.b16 %v6703, %v6703
        %v6768 = vpack.c.b16 %v6704, %v6704
        %v6769 = vpack.c.b16 %v6705, %v6705
        %v6770 = vpack.c.b16 %v6706, %v6706
        %v6771 = vpack.c.b16 %v6707, %v6707
        %v6772 = vpack.c.b16 %v6708, %v6708
        %v6773 = vpack.c.b16 %v6709, %v6709
        %v6774 = vpack.c.b16 %v6710, %v6710
        %v6775 = vpack.c.b16 %v6711, %v6711
        %v6776 = vpack.c.b16 %v6712, %v6712
        %v6777 = vunpack.c.l.b16 %v6713
        %v6778 = vunpack.c.l.b16 %v6714
        %v6779 = vunpack.c.l.b16 %v6715
        %v6780 = vunpack.c.l.b16 %v6716
        %v6781 = vunpack.c.l.b16 %v6717
        %v6782 = vunpack.c.l.b16 %v6718
        %v6783 = vunpack.c.l.b16 %v6719
        %v6784 = vunpack.c.l.b16 %v6720
        %v6785 = vunpack.c.l.b16 %v6721
        %v6786 = vunpack.c.l.b16 %v6722
        %v6787 = vunpack.c.l.b16 %v6723
        %v6788 = vunpack.c.l.b16 %v6724
        %v6789 = vunpack.c.l.b16 %v6725
        %v6790 = vunpack.c.l.b16 %v6726
        %v6791 = vunpack.c.l.b16 %v6727
        %v6792 = vunpack.c.l.b16 %v6728
        %v6793 = vunpack.c.l.b16 %v6729
        %v6794 = vunpack.c.l.b16 %v6730
        %v6795 = vunpack.c.l.b16 %v6731
        %v6796 = vunpack.c.l.b16 %v6732
        %v6797 = vunpack.c.l.b16 %v6733
        %v6798 = vunpack.c.l.b16 %v6734
        %v6799 = vunpack.c.l.b16 %v6735
        %v6800 = vunpack.c.l.b16 %v6736
        %v6801 = vunpack.c.l.b16 %v6737
        %v6802 = vunpack.c.l.b16 %v6738
        %v6803 = vunpack.c.l.b16 %v6739
        %v6804 = vunpack.c.l.b16 %v6740
        %v6805 = vunpack.c.l.b16 %v6741
        %v6806 = vunpack.c.l.b16 %v6742
        %v6807 = vunpack.c.l.b16 %v6743
        %v6808 = vunpack.c.l.b16 %v6744
        %v6809 = vunpack.c.l.b16 %v6745
        %v6810 = vunpack.c.l.b16 %v6746
        %v6811 = vunpack.c.l.b16 %v6747
        %v6812 = vunpack.c.l.b16 %v6748
        %v6813 = vunpack.c.l.b16 %v6749
        %v6814 = vunpack.c.l.b16 %v6750
        %v6815 = vunpack.c.l.b16 %v6751
        %v6816 = vunpack.c.l.b16 %v6752
        %v6817 = vunpack.c.l.b16 %v6753
        %v6818 = vunpack.c.l.b16 %v6754
        %v6819 = vunpack.c.l.b16 %v6755
        %v6820 = vunpack.c.l.b16 %v6756
        %v6821 = vunpack.c.l.b16 %v6757
        %v6822 = vunpack.c.l.b16 %v6758
        %v6823 = vunpack.c.l.b16 %v6759
        %v6824 = vunpack.c.l.b16 %v6760
        %v6825 = vunpack.c.l.b16 %v6761
        %v6826 = vunpack.c.l.b16 %v6762
        %v6827 = vunpack.c.l.b16 %v6763
        %v6828 = vunpack.c.l.b16 %v6764
        %v6829 = vunpack.c.l.b16 %v6765
        %v6830 = vunpack.c.l.b16 %v6766
        %v6831 = vunpack.c.l.b16 %v6767
        %v6832 = vunpack.c.l.b16 %v6768
        %v6833 = vunpack.c.l.b16 %v6769
        %v6834 = vunpack.c.l.b16 %v6770
        %v6835 = vunpack.c.l.b16 %v6771
        %v6836 = vunpack.c.l.b16 %v6772
        %v6837 = vunpack.c.l.b16 %v6773
        %v6838 = vunpack.c.l.b16 %v6774
        %v6839 = vunpack.c.l.b16 %v6775
        %v6840 = vunpack.c.l.b16 %v6776
        %vm6841 = vcmask 1041409
        %v6842 = vsel %vm6841, %v6778, %v6777
        %vm6843 = vcmask 1042434
        %v6844 = vsel %vm6843, %v6779, %v6842
        %vm6845 = vcmask 1043459
        %v6846 = vsel %vm6845, %v6780, %v6844
        %vm6847 = vcmask 1044484
        %v6848 = vsel %vm6847, %v6781, %v6846
        %vm6849 = vcmask 1045509
        %v6850 = vsel %vm6849, %v6782, %v6848
        %vm6851 = vcmask 1046534
        %v6852 = vsel %vm6851, %v6783, %v6850
        %vm6853 = vcmask 1047559
        %v6854 = vsel %vm6853, %v6784, %v6852
        %v6855 = vsel %vm6841, %v6786, %v6785
        %v6856 = vsel %vm6843, %v6787, %v6855
        %v6857 = vsel %vm6845, %v6788, %v6856
        %v6858 = vsel %vm6847, %v6789, %v6857
        %v6859 = vsel %vm6849, %v6790, %v6858
        %v6860 = vsel %vm6851, %v6791, %v6859
        %v6861 = vsel %vm6853, %v6792, %v6860
        %v6862 = vsel %vm6841, %v6794, %v6793
        %v6863 = vsel %vm6843, %v6795, %v6862
        %v6864 = vsel %vm6845, %v6796, %v6863
        %v6865 = vsel %vm6847, %v6797, %v6864
        %v6866 = vsel %vm6849, %v6798, %v6865
        %v6867 = vsel %vm6851, %v6799, %v6866
        %v6868 = vsel %vm6853, %v6800, %v6867
        %v6869 = vsel %vm6841, %v6802, %v6801
        %v6870 = vsel %vm6843, %v6803, %v6869
        %v6871 = vsel %vm6845, %v6804, %v6870
        %v6872 = vsel %vm6847, %v6805, %v6871
        %v6873 = vsel %vm6849, %v6806, %v6872
        %v6874 = vsel %vm6851, %v6807, %v6873
        %v6875 = vsel %vm6853, %v6808, %v6874
        %v6876 = vsel %vm6841, %v6810, %v6809
        %v6877 = vsel %vm6843, %v6811, %v6876
        %v6878 = vsel %vm6845, %v6812, %v6877
        %v6879 = vsel %vm6847, %v6813, %v6878
        %v6880 = vsel %vm6849, %v6814, %v6879
        %v6881 = vsel %vm6851, %v6815, %v6880
        %v6882 = vsel %vm6853, %v6816, %v6881
        %v6883 = vsel %vm6841, %v6818, %v6817
        %v6884 = vsel %vm6843, %v6819, %v6883
        %v6885 = vsel %vm6845, %v6820, %v6884
        %v6886 = vsel %vm6847, %v6821, %v6885
        %v6887 = vsel %vm6849, %v6822, %v6886
        %v6888 = vsel %vm6851, %v6823, %v6887
        %v6889 = vsel %vm6853, %v6824, %v6888
        %v6890 = vsel %vm6841, %v6826, %v6825
        %v6891 = vsel %vm6843, %v6827, %v6890
        %v6892 = vsel %vm6845, %v6828, %v6891
        %v6893 = vsel %vm6847, %v6829, %v6892
        %v6894 = vsel %vm6849, %v6830, %v6893
        %v6895 = vsel %vm6851, %v6831, %v6894
        %v6896 = vsel %vm6853, %v6832, %v6895
        %v6897 = vsel %vm6841, %v6834, %v6833
        %v6898 = vsel %vm6843, %v6835, %v6897
        %v6899 = vsel %vm6845, %v6836, %v6898
        %v6900 = vsel %vm6847, %v6837, %v6899
        %v6901 = vsel %vm6849, %v6838, %v6900
        %v6902 = vsel %vm6851, %v6839, %v6901
        %v6903 = vsel %vm6853, %v6840, %v6902
        %v6904 = vpack.c.b16 %v6854, %v6854
        %v6905 = vpack.c.b16 %v6861, %v6861
        %v6906 = vpack.c.b16 %v6868, %v6868
        %v6907 = vpack.c.b16 %v6875, %v6875
        %v6908 = vpack.c.b16 %v6882, %v6882
        %v6909 = vpack.c.b16 %v6889, %v6889
        %v6910 = vpack.c.b16 %v6896, %v6896
        %v6911 = vpack.c.b16 %v6903, %v6903
        %6920 = vst [vmem:[%s296] sm:$0xf] %v6904
        %6921 = vst [vmem:[%s296 + $0x4] sm:$0xf] %v6905
        %6922 = vst [vmem:[%s296 + $0x8] sm:$0xf] %v6906
        %6923 = vst [vmem:[%s296 + $0xc] sm:$0xf] %v6907
        %6924 = vst [vmem:[%s296 + $0x10] sm:$0xf] %v6908
        %6925 = vst [vmem:[%s296 + $0x14] sm:$0xf] %v6909
        %6926 = vst [vmem:[%s296 + $0x18] sm:$0xf] %v6910
        %6927 = vst [vmem:[%s296 + $0x1c] sm:$0xf] %v6911
        %s6928 = sand.u32 %s197, 1
        %s6929 = scalar_lea.sflag [#allocation3], %s6928
        %s6930 = sand.u32 %s197, 1
        %s6931 = smul.addr %s6930, 32
        %s6932 = scalar_lea.vmem [#allocation2], %s6931
        // Predicated region
        $region49: #{tpu_custom_call.1} parent=47 // pred_check
          %p6933 = pneg %p207
        $region50: #{tpu_custom_call.1} parent=47 // pred_check_branch
          %6935 = sbr.rel (%p6933) target = $region52
        $region51: #{tpu_custom_call.1} parent=47 // pred_region
          %s6936 = smul.u32 8, %s26
          %s6938 = ssub.s32 512, 512
          %6939 = vsyncadd %s6929, %s6938
          %s6940 = smul.addr %s25, 8
          %s6941 = sadd.s32 %s6936, %s6940
          %s6942 = smul.addr %s6941, 64
          %s6943 = scalar_lea.hbm %s7, %s6942
          %s6944 = sshll.u32 %s6932, 4
          %s6945 = int_to_ptr.vmem [resolvable:$true] %s6944
          %6950 = dma.vmem_to_hbm [thread:$0]  %s6945, 512, %s6943, %s6929, 64, 64, 4
        $region52: #{tpu_custom_call.1} parent=47 // pred_fallthru
          _
      $region48: #{tpu_custom_call.1} parent=5 // pred_fallthru
        _
      %p6951 = scmp.le.s32.totalorder 2, %s16
      // Predicated region
      $region53: #{tpu_custom_call.1} parent=5 // pred_check
        %p6952 = pneg %p6951
      $region54: #{tpu_custom_call.1} parent=5 // pred_check_branch
        %6954 = sbr.rel (%p6952) target = $region56
      $region55: #{tpu_custom_call.1} parent=5 // pred_region
        %s6955 = ssub.s32 %s16, 2
        // Predicated region
        $region57: #{tpu_custom_call.1} parent=55 // pred_check
          %p6956 = pneg %p213
        $region58: #{tpu_custom_call.1} parent=55 // pred_check_branch
          %6958 = sbr.rel (%p6956) target = $region60
        $region59: #{tpu_custom_call.1} parent=55 // pred_region
          %s6959 = sand.u32 %s198, 1
          %s6960 = scalar_lea.sflag [#allocation3], %s6959
          %s6961 = sand.u32 %s198, 1
          %s6962 = smul.addr %s6961, 32
          %s6963 = scalar_lea.vmem [#allocation2], %s6962
          %6964 = dma.done %s6960, 512
        $region60: #{tpu_custom_call.1} parent=55 // pred_fallthru
          _
      $region56: #{tpu_custom_call.1} parent=5 // pred_fallthru
        _
    $region6: #{tpu_custom_call.1} parent=1 // loop_footer
      %s20 = sadd.s32 1, %s16
    $region7: #{tpu_custom_call.1} parent=1 // loop_footer_branch
      %15 = sbr.rel target = $region3
    $region8: #{tpu_custom_call.1} parent=1 // loop_exit
      _
    %6965 = vsyncpa [#allocation3], 1
    %s6966 = scalar_lea.sflag [#allocation3], 1
    %6967 = vsyncpa %s6966, 1

</llo_original>
